<compile_context>
chip_gen: v5e
topology: v5e:2x2
jax: 0.10.0
libtpu: 0.0.40
codegen_flags: <defaults>
</compile_context>

<pallas_src>
import functools

import jax
import jax.numpy as jnp
from jax.experimental import pallas as pl
from jax.experimental.pallas import tpu as pltpu

LAYERS = (2, 2, 2, 2)


# ----------------------------------------------------------------------------
# Pallas kernels: fused (A @ W) + bias [+ residual | + A_ds @ W_ds] [+ ReLU]
# ----------------------------------------------------------------------------
def _mm_bias_kernel(a_ref, w_ref, b_ref, o_ref, *, relu):
    acc = jnp.dot(a_ref[...], w_ref[...], preferred_element_type=jnp.float32)
    out = acc + b_ref[...]
    if relu:
        out = jnp.maximum(out, 0.0)
    o_ref[...] = out


def _mm_bias_res_kernel(a_ref, w_ref, b_ref, r_ref, o_ref, *, relu):
    acc = jnp.dot(a_ref[...], w_ref[...], preferred_element_type=jnp.float32)
    out = acc + b_ref[...] + r_ref[...]
    if relu:
        out = jnp.maximum(out, 0.0)
    o_ref[...] = out


def _mm_bias_ds_kernel(a_ref, w_ref, b_ref, ad_ref, wd_ref, o_ref, *, relu):
    acc = jnp.dot(a_ref[...], w_ref[...], preferred_element_type=jnp.float32)
    acc = acc + jnp.dot(ad_ref[...], wd_ref[...], preferred_element_type=jnp.float32)
    out = acc + b_ref[...]
    if relu:
        out = jnp.maximum(out, 0.0)
    o_ref[...] = out


def fused_matmul(a, w, bias, *, relu, residual=None, a_ds=None, w_ds=None):
    """out = relu?( A @ W + bias [+ residual | + A_ds @ W_ds] )

    a: (M, K) patches, w: (K, C) with BN scale pre-folded, bias: (C,) f32,
    residual: (M, C) f32 or None, a_ds / w_ds: fused 1x1-downsample operands.
    """
    M, K = a.shape
    C = w.shape[1]

    # Real grid over M ("parallel" -> megacore on v7x, pipelining) when it pays.
    bm = 256 if (M > 256 and M % 256 == 0) else M
    grid = (M // bm,)

    a = a.astype(jnp.bfloat16)
    w = w.astype(jnp.bfloat16)
    bias2 = bias.reshape(1, C).astype(jnp.float32)

    in_specs = [
        pl.BlockSpec((bm, K), lambda i: (i, 0)),
        pl.BlockSpec((K, C), lambda i: (0, 0)),
        pl.BlockSpec((1, C), lambda i: (0, 0)),
    ]
    args = [a, w, bias2]

    if a_ds is not None:
        Kd = a_ds.shape[1]
        kern = functools.partial(_mm_bias_ds_kernel, relu=relu)
        in_specs += [
            pl.BlockSpec((bm, Kd), lambda i: (i, 0)),
            pl.BlockSpec((Kd, C), lambda i: (0, 0)),
        ]
        args += [a_ds.astype(jnp.bfloat16), w_ds.astype(jnp.bfloat16)]
    elif residual is not None:
        kern = functools.partial(_mm_bias_res_kernel, relu=relu)
        in_specs += [pl.BlockSpec((bm, C), lambda i: (i, 0))]
        args += [residual.astype(jnp.float32)]
    else:
        kern = functools.partial(_mm_bias_kernel, relu=relu)

    return pl.pallas_call(
        kern,
        out_shape=jax.ShapeDtypeStruct((M, C), jnp.float32),
        grid=grid,
        in_specs=in_specs,
        out_specs=pl.BlockSpec((bm, C), lambda i: (i, 0)),
        compiler_params=pltpu.CompilerParams(dimension_semantics=("parallel",)),
    )(*args)


# ----------------------------------------------------------------------------
# Convolution via im2col + fused Pallas matmul
# ----------------------------------------------------------------------------
def _im2col(x, kh, kw, stride, pad):
    """x: (N,H,W,C) -> (N*Ho*Wo, kh*kw*C), tap order (i, j, c) matching OIHW."""
    N, H, W, C = x.shape
    if pad:
        x = jnp.pad(x, ((0, 0), (pad, pad), (pad, pad), (0, 0)))
    Hp, Wp = H + 2 * pad, W + 2 * pad
    Ho = (Hp - kh) // stride + 1
    Wo = (Wp - kw) // stride + 1
    cols = []
    for i in range(kh):
        for j in range(kw):
            cols.append(x[:, i:i + stride * (Ho - 1) + 1:stride,
                          j:j + stride * (Wo - 1) + 1:stride, :])
    p = jnp.stack(cols, axis=3)                        # (N, Ho, Wo, kh*kw, C)
    return p.reshape(N * Ho * Wo, kh * kw * C), (N, Ho, Wo)
    # TODO(synk): tap-accumulation inside the kernel would remove the kh*kw
    # im2col HBM expansion entirely; bf16 patches halve the traffic for now.


def conv_bn(x, w_oihw, bn_s, bn_b, *, stride, pad, relu, residual=None,
            ds_x=None, ds_w=None, ds_stride=1, ds_s=None, ds_b=None):
    """x: NHWC, w_oihw: PyTorch (Cout, Cin, kh, kw). Returns NHWC float32."""
    Cout, Cin, kh, kw = w_oihw.shape
    a, (N, Ho, Wo) = _im2col(x, kh, kw, stride, pad)
    # Fold the BN scale into the weight matrix at trace time.
    wm = jnp.transpose(w_oihw, (2, 3, 1, 0)).reshape(kh * kw * Cin, Cout)
    wm = wm * bn_s[None, :]
    bias = bn_b

    a_ds = w_ds_m = None
    if ds_x is not None:
        dCout, dCin, dkh, dkw = ds_w.shape
        a_ds, _ = _im2col(ds_x, dkh, dkw, ds_stride, 0)
        w_ds_m = jnp.transpose(ds_w, (2, 3, 1, 0)).reshape(dkh * dkw * dCin, dCout)
        w_ds_m = w_ds_m * ds_s[None, :]
        bias = bias + ds_b

    res = residual.reshape(N * Ho * Wo, Cout) if residual is not None else None
    out = fused_matmul(a, wm, bias, relu=relu, residual=res,
                       a_ds=a_ds, w_ds=w_ds_m)
    return out.reshape(N, Ho, Wo, Cout)


# ----------------------------------------------------------------------------
# Pooling (plain jnp: fuses in XLA, no extra HBM stacks / kernel launches)
# ----------------------------------------------------------------------------
def maxpool_3x3_s2_p1(x):
    """PyTorch MaxPool2d(kernel_size=3, stride=2, padding=1), NHWC."""
    N, H, W, C = x.shape
    k, s, pad = 3, 2, 1
    xp = jnp.pad(x, ((0, 0), (pad, pad), (pad, pad), (0, 0)),
                 constant_values=-jnp.inf)
    Ho = (H + 2 * pad - k) // s + 1
    Wo = (W + 2 * pad - k) // s + 1
    out = None
    for i in range(k):
        for j in range(k):
            v = xp[:, i:i + s * (Ho - 1) + 1:s, j:j + s * (Wo - 1) + 1:s, :]
            out = v if out is None else jnp.maximum(out, v)
    return out


def avgpool_flatten(x):
    """AdaptiveAvgPool2d((1,1)) + flatten, NHWC -> (N, C)."""
    return jnp.mean(x, axis=(1, 2))


# ----------------------------------------------------------------------------
# Parameter construction (deterministic, matching the PyTorch __init__)
# ----------------------------------------------------------------------------
def _kaiming(key, cout, cin, kh, kw):
    fan_out = cout * kh * kw
    std = (2.0 / fan_out) ** 0.5
    return jax.random.normal(key, (cout, cin, kh, kw), jnp.float32) * std


def _bn_fold(gamma, beta=None, mean=None, var=None, eps=1e-5):
    gamma = jnp.asarray(gamma, jnp.float32)
    beta = jnp.zeros_like(gamma) if beta is None else beta
    mean = jnp.zeros_like(gamma) if mean is None else mean
    var = jnp.ones_like(gamma) if var is None else var
    s = gamma / jnp.sqrt(var + eps)
    return s, beta - mean * s


def build_params(key, nf=16, layers=LAYERS):
    """Only jnp arrays in the pytree; all structural info is derived statically."""
    keys = iter(jax.random.split(key, 128))
    p = {"conv1_w": _kaiming(next(keys), nf, 3, 3, 3)}
    p["bn1_s"], p["bn1_b"] = _bn_fold(jnp.ones(nf))
    inplanes = nf
    for st in range(4):
        planes = nf * (2 ** st)
        stage_stride = 1 if st == 0 else 2
        blocks = []
        for b in range(layers[st]):
            s = stage_stride if b == 0 else 1
            blk = {"conv1_w": _kaiming(next(keys), planes, inplanes, 3, 3)}
            blk["bn1_s"], blk["bn1_b"] = _bn_fold(jnp.ones(planes))
            blk["conv2_w"] = _kaiming(next(keys), planes, planes, 3, 3)
            # zero_init_residual=True -> bn2.weight = 0
            blk["bn2_s"], blk["bn2_b"] = _bn_fold(jnp.zeros(planes))
            if b == 0 and (s != 1 or inplanes != planes):
                blk["down_w"] = _kaiming(next(keys), planes, inplanes, 1, 1)
                blk["dbn_s"], blk["dbn_b"] = _bn_fold(jnp.ones(planes))
            blocks.append(blk)
            inplanes = planes
        p[f"layer{st + 1}"] = blocks
        p[f"stage{st + 1}_scale"] = jnp.ones((planes,), jnp.float32)
    p["raw_scale"] = jnp.ones((8 * nf,), jnp.float32)
    return p


# ----------------------------------------------------------------------------
# Forward pass
# ----------------------------------------------------------------------------
def basic_block(x, blk, stride, last_relu):
    # conv1 + bn1 + relu (one fused kernel)
    out = conv_bn(x, blk["conv1_w"], blk["bn1_s"], blk["bn1_b"],
                  stride=stride, pad=1, relu=True)
    if "down_w" in blk:
        # conv2 + bn2 + (1x1 downsample conv + bn) + add + relu? in ONE kernel
        out = conv_bn(out, blk["conv2_w"], blk["bn2_s"], blk["bn2_b"],
                      stride=1, pad=1, relu=last_relu,
                      ds_x=x, ds_w=blk["down_w"], ds_stride=stride,
                      ds_s=blk["dbn_s"], ds_b=blk["dbn_b"])
    else:
        # conv2 + bn2 + residual add + relu? in ONE kernel
        out = conv_bn(out, blk["conv2_w"], blk["bn2_s"], blk["bn2_b"],
                      stride=1, pad=1, relu=last_relu, residual=x)
    return out


def resnet_forward(params, x_nchw, nf=16, layers=LAYERS):
    # PyTorch input is NCHW; the kernels use NHWC internally.
    x = jnp.transpose(x_nchw, (0, 2, 3, 1)).astype(jnp.float32)
    x = conv_bn(x, params["conv1_w"], params["bn1_s"], params["bn1_b"],
                stride=1, pad=1, relu=True)
    x = maxpool_3x3_s2_p1(x)

    attention = []
    for st in range(4):
        stage_stride = 1 if st == 0 else 2
        blocks = params[f"layer{st + 1}"]
        for b, blk in enumerate(blocks):
            stride = stage_stride if b == 0 else 1
            # PyTorch _make_layer: block 0 keeps the default last_relu=True,
            # later blocks get last_relu=False (model.last_relu == False).
            last_relu = (b == 0)
            x = basic_block(x, blk, stride, last_relu)
        # Channel_Importance_Measure: per-channel scale (initialized to 1.0)
        x = x * params[f"stage{st + 1}_scale"][None, None, None, :]
        attention.append(x)
        # end_relu is identity because model.last_relu == False

    x4 = attention[-1]
    raw_features = avgpool_flatten(x4) * params["raw_scale"][None, :]
    features = avgpool_flatten(jnp.maximum(x4, 0.0))

    # TODO(synk): gradhook importance accumulation is a backward-pass hook;
    # forward returns the (zero-initialized) importance buffers only.
    importance = [
        jnp.zeros((nf,), jnp.float32),
        jnp.zeros((2 * nf,), jnp.float32),
        jnp.zeros((4 * nf,), jnp.float32),
        jnp.zeros((8 * nf,), jnp.float32),
        jnp.zeros((8 * nf,), jnp.float32),
    ]
    return {
        "raw_features": raw_features,                              # (N, 8*nf)
        "features": features,                                      # (N, 8*nf)
        "attention": [jnp.transpose(a, (0, 3, 1, 2)) for a in attention],  # NCHW
        "importance": importance,
    }


# ----------------------------------------------------------------------------
if __name__ == "__main__":
    nf = 16
    key = jax.random.PRNGKey(0)
    k_params, k_x = jax.random.split(key)
    params = build_params(k_params, nf=nf)

    # PyTorch-style NCHW input: batch=2, 3 channels, 16x16 spatial
    x = jax.random.normal(k_x, (2, 3, 16, 16), jnp.float32)

    fwd = jax.jit(functools.partial(resnet_forward, nf=nf))
    out = fwd(params, x)
    out = jax.block_until_ready(out)

    assert out["raw_features"].shape == (2, 8 * nf)
    assert out["features"].shape == (2, 8 * nf)
    assert out["attention"][0].shape == (2, nf, 8, 8)
    assert out["attention"][1].shape == (2, 2 * nf, 4, 4)
    assert out["attention"][2].shape == (2, 4 * nf, 2, 2)
    assert out["attention"][3].shape == (2, 8 * nf, 1, 1)
    assert all(bool(jnp.all(jnp.isfinite(a))) for a in out["attention"])
    assert bool(jnp.all(jnp.isfinite(out["raw_features"])))
    print("KERNEL_OK")
</pallas_src>

<mosaic_0001>
module attributes {stable_mosaic.version = 11 : i64} {
  func.func @_mm_bias_kernel(%arg0: i32, %arg1: memref<256x27xbf16, #tpu.memory_space<vmem>>, %arg2: memref<27x16xbf16, #tpu.memory_space<vmem>>, %arg3: memref<1x16xf32, #tpu.memory_space<vmem>>, %arg4: memref<256x16xf32, #tpu.memory_space<vmem>>) attributes {dimension_semantics = [#tpu.dimension_semantics<parallel>], iteration_bounds = array<i64: 2>, scalar_prefetch = 0 : i64, scratch_operands = 0 : i64, tpu.core_type = #tpu.core_type<tc>, window_params = [{transform_indices = @transform_0, window_bounds = array<i64: 256, 27>}, {pipeline_mode = #tpu.pipeline_mode<synchronous>, transform_indices = @transform_1, window_bounds = array<i64: 27, 16>}, {pipeline_mode = #tpu.pipeline_mode<synchronous>, transform_indices = @transform_2, window_bounds = array<i64: 1, 16>}, {transform_indices = @transform_3, window_bounds = array<i64: 256, 16>}]} {
    %c0 = arith.constant 0 : index
    %c0_0 = arith.constant 0 : index
    %0 = vector.load %arg1[%c0, %c0_0] : memref<256x27xbf16, #tpu.memory_space<vmem>>, vector<256x27xbf16>
    %c0_1 = arith.constant 0 : index
    %c0_2 = arith.constant 0 : index
    %1 = vector.load %arg2[%c0_1, %c0_2] : memref<27x16xbf16, #tpu.memory_space<vmem>>, vector<27x16xbf16>
    %cst = arith.constant dense<0.000000e+00> : vector<256x16xf32>
    %2 = tpu.matmul %0, %1, %cst {dimension_numbers = #tpu.dot_dimension_numbers<[1], [0], [0], [1], [0, 0, 1, 1], [], []>} : vector<256x27xbf16>, vector<27x16xbf16>, vector<256x16xf32> -> vector<256x16xf32>
    %c0_3 = arith.constant 0 : index
    %c0_4 = arith.constant 0 : index
    %3 = vector.load %arg3[%c0_3, %c0_4] : memref<1x16xf32, #tpu.memory_space<vmem>>, vector<1x16xf32>
    %4 = vector.broadcast %3 : vector<1x16xf32> to vector<256x16xf32>
    %5 = arith.addf %2, %4 : vector<256x16xf32>
    %cst_5 = arith.constant 0.000000e+00 : f32
    %6 = vector.broadcast %cst_5 : f32 to vector<256x16xf32>
    %7 = arith.maximumf %5, %6 : vector<256x16xf32>
    %c0_6 = arith.constant 0 : index
    %c0_7 = arith.constant 0 : index
    %8 = vector.load %arg4[%c0_6, %c0_7] : memref<256x16xf32, #tpu.memory_space<vmem>>, vector<256x16xf32>
    tpu.vector_store %arg4[%c0_6, %c0_7], %7 {strides = array<i32>} : memref<256x16xf32, #tpu.memory_space<vmem>>, vector<256x16xf32>,
    return
  }
  func.func @transform_0(%arg0: i32) -> (i32, i32) {
    %c0_i32 = arith.constant 0 : i32
    %c0_i32_0 = arith.constant 0 : i32
    return %arg0, %c0_i32 : i32, i32
  }
  func.func @transform_1(%arg0: i32) -> (i32, i32) {
    %c0_i32 = arith.constant 0 : i32
    %c0_i32_0 = arith.constant 0 : i32
    %c0_i32_1 = arith.constant 0 : i32
    return %c0_i32, %c0_i32_0 : i32, i32
  }
  func.func @transform_2(%arg0: i32) -> (i32, i32) {
    %c0_i32 = arith.constant 0 : i32
    %c0_i32_0 = arith.constant 0 : i32
    %c0_i32_1 = arith.constant 0 : i32
    return %c0_i32, %c0_i32_0 : i32, i32
  }
  func.func @transform_3(%arg0: i32) -> (i32, i32) {
    %c0_i32 = arith.constant 0 : i32
    %c0_i32_0 = arith.constant 0 : i32
    return %arg0, %c0_i32 : i32, i32
  }
}

module attributes {stable_mosaic.version = 11 : i64} {
  func.func @_mm_bias_res_kernel(%arg0: i32, %arg1: memref<128x144xbf16, #tpu.memory_space<vmem>>, %arg2: memref<144x16xbf16, #tpu.memory_space<vmem>>, %arg3: memref<1x16xf32, #tpu.memory_space<vmem>>, %arg4: memref<128x16xf32, #tpu.memory_space<vmem>>, %arg5: memref<128x16xf32, #tpu.memory_space<vmem>>) attributes {dimension_semantics = [#tpu.dimension_semantics<parallel>], iteration_bounds = array<i64: 1>, scalar_prefetch = 0 : i64, scratch_operands = 0 : i64, tpu.core_type = #tpu.core_type<tc>, window_params = [{transform_indices = @transform_0, window_bounds = array<i64: 128, 144>}, {pipeline_mode = #tpu.pipeline_mode<synchronous>, transform_indices = @transform_1, window_bounds = array<i64: 144, 16>}, {pipeline_mode = #tpu.pipeline_mode<synchronous>, transform_indices = @transform_2, window_bounds = array<i64: 1, 16>}, {transform_indices = @transform_3, window_bounds = array<i64: 128, 16>}, {transform_indices = @transform_4, window_bounds = array<i64: 128, 16>}]} {
    %c0 = arith.constant 0 : index
    %c0_0 = arith.constant 0 : index
    %0 = vector.load %arg1[%c0, %c0_0] : memref<128x144xbf16, #tpu.memory_space<vmem>>, vector<128x144xbf16>
    %c0_1 = arith.constant 0 : index
    %c0_2 = arith.constant 0 : index
    %1 = vector.load %arg2[%c0_1, %c0_2] : memref<144x16xbf16, #tpu.memory_space<vmem>>, vector<144x16xbf16>
    %cst = arith.constant dense<0.000000e+00> : vector<128x16xf32>
    %2 = tpu.matmul %0, %1, %cst {dimension_numbers = #tpu.dot_dimension_numbers<[1], [0], [0], [1], [0, 0, 1, 1], [], []>} : vector<128x144xbf16>, vector<144x16xbf16>, vector<128x16xf32> -> vector<128x16xf32>
    %c0_3 = arith.constant 0 : index
    %c0_4 = arith.constant 0 : index
    %3 = vector.load %arg3[%c0_3, %c0_4] : memref<1x16xf32, #tpu.memory_space<vmem>>, vector<1x16xf32>
    %4 = vector.broadcast %3 : vector<1x16xf32> to vector<128x16xf32>
    %5 = arith.addf %2, %4 : vector<128x16xf32>
    %c0_5 = arith.constant 0 : index
    %c0_6 = arith.constant 0 : index
    %6 = vector.load %arg4[%c0_5, %c0_6] : memref<128x16xf32, #tpu.memory_space<vmem>>, vector<128x16xf32>
    %7 = arith.addf %5, %6 : vector<128x16xf32>
    %cst_7 = arith.constant 0.000000e+00 : f32
    %8 = vector.broadcast %cst_7 : f32 to vector<128x16xf32>
    %9 = arith.maximumf %7, %8 : vector<128x16xf32>
    %c0_8 = arith.constant 0 : index
    %c0_9 = arith.constant 0 : index
    %10 = vector.load %arg5[%c0_8, %c0_9] : memref<128x16xf32, #tpu.memory_space<vmem>>, vector<128x16xf32>
    tpu.vector_store %arg5[%c0_8, %c0_9], %9 {strides = array<i32>} : memref<128x16xf32, #tpu.memory_space<vmem>>, vector<128x16xf32>,
    return
  }
  func.func @transform_0(%arg0: i32) -> (i32, i32) {
    %c0_i32 = arith.constant 0 : i32
    %c0_i32_0 = arith.constant 0 : i32
    return %arg0, %c0_i32 : i32, i32
  }
  func.func @transform_1(%arg0: i32) -> (i32, i32) {
    %c0_i32 = arith.constant 0 : i32
    %c0_i32_0 = arith.constant 0 : i32
    %c0_i32_1 = arith.constant 0 : i32
    return %c0_i32, %c0_i32_0 : i32, i32
  }
  func.func @transform_2(%arg0: i32) -> (i32, i32) {
    %c0_i32 = arith.constant 0 : i32
    %c0_i32_0 = arith.constant 0 : i32
    %c0_i32_1 = arith.constant 0 : i32
    return %c0_i32, %c0_i32_0 : i32, i32
  }
  func.func @transform_3(%arg0: i32) -> (i32, i32) {
    %c0_i32 = arith.constant 0 : i32
    %c0_i32_0 = arith.constant 0 : i32
    return %arg0, %c0_i32 : i32, i32
  }
  func.func @transform_4(%arg0: i32) -> (i32, i32) {
    %c0_i32 = arith.constant 0 : i32
    %c0_i32_0 = arith.constant 0 : i32
    return %arg0, %c0_i32 : i32, i32
  }
}

module attributes {stable_mosaic.version = 11 : i64} {
  func.func @_mm_bias_kernel(%arg0: i32, %arg1: memref<128x144xbf16, #tpu.memory_space<vmem>>, %arg2: memref<144x16xbf16, #tpu.memory_space<vmem>>, %arg3: memref<1x16xf32, #tpu.memory_space<vmem>>, %arg4: memref<128x16xf32, #tpu.memory_space<vmem>>) attributes {dimension_semantics = [#tpu.dimension_semantics<parallel>], iteration_bounds = array<i64: 1>, scalar_prefetch = 0 : i64, scratch_operands = 0 : i64, tpu.core_type = #tpu.core_type<tc>, window_params = [{transform_indices = @transform_0, window_bounds = array<i64: 128, 144>}, {pipeline_mode = #tpu.pipeline_mode<synchronous>, transform_indices = @transform_1, window_bounds = array<i64: 144, 16>}, {pipeline_mode = #tpu.pipeline_mode<synchronous>, transform_indices = @transform_2, window_bounds = array<i64: 1, 16>}, {transform_indices = @transform_3, window_bounds = array<i64: 128, 16>}]} {
    %c0 = arith.constant 0 : index
    %c0_0 = arith.constant 0 : index
    %0 = vector.load %arg1[%c0, %c0_0] : memref<128x144xbf16, #tpu.memory_space<vmem>>, vector<128x144xbf16>
    %c0_1 = arith.constant 0 : index
    %c0_2 = arith.constant 0 : index
    %1 = vector.load %arg2[%c0_1, %c0_2] : memref<144x16xbf16, #tpu.memory_space<vmem>>, vector<144x16xbf16>
    %cst = arith.constant dense<0.000000e+00> : vector<128x16xf32>
    %2 = tpu.matmul %0, %1, %cst {dimension_numbers = #tpu.dot_dimension_numbers<[1], [0], [0], [1], [0, 0, 1, 1], [], []>} : vector<128x144xbf16>, vector<144x16xbf16>, vector<128x16xf32> -> vector<128x16xf32>
    %c0_3 = arith.constant 0 : index
    %c0_4 = arith.constant 0 : index
    %3 = vector.load %arg3[%c0_3, %c0_4] : memref<1x16xf32, #tpu.memory_space<vmem>>, vector<1x16xf32>
    %4 = vector.broadcast %3 : vector<1x16xf32> to vector<128x16xf32>
    %5 = arith.addf %2, %4 : vector<128x16xf32>
    %cst_5 = arith.constant 0.000000e+00 : f32
    %6 = vector.broadcast %cst_5 : f32 to vector<128x16xf32>
    %7 = arith.maximumf %5, %6 : vector<128x16xf32>
    %c0_6 = arith.constant 0 : index
    %c0_7 = arith.constant 0 : index
    %8 = vector.load %arg4[%c0_6, %c0_7] : memref<128x16xf32, #tpu.memory_space<vmem>>, vector<128x16xf32>
    tpu.vector_store %arg4[%c0_6, %c0_7], %7 {strides = array<i32>} : memref<128x16xf32, #tpu.memory_space<vmem>>, vector<128x16xf32>,
    return
  }
  func.func @transform_0(%arg0: i32) -> (i32, i32) {
    %c0_i32 = arith.constant 0 : i32
    %c0_i32_0 = arith.constant 0 : i32
    return %arg0, %c0_i32 : i32, i32
  }
  func.func @transform_1(%arg0: i32) -> (i32, i32) {
    %c0_i32 = arith.constant 0 : i32
    %c0_i32_0 = arith.constant 0 : i32
    %c0_i32_1 = arith.constant 0 : i32
    return %c0_i32, %c0_i32_0 : i32, i32
  }
  func.func @transform_2(%arg0: i32) -> (i32, i32) {
    %c0_i32 = arith.constant 0 : i32
    %c0_i32_0 = arith.constant 0 : i32
    %c0_i32_1 = arith.constant 0 : i32
    return %c0_i32, %c0_i32_0 : i32, i32
  }
  func.func @transform_3(%arg0: i32) -> (i32, i32) {
    %c0_i32 = arith.constant 0 : i32
    %c0_i32_0 = arith.constant 0 : i32
    return %arg0, %c0_i32 : i32, i32
  }
}

module attributes {stable_mosaic.version = 11 : i64} {
  func.func @_mm_bias_res_kernel(%arg0: i32, %arg1: memref<128x144xbf16, #tpu.memory_space<vmem>>, %arg2: memref<144x16xbf16, #tpu.memory_space<vmem>>, %arg3: memref<1x16xf32, #tpu.memory_space<vmem>>, %arg4: memref<128x16xf32, #tpu.memory_space<vmem>>, %arg5: memref<128x16xf32, #tpu.memory_space<vmem>>) attributes {dimension_semantics = [#tpu.dimension_semantics<parallel>], iteration_bounds = array<i64: 1>, scalar_prefetch = 0 : i64, scratch_operands = 0 : i64, tpu.core_type = #tpu.core_type<tc>, window_params = [{transform_indices = @transform_0, window_bounds = array<i64: 128, 144>}, {pipeline_mode = #tpu.pipeline_mode<synchronous>, transform_indices = @transform_1, window_bounds = array<i64: 144, 16>}, {pipeline_mode = #tpu.pipeline_mode<synchronous>, transform_indices = @transform_2, window_bounds = array<i64: 1, 16>}, {transform_indices = @transform_3, window_bounds = array<i64: 128, 16>}, {transform_indices = @transform_4, window_bounds = array<i64: 128, 16>}]} {
    %c0 = arith.constant 0 : index
    %c0_0 = arith.constant 0 : index
    %0 = vector.load %arg1[%c0, %c0_0] : memref<128x144xbf16, #tpu.memory_space<vmem>>, vector<128x144xbf16>
    %c0_1 = arith.constant 0 : index
    %c0_2 = arith.constant 0 : index
    %1 = vector.load %arg2[%c0_1, %c0_2] : memref<144x16xbf16, #tpu.memory_space<vmem>>, vector<144x16xbf16>
    %cst = arith.constant dense<0.000000e+00> : vector<128x16xf32>
    %2 = tpu.matmul %0, %1, %cst {dimension_numbers = #tpu.dot_dimension_numbers<[1], [0], [0], [1], [0, 0, 1, 1], [], []>} : vector<128x144xbf16>, vector<144x16xbf16>, vector<128x16xf32> -> vector<128x16xf32>
    %c0_3 = arith.constant 0 : index
    %c0_4 = arith.constant 0 : index
    %3 = vector.load %arg3[%c0_3, %c0_4] : memref<1x16xf32, #tpu.memory_space<vmem>>, vector<1x16xf32>
    %4 = vector.broadcast %3 : vector<1x16xf32> to vector<128x16xf32>
    %5 = arith.addf %2, %4 : vector<128x16xf32>
    %c0_5 = arith.constant 0 : index
    %c0_6 = arith.constant 0 : index
    %6 = vector.load %arg4[%c0_5, %c0_6] : memref<128x16xf32, #tpu.memory_space<vmem>>, vector<128x16xf32>
    %7 = arith.addf %5, %6 : vector<128x16xf32>
    %c0_7 = arith.constant 0 : index
    %c0_8 = arith.constant 0 : index
    %8 = vector.load %arg5[%c0_7, %c0_8] : memref<128x16xf32, #tpu.memory_space<vmem>>, vector<128x16xf32>
    tpu.vector_store %arg5[%c0_7, %c0_8], %7 {strides = array<i32>} : memref<128x16xf32, #tpu.memory_space<vmem>>, vector<128x16xf32>,
    return
  }
  func.func @transform_0(%arg0: i32) -> (i32, i32) {
    %c0_i32 = arith.constant 0 : i32
    %c0_i32_0 = arith.constant 0 : i32
    return %arg0, %c0_i32 : i32, i32
  }
  func.func @transform_1(%arg0: i32) -> (i32, i32) {
    %c0_i32 = arith.constant 0 : i32
    %c0_i32_0 = arith.constant 0 : i32
    %c0_i32_1 = arith.constant 0 : i32
    return %c0_i32, %c0_i32_0 : i32, i32
  }
  func.func @transform_2(%arg0: i32) -> (i32, i32) {
    %c0_i32 = arith.constant 0 : i32
    %c0_i32_0 = arith.constant 0 : i32
    %c0_i32_1 = arith.constant 0 : i32
    return %c0_i32, %c0_i32_0 : i32, i32
  }
  func.func @transform_3(%arg0: i32) -> (i32, i32) {
    %c0_i32 = arith.constant 0 : i32
    %c0_i32_0 = arith.constant 0 : i32
    return %arg0, %c0_i32 : i32, i32
  }
  func.func @transform_4(%arg0: i32) -> (i32, i32) {
    %c0_i32 = arith.constant 0 : i32
    %c0_i32_0 = arith.constant 0 : i32
    return %arg0, %c0_i32 : i32, i32
  }
}

module attributes {stable_mosaic.version = 11 : i64} {
  func.func @_mm_bias_kernel(%arg0: i32, %arg1: memref<32x144xbf16, #tpu.memory_space<vmem>>, %arg2: memref<144x32xbf16, #tpu.memory_space<vmem>>, %arg3: memref<1x32xf32, #tpu.memory_space<vmem>>, %arg4: memref<32x32xf32, #tpu.memory_space<vmem>>) attributes {dimension_semantics = [#tpu.dimension_semantics<parallel>], iteration_bounds = array<i64: 1>, scalar_prefetch = 0 : i64, scratch_operands = 0 : i64, tpu.core_type = #tpu.core_type<tc>, window_params = [{transform_indices = @transform_0, window_bounds = array<i64: 32, 144>}, {pipeline_mode = #tpu.pipeline_mode<synchronous>, transform_indices = @transform_1, window_bounds = array<i64: 144, 32>}, {pipeline_mode = #tpu.pipeline_mode<synchronous>, transform_indices = @transform_2, window_bounds = array<i64: 1, 32>}, {transform_indices = @transform_3, window_bounds = array<i64: 32, 32>}]} {
    %c0 = arith.constant 0 : index
    %c0_0 = arith.constant 0 : index
    %0 = vector.load %arg1[%c0, %c0_0] : memref<32x144xbf16, #tpu.memory_space<vmem>>, vector<32x144xbf16>
    %c0_1 = arith.constant 0 : index
    %c0_2 = arith.constant 0 : index
    %1 = vector.load %arg2[%c0_1, %c0_2] : memref<144x32xbf16, #tpu.memory_space<vmem>>, vector<144x32xbf16>
    %cst = arith.constant dense<0.000000e+00> : vector<32x32xf32>
    %2 = tpu.matmul %0, %1, %cst {dimension_numbers = #tpu.dot_dimension_numbers<[1], [0], [0], [1], [0, 0, 1, 1], [], []>} : vector<32x144xbf16>, vector<144x32xbf16>, vector<32x32xf32> -> vector<32x32xf32>
    %c0_3 = arith.constant 0 : index
    %c0_4 = arith.constant 0 : index
    %3 = vector.load %arg3[%c0_3, %c0_4] : memref<1x32xf32, #tpu.memory_space<vmem>>, vector<1x32xf32>
    %4 = vector.broadcast %3 : vector<1x32xf32> to vector<32x32xf32>
    %5 = arith.addf %2, %4 : vector<32x32xf32>
    %cst_5 = arith.constant 0.000000e+00 : f32
    %6 = vector.broadcast %cst_5 : f32 to vector<32x32xf32>
    %7 = arith.maximumf %5, %6 : vector<32x32xf32>
    %c0_6 = arith.constant 0 : index
    %c0_7 = arith.constant 0 : index
    %8 = vector.load %arg4[%c0_6, %c0_7] : memref<32x32xf32, #tpu.memory_space<vmem>>, vector<32x32xf32>
    tpu.vector_store %arg4[%c0_6, %c0_7], %7 {strides = array<i32>} : memref<32x32xf32, #tpu.memory_space<vmem>>, vector<32x32xf32>,
    return
  }
  func.func @transform_0(%arg0: i32) -> (i32, i32) {
    %c0_i32 = arith.constant 0 : i32
    %c0_i32_0 = arith.constant 0 : i32
    return %arg0, %c0_i32 : i32, i32
  }
  func.func @transform_1(%arg0: i32) -> (i32, i32) {
    %c0_i32 = arith.constant 0 : i32
    %c0_i32_0 = arith.constant 0 : i32
    %c0_i32_1 = arith.constant 0 : i32
    return %c0_i32, %c0_i32_0 : i32, i32
  }
  func.func @transform_2(%arg0: i32) -> (i32, i32) {
    %c0_i32 = arith.constant 0 : i32
    %c0_i32_0 = arith.constant 0 : i32
    %c0_i32_1 = arith.constant 0 : i32
    return %c0_i32, %c0_i32_0 : i32, i32
  }
  func.func @transform_3(%arg0: i32) -> (i32, i32) {
    %c0_i32 = arith.constant 0 : i32
    %c0_i32_0 = arith.constant 0 : i32
    return %arg0, %c0_i32 : i32, i32
  }
}

module attributes {stable_mosaic.version = 11 : i64} {
  func.func @_mm_bias_res_kernel(%arg0: i32, %arg1: memref<32x288xbf16, #tpu.memory_space<vmem>>, %arg2: memref<288x32xbf16, #tpu.memory_space<vmem>>, %arg3: memref<1x32xf32, #tpu.memory_space<vmem>>, %arg4: memref<32x32xf32, #tpu.memory_space<vmem>>, %arg5: memref<32x32xf32, #tpu.memory_space<vmem>>) attributes {dimension_semantics = [#tpu.dimension_semantics<parallel>], iteration_bounds = array<i64: 1>, scalar_prefetch = 0 : i64, scratch_operands = 0 : i64, tpu.core_type = #tpu.core_type<tc>, window_params = [{transform_indices = @transform_0, window_bounds = array<i64: 32, 288>}, {pipeline_mode = #tpu.pipeline_mode<synchronous>, transform_indices = @transform_1, window_bounds = array<i64: 288, 32>}, {pipeline_mode = #tpu.pipeline_mode<synchronous>, transform_indices = @transform_2, window_bounds = array<i64: 1, 32>}, {transform_indices = @transform_3, window_bounds = array<i64: 32, 32>}, {transform_indices = @transform_4, window_bounds = array<i64: 32, 32>}]} {
    %c0 = arith.constant 0 : index
    %c0_0 = arith.constant 0 : index
    %0 = vector.load %arg1[%c0, %c0_0] : memref<32x288xbf16, #tpu.memory_space<vmem>>, vector<32x288xbf16>
    %c0_1 = arith.constant 0 : index
    %c0_2 = arith.constant 0 : index
    %1 = vector.load %arg2[%c0_1, %c0_2] : memref<288x32xbf16, #tpu.memory_space<vmem>>, vector<288x32xbf16>
    %cst = arith.constant dense<0.000000e+00> : vector<32x32xf32>
    %2 = tpu.matmul %0, %1, %cst {dimension_numbers = #tpu.dot_dimension_numbers<[1], [0], [0], [1], [0, 0, 1, 1], [], []>} : vector<32x288xbf16>, vector<288x32xbf16>, vector<32x32xf32> -> vector<32x32xf32>
    %c0_3 = arith.constant 0 : index
    %c0_4 = arith.constant 0 : index
    %3 = vector.load %arg3[%c0_3, %c0_4] : memref<1x32xf32, #tpu.memory_space<vmem>>, vector<1x32xf32>
    %4 = vector.broadcast %3 : vector<1x32xf32> to vector<32x32xf32>
    %5 = arith.addf %2, %4 : vector<32x32xf32>
    %c0_5 = arith.constant 0 : index
    %c0_6 = arith.constant 0 : index
    %6 = vector.load %arg4[%c0_5, %c0_6] : memref<32x32xf32, #tpu.memory_space<vmem>>, vector<32x32xf32>
    %7 = arith.addf %5, %6 : vector<32x32xf32>
    %c0_7 = arith.constant 0 : index
    %c0_8 = arith.constant 0 : index
    %8 = vector.load %arg5[%c0_7, %c0_8] : memref<32x32xf32, #tpu.memory_space<vmem>>, vector<32x32xf32>
    tpu.vector_store %arg5[%c0_7, %c0_8], %7 {strides = array<i32>} : memref<32x32xf32, #tpu.memory_space<vmem>>, vector<32x32xf32>,
    return
  }
  func.func @transform_0(%arg0: i32) -> (i32, i32) {
    %c0_i32 = arith.constant 0 : i32
    %c0_i32_0 = arith.constant 0 : i32
    return %arg0, %c0_i32 : i32, i32
  }
  func.func @transform_1(%arg0: i32) -> (i32, i32) {
    %c0_i32 = arith.constant 0 : i32
    %c0_i32_0 = arith.constant 0 : i32
    %c0_i32_1 = arith.constant 0 : i32
    return %c0_i32, %c0_i32_0 : i32, i32
  }
  func.func @transform_2(%arg0: i32) -> (i32, i32) {
    %c0_i32 = arith.constant 0 : i32
    %c0_i32_0 = arith.constant 0 : i32
    %c0_i32_1 = arith.constant 0 : i32
    return %c0_i32, %c0_i32_0 : i32, i32
  }
  func.func @transform_3(%arg0: i32) -> (i32, i32) {
    %c0_i32 = arith.constant 0 : i32
    %c0_i32_0 = arith.constant 0 : i32
    return %arg0, %c0_i32 : i32, i32
  }
  func.func @transform_4(%arg0: i32) -> (i32, i32) {
    %c0_i32 = arith.constant 0 : i32
    %c0_i32_0 = arith.constant 0 : i32
    return %arg0, %c0_i32 : i32, i32
  }
}

module attributes {stable_mosaic.version = 11 : i64} {
  func.func @_mm_bias_kernel(%arg0: i32, %arg1: memref<32x288xbf16, #tpu.memory_space<vmem>>, %arg2: memref<288x32xbf16, #tpu.memory_space<vmem>>, %arg3: memref<1x32xf32, #tpu.memory_space<vmem>>, %arg4: memref<32x32xf32, #tpu.memory_space<vmem>>) attributes {dimension_semantics = [#tpu.dimension_semantics<parallel>], iteration_bounds = array<i64: 1>, scalar_prefetch = 0 : i64, scratch_operands = 0 : i64, tpu.core_type = #tpu.core_type<tc>, window_params = [{transform_indices = @transform_0, window_bounds = array<i64: 32, 288>}, {pipeline_mode = #tpu.pipeline_mode<synchronous>, transform_indices = @transform_1, window_bounds = array<i64: 288, 32>}, {pipeline_mode = #tpu.pipeline_mode<synchronous>, transform_indices = @transform_2, window_bounds = array<i64: 1, 32>}, {transform_indices = @transform_3, window_bounds = array<i64: 32, 32>}]} {
    %c0 = arith.constant 0 : index
    %c0_0 = arith.constant 0 : index
    %0 = vector.load %arg1[%c0, %c0_0] : memref<32x288xbf16, #tpu.memory_space<vmem>>, vector<32x288xbf16>
    %c0_1 = arith.constant 0 : index
    %c0_2 = arith.constant 0 : index
    %1 = vector.load %arg2[%c0_1, %c0_2] : memref<288x32xbf16, #tpu.memory_space<vmem>>, vector<288x32xbf16>
    %cst = arith.constant dense<0.000000e+00> : vector<32x32xf32>
    %2 = tpu.matmul %0, %1, %cst {dimension_numbers = #tpu.dot_dimension_numbers<[1], [0], [0], [1], [0, 0, 1, 1], [], []>} : vector<32x288xbf16>, vector<288x32xbf16>, vector<32x32xf32> -> vector<32x32xf32>
    %c0_3 = arith.constant 0 : index
    %c0_4 = arith.constant 0 : index
    %3 = vector.load %arg3[%c0_3, %c0_4] : memref<1x32xf32, #tpu.memory_space<vmem>>, vector<1x32xf32>
    %4 = vector.broadcast %3 : vector<1x32xf32> to vector<32x32xf32>
    %5 = arith.addf %2, %4 : vector<32x32xf32>
    %cst_5 = arith.constant 0.000000e+00 : f32
    %6 = vector.broadcast %cst_5 : f32 to vector<32x32xf32>
    %7 = arith.maximumf %5, %6 : vector<32x32xf32>
    %c0_6 = arith.constant 0 : index
    %c0_7 = arith.constant 0 : index
    %8 = vector.load %arg4[%c0_6, %c0_7] : memref<32x32xf32, #tpu.memory_space<vmem>>, vector<32x32xf32>
    tpu.vector_store %arg4[%c0_6, %c0_7], %7 {strides = array<i32>} : memref<32x32xf32, #tpu.memory_space<vmem>>, vector<32x32xf32>,
    return
  }
  func.func @transform_0(%arg0: i32) -> (i32, i32) {
    %c0_i32 = arith.constant 0 : i32
    %c0_i32_0 = arith.constant 0 : i32
    return %arg0, %c0_i32 : i32, i32
  }
  func.func @transform_1(%arg0: i32) -> (i32, i32) {
    %c0_i32 = arith.constant 0 : i32
    %c0_i32_0 = arith.constant 0 : i32
    %c0_i32_1 = arith.constant 0 : i32
    return %c0_i32, %c0_i32_0 : i32, i32
  }
  func.func @transform_2(%arg0: i32) -> (i32, i32) {
    %c0_i32 = arith.constant 0 : i32
    %c0_i32_0 = arith.constant 0 : i32
    %c0_i32_1 = arith.constant 0 : i32
    return %c0_i32, %c0_i32_0 : i32, i32
  }
  func.func @transform_3(%arg0: i32) -> (i32, i32) {
    %c0_i32 = arith.constant 0 : i32
    %c0_i32_0 = arith.constant 0 : i32
    return %arg0, %c0_i32 : i32, i32
  }
}

module attributes {stable_mosaic.version = 11 : i64} {
  func.func @_mm_bias_ds_kernel(%arg0: i32, %arg1: memref<32x288xbf16, #tpu.memory_space<vmem>>, %arg2: memref<288x32xbf16, #tpu.memory_space<vmem>>, %arg3: memref<1x32xf32, #tpu.memory_space<vmem>>, %arg4: memref<32x16xbf16, #tpu.memory_space<vmem>>, %arg5: memref<16x32xbf16, #tpu.memory_space<vmem>>, %arg6: memref<32x32xf32, #tpu.memory_space<vmem>>) attributes {dimension_semantics = [#tpu.dimension_semantics<parallel>], iteration_bounds = array<i64: 1>, scalar_prefetch = 0 : i64, scratch_operands = 0 : i64, tpu.core_type = #tpu.core_type<tc>, window_params = [{transform_indices = @transform_0, window_bounds = array<i64: 32, 288>}, {pipeline_mode = #tpu.pipeline_mode<synchronous>, transform_indices = @transform_1, window_bounds = array<i64: 288, 32>}, {pipeline_mode = #tpu.pipeline_mode<synchronous>, transform_indices = @transform_2, window_bounds = array<i64: 1, 32>}, {transform_indices = @transform_3, window_bounds = array<i64: 32, 16>}, {pipeline_mode = #tpu.pipeline_mode<synchronous>, transform_indices = @transform_4, window_bounds = array<i64: 16, 32>}, {transform_indices = @transform_5, window_bounds = array<i64: 32, 32>}]} {
    %c0 = arith.constant 0 : index
    %c0_0 = arith.constant 0 : index
    %0 = vector.load %arg1[%c0, %c0_0] : memref<32x288xbf16, #tpu.memory_space<vmem>>, vector<32x288xbf16>
    %c0_1 = arith.constant 0 : index
    %c0_2 = arith.constant 0 : index
    %1 = vector.load %arg2[%c0_1, %c0_2] : memref<288x32xbf16, #tpu.memory_space<vmem>>, vector<288x32xbf16>
    %cst = arith.constant dense<0.000000e+00> : vector<32x32xf32>
    %2 = tpu.matmul %0, %1, %cst {dimension_numbers = #tpu.dot_dimension_numbers<[1], [0], [0], [1], [0, 0, 1, 1], [], []>} : vector<32x288xbf16>, vector<288x32xbf16>, vector<32x32xf32> -> vector<32x32xf32>
    %c0_3 = arith.constant 0 : index
    %c0_4 = arith.constant 0 : index
    %3 = vector.load %arg4[%c0_3, %c0_4] : memref<32x16xbf16, #tpu.memory_space<vmem>>, vector<32x16xbf16>
    %c0_5 = arith.constant 0 : index
    %c0_6 = arith.constant 0 : index
    %4 = vector.load %arg5[%c0_5, %c0_6] : memref<16x32xbf16, #tpu.memory_space<vmem>>, vector<16x32xbf16>
    %cst_7 = arith.constant dense<0.000000e+00> : vector<32x32xf32>
    %5 = tpu.matmul %3, %4, %cst_7 {dimension_numbers = #tpu.dot_dimension_numbers<[1], [0], [0], [1], [0, 0, 1, 1], [], []>} : vector<32x16xbf16>, vector<16x32xbf16>, vector<32x32xf32> -> vector<32x32xf32>
    %6 = arith.addf %2, %5 : vector<32x32xf32>
    %c0_8 = arith.constant 0 : index
    %c0_9 = arith.constant 0 : index
    %7 = vector.load %arg3[%c0_8, %c0_9] : memref<1x32xf32, #tpu.memory_space<vmem>>, vector<1x32xf32>
    %8 = vector.broadcast %7 : vector<1x32xf32> to vector<32x32xf32>
    %9 = arith.addf %6, %8 : vector<32x32xf32>
    %cst_10 = arith.constant 0.000000e+00 : f32
    %10 = vector.broadcast %cst_10 : f32 to vector<32x32xf32>
    %11 = arith.maximumf %9, %10 : vector<32x32xf32>
    %c0_11 = arith.constant 0 : index
    %c0_12 = arith.constant 0 : index
    %12 = vector.load %arg6[%c0_11, %c0_12] : memref<32x32xf32, #tpu.memory_space<vmem>>, vector<32x32xf32>
    tpu.vector_store %arg6[%c0_11, %c0_12], %11 {strides = array<i32>} : memref<32x32xf32, #tpu.memory_space<vmem>>, vector<32x32xf32>,
    return
  }
  func.func @transform_0(%arg0: i32) -> (i32, i32) {
    %c0_i32 = arith.constant 0 : i32
    %c0_i32_0 = arith.constant 0 : i32
    return %arg0, %c0_i32 : i32, i32
  }
  func.func @transform_1(%arg0: i32) -> (i32, i32) {
    %c0_i32 = arith.constant 0 : i32
    %c0_i32_0 = arith.constant 0 : i32
    %c0_i32_1 = arith.constant 0 : i32
    return %c0_i32, %c0_i32_0 : i32, i32
  }
  func.func @transform_2(%arg0: i32) -> (i32, i32) {
    %c0_i32 = arith.constant 0 : i32
    %c0_i32_0 = arith.constant 0 : i32
    %c0_i32_1 = arith.constant 0 : i32
    return %c0_i32, %c0_i32_0 : i32, i32
  }
  func.func @transform_3(%arg0: i32) -> (i32, i32) {
    %c0_i32 = arith.constant 0 : i32
    %c0_i32_0 = arith.constant 0 : i32
    return %arg0, %c0_i32 : i32, i32
  }
  func.func @transform_4(%arg0: i32) -> (i32, i32) {
    %c0_i32 = arith.constant 0 : i32
    %c0_i32_0 = arith.constant 0 : i32
    %c0_i32_1 = arith.constant 0 : i32
    return %c0_i32, %c0_i32_0 : i32, i32
  }
  func.func @transform_5(%arg0: i32) -> (i32, i32) {
    %c0_i32 = arith.constant 0 : i32
    %c0_i32_0 = arith.constant 0 : i32
    return %arg0, %c0_i32 : i32, i32
  }
}

module attributes {stable_mosaic.version = 11 : i64} {
  func.func @_mm_bias_kernel(%arg0: i32, %arg1: memref<8x288xbf16, #tpu.memory_space<vmem>>, %arg2: memref<288x64xbf16, #tpu.memory_space<vmem>>, %arg3: memref<1x64xf32, #tpu.memory_space<vmem>>, %arg4: memref<8x64xf32, #tpu.memory_space<vmem>>) attributes {dimension_semantics = [#tpu.dimension_semantics<parallel>], iteration_bounds = array<i64: 1>, scalar_prefetch = 0 : i64, scratch_operands = 0 : i64, tpu.core_type = #tpu.core_type<tc>, window_params = [{transform_indices = @transform_0, window_bounds = array<i64: 8, 288>}, {pipeline_mode = #tpu.pipeline_mode<synchronous>, transform_indices = @transform_1, window_bounds = array<i64: 288, 64>}, {pipeline_mode = #tpu.pipeline_mode<synchronous>, transform_indices = @transform_2, window_bounds = array<i64: 1, 64>}, {transform_indices = @transform_3, window_bounds = array<i64: 8, 64>}]} {
    %c0 = arith.constant 0 : index
    %c0_0 = arith.constant 0 : index
    %0 = vector.load %arg1[%c0, %c0_0] : memref<8x288xbf16, #tpu.memory_space<vmem>>, vector<8x288xbf16>
    %c0_1 = arith.constant 0 : index
    %c0_2 = arith.constant 0 : index
    %1 = vector.load %arg2[%c0_1, %c0_2] : memref<288x64xbf16, #tpu.memory_space<vmem>>, vector<288x64xbf16>
    %cst = arith.constant dense<0.000000e+00> : vector<8x64xf32>
    %2 = tpu.matmul %0, %1, %cst {dimension_numbers = #tpu.dot_dimension_numbers<[1], [0], [0], [1], [0, 0, 1, 1], [], []>} : vector<8x288xbf16>, vector<288x64xbf16>, vector<8x64xf32> -> vector<8x64xf32>
    %c0_3 = arith.constant 0 : index
    %c0_4 = arith.constant 0 : index
    %3 = vector.load %arg3[%c0_3, %c0_4] : memref<1x64xf32, #tpu.memory_space<vmem>>, vector<1x64xf32>
    %4 = vector.broadcast %3 : vector<1x64xf32> to vector<8x64xf32>
    %5 = arith.addf %2, %4 : vector<8x64xf32>
    %cst_5 = arith.constant 0.000000e+00 : f32
    %6 = vector.broadcast %cst_5 : f32 to vector<8x64xf32>
    %7 = arith.maximumf %5, %6 : vector<8x64xf32>
    %c0_6 = arith.constant 0 : index
    %c0_7 = arith.constant 0 : index
    %8 = vector.load %arg4[%c0_6, %c0_7] : memref<8x64xf32, #tpu.memory_space<vmem>>, vector<8x64xf32>
    tpu.vector_store %arg4[%c0_6, %c0_7], %7 {strides = array<i32>} : memref<8x64xf32, #tpu.memory_space<vmem>>, vector<8x64xf32>,
    return
  }
  func.func @transform_0(%arg0: i32) -> (i32, i32) {
    %c0_i32 = arith.constant 0 : i32
    %c0_i32_0 = arith.constant 0 : i32
    return %arg0, %c0_i32 : i32, i32
  }
  func.func @transform_1(%arg0: i32) -> (i32, i32) {
    %c0_i32 = arith.constant 0 : i32
    %c0_i32_0 = arith.constant 0 : i32
    %c0_i32_1 = arith.constant 0 : i32
    return %c0_i32, %c0_i32_0 : i32, i32
  }
  func.func @transform_2(%arg0: i32) -> (i32, i32) {
    %c0_i32 = arith.constant 0 : i32
    %c0_i32_0 = arith.constant 0 : i32
    %c0_i32_1 = arith.constant 0 : i32
    return %c0_i32, %c0_i32_0 : i32, i32
  }
  func.func @transform_3(%arg0: i32) -> (i32, i32) {
    %c0_i32 = arith.constant 0 : i32
    %c0_i32_0 = arith.constant 0 : i32
    return %arg0, %c0_i32 : i32, i32
  }
}

module attributes {stable_mosaic.version = 11 : i64} {
  func.func @_mm_bias_ds_kernel(%arg0: i32, %arg1: memref<8x576xbf16, #tpu.memory_space<vmem>>, %arg2: memref<576x64xbf16, #tpu.memory_space<vmem>>, %arg3: memref<1x64xf32, #tpu.memory_space<vmem>>, %arg4: memref<8x32xbf16, #tpu.memory_space<vmem>>, %arg5: memref<32x64xbf16, #tpu.memory_space<vmem>>, %arg6: memref<8x64xf32, #tpu.memory_space<vmem>>) attributes {dimension_semantics = [#tpu.dimension_semantics<parallel>], iteration_bounds = array<i64: 1>, scalar_prefetch = 0 : i64, scratch_operands = 0 : i64, tpu.core_type = #tpu.core_type<tc>, window_params = [{transform_indices = @transform_0, window_bounds = array<i64: 8, 576>}, {pipeline_mode = #tpu.pipeline_mode<synchronous>, transform_indices = @transform_1, window_bounds = array<i64: 576, 64>}, {pipeline_mode = #tpu.pipeline_mode<synchronous>, transform_indices = @transform_2, window_bounds = array<i64: 1, 64>}, {transform_indices = @transform_3, window_bounds = array<i64: 8, 32>}, {pipeline_mode = #tpu.pipeline_mode<synchronous>, transform_indices = @transform_4, window_bounds = array<i64: 32, 64>}, {transform_indices = @transform_5, window_bounds = array<i64: 8, 64>}]} {
    %c0 = arith.constant 0 : index
    %c0_0 = arith.constant 0 : index
    %0 = vector.load %arg1[%c0, %c0_0] : memref<8x576xbf16, #tpu.memory_space<vmem>>, vector<8x576xbf16>
    %c0_1 = arith.constant 0 : index
    %c0_2 = arith.constant 0 : index
    %1 = vector.load %arg2[%c0_1, %c0_2] : memref<576x64xbf16, #tpu.memory_space<vmem>>, vector<576x64xbf16>
    %cst = arith.constant dense<0.000000e+00> : vector<8x64xf32>
    %2 = tpu.matmul %0, %1, %cst {dimension_numbers = #tpu.dot_dimension_numbers<[1], [0], [0], [1], [0, 0, 1, 1], [], []>} : vector<8x576xbf16>, vector<576x64xbf16>, vector<8x64xf32> -> vector<8x64xf32>
    %c0_3 = arith.constant 0 : index
    %c0_4 = arith.constant 0 : index
    %3 = vector.load %arg4[%c0_3, %c0_4] : memref<8x32xbf16, #tpu.memory_space<vmem>>, vector<8x32xbf16>
    %c0_5 = arith.constant 0 : index
    %c0_6 = arith.constant 0 : index
    %4 = vector.load %arg5[%c0_5, %c0_6] : memref<32x64xbf16, #tpu.memory_space<vmem>>, vector<32x64xbf16>
    %cst_7 = arith.constant dense<0.000000e+00> : vector<8x64xf32>
    %5 = tpu.matmul %3, %4, %cst_7 {dimension_numbers = #tpu.dot_dimension_numbers<[1], [0], [0], [1], [0, 0, 1, 1], [], []>} : vector<8x32xbf16>, vector<32x64xbf16>, vector<8x64xf32> -> vector<8x64xf32>
    %6 = arith.addf %2, %5 : vector<8x64xf32>
    %c0_8 = arith.constant 0 : index
    %c0_9 = arith.constant 0 : index
    %7 = vector.load %arg3[%c0_8, %c0_9] : memref<1x64xf32, #tpu.memory_space<vmem>>, vector<1x64xf32>
    %8 = vector.broadcast %7 : vector<1x64xf32> to vector<8x64xf32>
    %9 = arith.addf %6, %8 : vector<8x64xf32>
    %cst_10 = arith.constant 0.000000e+00 : f32
    %10 = vector.broadcast %cst_10 : f32 to vector<8x64xf32>
    %11 = arith.maximumf %9, %10 : vector<8x64xf32>
    %c0_11 = arith.constant 0 : index
    %c0_12 = arith.constant 0 : index
    %12 = vector.load %arg6[%c0_11, %c0_12] : memref<8x64xf32, #tpu.memory_space<vmem>>, vector<8x64xf32>
    tpu.vector_store %arg6[%c0_11, %c0_12], %11 {strides = array<i32>} : memref<8x64xf32, #tpu.memory_space<vmem>>, vector<8x64xf32>,
    return
  }
  func.func @transform_0(%arg0: i32) -> (i32, i32) {
    %c0_i32 = arith.constant 0 : i32
    %c0_i32_0 = arith.constant 0 : i32
    return %arg0, %c0_i32 : i32, i32
  }
  func.func @transform_1(%arg0: i32) -> (i32, i32) {
    %c0_i32 = arith.constant 0 : i32
    %c0_i32_0 = arith.constant 0 : i32
    %c0_i32_1 = arith.constant 0 : i32
    return %c0_i32, %c0_i32_0 : i32, i32
  }
  func.func @transform_2(%arg0: i32) -> (i32, i32) {
    %c0_i32 = arith.constant 0 : i32
    %c0_i32_0 = arith.constant 0 : i32
    %c0_i32_1 = arith.constant 0 : i32
    return %c0_i32, %c0_i32_0 : i32, i32
  }
  func.func @transform_3(%arg0: i32) -> (i32, i32) {
    %c0_i32 = arith.constant 0 : i32
    %c0_i32_0 = arith.constant 0 : i32
    return %arg0, %c0_i32 : i32, i32
  }
  func.func @transform_4(%arg0: i32) -> (i32, i32) {
    %c0_i32 = arith.constant 0 : i32
    %c0_i32_0 = arith.constant 0 : i32
    %c0_i32_1 = arith.constant 0 : i32
    return %c0_i32, %c0_i32_0 : i32, i32
  }
  func.func @transform_5(%arg0: i32) -> (i32, i32) {
    %c0_i32 = arith.constant 0 : i32
    %c0_i32_0 = arith.constant 0 : i32
    return %arg0, %c0_i32 : i32, i32
  }
}

module attributes {stable_mosaic.version = 11 : i64} {
  func.func @_mm_bias_kernel(%arg0: i32, %arg1: memref<8x576xbf16, #tpu.memory_space<vmem>>, %arg2: memref<576x64xbf16, #tpu.memory_space<vmem>>, %arg3: memref<1x64xf32, #tpu.memory_space<vmem>>, %arg4: memref<8x64xf32, #tpu.memory_space<vmem>>) attributes {dimension_semantics = [#tpu.dimension_semantics<parallel>], iteration_bounds = array<i64: 1>, scalar_prefetch = 0 : i64, scratch_operands = 0 : i64, tpu.core_type = #tpu.core_type<tc>, window_params = [{transform_indices = @transform_0, window_bounds = array<i64: 8, 576>}, {pipeline_mode = #tpu.pipeline_mode<synchronous>, transform_indices = @transform_1, window_bounds = array<i64: 576, 64>}, {pipeline_mode = #tpu.pipeline_mode<synchronous>, transform_indices = @transform_2, window_bounds = array<i64: 1, 64>}, {transform_indices = @transform_3, window_bounds = array<i64: 8, 64>}]} {
    %c0 = arith.constant 0 : index
    %c0_0 = arith.constant 0 : index
    %0 = vector.load %arg1[%c0, %c0_0] : memref<8x576xbf16, #tpu.memory_space<vmem>>, vector<8x576xbf16>
    %c0_1 = arith.constant 0 : index
    %c0_2 = arith.constant 0 : index
    %1 = vector.load %arg2[%c0_1, %c0_2] : memref<576x64xbf16, #tpu.memory_space<vmem>>, vector<576x64xbf16>
    %cst = arith.constant dense<0.000000e+00> : vector<8x64xf32>
    %2 = tpu.matmul %0, %1, %cst {dimension_numbers = #tpu.dot_dimension_numbers<[1], [0], [0], [1], [0, 0, 1, 1], [], []>} : vector<8x576xbf16>, vector<576x64xbf16>, vector<8x64xf32> -> vector<8x64xf32>
    %c0_3 = arith.constant 0 : index
    %c0_4 = arith.constant 0 : index
    %3 = vector.load %arg3[%c0_3, %c0_4] : memref<1x64xf32, #tpu.memory_space<vmem>>, vector<1x64xf32>
    %4 = vector.broadcast %3 : vector<1x64xf32> to vector<8x64xf32>
    %5 = arith.addf %2, %4 : vector<8x64xf32>
    %cst_5 = arith.constant 0.000000e+00 : f32
    %6 = vector.broadcast %cst_5 : f32 to vector<8x64xf32>
    %7 = arith.maximumf %5, %6 : vector<8x64xf32>
    %c0_6 = arith.constant 0 : index
    %c0_7 = arith.constant 0 : index
    %8 = vector.load %arg4[%c0_6, %c0_7] : memref<8x64xf32, #tpu.memory_space<vmem>>, vector<8x64xf32>
    tpu.vector_store %arg4[%c0_6, %c0_7], %7 {strides = array<i32>} : memref<8x64xf32, #tpu.memory_space<vmem>>, vector<8x64xf32>,
    return
  }
  func.func @transform_0(%arg0: i32) -> (i32, i32) {
    %c0_i32 = arith.constant 0 : i32
    %c0_i32_0 = arith.constant 0 : i32
    return %arg0, %c0_i32 : i32, i32
  }
  func.func @transform_1(%arg0: i32) -> (i32, i32) {
    %c0_i32 = arith.constant 0 : i32
    %c0_i32_0 = arith.constant 0 : i32
    %c0_i32_1 = arith.constant 0 : i32
    return %c0_i32, %c0_i32_0 : i32, i32
  }
  func.func @transform_2(%arg0: i32) -> (i32, i32) {
    %c0_i32 = arith.constant 0 : i32
    %c0_i32_0 = arith.constant 0 : i32
    %c0_i32_1 = arith.constant 0 : i32
    return %c0_i32, %c0_i32_0 : i32, i32
  }
  func.func @transform_3(%arg0: i32) -> (i32, i32) {
    %c0_i32 = arith.constant 0 : i32
    %c0_i32_0 = arith.constant 0 : i32
    return %arg0, %c0_i32 : i32, i32
  }
}

module attributes {stable_mosaic.version = 11 : i64} {
  func.func @_mm_bias_res_kernel(%arg0: i32, %arg1: memref<8x576xbf16, #tpu.memory_space<vmem>>, %arg2: memref<576x64xbf16, #tpu.memory_space<vmem>>, %arg3: memref<1x64xf32, #tpu.memory_space<vmem>>, %arg4: memref<8x64xf32, #tpu.memory_space<vmem>>, %arg5: memref<8x64xf32, #tpu.memory_space<vmem>>) attributes {dimension_semantics = [#tpu.dimension_semantics<parallel>], iteration_bounds = array<i64: 1>, scalar_prefetch = 0 : i64, scratch_operands = 0 : i64, tpu.core_type = #tpu.core_type<tc>, window_params = [{transform_indices = @transform_0, window_bounds = array<i64: 8, 576>}, {pipeline_mode = #tpu.pipeline_mode<synchronous>, transform_indices = @transform_1, window_bounds = array<i64: 576, 64>}, {pipeline_mode = #tpu.pipeline_mode<synchronous>, transform_indices = @transform_2, window_bounds = array<i64: 1, 64>}, {transform_indices = @transform_3, window_bounds = array<i64: 8, 64>}, {transform_indices = @transform_4, window_bounds = array<i64: 8, 64>}]} {
    %c0 = arith.constant 0 : index
    %c0_0 = arith.constant 0 : index
    %0 = vector.load %arg1[%c0, %c0_0] : memref<8x576xbf16, #tpu.memory_space<vmem>>, vector<8x576xbf16>
    %c0_1 = arith.constant 0 : index
    %c0_2 = arith.constant 0 : index
    %1 = vector.load %arg2[%c0_1, %c0_2] : memref<576x64xbf16, #tpu.memory_space<vmem>>, vector<576x64xbf16>
    %cst = arith.constant dense<0.000000e+00> : vector<8x64xf32>
    %2 = tpu.matmul %0, %1, %cst {dimension_numbers = #tpu.dot_dimension_numbers<[1], [0], [0], [1], [0, 0, 1, 1], [], []>} : vector<8x576xbf16>, vector<576x64xbf16>, vector<8x64xf32> -> vector<8x64xf32>
    %c0_3 = arith.constant 0 : index
    %c0_4 = arith.constant 0 : index
    %3 = vector.load %arg3[%c0_3, %c0_4] : memref<1x64xf32, #tpu.memory_space<vmem>>, vector<1x64xf32>
    %4 = vector.broadcast %3 : vector<1x64xf32> to vector<8x64xf32>
    %5 = arith.addf %2, %4 : vector<8x64xf32>
    %c0_5 = arith.constant 0 : index
    %c0_6 = arith.constant 0 : index
    %6 = vector.load %arg4[%c0_5, %c0_6] : memref<8x64xf32, #tpu.memory_space<vmem>>, vector<8x64xf32>
    %7 = arith.addf %5, %6 : vector<8x64xf32>
    %c0_7 = arith.constant 0 : index
    %c0_8 = arith.constant 0 : index
    %8 = vector.load %arg5[%c0_7, %c0_8] : memref<8x64xf32, #tpu.memory_space<vmem>>, vector<8x64xf32>
    tpu.vector_store %arg5[%c0_7, %c0_8], %7 {strides = array<i32>} : memref<8x64xf32, #tpu.memory_space<vmem>>, vector<8x64xf32>,
    return
  }
  func.func @transform_0(%arg0: i32) -> (i32, i32) {
    %c0_i32 = arith.constant 0 : i32
    %c0_i32_0 = arith.constant 0 : i32
    return %arg0, %c0_i32 : i32, i32
  }
  func.func @transform_1(%arg0: i32) -> (i32, i32) {
    %c0_i32 = arith.constant 0 : i32
    %c0_i32_0 = arith.constant 0 : i32
    %c0_i32_1 = arith.constant 0 : i32
    return %c0_i32, %c0_i32_0 : i32, i32
  }
  func.func @transform_2(%arg0: i32) -> (i32, i32) {
    %c0_i32 = arith.constant 0 : i32
    %c0_i32_0 = arith.constant 0 : i32
    %c0_i32_1 = arith.constant 0 : i32
    return %c0_i32, %c0_i32_0 : i32, i32
  }
  func.func @transform_3(%arg0: i32) -> (i32, i32) {
    %c0_i32 = arith.constant 0 : i32
    %c0_i32_0 = arith.constant 0 : i32
    return %arg0, %c0_i32 : i32, i32
  }
  func.func @transform_4(%arg0: i32) -> (i32, i32) {
    %c0_i32 = arith.constant 0 : i32
    %c0_i32_0 = arith.constant 0 : i32
    return %arg0, %c0_i32 : i32, i32
  }
}

module attributes {stable_mosaic.version = 11 : i64} {
  func.func @_mm_bias_kernel(%arg0: i32, %arg1: memref<2x576xbf16, #tpu.memory_space<vmem>>, %arg2: memref<576x128xbf16, #tpu.memory_space<vmem>>, %arg3: memref<1x128xf32, #tpu.memory_space<vmem>>, %arg4: memref<2x128xf32, #tpu.memory_space<vmem>>) attributes {dimension_semantics = [#tpu.dimension_semantics<parallel>], iteration_bounds = array<i64: 1>, scalar_prefetch = 0 : i64, scratch_operands = 0 : i64, tpu.core_type = #tpu.core_type<tc>, window_params = [{transform_indices = @transform_0, window_bounds = array<i64: 2, 576>}, {pipeline_mode = #tpu.pipeline_mode<synchronous>, transform_indices = @transform_1, window_bounds = array<i64: 576, 128>}, {pipeline_mode = #tpu.pipeline_mode<synchronous>, transform_indices = @transform_2, window_bounds = array<i64: 1, 128>}, {transform_indices = @transform_3, window_bounds = array<i64: 2, 128>}]} {
    %c0 = arith.constant 0 : index
    %c0_0 = arith.constant 0 : index
    %0 = vector.load %arg1[%c0, %c0_0] : memref<2x576xbf16, #tpu.memory_space<vmem>>, vector<2x576xbf16>
    %c0_1 = arith.constant 0 : index
    %c0_2 = arith.constant 0 : index
    %1 = vector.load %arg2[%c0_1, %c0_2] : memref<576x128xbf16, #tpu.memory_space<vmem>>, vector<576x128xbf16>
    %cst = arith.constant dense<0.000000e+00> : vector<2x128xf32>
    %2 = tpu.matmul %0, %1, %cst {dimension_numbers = #tpu.dot_dimension_numbers<[1], [0], [0], [1], [0, 0, 1, 1], [], []>} : vector<2x576xbf16>, vector<576x128xbf16>, vector<2x128xf32> -> vector<2x128xf32>
    %c0_3 = arith.constant 0 : index
    %c0_4 = arith.constant 0 : index
    %3 = vector.load %arg3[%c0_3, %c0_4] : memref<1x128xf32, #tpu.memory_space<vmem>>, vector<1x128xf32>
    %4 = vector.broadcast %3 : vector<1x128xf32> to vector<2x128xf32>
    %5 = arith.addf %2, %4 : vector<2x128xf32>
    %cst_5 = arith.constant 0.000000e+00 : f32
    %6 = vector.broadcast %cst_5 : f32 to vector<2x128xf32>
    %7 = arith.maximumf %5, %6 : vector<2x128xf32>
    %c0_6 = arith.constant 0 : index
    %c0_7 = arith.constant 0 : index
    %8 = vector.load %arg4[%c0_6, %c0_7] : memref<2x128xf32, #tpu.memory_space<vmem>>, vector<2x128xf32>
    tpu.vector_store %arg4[%c0_6, %c0_7], %7 {strides = array<i32>} : memref<2x128xf32, #tpu.memory_space<vmem>>, vector<2x128xf32>,
    return
  }
  func.func @transform_0(%arg0: i32) -> (i32, i32) {
    %c0_i32 = arith.constant 0 : i32
    %c0_i32_0 = arith.constant 0 : i32
    return %arg0, %c0_i32 : i32, i32
  }
  func.func @transform_1(%arg0: i32) -> (i32, i32) {
    %c0_i32 = arith.constant 0 : i32
    %c0_i32_0 = arith.constant 0 : i32
    %c0_i32_1 = arith.constant 0 : i32
    return %c0_i32, %c0_i32_0 : i32, i32
  }
  func.func @transform_2(%arg0: i32) -> (i32, i32) {
    %c0_i32 = arith.constant 0 : i32
    %c0_i32_0 = arith.constant 0 : i32
    %c0_i32_1 = arith.constant 0 : i32
    return %c0_i32, %c0_i32_0 : i32, i32
  }
  func.func @transform_3(%arg0: i32) -> (i32, i32) {
    %c0_i32 = arith.constant 0 : i32
    %c0_i32_0 = arith.constant 0 : i32
    return %arg0, %c0_i32 : i32, i32
  }
}

module attributes {stable_mosaic.version = 11 : i64} {
  func.func @_mm_bias_ds_kernel(%arg0: i32, %arg1: memref<2x1152xbf16, #tpu.memory_space<vmem>>, %arg2: memref<1152x128xbf16, #tpu.memory_space<vmem>>, %arg3: memref<1x128xf32, #tpu.memory_space<vmem>>, %arg4: memref<2x64xbf16, #tpu.memory_space<vmem>>, %arg5: memref<64x128xbf16, #tpu.memory_space<vmem>>, %arg6: memref<2x128xf32, #tpu.memory_space<vmem>>) attributes {dimension_semantics = [#tpu.dimension_semantics<parallel>], iteration_bounds = array<i64: 1>, scalar_prefetch = 0 : i64, scratch_operands = 0 : i64, tpu.core_type = #tpu.core_type<tc>, window_params = [{transform_indices = @transform_0, window_bounds = array<i64: 2, 1152>}, {pipeline_mode = #tpu.pipeline_mode<synchronous>, transform_indices = @transform_1, window_bounds = array<i64: 1152, 128>}, {pipeline_mode = #tpu.pipeline_mode<synchronous>, transform_indices = @transform_2, window_bounds = array<i64: 1, 128>}, {transform_indices = @transform_3, window_bounds = array<i64: 2, 64>}, {pipeline_mode = #tpu.pipeline_mode<synchronous>, transform_indices = @transform_4, window_bounds = array<i64: 64, 128>}, {transform_indices = @transform_5, window_bounds = array<i64: 2, 128>}]} {
    %c0 = arith.constant 0 : index
    %c0_0 = arith.constant 0 : index
    %0 = vector.load %arg1[%c0, %c0_0] : memref<2x1152xbf16, #tpu.memory_space<vmem>>, vector<2x1152xbf16>
    %c0_1 = arith.constant 0 : index
    %c0_2 = arith.constant 0 : index
    %1 = vector.load %arg2[%c0_1, %c0_2] : memref<1152x128xbf16, #tpu.memory_space<vmem>>, vector<1152x128xbf16>
    %cst = arith.constant dense<0.000000e+00> : vector<2x128xf32>
    %2 = tpu.matmul %0, %1, %cst {dimension_numbers = #tpu.dot_dimension_numbers<[1], [0], [0], [1], [0, 0, 1, 1], [], []>} : vector<2x1152xbf16>, vector<1152x128xbf16>, vector<2x128xf32> -> vector<2x128xf32>
    %c0_3 = arith.constant 0 : index
    %c0_4 = arith.constant 0 : index
    %3 = vector.load %arg4[%c0_3, %c0_4] : memref<2x64xbf16, #tpu.memory_space<vmem>>, vector<2x64xbf16>
    %c0_5 = arith.constant 0 : index
    %c0_6 = arith.constant 0 : index
    %4 = vector.load %arg5[%c0_5, %c0_6] : memref<64x128xbf16, #tpu.memory_space<vmem>>, vector<64x128xbf16>
    %cst_7 = arith.constant dense<0.000000e+00> : vector<2x128xf32>
    %5 = tpu.matmul %3, %4, %cst_7 {dimension_numbers = #tpu.dot_dimension_numbers<[1], [0], [0], [1], [0, 0, 1, 1], [], []>} : vector<2x64xbf16>, vector<64x128xbf16>, vector<2x128xf32> -> vector<2x128xf32>
    %6 = arith.addf %2, %5 : vector<2x128xf32>
    %c0_8 = arith.constant 0 : index
    %c0_9 = arith.constant 0 : index
    %7 = vector.load %arg3[%c0_8, %c0_9] : memref<1x128xf32, #tpu.memory_space<vmem>>, vector<1x128xf32>
    %8 = vector.broadcast %7 : vector<1x128xf32> to vector<2x128xf32>
    %9 = arith.addf %6, %8 : vector<2x128xf32>
    %cst_10 = arith.constant 0.000000e+00 : f32
    %10 = vector.broadcast %cst_10 : f32 to vector<2x128xf32>
    %11 = arith.maximumf %9, %10 : vector<2x128xf32>
    %c0_11 = arith.constant 0 : index
    %c0_12 = arith.constant 0 : index
    %12 = vector.load %arg6[%c0_11, %c0_12] : memref<2x128xf32, #tpu.memory_space<vmem>>, vector<2x128xf32>
    tpu.vector_store %arg6[%c0_11, %c0_12], %11 {strides = array<i32>} : memref<2x128xf32, #tpu.memory_space<vmem>>, vector<2x128xf32>,
    return
  }
  func.func @transform_0(%arg0: i32) -> (i32, i32) {
    %c0_i32 = arith.constant 0 : i32
    %c0_i32_0 = arith.constant 0 : i32
    return %arg0, %c0_i32 : i32, i32
  }
  func.func @transform_1(%arg0: i32) -> (i32, i32) {
    %c0_i32 = arith.constant 0 : i32
    %c0_i32_0 = arith.constant 0 : i32
    %c0_i32_1 = arith.constant 0 : i32
    return %c0_i32, %c0_i32_0 : i32, i32
  }
  func.func @transform_2(%arg0: i32) -> (i32, i32) {
    %c0_i32 = arith.constant 0 : i32
    %c0_i32_0 = arith.constant 0 : i32
    %c0_i32_1 = arith.constant 0 : i32
    return %c0_i32, %c0_i32_0 : i32, i32
  }
  func.func @transform_3(%arg0: i32) -> (i32, i32) {
    %c0_i32 = arith.constant 0 : i32
    %c0_i32_0 = arith.constant 0 : i32
    return %arg0, %c0_i32 : i32, i32
  }
  func.func @transform_4(%arg0: i32) -> (i32, i32) {
    %c0_i32 = arith.constant 0 : i32
    %c0_i32_0 = arith.constant 0 : i32
    %c0_i32_1 = arith.constant 0 : i32
    return %c0_i32, %c0_i32_0 : i32, i32
  }
  func.func @transform_5(%arg0: i32) -> (i32, i32) {
    %c0_i32 = arith.constant 0 : i32
    %c0_i32_0 = arith.constant 0 : i32
    return %arg0, %c0_i32 : i32, i32
  }
}

module attributes {stable_mosaic.version = 11 : i64} {
  func.func @_mm_bias_res_kernel(%arg0: i32, %arg1: memref<2x1152xbf16, #tpu.memory_space<vmem>>, %arg2: memref<1152x128xbf16, #tpu.memory_space<vmem>>, %arg3: memref<1x128xf32, #tpu.memory_space<vmem>>, %arg4: memref<2x128xf32, #tpu.memory_space<vmem>>, %arg5: memref<2x128xf32, #tpu.memory_space<vmem>>) attributes {dimension_semantics = [#tpu.dimension_semantics<parallel>], iteration_bounds = array<i64: 1>, scalar_prefetch = 0 : i64, scratch_operands = 0 : i64, tpu.core_type = #tpu.core_type<tc>, window_params = [{transform_indices = @transform_0, window_bounds = array<i64: 2, 1152>}, {pipeline_mode = #tpu.pipeline_mode<synchronous>, transform_indices = @transform_1, window_bounds = array<i64: 1152, 128>}, {pipeline_mode = #tpu.pipeline_mode<synchronous>, transform_indices = @transform_2, window_bounds = array<i64: 1, 128>}, {transform_indices = @transform_3, window_bounds = array<i64: 2, 128>}, {transform_indices = @transform_4, window_bounds = array<i64: 2, 128>}]} {
    %c0 = arith.constant 0 : index
    %c0_0 = arith.constant 0 : index
    %0 = vector.load %arg1[%c0, %c0_0] : memref<2x1152xbf16, #tpu.memory_space<vmem>>, vector<2x1152xbf16>
    %c0_1 = arith.constant 0 : index
    %c0_2 = arith.constant 0 : index
    %1 = vector.load %arg2[%c0_1, %c0_2] : memref<1152x128xbf16, #tpu.memory_space<vmem>>, vector<1152x128xbf16>
    %cst = arith.constant dense<0.000000e+00> : vector<2x128xf32>
    %2 = tpu.matmul %0, %1, %cst {dimension_numbers = #tpu.dot_dimension_numbers<[1], [0], [0], [1], [0, 0, 1, 1], [], []>} : vector<2x1152xbf16>, vector<1152x128xbf16>, vector<2x128xf32> -> vector<2x128xf32>
    %c0_3 = arith.constant 0 : index
    %c0_4 = arith.constant 0 : index
    %3 = vector.load %arg3[%c0_3, %c0_4] : memref<1x128xf32, #tpu.memory_space<vmem>>, vector<1x128xf32>
    %4 = vector.broadcast %3 : vector<1x128xf32> to vector<2x128xf32>
    %5 = arith.addf %2, %4 : vector<2x128xf32>
    %c0_5 = arith.constant 0 : index
    %c0_6 = arith.constant 0 : index
    %6 = vector.load %arg4[%c0_5, %c0_6] : memref<2x128xf32, #tpu.memory_space<vmem>>, vector<2x128xf32>
    %7 = arith.addf %5, %6 : vector<2x128xf32>
    %c0_7 = arith.constant 0 : index
    %c0_8 = arith.constant 0 : index
    %8 = vector.load %arg5[%c0_7, %c0_8] : memref<2x128xf32, #tpu.memory_space<vmem>>, vector<2x128xf32>
    tpu.vector_store %arg5[%c0_7, %c0_8], %7 {strides = array<i32>} : memref<2x128xf32, #tpu.memory_space<vmem>>, vector<2x128xf32>,
    return
  }
  func.func @transform_0(%arg0: i32) -> (i32, i32) {
    %c0_i32 = arith.constant 0 : i32
    %c0_i32_0 = arith.constant 0 : i32
    return %arg0, %c0_i32 : i32, i32
  }
  func.func @transform_1(%arg0: i32) -> (i32, i32) {
    %c0_i32 = arith.constant 0 : i32
    %c0_i32_0 = arith.constant 0 : i32
    %c0_i32_1 = arith.constant 0 : i32
    return %c0_i32, %c0_i32_0 : i32, i32
  }
  func.func @transform_2(%arg0: i32) -> (i32, i32) {
    %c0_i32 = arith.constant 0 : i32
    %c0_i32_0 = arith.constant 0 : i32
    %c0_i32_1 = arith.constant 0 : i32
    return %c0_i32, %c0_i32_0 : i32, i32
  }
  func.func @transform_3(%arg0: i32) -> (i32, i32) {
    %c0_i32 = arith.constant 0 : i32
    %c0_i32_0 = arith.constant 0 : i32
    return %arg0, %c0_i32 : i32, i32
  }
  func.func @transform_4(%arg0: i32) -> (i32, i32) {
    %c0_i32 = arith.constant 0 : i32
    %c0_i32_0 = arith.constant 0 : i32
    return %arg0, %c0_i32 : i32, i32
  }
}

module attributes {stable_mosaic.version = 11 : i64} {
  func.func @_mm_bias_kernel(%arg0: i32, %arg1: memref<2x1152xbf16, #tpu.memory_space<vmem>>, %arg2: memref<1152x128xbf16, #tpu.memory_space<vmem>>, %arg3: memref<1x128xf32, #tpu.memory_space<vmem>>, %arg4: memref<2x128xf32, #tpu.memory_space<vmem>>) attributes {dimension_semantics = [#tpu.dimension_semantics<parallel>], iteration_bounds = array<i64: 1>, scalar_prefetch = 0 : i64, scratch_operands = 0 : i64, tpu.core_type = #tpu.core_type<tc>, window_params = [{transform_indices = @transform_0, window_bounds = array<i64: 2, 1152>}, {pipeline_mode = #tpu.pipeline_mode<synchronous>, transform_indices = @transform_1, window_bounds = array<i64: 1152, 128>}, {pipeline_mode = #tpu.pipeline_mode<synchronous>, transform_indices = @transform_2, window_bounds = array<i64: 1, 128>}, {transform_indices = @transform_3, window_bounds = array<i64: 2, 128>}]} {
    %c0 = arith.constant 0 : index
    %c0_0 = arith.constant 0 : index
    %0 = vector.load %arg1[%c0, %c0_0] : memref<2x1152xbf16, #tpu.memory_space<vmem>>, vector<2x1152xbf16>
    %c0_1 = arith.constant 0 : index
    %c0_2 = arith.constant 0 : index
    %1 = vector.load %arg2[%c0_1, %c0_2] : memref<1152x128xbf16, #tpu.memory_space<vmem>>, vector<1152x128xbf16>
    %cst = arith.constant dense<0.000000e+00> : vector<2x128xf32>
    %2 = tpu.matmul %0, %1, %cst {dimension_numbers = #tpu.dot_dimension_numbers<[1], [0], [0], [1], [0, 0, 1, 1], [], []>} : vector<2x1152xbf16>, vector<1152x128xbf16>, vector<2x128xf32> -> vector<2x128xf32>
    %c0_3 = arith.constant 0 : index
    %c0_4 = arith.constant 0 : index
    %3 = vector.load %arg3[%c0_3, %c0_4] : memref<1x128xf32, #tpu.memory_space<vmem>>, vector<1x128xf32>
    %4 = vector.broadcast %3 : vector<1x128xf32> to vector<2x128xf32>
    %5 = arith.addf %2, %4 : vector<2x128xf32>
    %cst_5 = arith.constant 0.000000e+00 : f32
    %6 = vector.broadcast %cst_5 : f32 to vector<2x128xf32>
    %7 = arith.maximumf %5, %6 : vector<2x128xf32>
    %c0_6 = arith.constant 0 : index
    %c0_7 = arith.constant 0 : index
    %8 = vector.load %arg4[%c0_6, %c0_7] : memref<2x128xf32, #tpu.memory_space<vmem>>, vector<2x128xf32>
    tpu.vector_store %arg4[%c0_6, %c0_7], %7 {strides = array<i32>} : memref<2x128xf32, #tpu.memory_space<vmem>>, vector<2x128xf32>,
    return
  }
  func.func @transform_0(%arg0: i32) -> (i32, i32) {
    %c0_i32 = arith.constant 0 : i32
    %c0_i32_0 = arith.constant 0 : i32
    return %arg0, %c0_i32 : i32, i32
  }
  func.func @transform_1(%arg0: i32) -> (i32, i32) {
    %c0_i32 = arith.constant 0 : i32
    %c0_i32_0 = arith.constant 0 : i32
    %c0_i32_1 = arith.constant 0 : i32
    return %c0_i32, %c0_i32_0 : i32, i32
  }
  func.func @transform_2(%arg0: i32) -> (i32, i32) {
    %c0_i32 = arith.constant 0 : i32
    %c0_i32_0 = arith.constant 0 : i32
    %c0_i32_1 = arith.constant 0 : i32
    return %c0_i32, %c0_i32_0 : i32, i32
  }
  func.func @transform_3(%arg0: i32) -> (i32, i32) {
    %c0_i32 = arith.constant 0 : i32
    %c0_i32_0 = arith.constant 0 : i32
    return %arg0, %c0_i32 : i32, i32
  }
}

</mosaic_0001>

<llo_original>
// kernel: resnet_forward.17
$region0: #{resnet_forward.17}
  #allocation0 [shape = 'u32[]', space=smem, size = 0x4, offset = 0x4, fixed_abs, tag = 'smem constant byte address 0x4 - core index']
  #allocation1 [shape = 'u32[72,128]{1,0:T(1,128)}', space=vmem, size = 0x9000, scoped, tag = 'internal scratch']
  %s0 = inlined_call_operand.vmem [shape: bf16[512,27], index: 0, kind: input, shape index: {}]
  %s1 = inlined_call_operand.vmem [shape: bf16[27,16], index: 1, kind: input, shape index: {}]
  %s2 = inlined_call_operand.vmem [shape: f32[1,16], index: 2, kind: input, shape index: {}]
  %s3 = inlined_call_operand.vmem [shape: f32[512,16], index: 3, kind: output, shape index: {}]
  %s4 = sld [smem:[#allocation0]]
  $region45: #{resnet_forward.17} parent=0
    _
  %s6 = ssub.s32 1, %s4
  %s7 = scalar_select 0, %s6, %s4
  loop: start=0, step=1, limit=4
  $region2: #{resnet_forward.17} parent=0 // loop_pre_header
    _
  $region3: #{resnet_forward.17} parent=0 // loop_header
    %s9 = sphi 0, %s13
    %p10 = scmp.ge.s32.totalorder %s9, 4
    %s19 = sphi 0, %s21
    %s22 = sphi 0, %s19
    %s23 = sphi 0, %s22
    %s39 = sphi 0, %s23
    %s43 = sphi 0, %s43
    %s45 = sphi 0, %s43
    %s46 = sphi 0, %s45
    %s60 = sphi 0, %s46
    %s64 = sphi 0, %s64
    %s66 = sphi 0, %s64
    %s67 = sphi 0, %s66
    %s81 = sphi 0, %s67
    %s87 = sphi 0, %s89
    %s90 = sphi 0, %s87
    %s91 = sphi 0, %s90
    %s107 = sphi 0, %s91
  $region4: #{resnet_forward.17} parent=0 // loop_header_branch
    %12 = sbr.rel (%p10) target = $region8
  $region5: #{resnet_forward.17} parent=0 // loop_body
    %s14 = ssub.s32 %s9, 1
    %s15 = ssub.s32 %s9, 2
    %s16 = sadd.s32 %s9, 1
    %s17 = ssub.s32 %s9, %s16
    %p18 = scmp.eq.s32.totalorder %s17, 0
    %s20 = sadd.s32 %s19, 1
    %s21 = scalar_select %p18, %s19, %s20
    %p24 = pneg %p18
    %p25 = scmp.eq.s32.totalorder %s9, 1
    %p26 = por %p24, %p25
    %p27 = scmp.ne.s32.totalorder %s19, %s22
    %p28 = scmp.eq.s32.totalorder %s9, 0
    %p29 = por %p27, %p28
    %p30 = scmp.ne.s32.totalorder %s19, %s22
    %p31 = scmp.eq.s32.totalorder %s14, 1
    %p32 = por %p30, %p31
    %p33 = scmp.ne.s32.totalorder %s22, %s23
    %p34 = scmp.eq.s32.totalorder %s14, 0
    %p35 = por %p33, %p34
    %p36 = scmp.ne.s32.totalorder %s22, %s23
    %p37 = scmp.eq.s32.totalorder %s15, 1
    %p38 = por %p36, %p37
    %p40 = scmp.ne.s32.totalorder %s23, %s39
    %p41 = scmp.eq.s32.totalorder %s15, 0
    %p42 = por %p40, %p41
    %s44 = sadd.s32 %s43, 1
    %p47 = scmp.eq.s32.totalorder %s9, 1
    %p48 = scmp.ne.s32.totalorder %s43, %s45
    %p49 = scmp.eq.s32.totalorder %s9, 0
    %p50 = por %p48, %p49
    %p51 = scmp.ne.s32.totalorder %s43, %s45
    %p52 = scmp.eq.s32.totalorder %s14, 1
    %p53 = por %p51, %p52
    %p54 = scmp.ne.s32.totalorder %s45, %s46
    %p55 = scmp.eq.s32.totalorder %s14, 0
    %p56 = por %p54, %p55
    %p57 = scmp.ne.s32.totalorder %s45, %s46
    %p58 = scmp.eq.s32.totalorder %s15, 1
    %p59 = por %p57, %p58
    %p61 = scmp.ne.s32.totalorder %s46, %s60
    %p62 = scmp.eq.s32.totalorder %s15, 0
    %p63 = por %p61, %p62
    %s65 = sadd.s32 %s64, 1
    %p68 = scmp.eq.s32.totalorder %s9, 1
    %p69 = scmp.ne.s32.totalorder %s64, %s66
    %p70 = scmp.eq.s32.totalorder %s9, 0
    %p71 = por %p69, %p70
    %p72 = scmp.ne.s32.totalorder %s64, %s66
    %p73 = scmp.eq.s32.totalorder %s14, 1
    %p74 = por %p72, %p73
    %p75 = scmp.ne.s32.totalorder %s66, %s67
    %p76 = scmp.eq.s32.totalorder %s14, 0
    %p77 = por %p75, %p76
    %p78 = scmp.ne.s32.totalorder %s66, %s67
    %p79 = scmp.eq.s32.totalorder %s15, 1
    %p80 = por %p78, %p79
    %p82 = scmp.ne.s32.totalorder %s67, %s81
    %p83 = scmp.eq.s32.totalorder %s15, 0
    %p84 = por %p82, %p83
    %s85 = ssub.s32 %s9, %s16
    %p86 = scmp.eq.s32.totalorder %s85, 0
    %s88 = sadd.s32 %s87, 1
    %s89 = scalar_select %p86, %s87, %s88
    %p92 = pneg %p86
    %p93 = scmp.eq.s32.totalorder %s9, 1
    %p94 = por %p92, %p93
    %p95 = scmp.ne.s32.totalorder %s87, %s90
    %p96 = scmp.eq.s32.totalorder %s9, 0
    %p97 = por %p95, %p96
    %p98 = scmp.ne.s32.totalorder %s87, %s90
    %p99 = scmp.eq.s32.totalorder %s14, 1
    %p100 = por %p98, %p99
    %p101 = scmp.ne.s32.totalorder %s90, %s91
    %p102 = scmp.eq.s32.totalorder %s14, 0
    %p103 = por %p101, %p102
    %p104 = scmp.ne.s32.totalorder %s90, %s91
    %p105 = scmp.eq.s32.totalorder %s15, 1
    %p106 = por %p104, %p105
    %p108 = scmp.ne.s32.totalorder %s91, %s107
    %p109 = scmp.eq.s32.totalorder %s15, 0
    %p110 = por %p108, %p109
    %p111 = scmp.le.s32.totalorder 1, %s9
    %p112 = scmp.lt.s32.totalorder %s9, 3
    %p113 = pnand %p111, %p112
    %p114 = pneg %p113
    // Predicated region
    $region9: #{resnet_forward.17} parent=5 // pred_check
      _
    $region10: #{resnet_forward.17} parent=5 // pred_check_branch
      %116 = sbr.rel (%p113) target = $region12
    $region11: #{resnet_forward.17} parent=5 // pred_region
      %s117 = ssub.s32 %s9, 1
      // Predicated region
      $region13: #{resnet_forward.17} parent=11 // pred_check
        %p118 = pneg %p56
      $region14: #{resnet_forward.17} parent=11 // pred_check_branch
        %120 = sbr.rel (%p118) target = $region16
      $region15: #{resnet_forward.17} parent=11 // pred_region
        _
      $region16: #{resnet_forward.17} parent=11 // pred_fallthru
        _
      // Predicated region
      $region17: #{resnet_forward.17} parent=11 // pred_check
        %p121 = pneg %p77
      $region18: #{resnet_forward.17} parent=11 // pred_check_branch
        %123 = sbr.rel (%p121) target = $region20
      $region19: #{resnet_forward.17} parent=11 // pred_region
        _
      $region20: #{resnet_forward.17} parent=11 // pred_fallthru
        _
    $region12: #{resnet_forward.17} parent=5 // pred_fallthru
      _
    %p124 = scmp.lt.s32.totalorder %s9, 2
    // Predicated region
    $region21: #{resnet_forward.17} parent=5 // pred_check
      %p125 = pneg %p124
    $region22: #{resnet_forward.17} parent=5 // pred_check_branch
      %127 = sbr.rel (%p125) target = $region24
    $region23: #{resnet_forward.17} parent=5 // pred_region
      // Predicated region
      $region25: #{resnet_forward.17} parent=23 // pred_check
        %p128 = pneg %p29
      $region26: #{resnet_forward.17} parent=23 // pred_check_branch
        %130 = sbr.rel (%p128) target = $region28
      $region27: #{resnet_forward.17} parent=23 // pred_region
        %s131 = smul.u32 32, %s9
        %p132 = scmp.lt.s32.totalorder %s131, 63
        %s133 = scalar_select %p132, %s131, 63
        %s134 = smul.addr %s133, 4
        %s135 = scalar_lea.vmem %s0, %s134
        %s136 = smul.u32 32, %s9
      $region28: #{resnet_forward.17} parent=23 // pred_fallthru
        _
    $region24: #{resnet_forward.17} parent=5 // pred_fallthru
      _
    %p137 = scmp.le.s32.totalorder 1, %s9
    %p138 = scmp.lt.s32.totalorder %s9, 3
    %p139 = pnand %p137, %p138
    %p140 = pneg %p139
    // Predicated region
    $region29: #{resnet_forward.17} parent=5 // pred_check
      _
    $region30: #{resnet_forward.17} parent=5 // pred_check_branch
      %142 = sbr.rel (%p139) target = $region32
    $region31: #{resnet_forward.17} parent=5 // pred_region
      %s143 = ssub.s32 %s9, 1
      %s144 = smul.u32 32, %s14
      %p145 = scmp.lt.s32.totalorder %s144, 63
      %s146 = scalar_select %p145, %s144, 63
      %s147 = smul.addr %s146, 4
      %s148 = scalar_lea.vmem %s0, %s147
      %p149 = pneg %p35
      %p150 = pneg %p32
      %p151 = pneg %p56
      %p152 = pneg %p53
      %p153 = pneg %p77
      %p154 = pneg %p74
      %p155 = pneg %p103
      %p156 = pneg %p100
      %s157 = smul.u32 32, %s14
      %p158 = scmp.lt.s32.totalorder %s157, 63
      %s159 = scalar_select %p158, %s157, 63
      %s160 = smul.addr %s159, 8
      %s161 = scalar_lea.vmem %s3, %s160
      %s162 = smul.u32 32, %s14
      %p163 = scmp.lt.s32.totalorder %s162, 63
      %s164 = scalar_select %p163, %s162, 63
      %s165 = smul.addr %s164, 4
      %s166 = scalar_lea.vmem %s0, %s165
      %s167 = smul.u32 32, %s14
      %s168 = smul.u32 32, %s14
      %p169 = scmp.lt.s32.totalorder %s168, 63
      %s170 = scalar_select %p169, %s168, 63
      %s171 = smul.addr %s170, 8
      %s172 = scalar_lea.vmem %s3, %s171
      %s173 = smul.u32 32, %s14
      %v175 = vld [vmem:[%s166] sm:$0xf]
      %v176 = vld [vmem:[%s166 + $0x4] sm:$0xf]
      %v177 = vld [vmem:[%s166 + $0x8] sm:$0xf]
      %v178 = vld [vmem:[%s166 + $0xc] sm:$0xf]
      %v179 = vld [vmem:[%s166 + $0x10] sm:$0xf]
      %v180 = vld [vmem:[%s166 + $0x14] sm:$0xf]
      %v181 = vld [vmem:[%s166 + $0x18] sm:$0xf]
      %v182 = vld [vmem:[%s166 + $0x1c] sm:$0xf]
      %v183 = vld [vmem:[%s166 + $0x20] sm:$0xf]
      %v184 = vld [vmem:[%s166 + $0x24] sm:$0xf]
      %v185 = vld [vmem:[%s166 + $0x28] sm:$0xf]
      %v186 = vld [vmem:[%s166 + $0x2c] sm:$0xf]
      %v187 = vld [vmem:[%s166 + $0x30] sm:$0xf]
      %v188 = vld [vmem:[%s166 + $0x34] sm:$0xf]
      %v189 = vld [vmem:[%s166 + $0x38] sm:$0xf]
      %v190 = vld [vmem:[%s166 + $0x3c] sm:$0xf]
      %v191 = vld [vmem:[%s166 + $0x40] sm:$0xf]
      %v192 = vld [vmem:[%s166 + $0x44] sm:$0xf]
      %v193 = vld [vmem:[%s166 + $0x48] sm:$0xf]
      %v194 = vld [vmem:[%s166 + $0x4c] sm:$0xf]
      %v195 = vld [vmem:[%s166 + $0x50] sm:$0xf]
      %v196 = vld [vmem:[%s166 + $0x54] sm:$0xf]
      %v197 = vld [vmem:[%s166 + $0x58] sm:$0xf]
      %v198 = vld [vmem:[%s166 + $0x5c] sm:$0xf]
      %v199 = vld [vmem:[%s166 + $0x60] sm:$0xf]
      %v200 = vld [vmem:[%s166 + $0x64] sm:$0xf]
      %v201 = vld [vmem:[%s166 + $0x68] sm:$0xf]
      %v202 = vld [vmem:[%s166 + $0x6c] sm:$0xf]
      %v203 = vld [vmem:[%s166 + $0x70] sm:$0xf]
      %v204 = vld [vmem:[%s166 + $0x74] sm:$0xf]
      %v205 = vld [vmem:[%s166 + $0x78] sm:$0xf]
      %v206 = vld [vmem:[%s166 + $0x7c] sm:$0xf]
      %v207 = vld [vmem:[%s1] sm:$0xf]
      %v208 = vld [vmem:[%s1 + $0x4] sm:$0xf]
      %v209 = vld [vmem:[%s1 + $0x8] sm:$0xf]
      %v210 = vld [vmem:[%s1 + $0xc] sm:$0x3]
      %v211 = vld [vmem:[%s2] sm:$0x1]
      %v213 = vperm.slane %v211, 0
      %v247 = vunpack.c.l.b16 %v175
      %v248 = vunpack.c.l.b16 %v176
      %v249 = vunpack.c.l.b16 %v177
      %v250 = vunpack.c.l.b16 %v178
      %v251 = vunpack.c.l.b16 %v179
      %v252 = vunpack.c.l.b16 %v180
      %v253 = vunpack.c.l.b16 %v181
      %v254 = vunpack.c.l.b16 %v182
      %v255 = vunpack.c.l.b16 %v183
      %v256 = vunpack.c.l.b16 %v184
      %v257 = vunpack.c.l.b16 %v185
      %v258 = vunpack.c.l.b16 %v186
      %v259 = vunpack.c.l.b16 %v187
      %v260 = vunpack.c.l.b16 %v188
      %v261 = vunpack.c.l.b16 %v189
      %v262 = vunpack.c.l.b16 %v190
      %v263 = vunpack.c.l.b16 %v191
      %v264 = vunpack.c.l.b16 %v192
      %v265 = vunpack.c.l.b16 %v193
      %v266 = vunpack.c.l.b16 %v194
      %v267 = vunpack.c.l.b16 %v195
      %v268 = vunpack.c.l.b16 %v196
      %v269 = vunpack.c.l.b16 %v197
      %v270 = vunpack.c.l.b16 %v198
      %v271 = vunpack.c.l.b16 %v199
      %v272 = vunpack.c.l.b16 %v200
      %v273 = vunpack.c.l.b16 %v201
      %v274 = vunpack.c.l.b16 %v202
      %v275 = vunpack.c.l.b16 %v203
      %v276 = vunpack.c.l.b16 %v204
      %v277 = vunpack.c.l.b16 %v205
      %v278 = vunpack.c.l.b16 %v206
      %v279 = vpack.c.b16 %v248, %v247
      %v280 = vpack.c.b16 %v250, %v249
      %v281 = vpack.c.b16 %v252, %v251
      %v282 = vpack.c.b16 %v254, %v253
      %v283 = vpack.c.b16 %v256, %v255
      %v284 = vpack.c.b16 %v258, %v257
      %v285 = vpack.c.b16 %v260, %v259
      %v286 = vpack.c.b16 %v262, %v261
      %v287 = vpack.c.b16 %v264, %v263
      %v288 = vpack.c.b16 %v266, %v265
      %v289 = vpack.c.b16 %v268, %v267
      %v290 = vpack.c.b16 %v270, %v269
      %v291 = vpack.c.b16 %v272, %v271
      %v292 = vpack.c.b16 %v274, %v273
      %v293 = vpack.c.b16 %v276, %v275
      %v294 = vpack.c.b16 %v278, %v277
      %v299 = vunpack.c.l.b16 %v207
      %v300 = vunpack.c.l.b16 %v208
      %v301 = vunpack.c.l.b16 %v209
      %v302 = vunpack.c.l.b16 %v210
      %v303 = vpack.c.b16 %v300, %v299
      %v304 = vpack.c.b16 %v302, %v301
      %vm306 = vcmask 220160
      %v308 = vsel %vm306, %v279, 0
      %v311 = vsel %vm306, %v280, 0
      %v314 = vsel %vm306, %v281, 0
      %v317 = vsel %vm306, %v282, 0
      %v320 = vsel %vm306, %v283, 0
      %v323 = vsel %vm306, %v284, 0
      %v326 = vsel %vm306, %v285, 0
      %v329 = vsel %vm306, %v286, 0
      %v332 = vsel %vm306, %v287, 0
      %v335 = vsel %vm306, %v288, 0
      %v338 = vsel %vm306, %v289, 0
      %v341 = vsel %vm306, %v290, 0
      %v344 = vsel %vm306, %v291, 0
      %v347 = vsel %vm306, %v292, 0
      %v350 = vsel %vm306, %v293, 0
      %v353 = vsel %vm306, %v294, 0
      %vm355 = vcmask 1044480
      %vm356 = vcmask 1045504
      %v357 = vsel %vm355, 4294967295, 65535
      %v358 = vsel %vm356, %v357, 0
      %v360 = vand.u32 %v304, %v358
      %362 = vmatpush.bf16.msra.mxu0 0
      %363 = vmatpush.bf16.msra.mxu0 0
      %364 = vmatpush.bf16.msra.mxu0 0
      %365 = vmatpush.bf16.msra.mxu0 0
      %366 = vmatpush.bf16.msra.mxu0 0
      %367 = vmatpush.bf16.msra.mxu0 0
      %368 = vmatpush.bf16.msra.mxu0 %v360
      %369 = vmatpush.bf16.msra.mxu0 %v303
      %370 = vmatmul.bf16.gmra.mxu0 %v308
      %v371 = vpop.f32.mrf.mxu0
      %v372 = vadd.f32 %v213, %v371
      %v373 = vpop.f32.mrf.mxu0
      %v374 = vadd.f32 %v213, %v373
      %375 = vmatmul.bf16.gmra.mxu0 %v311
      %v376 = vpop.f32.mrf.mxu0
      %v377 = vadd.f32 %v213, %v376
      %v378 = vpop.f32.mrf.mxu0
      %v379 = vadd.f32 %v213, %v378
      %380 = vmatmul.bf16.gmra.mxu0 %v314
      %v381 = vpop.f32.mrf.mxu0
      %v382 = vadd.f32 %v213, %v381
      %v383 = vpop.f32.mrf.mxu0
      %v384 = vadd.f32 %v213, %v383
      %385 = vmatmul.bf16.gmra.mxu0 %v317
      %v386 = vpop.f32.mrf.mxu0
      %v387 = vadd.f32 %v213, %v386
      %v388 = vpop.f32.mrf.mxu0
      %v389 = vadd.f32 %v213, %v388
      %390 = vmatmul.bf16.gmra.mxu0 %v320
      %v391 = vpop.f32.mrf.mxu0
      %v392 = vadd.f32 %v213, %v391
      %v393 = vpop.f32.mrf.mxu0
      %v394 = vadd.f32 %v213, %v393
      %395 = vmatmul.bf16.gmra.mxu0 %v323
      %v396 = vpop.f32.mrf.mxu0
      %v397 = vadd.f32 %v213, %v396
      %v398 = vpop.f32.mrf.mxu0
      %v399 = vadd.f32 %v213, %v398
      %400 = vmatmul.bf16.gmra.mxu0 %v326
      %v401 = vpop.f32.mrf.mxu0
      %v402 = vadd.f32 %v213, %v401
      %v403 = vpop.f32.mrf.mxu0
      %v404 = vadd.f32 %v213, %v403
      %405 = vmatmul.bf16.gmra.mxu0 %v329
      %v406 = vpop.f32.mrf.mxu0
      %v407 = vadd.f32 %v213, %v406
      %v408 = vpop.f32.mrf.mxu0
      %v409 = vadd.f32 %v213, %v408
      %410 = vmatmul.bf16.gmra.mxu0 %v332
      %v411 = vpop.f32.mrf.mxu0
      %v412 = vadd.f32 %v213, %v411
      %v413 = vpop.f32.mrf.mxu0
      %v414 = vadd.f32 %v213, %v413
      %415 = vmatmul.bf16.gmra.mxu0 %v335
      %v416 = vpop.f32.mrf.mxu0
      %v417 = vadd.f32 %v213, %v416
      %v418 = vpop.f32.mrf.mxu0
      %v419 = vadd.f32 %v213, %v418
      %420 = vmatmul.bf16.gmra.mxu0 %v338
      %v421 = vpop.f32.mrf.mxu0
      %v422 = vadd.f32 %v213, %v421
      %v423 = vpop.f32.mrf.mxu0
      %v424 = vadd.f32 %v213, %v423
      %425 = vmatmul.bf16.gmra.mxu0 %v341
      %v426 = vpop.f32.mrf.mxu0
      %v427 = vadd.f32 %v213, %v426
      %v428 = vpop.f32.mrf.mxu0
      %v429 = vadd.f32 %v213, %v428
      %430 = vmatmul.bf16.gmra.mxu0 %v344
      %v431 = vpop.f32.mrf.mxu0
      %v432 = vadd.f32 %v213, %v431
      %v433 = vpop.f32.mrf.mxu0
      %v434 = vadd.f32 %v213, %v433
      %435 = vmatmul.bf16.gmra.mxu0 %v347
      %v436 = vpop.f32.mrf.mxu0
      %v437 = vadd.f32 %v213, %v436
      %v438 = vpop.f32.mrf.mxu0
      %v439 = vadd.f32 %v213, %v438
      %440 = vmatmul.bf16.gmra.mxu0 %v350
      %v441 = vpop.f32.mrf.mxu0
      %v442 = vadd.f32 %v213, %v441
      %v443 = vpop.f32.mrf.mxu0
      %v444 = vadd.f32 %v213, %v443
      %445 = vmatmul.bf16.gmra.mxu0 %v353
      %v446 = vpop.f32.mrf.mxu0
      %v447 = vadd.f32 %v213, %v446
      %v448 = vpop.f32.mrf.mxu0
      %v449 = vadd.f32 %v213, %v448
      %450 = vdwg.mxu0
      %v451 = vmax.f32 %v372, 0.0
      %v452 = vmax.f32 %v374, 0.0
      %v453 = vmax.f32 %v377, 0.0
      %v454 = vmax.f32 %v379, 0.0
      %v455 = vmax.f32 %v382, 0.0
      %v456 = vmax.f32 %v384, 0.0
      %v457 = vmax.f32 %v387, 0.0
      %v458 = vmax.f32 %v389, 0.0
      %v459 = vmax.f32 %v392, 0.0
      %v460 = vmax.f32 %v394, 0.0
      %v461 = vmax.f32 %v397, 0.0
      %v462 = vmax.f32 %v399, 0.0
      %v463 = vmax.f32 %v402, 0.0
      %v464 = vmax.f32 %v404, 0.0
      %v465 = vmax.f32 %v407, 0.0
      %v466 = vmax.f32 %v409, 0.0
      %v467 = vmax.f32 %v412, 0.0
      %v468 = vmax.f32 %v414, 0.0
      %v469 = vmax.f32 %v417, 0.0
      %v470 = vmax.f32 %v419, 0.0
      %v471 = vmax.f32 %v422, 0.0
      %v472 = vmax.f32 %v424, 0.0
      %v473 = vmax.f32 %v427, 0.0
      %v474 = vmax.f32 %v429, 0.0
      %v475 = vmax.f32 %v432, 0.0
      %v476 = vmax.f32 %v434, 0.0
      %v477 = vmax.f32 %v437, 0.0
      %v478 = vmax.f32 %v439, 0.0
      %v479 = vmax.f32 %v442, 0.0
      %v480 = vmax.f32 %v444, 0.0
      %v481 = vmax.f32 %v447, 0.0
      %v482 = vmax.f32 %v449, 0.0
      %vm483 = vcmask 130048
      %484 = vst.msk [vmem:[%s172] sm:$0xff] %vm483, %v451
      %485 = vst.msk [vmem:[%s172 + $0x8] sm:$0xff] %vm483, %v452
      %486 = vst.msk [vmem:[%s172 + $0x10] sm:$0xff] %vm483, %v453
      %487 = vst.msk [vmem:[%s172 + $0x18] sm:$0xff] %vm483, %v454
      %488 = vst.msk [vmem:[%s172 + $0x20] sm:$0xff] %vm483, %v455
      %489 = vst.msk [vmem:[%s172 + $0x28] sm:$0xff] %vm483, %v456
      %490 = vst.msk [vmem:[%s172 + $0x30] sm:$0xff] %vm483, %v457
      %491 = vst.msk [vmem:[%s172 + $0x38] sm:$0xff] %vm483, %v458
      %492 = vst.msk [vmem:[%s172 + $0x40] sm:$0xff] %vm483, %v459
      %493 = vst.msk [vmem:[%s172 + $0x48] sm:$0xff] %vm483, %v460
      %494 = vst.msk [vmem:[%s172 + $0x50] sm:$0xff] %vm483, %v461
      %495 = vst.msk [vmem:[%s172 + $0x58] sm:$0xff] %vm483, %v462
      %496 = vst.msk [vmem:[%s172 + $0x60] sm:$0xff] %vm483, %v463
      %497 = vst.msk [vmem:[%s172 + $0x68] sm:$0xff] %vm483, %v464
      %498 = vst.msk [vmem:[%s172 + $0x70] sm:$0xff] %vm483, %v465
      %499 = vst.msk [vmem:[%s172 + $0x78] sm:$0xff] %vm483, %v466
      %500 = vst.msk [vmem:[%s172 + $0x80] sm:$0xff] %vm483, %v467
      %501 = vst.msk [vmem:[%s172 + $0x88] sm:$0xff] %vm483, %v468
      %502 = vst.msk [vmem:[%s172 + $0x90] sm:$0xff] %vm483, %v469
      %503 = vst.msk [vmem:[%s172 + $0x98] sm:$0xff] %vm483, %v470
      %504 = vst.msk [vmem:[%s172 + $0xa0] sm:$0xff] %vm483, %v471
      %505 = vst.msk [vmem:[%s172 + $0xa8] sm:$0xff] %vm483, %v472
      %506 = vst.msk [vmem:[%s172 + $0xb0] sm:$0xff] %vm483, %v473
      %507 = vst.msk [vmem:[%s172 + $0xb8] sm:$0xff] %vm483, %v474
      %508 = vst.msk [vmem:[%s172 + $0xc0] sm:$0xff] %vm483, %v475
      %509 = vst.msk [vmem:[%s172 + $0xc8] sm:$0xff] %vm483, %v476
      %510 = vst.msk [vmem:[%s172 + $0xd0] sm:$0xff] %vm483, %v477
      %511 = vst.msk [vmem:[%s172 + $0xd8] sm:$0xff] %vm483, %v478
      %512 = vst.msk [vmem:[%s172 + $0xe0] sm:$0xff] %vm483, %v479
      %513 = vst.msk [vmem:[%s172 + $0xe8] sm:$0xff] %vm483, %v480
      %514 = vst.msk [vmem:[%s172 + $0xf0] sm:$0xff] %vm483, %v481
      %515 = vst.msk [vmem:[%s172 + $0xf8] sm:$0xff] %vm483, %v482
      %s516 = smul.u32 32, %s14
      %p517 = scmp.lt.s32.totalorder %s516, 63
      %s518 = scalar_select %p517, %s516, 63
      %s519 = smul.addr %s518, 8
      %s520 = scalar_lea.vmem %s3, %s519
      // Predicated region
      $region33: #{resnet_forward.17} parent=31 // pred_check
        %p521 = pneg %p100
      $region34: #{resnet_forward.17} parent=31 // pred_check_branch
        %523 = sbr.rel (%p521) target = $region36
      $region35: #{resnet_forward.17} parent=31 // pred_region
        %s524 = smul.u32 32, %s14
      $region36: #{resnet_forward.17} parent=31 // pred_fallthru
        _
    $region32: #{resnet_forward.17} parent=5 // pred_fallthru
      _
    %p525 = scmp.le.s32.totalorder 2, %s9
    // Predicated region
    $region37: #{resnet_forward.17} parent=5 // pred_check
      %p526 = pneg %p525
    $region38: #{resnet_forward.17} parent=5 // pred_check_branch
      %528 = sbr.rel (%p526) target = $region40
    $region39: #{resnet_forward.17} parent=5 // pred_region
      %s529 = ssub.s32 %s9, 2
      // Predicated region
      $region41: #{resnet_forward.17} parent=39 // pred_check
        %p530 = pneg %p106
      $region42: #{resnet_forward.17} parent=39 // pred_check_branch
        %532 = sbr.rel (%p530) target = $region44
      $region43: #{resnet_forward.17} parent=39 // pred_region
        %s533 = smul.u32 32, %s15
        %p534 = scmp.lt.s32.totalorder %s533, 63
        %s535 = scalar_select %p534, %s533, 63
        %s536 = smul.addr %s535, 8
        %s537 = scalar_lea.vmem %s3, %s536
      $region44: #{resnet_forward.17} parent=39 // pred_fallthru
        _
    $region40: #{resnet_forward.17} parent=5 // pred_fallthru
      _
  $region6: #{resnet_forward.17} parent=0 // loop_footer
    %s13 = sadd.s32 1, %s9
  $region7: #{resnet_forward.17} parent=0 // loop_footer_branch
    %8 = sbr.rel target = $region3
  $region8: #{resnet_forward.17} parent=0 // loop_exit
    _

// kernel: resnet_forward.18
$region0: #{resnet_forward.18}
  #allocation0 [shape = 'u32[]', space=smem, size = 0x4, offset = 0x4, fixed_abs, tag = 'smem constant byte address 0x4 - core index']
  #allocation1 [shape = 'u32[72,128]{1,0:T(1,128)}', space=vmem, size = 0x9000, scoped, tag = 'internal scratch']
  %s0 = inlined_call_operand.vmem [shape: bf16[128,144], index: 0, kind: input, shape index: {}]
  %s1 = inlined_call_operand.vmem [shape: bf16[144,16], index: 1, kind: input, shape index: {}]
  %s2 = inlined_call_operand.vmem [shape: f32[1,16], index: 2, kind: input, shape index: {}]
  %s3 = inlined_call_operand.vmem [shape: f32[128,16], index: 3, kind: output, shape index: {}]
  %s4 = sld [smem:[#allocation0]]
  $region22: #{resnet_forward.18} parent=0
    _
  %s6 = ssub.s32 1, %s4
  %s7 = scalar_select 0, %s6, %s4
  // Predicated region
  $region2: #{resnet_forward.18} parent=0 // pred_check
    _
  $region3: #{resnet_forward.18} parent=0 // pred_check_branch
    %9 = sbr.rel (0) target = $region5
  $region4: #{resnet_forward.18} parent=0 // pred_region
    _
  $region5: #{resnet_forward.18} parent=0 // pred_fallthru
    _
  // Predicated region
  $region6: #{resnet_forward.18} parent=0 // pred_check
    _
  $region7: #{resnet_forward.18} parent=0 // pred_check_branch
    %11 = sbr.rel (0) target = $region9
  $region8: #{resnet_forward.18} parent=0 // pred_region
    _
  $region9: #{resnet_forward.18} parent=0 // pred_fallthru
    _
  // Predicated region
  $region10: #{resnet_forward.18} parent=0 // pred_check
    _
  $region11: #{resnet_forward.18} parent=0 // pred_check_branch
    %13 = sbr.rel (0) target = $region13
  $region12: #{resnet_forward.18} parent=0 // pred_region
    _
  $region13: #{resnet_forward.18} parent=0 // pred_fallthru
    _
  %v15 = vld [vmem:[%s0] sm:$0xff]
  %v16 = vld [vmem:[%s0 + $0x8] sm:$0xff]
  %v17 = vld [vmem:[%s0 + $0x10] sm:$0xff]
  %v18 = vld [vmem:[%s0 + $0x18] sm:$0xff]
  %v19 = vld [vmem:[%s0 + $0x20] sm:$0xff]
  %v20 = vld [vmem:[%s0 + $0x28] sm:$0xff]
  %v21 = vld [vmem:[%s0 + $0x30] sm:$0xff]
  %v22 = vld [vmem:[%s0 + $0x38] sm:$0xff]
  %v23 = vld [vmem:[%s0 + $0x40] sm:$0xff]
  %v24 = vld [vmem:[%s0 + $0x48] sm:$0xff]
  %v25 = vld [vmem:[%s0 + $0x50] sm:$0xff]
  %v26 = vld [vmem:[%s0 + $0x58] sm:$0xff]
  %v27 = vld [vmem:[%s0 + $0x60] sm:$0xff]
  %v28 = vld [vmem:[%s0 + $0x68] sm:$0xff]
  %v29 = vld [vmem:[%s0 + $0x70] sm:$0xff]
  %v30 = vld [vmem:[%s0 + $0x78] sm:$0xff]
  %v31 = vld [vmem:[%s1] sm:$0xf]
  %v32 = vld [vmem:[%s1 + $0x4] sm:$0xf]
  %v33 = vld [vmem:[%s1 + $0x8] sm:$0xf]
  %v34 = vld [vmem:[%s1 + $0xc] sm:$0xf]
  %v35 = vld [vmem:[%s1 + $0x10] sm:$0xf]
  %v36 = vld [vmem:[%s1 + $0x14] sm:$0xf]
  %v37 = vld [vmem:[%s1 + $0x18] sm:$0xf]
  %v38 = vld [vmem:[%s1 + $0x1c] sm:$0xf]
  %v39 = vld [vmem:[%s1 + $0x20] sm:$0xf]
  %v40 = vld [vmem:[%s1 + $0x24] sm:$0xf]
  %v41 = vld [vmem:[%s1 + $0x28] sm:$0xf]
  %v42 = vld [vmem:[%s1 + $0x2c] sm:$0xf]
  %v43 = vld [vmem:[%s1 + $0x30] sm:$0xf]
  %v44 = vld [vmem:[%s1 + $0x34] sm:$0xf]
  %v45 = vld [vmem:[%s1 + $0x38] sm:$0xf]
  %v46 = vld [vmem:[%s1 + $0x3c] sm:$0xf]
  %v47 = vld [vmem:[%s1 + $0x40] sm:$0xf]
  %v48 = vld [vmem:[%s1 + $0x44] sm:$0xf]
  %v49 = vld [vmem:[%s2] sm:$0x1]
  %v51 = vperm.slane %v49, 0
  %v69 = vunpack.c.l.b16 %v15
  %v70 = vunpack.c.h.b16 %v15
  %v71 = vunpack.c.l.b16 %v16
  %v72 = vunpack.c.h.b16 %v16
  %v73 = vunpack.c.l.b16 %v17
  %v74 = vunpack.c.h.b16 %v17
  %v75 = vunpack.c.l.b16 %v18
  %v76 = vunpack.c.h.b16 %v18
  %v77 = vunpack.c.l.b16 %v19
  %v78 = vunpack.c.h.b16 %v19
  %v79 = vunpack.c.l.b16 %v20
  %v80 = vunpack.c.h.b16 %v20
  %v81 = vunpack.c.l.b16 %v21
  %v82 = vunpack.c.h.b16 %v21
  %v83 = vunpack.c.l.b16 %v22
  %v84 = vunpack.c.h.b16 %v22
  %v85 = vunpack.c.l.b16 %v23
  %v86 = vunpack.c.h.b16 %v23
  %v87 = vunpack.c.l.b16 %v24
  %v88 = vunpack.c.h.b16 %v24
  %v89 = vunpack.c.l.b16 %v25
  %v90 = vunpack.c.h.b16 %v25
  %v91 = vunpack.c.l.b16 %v26
  %v92 = vunpack.c.h.b16 %v26
  %v93 = vunpack.c.l.b16 %v27
  %v94 = vunpack.c.h.b16 %v27
  %v95 = vunpack.c.l.b16 %v28
  %v96 = vunpack.c.h.b16 %v28
  %v97 = vunpack.c.l.b16 %v29
  %v98 = vunpack.c.h.b16 %v29
  %v99 = vunpack.c.l.b16 %v30
  %v100 = vunpack.c.h.b16 %v30
  %v101 = vpack.c.b16 %v71, %v69
  %v102 = vpack.c.b16 %v72, %v70
  %v103 = vpack.c.b16 %v75, %v73
  %v104 = vpack.c.b16 %v76, %v74
  %v105 = vpack.c.b16 %v79, %v77
  %v106 = vpack.c.b16 %v80, %v78
  %v107 = vpack.c.b16 %v83, %v81
  %v108 = vpack.c.b16 %v84, %v82
  %v109 = vpack.c.b16 %v87, %v85
  %v110 = vpack.c.b16 %v88, %v86
  %v111 = vpack.c.b16 %v91, %v89
  %v112 = vpack.c.b16 %v92, %v90
  %v113 = vpack.c.b16 %v95, %v93
  %v114 = vpack.c.b16 %v96, %v94
  %v115 = vpack.c.b16 %v99, %v97
  %v116 = vpack.c.b16 %v100, %v98
  %v143 = vunpack.c.l.b16 %v31
  %v144 = vunpack.c.l.b16 %v32
  %v145 = vunpack.c.l.b16 %v33
  %v146 = vunpack.c.l.b16 %v34
  %v147 = vunpack.c.l.b16 %v35
  %v148 = vunpack.c.l.b16 %v36
  %v149 = vunpack.c.l.b16 %v37
  %v150 = vunpack.c.l.b16 %v38
  %v151 = vunpack.c.l.b16 %v39
  %v152 = vunpack.c.l.b16 %v40
  %v153 = vunpack.c.l.b16 %v41
  %v154 = vunpack.c.l.b16 %v42
  %v155 = vunpack.c.l.b16 %v43
  %v156 = vunpack.c.l.b16 %v44
  %v157 = vunpack.c.l.b16 %v45
  %v158 = vunpack.c.l.b16 %v46
  %v159 = vunpack.c.l.b16 %v47
  %v160 = vunpack.c.l.b16 %v48
  %v161 = vpack.c.b16 %v144, %v143
  %v162 = vpack.c.b16 %v146, %v145
  %v163 = vpack.c.b16 %v148, %v147
  %v164 = vpack.c.b16 %v150, %v149
  %v165 = vpack.c.b16 %v152, %v151
  %v166 = vpack.c.b16 %v154, %v153
  %v167 = vpack.c.b16 %v156, %v155
  %v168 = vpack.c.b16 %v158, %v157
  %v169 = vpack.c.b16 %v160, %v159
  %vm179 = vcmask 130048
  %v181 = vsel %vm179, %v102, 0
  %v184 = vsel %vm179, %v104, 0
  %v187 = vsel %vm179, %v106, 0
  %v190 = vsel %vm179, %v108, 0
  %v193 = vsel %vm179, %v110, 0
  %v196 = vsel %vm179, %v112, 0
  %v199 = vsel %vm179, %v114, 0
  %v202 = vsel %vm179, %v116, 0
  %204 = vmatpush.bf16.msra.mxu0 %v168
  %205 = vmatpush.bf16.msra.mxu0 %v167
  %206 = vmatpush.bf16.msra.mxu0 %v166
  %207 = vmatpush.bf16.msra.mxu0 %v165
  %208 = vmatpush.bf16.msra.mxu0 %v164
  %209 = vmatpush.bf16.msra.mxu0 %v163
  %210 = vmatpush.bf16.msra.mxu0 %v162
  %211 = vmatpush.bf16.msra.mxu0 %v161
  %212 = vmatmul.bf16.gmra.mxu0 %v101
  %v213 = vpop.f32.mrf.mxu0
  %v214 = vadd.f32 %v51, %v213
  %v215 = vpop.f32.mrf.mxu0
  %v216 = vadd.f32 %v51, %v215
  %217 = vmatmul.bf16.gmra.mxu0 %v103
  %v218 = vpop.f32.mrf.mxu0
  %v219 = vadd.f32 %v51, %v218
  %v220 = vpop.f32.mrf.mxu0
  %v221 = vadd.f32 %v51, %v220
  %222 = vmatmul.bf16.gmra.mxu0 %v105
  %v223 = vpop.f32.mrf.mxu0
  %v224 = vadd.f32 %v51, %v223
  %v225 = vpop.f32.mrf.mxu0
  %v226 = vadd.f32 %v51, %v225
  %227 = vmatmul.bf16.gmra.mxu0 %v107
  %v228 = vpop.f32.mrf.mxu0
  %v229 = vadd.f32 %v51, %v228
  %v230 = vpop.f32.mrf.mxu0
  %v231 = vadd.f32 %v51, %v230
  %232 = vmatmul.bf16.gmra.mxu0 %v109
  %v233 = vpop.f32.mrf.mxu0
  %v234 = vadd.f32 %v51, %v233
  %v235 = vpop.f32.mrf.mxu0
  %v236 = vadd.f32 %v51, %v235
  %237 = vmatmul.bf16.gmra.mxu0 %v111
  %v238 = vpop.f32.mrf.mxu0
  %v239 = vadd.f32 %v51, %v238
  %v240 = vpop.f32.mrf.mxu0
  %v241 = vadd.f32 %v51, %v240
  %242 = vmatmul.bf16.gmra.mxu0 %v113
  %v243 = vpop.f32.mrf.mxu0
  %v244 = vadd.f32 %v51, %v243
  %v245 = vpop.f32.mrf.mxu0
  %v246 = vadd.f32 %v51, %v245
  %247 = vmatmul.bf16.gmra.mxu0 %v115
  %v248 = vpop.f32.mrf.mxu0
  %v249 = vadd.f32 %v51, %v248
  %v250 = vpop.f32.mrf.mxu0
  %v251 = vadd.f32 %v51, %v250
  %252 = vdwg.mxu0
  %253 = vmatpush.bf16.msra.mxu0 0
  %254 = vmatpush.bf16.msra.mxu0 0
  %255 = vmatpush.bf16.msra.mxu0 0
  %256 = vmatpush.bf16.msra.mxu0 0
  %257 = vmatpush.bf16.msra.mxu0 0
  %258 = vmatpush.bf16.msra.mxu0 0
  %259 = vmatpush.bf16.msra.mxu0 0
  %260 = vmatpush.bf16.msra.mxu0 %v169
  %261 = vmatmul.bf16.gmra.mxu0 %v181
  %v262 = vpop.f32.mrf.mxu0
  %v263 = vadd.f32 %v214, %v262
  %v264 = vpop.f32.mrf.mxu0
  %v265 = vadd.f32 %v216, %v264
  %266 = vmatmul.bf16.gmra.mxu0 %v184
  %v267 = vpop.f32.mrf.mxu0
  %v268 = vadd.f32 %v219, %v267
  %v269 = vpop.f32.mrf.mxu0
  %v270 = vadd.f32 %v221, %v269
  %271 = vmatmul.bf16.gmra.mxu0 %v187
  %v272 = vpop.f32.mrf.mxu0
  %v273 = vadd.f32 %v224, %v272
  %v274 = vpop.f32.mrf.mxu0
  %v275 = vadd.f32 %v226, %v274
  %276 = vmatmul.bf16.gmra.mxu0 %v190
  %v277 = vpop.f32.mrf.mxu0
  %v278 = vadd.f32 %v229, %v277
  %v279 = vpop.f32.mrf.mxu0
  %v280 = vadd.f32 %v231, %v279
  %281 = vmatmul.bf16.gmra.mxu0 %v193
  %v282 = vpop.f32.mrf.mxu0
  %v283 = vadd.f32 %v234, %v282
  %v284 = vpop.f32.mrf.mxu0
  %v285 = vadd.f32 %v236, %v284
  %286 = vmatmul.bf16.gmra.mxu0 %v196
  %v287 = vpop.f32.mrf.mxu0
  %v288 = vadd.f32 %v239, %v287
  %v289 = vpop.f32.mrf.mxu0
  %v290 = vadd.f32 %v241, %v289
  %291 = vmatmul.bf16.gmra.mxu0 %v199
  %v292 = vpop.f32.mrf.mxu0
  %v293 = vadd.f32 %v244, %v292
  %v294 = vpop.f32.mrf.mxu0
  %v295 = vadd.f32 %v246, %v294
  %296 = vmatmul.bf16.gmra.mxu0 %v202
  %v297 = vpop.f32.mrf.mxu0
  %v298 = vadd.f32 %v249, %v297
  %v299 = vpop.f32.mrf.mxu0
  %v300 = vadd.f32 %v251, %v299
  %301 = vdwg.mxu0
  %v302 = vmax.f32 %v263, 0.0
  %v303 = vmax.f32 %v265, 0.0
  %v304 = vmax.f32 %v268, 0.0
  %v305 = vmax.f32 %v270, 0.0
  %v306 = vmax.f32 %v273, 0.0
  %v307 = vmax.f32 %v275, 0.0
  %v308 = vmax.f32 %v278, 0.0
  %v309 = vmax.f32 %v280, 0.0
  %v310 = vmax.f32 %v283, 0.0
  %v311 = vmax.f32 %v285, 0.0
  %v312 = vmax.f32 %v288, 0.0
  %v313 = vmax.f32 %v290, 0.0
  %v314 = vmax.f32 %v293, 0.0
  %v315 = vmax.f32 %v295, 0.0
  %v316 = vmax.f32 %v298, 0.0
  %v317 = vmax.f32 %v300, 0.0
  %318 = vst.msk [vmem:[%s3] sm:$0xff] %vm179, %v302
  %319 = vst.msk [vmem:[%s3 + $0x8] sm:$0xff] %vm179, %v303
  %320 = vst.msk [vmem:[%s3 + $0x10] sm:$0xff] %vm179, %v304
  %321 = vst.msk [vmem:[%s3 + $0x18] sm:$0xff] %vm179, %v305
  %322 = vst.msk [vmem:[%s3 + $0x20] sm:$0xff] %vm179, %v306
  %323 = vst.msk [vmem:[%s3 + $0x28] sm:$0xff] %vm179, %v307
  %324 = vst.msk [vmem:[%s3 + $0x30] sm:$0xff] %vm179, %v308
  %325 = vst.msk [vmem:[%s3 + $0x38] sm:$0xff] %vm179, %v309
  %326 = vst.msk [vmem:[%s3 + $0x40] sm:$0xff] %vm179, %v310
  %327 = vst.msk [vmem:[%s3 + $0x48] sm:$0xff] %vm179, %v311
  %328 = vst.msk [vmem:[%s3 + $0x50] sm:$0xff] %vm179, %v312
  %329 = vst.msk [vmem:[%s3 + $0x58] sm:$0xff] %vm179, %v313
  %330 = vst.msk [vmem:[%s3 + $0x60] sm:$0xff] %vm179, %v314
  %331 = vst.msk [vmem:[%s3 + $0x68] sm:$0xff] %vm179, %v315
  %332 = vst.msk [vmem:[%s3 + $0x70] sm:$0xff] %vm179, %v316
  %333 = vst.msk [vmem:[%s3 + $0x78] sm:$0xff] %vm179, %v317
  // Predicated region
  $region14: #{resnet_forward.18} parent=0 // pred_check
    _
  $region15: #{resnet_forward.18} parent=0 // pred_check_branch
    %335 = sbr.rel (0) target = $region17
  $region16: #{resnet_forward.18} parent=0 // pred_region
    _
  $region17: #{resnet_forward.18} parent=0 // pred_fallthru
    _
  // Predicated region
  $region18: #{resnet_forward.18} parent=0 // pred_check
    _
  $region19: #{resnet_forward.18} parent=0 // pred_check_branch
    %337 = sbr.rel (0) target = $region21
  $region20: #{resnet_forward.18} parent=0 // pred_region
    _
  $region21: #{resnet_forward.18} parent=0 // pred_fallthru
    _

// kernel: resnet_forward.19
$region0: #{resnet_forward.19}
  #allocation0 [shape = 'u32[]', space=smem, size = 0x4, offset = 0x4, fixed_abs, tag = 'smem constant byte address 0x4 - core index']
  #allocation1 [shape = 'u32[72,128]{1,0:T(1,128)}', space=vmem, size = 0x9000, scoped, tag = 'internal scratch']
  %s0 = inlined_call_operand.vmem [shape: bf16[128,144], index: 0, kind: input, shape index: {}]
  %s1 = inlined_call_operand.vmem [shape: bf16[144,16], index: 1, kind: input, shape index: {}]
  %s2 = inlined_call_operand.vmem [shape: f32[1,16], index: 2, kind: input, shape index: {}]
  %s3 = inlined_call_operand.vmem [shape: f32[128,16], index: 3, kind: input, shape index: {}]
  %s4 = inlined_call_operand.vmem [shape: f32[128,16], index: 4, kind: output, shape index: {}]
  %s5 = sld [smem:[#allocation0]]
  $region26: #{resnet_forward.19} parent=0
    _
  %s7 = ssub.s32 1, %s5
  %s8 = scalar_select 0, %s7, %s5
  // Predicated region
  $region2: #{resnet_forward.19} parent=0 // pred_check
    _
  $region3: #{resnet_forward.19} parent=0 // pred_check_branch
    %10 = sbr.rel (0) target = $region5
  $region4: #{resnet_forward.19} parent=0 // pred_region
    _
  $region5: #{resnet_forward.19} parent=0 // pred_fallthru
    _
  // Predicated region
  $region6: #{resnet_forward.19} parent=0 // pred_check
    _
  $region7: #{resnet_forward.19} parent=0 // pred_check_branch
    %12 = sbr.rel (0) target = $region9
  $region8: #{resnet_forward.19} parent=0 // pred_region
    _
  $region9: #{resnet_forward.19} parent=0 // pred_fallthru
    _
  // Predicated region
  $region10: #{resnet_forward.19} parent=0 // pred_check
    _
  $region11: #{resnet_forward.19} parent=0 // pred_check_branch
    %14 = sbr.rel (0) target = $region13
  $region12: #{resnet_forward.19} parent=0 // pred_region
    _
  $region13: #{resnet_forward.19} parent=0 // pred_fallthru
    _
  // Predicated region
  $region14: #{resnet_forward.19} parent=0 // pred_check
    _
  $region15: #{resnet_forward.19} parent=0 // pred_check_branch
    %16 = sbr.rel (0) target = $region17
  $region16: #{resnet_forward.19} parent=0 // pred_region
    _
  $region17: #{resnet_forward.19} parent=0 // pred_fallthru
    _
  %v18 = vld [vmem:[%s0] sm:$0xff]
  %v19 = vld [vmem:[%s0 + $0x8] sm:$0xff]
  %v20 = vld [vmem:[%s0 + $0x10] sm:$0xff]
  %v21 = vld [vmem:[%s0 + $0x18] sm:$0xff]
  %v22 = vld [vmem:[%s0 + $0x20] sm:$0xff]
  %v23 = vld [vmem:[%s0 + $0x28] sm:$0xff]
  %v24 = vld [vmem:[%s0 + $0x30] sm:$0xff]
  %v25 = vld [vmem:[%s0 + $0x38] sm:$0xff]
  %v26 = vld [vmem:[%s0 + $0x40] sm:$0xff]
  %v27 = vld [vmem:[%s0 + $0x48] sm:$0xff]
  %v28 = vld [vmem:[%s0 + $0x50] sm:$0xff]
  %v29 = vld [vmem:[%s0 + $0x58] sm:$0xff]
  %v30 = vld [vmem:[%s0 + $0x60] sm:$0xff]
  %v31 = vld [vmem:[%s0 + $0x68] sm:$0xff]
  %v32 = vld [vmem:[%s0 + $0x70] sm:$0xff]
  %v33 = vld [vmem:[%s0 + $0x78] sm:$0xff]
  %v34 = vld [vmem:[%s1] sm:$0xf]
  %v35 = vld [vmem:[%s1 + $0x4] sm:$0xf]
  %v36 = vld [vmem:[%s1 + $0x8] sm:$0xf]
  %v37 = vld [vmem:[%s1 + $0xc] sm:$0xf]
  %v38 = vld [vmem:[%s1 + $0x10] sm:$0xf]
  %v39 = vld [vmem:[%s1 + $0x14] sm:$0xf]
  %v40 = vld [vmem:[%s1 + $0x18] sm:$0xf]
  %v41 = vld [vmem:[%s1 + $0x1c] sm:$0xf]
  %v42 = vld [vmem:[%s1 + $0x20] sm:$0xf]
  %v43 = vld [vmem:[%s1 + $0x24] sm:$0xf]
  %v44 = vld [vmem:[%s1 + $0x28] sm:$0xf]
  %v45 = vld [vmem:[%s1 + $0x2c] sm:$0xf]
  %v46 = vld [vmem:[%s1 + $0x30] sm:$0xf]
  %v47 = vld [vmem:[%s1 + $0x34] sm:$0xf]
  %v48 = vld [vmem:[%s1 + $0x38] sm:$0xf]
  %v49 = vld [vmem:[%s1 + $0x3c] sm:$0xf]
  %v50 = vld [vmem:[%s1 + $0x40] sm:$0xf]
  %v51 = vld [vmem:[%s1 + $0x44] sm:$0xf]
  %v52 = vld [vmem:[%s2] sm:$0x1]
  %v54 = vperm.slane %v52, 0
  %v72 = vunpack.c.l.b16 %v18
  %v73 = vunpack.c.h.b16 %v18
  %v74 = vunpack.c.l.b16 %v19
  %v75 = vunpack.c.h.b16 %v19
  %v76 = vunpack.c.l.b16 %v20
  %v77 = vunpack.c.h.b16 %v20
  %v78 = vunpack.c.l.b16 %v21
  %v79 = vunpack.c.h.b16 %v21
  %v80 = vunpack.c.l.b16 %v22
  %v81 = vunpack.c.h.b16 %v22
  %v82 = vunpack.c.l.b16 %v23
  %v83 = vunpack.c.h.b16 %v23
  %v84 = vunpack.c.l.b16 %v24
  %v85 = vunpack.c.h.b16 %v24
  %v86 = vunpack.c.l.b16 %v25
  %v87 = vunpack.c.h.b16 %v25
  %v88 = vunpack.c.l.b16 %v26
  %v89 = vunpack.c.h.b16 %v26
  %v90 = vunpack.c.l.b16 %v27
  %v91 = vunpack.c.h.b16 %v27
  %v92 = vunpack.c.l.b16 %v28
  %v93 = vunpack.c.h.b16 %v28
  %v94 = vunpack.c.l.b16 %v29
  %v95 = vunpack.c.h.b16 %v29
  %v96 = vunpack.c.l.b16 %v30
  %v97 = vunpack.c.h.b16 %v30
  %v98 = vunpack.c.l.b16 %v31
  %v99 = vunpack.c.h.b16 %v31
  %v100 = vunpack.c.l.b16 %v32
  %v101 = vunpack.c.h.b16 %v32
  %v102 = vunpack.c.l.b16 %v33
  %v103 = vunpack.c.h.b16 %v33
  %v104 = vpack.c.b16 %v74, %v72
  %v105 = vpack.c.b16 %v75, %v73
  %v106 = vpack.c.b16 %v78, %v76
  %v107 = vpack.c.b16 %v79, %v77
  %v108 = vpack.c.b16 %v82, %v80
  %v109 = vpack.c.b16 %v83, %v81
  %v110 = vpack.c.b16 %v86, %v84
  %v111 = vpack.c.b16 %v87, %v85
  %v112 = vpack.c.b16 %v90, %v88
  %v113 = vpack.c.b16 %v91, %v89
  %v114 = vpack.c.b16 %v94, %v92
  %v115 = vpack.c.b16 %v95, %v93
  %v116 = vpack.c.b16 %v98, %v96
  %v117 = vpack.c.b16 %v99, %v97
  %v118 = vpack.c.b16 %v102, %v100
  %v119 = vpack.c.b16 %v103, %v101
  %v146 = vunpack.c.l.b16 %v34
  %v147 = vunpack.c.l.b16 %v35
  %v148 = vunpack.c.l.b16 %v36
  %v149 = vunpack.c.l.b16 %v37
  %v150 = vunpack.c.l.b16 %v38
  %v151 = vunpack.c.l.b16 %v39
  %v152 = vunpack.c.l.b16 %v40
  %v153 = vunpack.c.l.b16 %v41
  %v154 = vunpack.c.l.b16 %v42
  %v155 = vunpack.c.l.b16 %v43
  %v156 = vunpack.c.l.b16 %v44
  %v157 = vunpack.c.l.b16 %v45
  %v158 = vunpack.c.l.b16 %v46
  %v159 = vunpack.c.l.b16 %v47
  %v160 = vunpack.c.l.b16 %v48
  %v161 = vunpack.c.l.b16 %v49
  %v162 = vunpack.c.l.b16 %v50
  %v163 = vunpack.c.l.b16 %v51
  %v164 = vpack.c.b16 %v147, %v146
  %v165 = vpack.c.b16 %v149, %v148
  %v166 = vpack.c.b16 %v151, %v150
  %v167 = vpack.c.b16 %v153, %v152
  %v168 = vpack.c.b16 %v155, %v154
  %v169 = vpack.c.b16 %v157, %v156
  %v170 = vpack.c.b16 %v159, %v158
  %v171 = vpack.c.b16 %v161, %v160
  %v172 = vpack.c.b16 %v163, %v162
  %vm182 = vcmask 130048
  %v184 = vsel %vm182, %v105, 0
  %v187 = vsel %vm182, %v107, 0
  %v190 = vsel %vm182, %v109, 0
  %v193 = vsel %vm182, %v111, 0
  %v196 = vsel %vm182, %v113, 0
  %v199 = vsel %vm182, %v115, 0
  %v202 = vsel %vm182, %v117, 0
  %v205 = vsel %vm182, %v119, 0
  %207 = vmatpush.bf16.msra.mxu0 %v171
  %208 = vmatpush.bf16.msra.mxu0 %v170
  %209 = vmatpush.bf16.msra.mxu0 %v169
  %210 = vmatpush.bf16.msra.mxu0 %v168
  %211 = vmatpush.bf16.msra.mxu0 %v167
  %212 = vmatpush.bf16.msra.mxu0 %v166
  %213 = vmatpush.bf16.msra.mxu0 %v165
  %214 = vmatpush.bf16.msra.mxu0 %v164
  %215 = vmatmul.bf16.gmra.mxu0 %v104
  %v216 = vpop.f32.mrf.mxu0
  %v217 = vadd.f32 %v54, %v216
  %v218 = vpop.f32.mrf.mxu0
  %v219 = vadd.f32 %v54, %v218
  %220 = vmatmul.bf16.gmra.mxu0 %v106
  %v221 = vpop.f32.mrf.mxu0
  %v222 = vadd.f32 %v54, %v221
  %v223 = vpop.f32.mrf.mxu0
  %v224 = vadd.f32 %v54, %v223
  %225 = vmatmul.bf16.gmra.mxu0 %v108
  %v226 = vpop.f32.mrf.mxu0
  %v227 = vadd.f32 %v54, %v226
  %v228 = vpop.f32.mrf.mxu0
  %v229 = vadd.f32 %v54, %v228
  %230 = vmatmul.bf16.gmra.mxu0 %v110
  %v231 = vpop.f32.mrf.mxu0
  %v232 = vadd.f32 %v54, %v231
  %v233 = vpop.f32.mrf.mxu0
  %v234 = vadd.f32 %v54, %v233
  %235 = vmatmul.bf16.gmra.mxu0 %v112
  %v236 = vpop.f32.mrf.mxu0
  %v237 = vadd.f32 %v54, %v236
  %v238 = vpop.f32.mrf.mxu0
  %v239 = vadd.f32 %v54, %v238
  %240 = vmatmul.bf16.gmra.mxu0 %v114
  %v241 = vpop.f32.mrf.mxu0
  %v242 = vadd.f32 %v54, %v241
  %v243 = vpop.f32.mrf.mxu0
  %v244 = vadd.f32 %v54, %v243
  %245 = vmatmul.bf16.gmra.mxu0 %v116
  %v246 = vpop.f32.mrf.mxu0
  %v247 = vadd.f32 %v54, %v246
  %v248 = vpop.f32.mrf.mxu0
  %v249 = vadd.f32 %v54, %v248
  %250 = vmatmul.bf16.gmra.mxu0 %v118
  %v251 = vpop.f32.mrf.mxu0
  %v252 = vadd.f32 %v54, %v251
  %v253 = vpop.f32.mrf.mxu0
  %v254 = vadd.f32 %v54, %v253
  %255 = vdwg.mxu0
  %256 = vmatpush.bf16.msra.mxu0 0
  %257 = vmatpush.bf16.msra.mxu0 0
  %258 = vmatpush.bf16.msra.mxu0 0
  %259 = vmatpush.bf16.msra.mxu0 0
  %260 = vmatpush.bf16.msra.mxu0 0
  %261 = vmatpush.bf16.msra.mxu0 0
  %262 = vmatpush.bf16.msra.mxu0 0
  %263 = vmatpush.bf16.msra.mxu0 %v172
  %264 = vmatmul.bf16.gmra.mxu0 %v184
  %v265 = vpop.f32.mrf.mxu0
  %v266 = vadd.f32 %v217, %v265
  %v267 = vpop.f32.mrf.mxu0
  %v268 = vadd.f32 %v219, %v267
  %269 = vmatmul.bf16.gmra.mxu0 %v187
  %v270 = vpop.f32.mrf.mxu0
  %v271 = vadd.f32 %v222, %v270
  %v272 = vpop.f32.mrf.mxu0
  %v273 = vadd.f32 %v224, %v272
  %274 = vmatmul.bf16.gmra.mxu0 %v190
  %v275 = vpop.f32.mrf.mxu0
  %v276 = vadd.f32 %v227, %v275
  %v277 = vpop.f32.mrf.mxu0
  %v278 = vadd.f32 %v229, %v277
  %279 = vmatmul.bf16.gmra.mxu0 %v193
  %v280 = vpop.f32.mrf.mxu0
  %v281 = vadd.f32 %v232, %v280
  %v282 = vpop.f32.mrf.mxu0
  %v283 = vadd.f32 %v234, %v282
  %284 = vmatmul.bf16.gmra.mxu0 %v196
  %v285 = vpop.f32.mrf.mxu0
  %v286 = vadd.f32 %v237, %v285
  %v287 = vpop.f32.mrf.mxu0
  %v288 = vadd.f32 %v239, %v287
  %289 = vmatmul.bf16.gmra.mxu0 %v199
  %v290 = vpop.f32.mrf.mxu0
  %v291 = vadd.f32 %v242, %v290
  %v292 = vpop.f32.mrf.mxu0
  %v293 = vadd.f32 %v244, %v292
  %294 = vmatmul.bf16.gmra.mxu0 %v202
  %v295 = vpop.f32.mrf.mxu0
  %v296 = vadd.f32 %v247, %v295
  %v297 = vpop.f32.mrf.mxu0
  %v298 = vadd.f32 %v249, %v297
  %299 = vmatmul.bf16.gmra.mxu0 %v205
  %v300 = vpop.f32.mrf.mxu0
  %v301 = vadd.f32 %v252, %v300
  %v302 = vpop.f32.mrf.mxu0
  %v303 = vadd.f32 %v254, %v302
  %304 = vdwg.mxu0
  %v305 = vld [vmem:[%s3] sm:$0xff]
  %v306 = vld [vmem:[%s3 + $0x8] sm:$0xff]
  %v307 = vld [vmem:[%s3 + $0x10] sm:$0xff]
  %v308 = vld [vmem:[%s3 + $0x18] sm:$0xff]
  %v309 = vld [vmem:[%s3 + $0x20] sm:$0xff]
  %v310 = vld [vmem:[%s3 + $0x28] sm:$0xff]
  %v311 = vld [vmem:[%s3 + $0x30] sm:$0xff]
  %v312 = vld [vmem:[%s3 + $0x38] sm:$0xff]
  %v313 = vld [vmem:[%s3 + $0x40] sm:$0xff]
  %v314 = vld [vmem:[%s3 + $0x48] sm:$0xff]
  %v315 = vld [vmem:[%s3 + $0x50] sm:$0xff]
  %v316 = vld [vmem:[%s3 + $0x58] sm:$0xff]
  %v317 = vld [vmem:[%s3 + $0x60] sm:$0xff]
  %v318 = vld [vmem:[%s3 + $0x68] sm:$0xff]
  %v319 = vld [vmem:[%s3 + $0x70] sm:$0xff]
  %v320 = vld [vmem:[%s3 + $0x78] sm:$0xff]
  %v321 = vadd.f32 %v266, %v305
  %v322 = vadd.f32 %v268, %v306
  %v323 = vadd.f32 %v271, %v307
  %v324 = vadd.f32 %v273, %v308
  %v325 = vadd.f32 %v276, %v309
  %v326 = vadd.f32 %v278, %v310
  %v327 = vadd.f32 %v281, %v311
  %v328 = vadd.f32 %v283, %v312
  %v329 = vadd.f32 %v286, %v313
  %v330 = vadd.f32 %v288, %v314
  %v331 = vadd.f32 %v291, %v315
  %v332 = vadd.f32 %v293, %v316
  %v333 = vadd.f32 %v296, %v317
  %v334 = vadd.f32 %v298, %v318
  %v335 = vadd.f32 %v301, %v319
  %v336 = vadd.f32 %v303, %v320
  %v337 = vmax.f32 %v321, 0.0
  %v338 = vmax.f32 %v322, 0.0
  %v339 = vmax.f32 %v323, 0.0
  %v340 = vmax.f32 %v324, 0.0
  %v341 = vmax.f32 %v325, 0.0
  %v342 = vmax.f32 %v326, 0.0
  %v343 = vmax.f32 %v327, 0.0
  %v344 = vmax.f32 %v328, 0.0
  %v345 = vmax.f32 %v329, 0.0
  %v346 = vmax.f32 %v330, 0.0
  %v347 = vmax.f32 %v331, 0.0
  %v348 = vmax.f32 %v332, 0.0
  %v349 = vmax.f32 %v333, 0.0
  %v350 = vmax.f32 %v334, 0.0
  %v351 = vmax.f32 %v335, 0.0
  %v352 = vmax.f32 %v336, 0.0
  %353 = vst.msk [vmem:[%s4] sm:$0xff] %vm182, %v337
  %354 = vst.msk [vmem:[%s4 + $0x8] sm:$0xff] %vm182, %v338
  %355 = vst.msk [vmem:[%s4 + $0x10] sm:$0xff] %vm182, %v339
  %356 = vst.msk [vmem:[%s4 + $0x18] sm:$0xff] %vm182, %v340
  %357 = vst.msk [vmem:[%s4 + $0x20] sm:$0xff] %vm182, %v341
  %358 = vst.msk [vmem:[%s4 + $0x28] sm:$0xff] %vm182, %v342
  %359 = vst.msk [vmem:[%s4 + $0x30] sm:$0xff] %vm182, %v343
  %360 = vst.msk [vmem:[%s4 + $0x38] sm:$0xff] %vm182, %v344
  %361 = vst.msk [vmem:[%s4 + $0x40] sm:$0xff] %vm182, %v345
  %362 = vst.msk [vmem:[%s4 + $0x48] sm:$0xff] %vm182, %v346
  %363 = vst.msk [vmem:[%s4 + $0x50] sm:$0xff] %vm182, %v347
  %364 = vst.msk [vmem:[%s4 + $0x58] sm:$0xff] %vm182, %v348
  %365 = vst.msk [vmem:[%s4 + $0x60] sm:$0xff] %vm182, %v349
  %366 = vst.msk [vmem:[%s4 + $0x68] sm:$0xff] %vm182, %v350
  %367 = vst.msk [vmem:[%s4 + $0x70] sm:$0xff] %vm182, %v351
  %368 = vst.msk [vmem:[%s4 + $0x78] sm:$0xff] %vm182, %v352
  // Predicated region
  $region18: #{resnet_forward.19} parent=0 // pred_check
    _
  $region19: #{resnet_forward.19} parent=0 // pred_check_branch
    %370 = sbr.rel (0) target = $region21
  $region20: #{resnet_forward.19} parent=0 // pred_region
    _
  $region21: #{resnet_forward.19} parent=0 // pred_fallthru
    _
  // Predicated region
  $region22: #{resnet_forward.19} parent=0 // pred_check
    _
  $region23: #{resnet_forward.19} parent=0 // pred_check_branch
    %372 = sbr.rel (0) target = $region25
  $region24: #{resnet_forward.19} parent=0 // pred_region
    _
  $region25: #{resnet_forward.19} parent=0 // pred_fallthru
    _

// kernel: resnet_forward.21
$region0: #{resnet_forward.21}
  #allocation0 [shape = 'u32[]', space=smem, size = 0x4, offset = 0x4, fixed_abs, tag = 'smem constant byte address 0x4 - core index']
  #allocation1 [shape = 'u32[72,128]{1,0:T(1,128)}', space=vmem, size = 0x9000, scoped, tag = 'internal scratch']
  %s0 = inlined_call_operand.vmem [shape: bf16[128,144], index: 0, kind: input, shape index: {}]
  %s1 = inlined_call_operand.vmem [shape: bf16[144,16], index: 1, kind: input, shape index: {}]
  %s2 = inlined_call_operand.vmem [shape: f32[1,16], index: 2, kind: input, shape index: {}]
  %s3 = inlined_call_operand.vmem [shape: f32[128,16], index: 3, kind: input, shape index: {}]
  %s4 = inlined_call_operand.vmem [shape: f32[128,16], index: 4, kind: output, shape index: {}]
  %s5 = sld [smem:[#allocation0]]
  $region26: #{resnet_forward.21} parent=0
    _
  %s7 = ssub.s32 1, %s5
  %s8 = scalar_select 0, %s7, %s5
  // Predicated region
  $region2: #{resnet_forward.21} parent=0 // pred_check
    _
  $region3: #{resnet_forward.21} parent=0 // pred_check_branch
    %10 = sbr.rel (0) target = $region5
  $region4: #{resnet_forward.21} parent=0 // pred_region
    _
  $region5: #{resnet_forward.21} parent=0 // pred_fallthru
    _
  // Predicated region
  $region6: #{resnet_forward.21} parent=0 // pred_check
    _
  $region7: #{resnet_forward.21} parent=0 // pred_check_branch
    %12 = sbr.rel (0) target = $region9
  $region8: #{resnet_forward.21} parent=0 // pred_region
    _
  $region9: #{resnet_forward.21} parent=0 // pred_fallthru
    _
  // Predicated region
  $region10: #{resnet_forward.21} parent=0 // pred_check
    _
  $region11: #{resnet_forward.21} parent=0 // pred_check_branch
    %14 = sbr.rel (0) target = $region13
  $region12: #{resnet_forward.21} parent=0 // pred_region
    _
  $region13: #{resnet_forward.21} parent=0 // pred_fallthru
    _
  // Predicated region
  $region14: #{resnet_forward.21} parent=0 // pred_check
    _
  $region15: #{resnet_forward.21} parent=0 // pred_check_branch
    %16 = sbr.rel (0) target = $region17
  $region16: #{resnet_forward.21} parent=0 // pred_region
    _
  $region17: #{resnet_forward.21} parent=0 // pred_fallthru
    _
  %v18 = vld [vmem:[%s0] sm:$0xff]
  %v19 = vld [vmem:[%s0 + $0x8] sm:$0xff]
  %v20 = vld [vmem:[%s0 + $0x10] sm:$0xff]
  %v21 = vld [vmem:[%s0 + $0x18] sm:$0xff]
  %v22 = vld [vmem:[%s0 + $0x20] sm:$0xff]
  %v23 = vld [vmem:[%s0 + $0x28] sm:$0xff]
  %v24 = vld [vmem:[%s0 + $0x30] sm:$0xff]
  %v25 = vld [vmem:[%s0 + $0x38] sm:$0xff]
  %v26 = vld [vmem:[%s0 + $0x40] sm:$0xff]
  %v27 = vld [vmem:[%s0 + $0x48] sm:$0xff]
  %v28 = vld [vmem:[%s0 + $0x50] sm:$0xff]
  %v29 = vld [vmem:[%s0 + $0x58] sm:$0xff]
  %v30 = vld [vmem:[%s0 + $0x60] sm:$0xff]
  %v31 = vld [vmem:[%s0 + $0x68] sm:$0xff]
  %v32 = vld [vmem:[%s0 + $0x70] sm:$0xff]
  %v33 = vld [vmem:[%s0 + $0x78] sm:$0xff]
  %v34 = vld [vmem:[%s1] sm:$0xf]
  %v35 = vld [vmem:[%s1 + $0x4] sm:$0xf]
  %v36 = vld [vmem:[%s1 + $0x8] sm:$0xf]
  %v37 = vld [vmem:[%s1 + $0xc] sm:$0xf]
  %v38 = vld [vmem:[%s1 + $0x10] sm:$0xf]
  %v39 = vld [vmem:[%s1 + $0x14] sm:$0xf]
  %v40 = vld [vmem:[%s1 + $0x18] sm:$0xf]
  %v41 = vld [vmem:[%s1 + $0x1c] sm:$0xf]
  %v42 = vld [vmem:[%s1 + $0x20] sm:$0xf]
  %v43 = vld [vmem:[%s1 + $0x24] sm:$0xf]
  %v44 = vld [vmem:[%s1 + $0x28] sm:$0xf]
  %v45 = vld [vmem:[%s1 + $0x2c] sm:$0xf]
  %v46 = vld [vmem:[%s1 + $0x30] sm:$0xf]
  %v47 = vld [vmem:[%s1 + $0x34] sm:$0xf]
  %v48 = vld [vmem:[%s1 + $0x38] sm:$0xf]
  %v49 = vld [vmem:[%s1 + $0x3c] sm:$0xf]
  %v50 = vld [vmem:[%s1 + $0x40] sm:$0xf]
  %v51 = vld [vmem:[%s1 + $0x44] sm:$0xf]
  %v52 = vld [vmem:[%s2] sm:$0x1]
  %v54 = vperm.slane %v52, 0
  %v72 = vunpack.c.l.b16 %v18
  %v73 = vunpack.c.h.b16 %v18
  %v74 = vunpack.c.l.b16 %v19
  %v75 = vunpack.c.h.b16 %v19
  %v76 = vunpack.c.l.b16 %v20
  %v77 = vunpack.c.h.b16 %v20
  %v78 = vunpack.c.l.b16 %v21
  %v79 = vunpack.c.h.b16 %v21
  %v80 = vunpack.c.l.b16 %v22
  %v81 = vunpack.c.h.b16 %v22
  %v82 = vunpack.c.l.b16 %v23
  %v83 = vunpack.c.h.b16 %v23
  %v84 = vunpack.c.l.b16 %v24
  %v85 = vunpack.c.h.b16 %v24
  %v86 = vunpack.c.l.b16 %v25
  %v87 = vunpack.c.h.b16 %v25
  %v88 = vunpack.c.l.b16 %v26
  %v89 = vunpack.c.h.b16 %v26
  %v90 = vunpack.c.l.b16 %v27
  %v91 = vunpack.c.h.b16 %v27
  %v92 = vunpack.c.l.b16 %v28
  %v93 = vunpack.c.h.b16 %v28
  %v94 = vunpack.c.l.b16 %v29
  %v95 = vunpack.c.h.b16 %v29
  %v96 = vunpack.c.l.b16 %v30
  %v97 = vunpack.c.h.b16 %v30
  %v98 = vunpack.c.l.b16 %v31
  %v99 = vunpack.c.h.b16 %v31
  %v100 = vunpack.c.l.b16 %v32
  %v101 = vunpack.c.h.b16 %v32
  %v102 = vunpack.c.l.b16 %v33
  %v103 = vunpack.c.h.b16 %v33
  %v104 = vpack.c.b16 %v74, %v72
  %v105 = vpack.c.b16 %v75, %v73
  %v106 = vpack.c.b16 %v78, %v76
  %v107 = vpack.c.b16 %v79, %v77
  %v108 = vpack.c.b16 %v82, %v80
  %v109 = vpack.c.b16 %v83, %v81
  %v110 = vpack.c.b16 %v86, %v84
  %v111 = vpack.c.b16 %v87, %v85
  %v112 = vpack.c.b16 %v90, %v88
  %v113 = vpack.c.b16 %v91, %v89
  %v114 = vpack.c.b16 %v94, %v92
  %v115 = vpack.c.b16 %v95, %v93
  %v116 = vpack.c.b16 %v98, %v96
  %v117 = vpack.c.b16 %v99, %v97
  %v118 = vpack.c.b16 %v102, %v100
  %v119 = vpack.c.b16 %v103, %v101
  %v146 = vunpack.c.l.b16 %v34
  %v147 = vunpack.c.l.b16 %v35
  %v148 = vunpack.c.l.b16 %v36
  %v149 = vunpack.c.l.b16 %v37
  %v150 = vunpack.c.l.b16 %v38
  %v151 = vunpack.c.l.b16 %v39
  %v152 = vunpack.c.l.b16 %v40
  %v153 = vunpack.c.l.b16 %v41
  %v154 = vunpack.c.l.b16 %v42
  %v155 = vunpack.c.l.b16 %v43
  %v156 = vunpack.c.l.b16 %v44
  %v157 = vunpack.c.l.b16 %v45
  %v158 = vunpack.c.l.b16 %v46
  %v159 = vunpack.c.l.b16 %v47
  %v160 = vunpack.c.l.b16 %v48
  %v161 = vunpack.c.l.b16 %v49
  %v162 = vunpack.c.l.b16 %v50
  %v163 = vunpack.c.l.b16 %v51
  %v164 = vpack.c.b16 %v147, %v146
  %v165 = vpack.c.b16 %v149, %v148
  %v166 = vpack.c.b16 %v151, %v150
  %v167 = vpack.c.b16 %v153, %v152
  %v168 = vpack.c.b16 %v155, %v154
  %v169 = vpack.c.b16 %v157, %v156
  %v170 = vpack.c.b16 %v159, %v158
  %v171 = vpack.c.b16 %v161, %v160
  %v172 = vpack.c.b16 %v163, %v162
  %vm182 = vcmask 130048
  %v184 = vsel %vm182, %v105, 0
  %v187 = vsel %vm182, %v107, 0
  %v190 = vsel %vm182, %v109, 0
  %v193 = vsel %vm182, %v111, 0
  %v196 = vsel %vm182, %v113, 0
  %v199 = vsel %vm182, %v115, 0
  %v202 = vsel %vm182, %v117, 0
  %v205 = vsel %vm182, %v119, 0
  %207 = vmatpush.bf16.msra.mxu0 %v171
  %208 = vmatpush.bf16.msra.mxu0 %v170
  %209 = vmatpush.bf16.msra.mxu0 %v169
  %210 = vmatpush.bf16.msra.mxu0 %v168
  %211 = vmatpush.bf16.msra.mxu0 %v167
  %212 = vmatpush.bf16.msra.mxu0 %v166
  %213 = vmatpush.bf16.msra.mxu0 %v165
  %214 = vmatpush.bf16.msra.mxu0 %v164
  %215 = vmatmul.bf16.gmra.mxu0 %v104
  %v216 = vpop.f32.mrf.mxu0
  %v217 = vadd.f32 %v54, %v216
  %v218 = vpop.f32.mrf.mxu0
  %v219 = vadd.f32 %v54, %v218
  %220 = vmatmul.bf16.gmra.mxu0 %v106
  %v221 = vpop.f32.mrf.mxu0
  %v222 = vadd.f32 %v54, %v221
  %v223 = vpop.f32.mrf.mxu0
  %v224 = vadd.f32 %v54, %v223
  %225 = vmatmul.bf16.gmra.mxu0 %v108
  %v226 = vpop.f32.mrf.mxu0
  %v227 = vadd.f32 %v54, %v226
  %v228 = vpop.f32.mrf.mxu0
  %v229 = vadd.f32 %v54, %v228
  %230 = vmatmul.bf16.gmra.mxu0 %v110
  %v231 = vpop.f32.mrf.mxu0
  %v232 = vadd.f32 %v54, %v231
  %v233 = vpop.f32.mrf.mxu0
  %v234 = vadd.f32 %v54, %v233
  %235 = vmatmul.bf16.gmra.mxu0 %v112
  %v236 = vpop.f32.mrf.mxu0
  %v237 = vadd.f32 %v54, %v236
  %v238 = vpop.f32.mrf.mxu0
  %v239 = vadd.f32 %v54, %v238
  %240 = vmatmul.bf16.gmra.mxu0 %v114
  %v241 = vpop.f32.mrf.mxu0
  %v242 = vadd.f32 %v54, %v241
  %v243 = vpop.f32.mrf.mxu0
  %v244 = vadd.f32 %v54, %v243
  %245 = vmatmul.bf16.gmra.mxu0 %v116
  %v246 = vpop.f32.mrf.mxu0
  %v247 = vadd.f32 %v54, %v246
  %v248 = vpop.f32.mrf.mxu0
  %v249 = vadd.f32 %v54, %v248
  %250 = vmatmul.bf16.gmra.mxu0 %v118
  %v251 = vpop.f32.mrf.mxu0
  %v252 = vadd.f32 %v54, %v251
  %v253 = vpop.f32.mrf.mxu0
  %v254 = vadd.f32 %v54, %v253
  %255 = vdwg.mxu0
  %256 = vmatpush.bf16.msra.mxu0 0
  %257 = vmatpush.bf16.msra.mxu0 0
  %258 = vmatpush.bf16.msra.mxu0 0
  %259 = vmatpush.bf16.msra.mxu0 0
  %260 = vmatpush.bf16.msra.mxu0 0
  %261 = vmatpush.bf16.msra.mxu0 0
  %262 = vmatpush.bf16.msra.mxu0 0
  %263 = vmatpush.bf16.msra.mxu0 %v172
  %264 = vmatmul.bf16.gmra.mxu0 %v184
  %v265 = vpop.f32.mrf.mxu0
  %v266 = vadd.f32 %v217, %v265
  %v267 = vpop.f32.mrf.mxu0
  %v268 = vadd.f32 %v219, %v267
  %269 = vmatmul.bf16.gmra.mxu0 %v187
  %v270 = vpop.f32.mrf.mxu0
  %v271 = vadd.f32 %v222, %v270
  %v272 = vpop.f32.mrf.mxu0
  %v273 = vadd.f32 %v224, %v272
  %274 = vmatmul.bf16.gmra.mxu0 %v190
  %v275 = vpop.f32.mrf.mxu0
  %v276 = vadd.f32 %v227, %v275
  %v277 = vpop.f32.mrf.mxu0
  %v278 = vadd.f32 %v229, %v277
  %279 = vmatmul.bf16.gmra.mxu0 %v193
  %v280 = vpop.f32.mrf.mxu0
  %v281 = vadd.f32 %v232, %v280
  %v282 = vpop.f32.mrf.mxu0
  %v283 = vadd.f32 %v234, %v282
  %284 = vmatmul.bf16.gmra.mxu0 %v196
  %v285 = vpop.f32.mrf.mxu0
  %v286 = vadd.f32 %v237, %v285
  %v287 = vpop.f32.mrf.mxu0
  %v288 = vadd.f32 %v239, %v287
  %289 = vmatmul.bf16.gmra.mxu0 %v199
  %v290 = vpop.f32.mrf.mxu0
  %v291 = vadd.f32 %v242, %v290
  %v292 = vpop.f32.mrf.mxu0
  %v293 = vadd.f32 %v244, %v292
  %294 = vmatmul.bf16.gmra.mxu0 %v202
  %v295 = vpop.f32.mrf.mxu0
  %v296 = vadd.f32 %v247, %v295
  %v297 = vpop.f32.mrf.mxu0
  %v298 = vadd.f32 %v249, %v297
  %299 = vmatmul.bf16.gmra.mxu0 %v205
  %v300 = vpop.f32.mrf.mxu0
  %v301 = vadd.f32 %v252, %v300
  %v302 = vpop.f32.mrf.mxu0
  %v303 = vadd.f32 %v254, %v302
  %304 = vdwg.mxu0
  %v305 = vld [vmem:[%s3] sm:$0xff]
  %v306 = vld [vmem:[%s3 + $0x8] sm:$0xff]
  %v307 = vld [vmem:[%s3 + $0x10] sm:$0xff]
  %v308 = vld [vmem:[%s3 + $0x18] sm:$0xff]
  %v309 = vld [vmem:[%s3 + $0x20] sm:$0xff]
  %v310 = vld [vmem:[%s3 + $0x28] sm:$0xff]
  %v311 = vld [vmem:[%s3 + $0x30] sm:$0xff]
  %v312 = vld [vmem:[%s3 + $0x38] sm:$0xff]
  %v313 = vld [vmem:[%s3 + $0x40] sm:$0xff]
  %v314 = vld [vmem:[%s3 + $0x48] sm:$0xff]
  %v315 = vld [vmem:[%s3 + $0x50] sm:$0xff]
  %v316 = vld [vmem:[%s3 + $0x58] sm:$0xff]
  %v317 = vld [vmem:[%s3 + $0x60] sm:$0xff]
  %v318 = vld [vmem:[%s3 + $0x68] sm:$0xff]
  %v319 = vld [vmem:[%s3 + $0x70] sm:$0xff]
  %v320 = vld [vmem:[%s3 + $0x78] sm:$0xff]
  %v321 = vadd.f32 %v266, %v305
  %v322 = vadd.f32 %v268, %v306
  %v323 = vadd.f32 %v271, %v307
  %v324 = vadd.f32 %v273, %v308
  %v325 = vadd.f32 %v276, %v309
  %v326 = vadd.f32 %v278, %v310
  %v327 = vadd.f32 %v281, %v311
  %v328 = vadd.f32 %v283, %v312
  %v329 = vadd.f32 %v286, %v313
  %v330 = vadd.f32 %v288, %v314
  %v331 = vadd.f32 %v291, %v315
  %v332 = vadd.f32 %v293, %v316
  %v333 = vadd.f32 %v296, %v317
  %v334 = vadd.f32 %v298, %v318
  %v335 = vadd.f32 %v301, %v319
  %v336 = vadd.f32 %v303, %v320
  %337 = vst.msk [vmem:[%s4] sm:$0xff] %vm182, %v321
  %338 = vst.msk [vmem:[%s4 + $0x8] sm:$0xff] %vm182, %v322
  %339 = vst.msk [vmem:[%s4 + $0x10] sm:$0xff] %vm182, %v323
  %340 = vst.msk [vmem:[%s4 + $0x18] sm:$0xff] %vm182, %v324
  %341 = vst.msk [vmem:[%s4 + $0x20] sm:$0xff] %vm182, %v325
  %342 = vst.msk [vmem:[%s4 + $0x28] sm:$0xff] %vm182, %v326
  %343 = vst.msk [vmem:[%s4 + $0x30] sm:$0xff] %vm182, %v327
  %344 = vst.msk [vmem:[%s4 + $0x38] sm:$0xff] %vm182, %v328
  %345 = vst.msk [vmem:[%s4 + $0x40] sm:$0xff] %vm182, %v329
  %346 = vst.msk [vmem:[%s4 + $0x48] sm:$0xff] %vm182, %v330
  %347 = vst.msk [vmem:[%s4 + $0x50] sm:$0xff] %vm182, %v331
  %348 = vst.msk [vmem:[%s4 + $0x58] sm:$0xff] %vm182, %v332
  %349 = vst.msk [vmem:[%s4 + $0x60] sm:$0xff] %vm182, %v333
  %350 = vst.msk [vmem:[%s4 + $0x68] sm:$0xff] %vm182, %v334
  %351 = vst.msk [vmem:[%s4 + $0x70] sm:$0xff] %vm182, %v335
  %352 = vst.msk [vmem:[%s4 + $0x78] sm:$0xff] %vm182, %v336
  // Predicated region
  $region18: #{resnet_forward.21} parent=0 // pred_check
    _
  $region19: #{resnet_forward.21} parent=0 // pred_check_branch
    %354 = sbr.rel (0) target = $region21
  $region20: #{resnet_forward.21} parent=0 // pred_region
    _
  $region21: #{resnet_forward.21} parent=0 // pred_fallthru
    _
  // Predicated region
  $region22: #{resnet_forward.21} parent=0 // pred_check
    _
  $region23: #{resnet_forward.21} parent=0 // pred_check_branch
    %356 = sbr.rel (0) target = $region25
  $region24: #{resnet_forward.21} parent=0 // pred_region
    _
  $region25: #{resnet_forward.21} parent=0 // pred_fallthru
    _

// kernel: resnet_forward.22
$region0: #{resnet_forward.22}
  #allocation0 [shape = 'u32[]', space=smem, size = 0x4, offset = 0x4, fixed_abs, tag = 'smem constant byte address 0x4 - core index']
  #allocation1 [shape = 'u32[72,128]{1,0:T(1,128)}', space=vmem, size = 0x9000, scoped, tag = 'internal scratch']
  %s0 = inlined_call_operand.vmem [shape: bf16[32,144], index: 0, kind: input, shape index: {}]
  %s1 = inlined_call_operand.vmem [shape: bf16[144,32], index: 1, kind: input, shape index: {}]
  %s2 = inlined_call_operand.vmem [shape: f32[1,32], index: 2, kind: input, shape index: {}]
  %s3 = inlined_call_operand.vmem [shape: f32[32,32], index: 3, kind: output, shape index: {}]
  %s4 = sld [smem:[#allocation0]]
  $region22: #{resnet_forward.22} parent=0
    _
  %s6 = ssub.s32 1, %s4
  %s7 = scalar_select 0, %s6, %s4
  // Predicated region
  $region2: #{resnet_forward.22} parent=0 // pred_check
    _
  $region3: #{resnet_forward.22} parent=0 // pred_check_branch
    %9 = sbr.rel (0) target = $region5
  $region4: #{resnet_forward.22} parent=0 // pred_region
    _
  $region5: #{resnet_forward.22} parent=0 // pred_fallthru
    _
  // Predicated region
  $region6: #{resnet_forward.22} parent=0 // pred_check
    _
  $region7: #{resnet_forward.22} parent=0 // pred_check_branch
    %11 = sbr.rel (0) target = $region9
  $region8: #{resnet_forward.22} parent=0 // pred_region
    _
  $region9: #{resnet_forward.22} parent=0 // pred_fallthru
    _
  // Predicated region
  $region10: #{resnet_forward.22} parent=0 // pred_check
    _
  $region11: #{resnet_forward.22} parent=0 // pred_check_branch
    %13 = sbr.rel (0) target = $region13
  $region12: #{resnet_forward.22} parent=0 // pred_region
    _
  $region13: #{resnet_forward.22} parent=0 // pred_fallthru
    _
  %v15 = vld [vmem:[%s0] sm:$0xff]
  %v16 = vld [vmem:[%s0 + $0x8] sm:$0xff]
  %v17 = vld [vmem:[%s0 + $0x10] sm:$0xff]
  %v18 = vld [vmem:[%s0 + $0x18] sm:$0xff]
  %v19 = vld [vmem:[%s1] sm:$0xf]
  %v20 = vld [vmem:[%s1 + $0x4] sm:$0xf]
  %v21 = vld [vmem:[%s1 + $0x8] sm:$0xf]
  %v22 = vld [vmem:[%s1 + $0xc] sm:$0xf]
  %v23 = vld [vmem:[%s1 + $0x10] sm:$0xf]
  %v24 = vld [vmem:[%s1 + $0x14] sm:$0xf]
  %v25 = vld [vmem:[%s1 + $0x18] sm:$0xf]
  %v26 = vld [vmem:[%s1 + $0x1c] sm:$0xf]
  %v27 = vld [vmem:[%s1 + $0x20] sm:$0xf]
  %v28 = vld [vmem:[%s1 + $0x24] sm:$0xf]
  %v29 = vld [vmem:[%s1 + $0x28] sm:$0xf]
  %v30 = vld [vmem:[%s1 + $0x2c] sm:$0xf]
  %v31 = vld [vmem:[%s1 + $0x30] sm:$0xf]
  %v32 = vld [vmem:[%s1 + $0x34] sm:$0xf]
  %v33 = vld [vmem:[%s1 + $0x38] sm:$0xf]
  %v34 = vld [vmem:[%s1 + $0x3c] sm:$0xf]
  %v35 = vld [vmem:[%s1 + $0x40] sm:$0xf]
  %v36 = vld [vmem:[%s1 + $0x44] sm:$0xf]
  %v37 = vld [vmem:[%s2] sm:$0x1]
  %v39 = vperm.slane %v37, 0
  %v45 = vunpack.c.l.b16 %v15
  %v46 = vunpack.c.h.b16 %v15
  %v47 = vunpack.c.l.b16 %v16
  %v48 = vunpack.c.h.b16 %v16
  %v49 = vunpack.c.l.b16 %v17
  %v50 = vunpack.c.h.b16 %v17
  %v51 = vunpack.c.l.b16 %v18
  %v52 = vunpack.c.h.b16 %v18
  %v53 = vpack.c.b16 %v47, %v45
  %v54 = vpack.c.b16 %v48, %v46
  %v55 = vpack.c.b16 %v51, %v49
  %v56 = vpack.c.b16 %v52, %v50
  %v77 = vunpack.c.l.b16 %v19
  %v78 = vunpack.c.l.b16 %v20
  %v79 = vunpack.c.l.b16 %v21
  %v80 = vunpack.c.l.b16 %v22
  %v81 = vunpack.c.l.b16 %v23
  %v82 = vunpack.c.l.b16 %v24
  %v83 = vunpack.c.l.b16 %v25
  %v84 = vunpack.c.l.b16 %v26
  %v85 = vunpack.c.l.b16 %v27
  %v86 = vunpack.c.l.b16 %v28
  %v87 = vunpack.c.l.b16 %v29
  %v88 = vunpack.c.l.b16 %v30
  %v89 = vunpack.c.l.b16 %v31
  %v90 = vunpack.c.l.b16 %v32
  %v91 = vunpack.c.l.b16 %v33
  %v92 = vunpack.c.l.b16 %v34
  %v93 = vunpack.c.l.b16 %v35
  %v94 = vunpack.c.l.b16 %v36
  %v95 = vpack.c.b16 %v78, %v77
  %v96 = vpack.c.b16 %v80, %v79
  %v97 = vpack.c.b16 %v82, %v81
  %v98 = vpack.c.b16 %v84, %v83
  %v99 = vpack.c.b16 %v86, %v85
  %v100 = vpack.c.b16 %v88, %v87
  %v101 = vpack.c.b16 %v90, %v89
  %v102 = vpack.c.b16 %v92, %v91
  %v103 = vpack.c.b16 %v94, %v93
  %vm113 = vcmask 130048
  %v115 = vsel %vm113, %v54, 0
  %v118 = vsel %vm113, %v56, 0
  %120 = vmatpush.bf16.msra.mxu0 %v102
  %121 = vmatpush.bf16.msra.mxu0 %v101
  %122 = vmatpush.bf16.msra.mxu0 %v100
  %123 = vmatpush.bf16.msra.mxu0 %v99
  %124 = vmatpush.bf16.msra.mxu0 %v98
  %125 = vmatpush.bf16.msra.mxu0 %v97
  %126 = vmatpush.bf16.msra.mxu0 %v96
  %127 = vmatpush.bf16.msra.mxu0 %v95
  %128 = vmatmul.bf16.gmra.mxu0 %v53
  %v129 = vpop.f32.mrf.mxu0
  %v130 = vadd.f32 %v39, %v129
  %v131 = vpop.f32.mrf.mxu0
  %v132 = vadd.f32 %v39, %v131
  %133 = vmatmul.bf16.gmra.mxu0 %v55
  %v134 = vpop.f32.mrf.mxu0
  %v135 = vadd.f32 %v39, %v134
  %v136 = vpop.f32.mrf.mxu0
  %v137 = vadd.f32 %v39, %v136
  %138 = vdwg.mxu0
  %139 = vmatpush.bf16.msra.mxu0 0
  %140 = vmatpush.bf16.msra.mxu0 0
  %141 = vmatpush.bf16.msra.mxu0 0
  %142 = vmatpush.bf16.msra.mxu0 0
  %143 = vmatpush.bf16.msra.mxu0 0
  %144 = vmatpush.bf16.msra.mxu0 0
  %145 = vmatpush.bf16.msra.mxu0 0
  %146 = vmatpush.bf16.msra.mxu0 %v103
  %147 = vmatmul.bf16.gmra.mxu0 %v115
  %v148 = vpop.f32.mrf.mxu0
  %v149 = vadd.f32 %v130, %v148
  %v150 = vpop.f32.mrf.mxu0
  %v151 = vadd.f32 %v132, %v150
  %152 = vmatmul.bf16.gmra.mxu0 %v118
  %v153 = vpop.f32.mrf.mxu0
  %v154 = vadd.f32 %v135, %v153
  %v155 = vpop.f32.mrf.mxu0
  %v156 = vadd.f32 %v137, %v155
  %157 = vdwg.mxu0
  %v158 = vmax.f32 %v149, 0.0
  %v159 = vmax.f32 %v151, 0.0
  %v160 = vmax.f32 %v154, 0.0
  %v161 = vmax.f32 %v156, 0.0
  %vm162 = vcmask 261120
  %163 = vst.msk [vmem:[%s3] sm:$0xff] %vm162, %v158
  %164 = vst.msk [vmem:[%s3 + $0x8] sm:$0xff] %vm162, %v159
  %165 = vst.msk [vmem:[%s3 + $0x10] sm:$0xff] %vm162, %v160
  %166 = vst.msk [vmem:[%s3 + $0x18] sm:$0xff] %vm162, %v161
  // Predicated region
  $region14: #{resnet_forward.22} parent=0 // pred_check
    _
  $region15: #{resnet_forward.22} parent=0 // pred_check_branch
    %168 = sbr.rel (0) target = $region17
  $region16: #{resnet_forward.22} parent=0 // pred_region
    _
  $region17: #{resnet_forward.22} parent=0 // pred_fallthru
    _
  // Predicated region
  $region18: #{resnet_forward.22} parent=0 // pred_check
    _
  $region19: #{resnet_forward.22} parent=0 // pred_check_branch
    %170 = sbr.rel (0) target = $region21
  $region20: #{resnet_forward.22} parent=0 // pred_region
    _
  $region21: #{resnet_forward.22} parent=0 // pred_fallthru
    _

// kernel: resnet_forward.25
$region0: #{resnet_forward.25}
  #allocation0 [shape = 'u32[]', space=smem, size = 0x4, offset = 0x4, fixed_abs, tag = 'smem constant byte address 0x4 - core index']
  #allocation1 [shape = 'u32[72,128]{1,0:T(1,128)}', space=vmem, size = 0x9000, scoped, tag = 'internal scratch']
  %s0 = inlined_call_operand.vmem [shape: bf16[32,288], index: 0, kind: input, shape index: {}]
  %s1 = inlined_call_operand.vmem [shape: bf16[288,32], index: 1, kind: input, shape index: {}]
  %s2 = inlined_call_operand.vmem [shape: f32[1,32], index: 2, kind: input, shape index: {}]
  %s3 = inlined_call_operand.vmem [shape: f32[32,32], index: 3, kind: input, shape index: {}]
  %s4 = inlined_call_operand.vmem [shape: f32[32,32], index: 4, kind: output, shape index: {}]
  %s5 = sld [smem:[#allocation0]]
  $region26: #{resnet_forward.25} parent=0
    _
  %s7 = ssub.s32 1, %s5
  %s8 = scalar_select 0, %s7, %s5
  // Predicated region
  $region2: #{resnet_forward.25} parent=0 // pred_check
    _
  $region3: #{resnet_forward.25} parent=0 // pred_check_branch
    %10 = sbr.rel (0) target = $region5
  $region4: #{resnet_forward.25} parent=0 // pred_region
    _
  $region5: #{resnet_forward.25} parent=0 // pred_fallthru
    _
  // Predicated region
  $region6: #{resnet_forward.25} parent=0 // pred_check
    _
  $region7: #{resnet_forward.25} parent=0 // pred_check_branch
    %12 = sbr.rel (0) target = $region9
  $region8: #{resnet_forward.25} parent=0 // pred_region
    _
  $region9: #{resnet_forward.25} parent=0 // pred_fallthru
    _
  // Predicated region
  $region10: #{resnet_forward.25} parent=0 // pred_check
    _
  $region11: #{resnet_forward.25} parent=0 // pred_check_branch
    %14 = sbr.rel (0) target = $region13
  $region12: #{resnet_forward.25} parent=0 // pred_region
    _
  $region13: #{resnet_forward.25} parent=0 // pred_fallthru
    _
  // Predicated region
  $region14: #{resnet_forward.25} parent=0 // pred_check
    _
  $region15: #{resnet_forward.25} parent=0 // pred_check_branch
    %16 = sbr.rel (0) target = $region17
  $region16: #{resnet_forward.25} parent=0 // pred_region
    _
  $region17: #{resnet_forward.25} parent=0 // pred_fallthru
    _
  %v18 = vld [vmem:[%s0] sm:$0xff]
  %v19 = vld [vmem:[%s0 + $0x8] sm:$0xf]
  %v20 = vld [vmem:[%s0 + $0xc] sm:$0xff]
  %v21 = vld [vmem:[%s0 + $0x14] sm:$0xf]
  %v22 = vld [vmem:[%s0 + $0x18] sm:$0xff]
  %v23 = vld [vmem:[%s0 + $0x20] sm:$0xf]
  %v24 = vld [vmem:[%s0 + $0x24] sm:$0xff]
  %v25 = vld [vmem:[%s0 + $0x2c] sm:$0xf]
  %v26 = vld [vmem:[%s1] sm:$0xf]
  %v27 = vld [vmem:[%s1 + $0x4] sm:$0xf]
  %v28 = vld [vmem:[%s1 + $0x8] sm:$0xf]
  %v29 = vld [vmem:[%s1 + $0xc] sm:$0xf]
  %v30 = vld [vmem:[%s1 + $0x10] sm:$0xf]
  %v31 = vld [vmem:[%s1 + $0x14] sm:$0xf]
  %v32 = vld [vmem:[%s1 + $0x18] sm:$0xf]
  %v33 = vld [vmem:[%s1 + $0x1c] sm:$0xf]
  %v34 = vld [vmem:[%s1 + $0x20] sm:$0xf]
  %v35 = vld [vmem:[%s1 + $0x24] sm:$0xf]
  %v36 = vld [vmem:[%s1 + $0x28] sm:$0xf]
  %v37 = vld [vmem:[%s1 + $0x2c] sm:$0xf]
  %v38 = vld [vmem:[%s1 + $0x30] sm:$0xf]
  %v39 = vld [vmem:[%s1 + $0x34] sm:$0xf]
  %v40 = vld [vmem:[%s1 + $0x38] sm:$0xf]
  %v41 = vld [vmem:[%s1 + $0x3c] sm:$0xf]
  %v42 = vld [vmem:[%s1 + $0x40] sm:$0xf]
  %v43 = vld [vmem:[%s1 + $0x44] sm:$0xf]
  %v44 = vld [vmem:[%s1 + $0x48] sm:$0xf]
  %v45 = vld [vmem:[%s1 + $0x4c] sm:$0xf]
  %v46 = vld [vmem:[%s1 + $0x50] sm:$0xf]
  %v47 = vld [vmem:[%s1 + $0x54] sm:$0xf]
  %v48 = vld [vmem:[%s1 + $0x58] sm:$0xf]
  %v49 = vld [vmem:[%s1 + $0x5c] sm:$0xf]
  %v50 = vld [vmem:[%s1 + $0x60] sm:$0xf]
  %v51 = vld [vmem:[%s1 + $0x64] sm:$0xf]
  %v52 = vld [vmem:[%s1 + $0x68] sm:$0xf]
  %v53 = vld [vmem:[%s1 + $0x6c] sm:$0xf]
  %v54 = vld [vmem:[%s1 + $0x70] sm:$0xf]
  %v55 = vld [vmem:[%s1 + $0x74] sm:$0xf]
  %v56 = vld [vmem:[%s1 + $0x78] sm:$0xf]
  %v57 = vld [vmem:[%s1 + $0x7c] sm:$0xf]
  %v58 = vld [vmem:[%s1 + $0x80] sm:$0xf]
  %v59 = vld [vmem:[%s1 + $0x84] sm:$0xf]
  %v60 = vld [vmem:[%s1 + $0x88] sm:$0xf]
  %v61 = vld [vmem:[%s1 + $0x8c] sm:$0xf]
  %v62 = vld [vmem:[%s2] sm:$0x1]
  %v64 = vperm.slane %v62, 0
  %v74 = vunpack.c.l.b16 %v18
  %v75 = vunpack.c.h.b16 %v18
  %v76 = vunpack.c.l.b16 %v19
  %v77 = vunpack.c.l.b16 %v20
  %v78 = vunpack.c.h.b16 %v20
  %v79 = vunpack.c.l.b16 %v21
  %v80 = vunpack.c.l.b16 %v22
  %v81 = vunpack.c.h.b16 %v22
  %v82 = vunpack.c.l.b16 %v23
  %v83 = vunpack.c.l.b16 %v24
  %v84 = vunpack.c.h.b16 %v24
  %v85 = vunpack.c.l.b16 %v25
  %v86 = vpack.c.b16 %v77, %v74
  %v87 = vpack.c.b16 %v78, %v75
  %v88 = vpack.c.b16 %v79, %v76
  %v89 = vpack.c.b16 %v83, %v80
  %v90 = vpack.c.b16 %v84, %v81
  %v91 = vpack.c.b16 %v85, %v82
  %v132 = vunpack.c.l.b16 %v26
  %v133 = vunpack.c.l.b16 %v27
  %v134 = vunpack.c.l.b16 %v28
  %v135 = vunpack.c.l.b16 %v29
  %v136 = vunpack.c.l.b16 %v30
  %v137 = vunpack.c.l.b16 %v31
  %v138 = vunpack.c.l.b16 %v32
  %v139 = vunpack.c.l.b16 %v33
  %v140 = vunpack.c.l.b16 %v34
  %v141 = vunpack.c.l.b16 %v35
  %v142 = vunpack.c.l.b16 %v36
  %v143 = vunpack.c.l.b16 %v37
  %v144 = vunpack.c.l.b16 %v38
  %v145 = vunpack.c.l.b16 %v39
  %v146 = vunpack.c.l.b16 %v40
  %v147 = vunpack.c.l.b16 %v41
  %v148 = vunpack.c.l.b16 %v42
  %v149 = vunpack.c.l.b16 %v43
  %v150 = vunpack.c.l.b16 %v44
  %v151 = vunpack.c.l.b16 %v45
  %v152 = vunpack.c.l.b16 %v46
  %v153 = vunpack.c.l.b16 %v47
  %v154 = vunpack.c.l.b16 %v48
  %v155 = vunpack.c.l.b16 %v49
  %v156 = vunpack.c.l.b16 %v50
  %v157 = vunpack.c.l.b16 %v51
  %v158 = vunpack.c.l.b16 %v52
  %v159 = vunpack.c.l.b16 %v53
  %v160 = vunpack.c.l.b16 %v54
  %v161 = vunpack.c.l.b16 %v55
  %v162 = vunpack.c.l.b16 %v56
  %v163 = vunpack.c.l.b16 %v57
  %v164 = vunpack.c.l.b16 %v58
  %v165 = vunpack.c.l.b16 %v59
  %v166 = vunpack.c.l.b16 %v60
  %v167 = vunpack.c.l.b16 %v61
  %v168 = vpack.c.b16 %v133, %v132
  %v169 = vpack.c.b16 %v135, %v134
  %v170 = vpack.c.b16 %v137, %v136
  %v171 = vpack.c.b16 %v139, %v138
  %v172 = vpack.c.b16 %v141, %v140
  %v173 = vpack.c.b16 %v143, %v142
  %v174 = vpack.c.b16 %v145, %v144
  %v175 = vpack.c.b16 %v147, %v146
  %v176 = vpack.c.b16 %v149, %v148
  %v177 = vpack.c.b16 %v151, %v150
  %v178 = vpack.c.b16 %v153, %v152
  %v179 = vpack.c.b16 %v155, %v154
  %v180 = vpack.c.b16 %v157, %v156
  %v181 = vpack.c.b16 %v159, %v158
  %v182 = vpack.c.b16 %v161, %v160
  %v183 = vpack.c.b16 %v163, %v162
  %v184 = vpack.c.b16 %v165, %v164
  %v185 = vpack.c.b16 %v167, %v166
  %vm204 = vcmask 261120
  %v206 = vsel %vm204, %v88, 0
  %v209 = vsel %vm204, %v91, 0
  %211 = vmatpush.bf16.msra.mxu0 %v175
  %212 = vmatpush.bf16.msra.mxu0 %v174
  %213 = vmatpush.bf16.msra.mxu0 %v173
  %214 = vmatpush.bf16.msra.mxu0 %v172
  %215 = vmatpush.bf16.msra.mxu0 %v171
  %216 = vmatpush.bf16.msra.mxu0 %v170
  %217 = vmatpush.bf16.msra.mxu0 %v169
  %218 = vmatpush.bf16.msra.mxu0 %v168
  %219 = vmatmul.bf16.gmra.mxu0 %v86
  %v220 = vpop.f32.mrf.mxu0
  %v221 = vadd.f32 %v64, %v220
  %v222 = vpop.f32.mrf.mxu0
  %v223 = vadd.f32 %v64, %v222
  %224 = vmatmul.bf16.gmra.mxu0 %v89
  %v225 = vpop.f32.mrf.mxu0
  %v226 = vadd.f32 %v64, %v225
  %v227 = vpop.f32.mrf.mxu0
  %v228 = vadd.f32 %v64, %v227
  %229 = vdwg.mxu0
  %230 = vmatpush.bf16.msra.mxu0 %v183
  %231 = vmatpush.bf16.msra.mxu0 %v182
  %232 = vmatpush.bf16.msra.mxu0 %v181
  %233 = vmatpush.bf16.msra.mxu0 %v180
  %234 = vmatpush.bf16.msra.mxu0 %v179
  %235 = vmatpush.bf16.msra.mxu0 %v178
  %236 = vmatpush.bf16.msra.mxu0 %v177
  %237 = vmatpush.bf16.msra.mxu0 %v176
  %238 = vmatmul.bf16.gmra.mxu0 %v87
  %v239 = vpop.f32.mrf.mxu0
  %v240 = vadd.f32 %v221, %v239
  %v241 = vpop.f32.mrf.mxu0
  %v242 = vadd.f32 %v223, %v241
  %243 = vmatmul.bf16.gmra.mxu0 %v90
  %v244 = vpop.f32.mrf.mxu0
  %v245 = vadd.f32 %v226, %v244
  %v246 = vpop.f32.mrf.mxu0
  %v247 = vadd.f32 %v228, %v246
  %248 = vdwg.mxu0
  %249 = vmatpush.bf16.msra.mxu0 0
  %250 = vmatpush.bf16.msra.mxu0 0
  %251 = vmatpush.bf16.msra.mxu0 0
  %252 = vmatpush.bf16.msra.mxu0 0
  %253 = vmatpush.bf16.msra.mxu0 0
  %254 = vmatpush.bf16.msra.mxu0 0
  %255 = vmatpush.bf16.msra.mxu0 %v185
  %256 = vmatpush.bf16.msra.mxu0 %v184
  %257 = vmatmul.bf16.gmra.mxu0 %v206
  %v258 = vpop.f32.mrf.mxu0
  %v259 = vadd.f32 %v240, %v258
  %v260 = vpop.f32.mrf.mxu0
  %v261 = vadd.f32 %v242, %v260
  %262 = vmatmul.bf16.gmra.mxu0 %v209
  %v263 = vpop.f32.mrf.mxu0
  %v264 = vadd.f32 %v245, %v263
  %v265 = vpop.f32.mrf.mxu0
  %v266 = vadd.f32 %v247, %v265
  %267 = vdwg.mxu0
  %v268 = vld [vmem:[%s3] sm:$0xff]
  %v269 = vld [vmem:[%s3 + $0x8] sm:$0xff]
  %v270 = vld [vmem:[%s3 + $0x10] sm:$0xff]
  %v271 = vld [vmem:[%s3 + $0x18] sm:$0xff]
  %v272 = vadd.f32 %v259, %v268
  %v273 = vadd.f32 %v261, %v269
  %v274 = vadd.f32 %v264, %v270
  %v275 = vadd.f32 %v266, %v271
  %276 = vst.msk [vmem:[%s4] sm:$0xff] %vm204, %v272
  %277 = vst.msk [vmem:[%s4 + $0x8] sm:$0xff] %vm204, %v273
  %278 = vst.msk [vmem:[%s4 + $0x10] sm:$0xff] %vm204, %v274
  %279 = vst.msk [vmem:[%s4 + $0x18] sm:$0xff] %vm204, %v275
  // Predicated region
  $region18: #{resnet_forward.25} parent=0 // pred_check
    _
  $region19: #{resnet_forward.25} parent=0 // pred_check_branch
    %281 = sbr.rel (0) target = $region21
  $region20: #{resnet_forward.25} parent=0 // pred_region
    _
  $region21: #{resnet_forward.25} parent=0 // pred_fallthru
    _
  // Predicated region
  $region22: #{resnet_forward.25} parent=0 // pred_check
    _
  $region23: #{resnet_forward.25} parent=0 // pred_check_branch
    %283 = sbr.rel (0) target = $region25
  $region24: #{resnet_forward.25} parent=0 // pred_region
    _
  $region25: #{resnet_forward.25} parent=0 // pred_fallthru
    _

// kernel: resnet_forward.23
$region0: #{resnet_forward.23}
  #allocation0 [shape = 'u32[]', space=smem, size = 0x4, offset = 0x4, fixed_abs, tag = 'smem constant byte address 0x4 - core index']
  #allocation1 [shape = 'u32[72,128]{1,0:T(1,128)}', space=vmem, size = 0x9000, scoped, tag = 'internal scratch']
  %s0 = inlined_call_operand.vmem [shape: bf16[32,288], index: 0, kind: input, shape index: {}]
  %s1 = inlined_call_operand.vmem [shape: bf16[288,32], index: 1, kind: input, shape index: {}]
  %s2 = inlined_call_operand.vmem [shape: f32[1,32], index: 2, kind: input, shape index: {}]
  %s3 = inlined_call_operand.vmem [shape: bf16[32,16], index: 3, kind: input, shape index: {}]
  %s4 = inlined_call_operand.vmem [shape: bf16[16,32], index: 4, kind: input, shape index: {}]
  %s5 = inlined_call_operand.vmem [shape: f32[32,32], index: 5, kind: output, shape index: {}]
  %s6 = sld [smem:[#allocation0]]
  $region30: #{resnet_forward.23} parent=0
    _
  %s8 = ssub.s32 1, %s6
  %s9 = scalar_select 0, %s8, %s6
  // Predicated region
  $region2: #{resnet_forward.23} parent=0 // pred_check
    _
  $region3: #{resnet_forward.23} parent=0 // pred_check_branch
    %11 = sbr.rel (0) target = $region5
  $region4: #{resnet_forward.23} parent=0 // pred_region
    _
  $region5: #{resnet_forward.23} parent=0 // pred_fallthru
    _
  // Predicated region
  $region6: #{resnet_forward.23} parent=0 // pred_check
    _
  $region7: #{resnet_forward.23} parent=0 // pred_check_branch
    %13 = sbr.rel (0) target = $region9
  $region8: #{resnet_forward.23} parent=0 // pred_region
    _
  $region9: #{resnet_forward.23} parent=0 // pred_fallthru
    _
  // Predicated region
  $region10: #{resnet_forward.23} parent=0 // pred_check
    _
  $region11: #{resnet_forward.23} parent=0 // pred_check_branch
    %15 = sbr.rel (0) target = $region13
  $region12: #{resnet_forward.23} parent=0 // pred_region
    _
  $region13: #{resnet_forward.23} parent=0 // pred_fallthru
    _
  // Predicated region
  $region14: #{resnet_forward.23} parent=0 // pred_check
    _
  $region15: #{resnet_forward.23} parent=0 // pred_check_branch
    %17 = sbr.rel (0) target = $region17
  $region16: #{resnet_forward.23} parent=0 // pred_region
    _
  $region17: #{resnet_forward.23} parent=0 // pred_fallthru
    _
  // Predicated region
  $region18: #{resnet_forward.23} parent=0 // pred_check
    _
  $region19: #{resnet_forward.23} parent=0 // pred_check_branch
    %19 = sbr.rel (0) target = $region21
  $region20: #{resnet_forward.23} parent=0 // pred_region
    _
  $region21: #{resnet_forward.23} parent=0 // pred_fallthru
    _
  %v21 = vld [vmem:[%s0] sm:$0xff]
  %v22 = vld [vmem:[%s0 + $0x8] sm:$0xf]
  %v23 = vld [vmem:[%s0 + $0xc] sm:$0xff]
  %v24 = vld [vmem:[%s0 + $0x14] sm:$0xf]
  %v25 = vld [vmem:[%s0 + $0x18] sm:$0xff]
  %v26 = vld [vmem:[%s0 + $0x20] sm:$0xf]
  %v27 = vld [vmem:[%s0 + $0x24] sm:$0xff]
  %v28 = vld [vmem:[%s0 + $0x2c] sm:$0xf]
  %v29 = vld [vmem:[%s1] sm:$0xf]
  %v30 = vld [vmem:[%s1 + $0x4] sm:$0xf]
  %v31 = vld [vmem:[%s1 + $0x8] sm:$0xf]
  %v32 = vld [vmem:[%s1 + $0xc] sm:$0xf]
  %v33 = vld [vmem:[%s1 + $0x10] sm:$0xf]
  %v34 = vld [vmem:[%s1 + $0x14] sm:$0xf]
  %v35 = vld [vmem:[%s1 + $0x18] sm:$0xf]
  %v36 = vld [vmem:[%s1 + $0x1c] sm:$0xf]
  %v37 = vld [vmem:[%s1 + $0x20] sm:$0xf]
  %v38 = vld [vmem:[%s1 + $0x24] sm:$0xf]
  %v39 = vld [vmem:[%s1 + $0x28] sm:$0xf]
  %v40 = vld [vmem:[%s1 + $0x2c] sm:$0xf]
  %v41 = vld [vmem:[%s1 + $0x30] sm:$0xf]
  %v42 = vld [vmem:[%s1 + $0x34] sm:$0xf]
  %v43 = vld [vmem:[%s1 + $0x38] sm:$0xf]
  %v44 = vld [vmem:[%s1 + $0x3c] sm:$0xf]
  %v45 = vld [vmem:[%s1 + $0x40] sm:$0xf]
  %v46 = vld [vmem:[%s1 + $0x44] sm:$0xf]
  %v47 = vld [vmem:[%s1 + $0x48] sm:$0xf]
  %v48 = vld [vmem:[%s1 + $0x4c] sm:$0xf]
  %v49 = vld [vmem:[%s1 + $0x50] sm:$0xf]
  %v50 = vld [vmem:[%s1 + $0x54] sm:$0xf]
  %v51 = vld [vmem:[%s1 + $0x58] sm:$0xf]
  %v52 = vld [vmem:[%s1 + $0x5c] sm:$0xf]
  %v53 = vld [vmem:[%s1 + $0x60] sm:$0xf]
  %v54 = vld [vmem:[%s1 + $0x64] sm:$0xf]
  %v55 = vld [vmem:[%s1 + $0x68] sm:$0xf]
  %v56 = vld [vmem:[%s1 + $0x6c] sm:$0xf]
  %v57 = vld [vmem:[%s1 + $0x70] sm:$0xf]
  %v58 = vld [vmem:[%s1 + $0x74] sm:$0xf]
  %v59 = vld [vmem:[%s1 + $0x78] sm:$0xf]
  %v60 = vld [vmem:[%s1 + $0x7c] sm:$0xf]
  %v61 = vld [vmem:[%s1 + $0x80] sm:$0xf]
  %v62 = vld [vmem:[%s1 + $0x84] sm:$0xf]
  %v63 = vld [vmem:[%s1 + $0x88] sm:$0xf]
  %v64 = vld [vmem:[%s1 + $0x8c] sm:$0xf]
  %v65 = vld [vmem:[%s3] sm:$0xf]
  %v66 = vld [vmem:[%s3 + $0x4] sm:$0xf]
  %v67 = vld [vmem:[%s3 + $0x8] sm:$0xf]
  %v68 = vld [vmem:[%s3 + $0xc] sm:$0xf]
  %v69 = vld [vmem:[%s4] sm:$0xf]
  %v70 = vld [vmem:[%s4 + $0x4] sm:$0xf]
  %v75 = vunpack.c.l.b16 %v65
  %v76 = vunpack.c.l.b16 %v66
  %v77 = vunpack.c.l.b16 %v67
  %v78 = vunpack.c.l.b16 %v68
  %v79 = vpack.c.b16 %v76, %v75
  %v80 = vpack.c.b16 %v78, %v77
  %v83 = vunpack.c.l.b16 %v69
  %v84 = vunpack.c.l.b16 %v70
  %v85 = vpack.c.b16 %v84, %v83
  %vm87 = vcmask 130048
  %v89 = vsel %vm87, %v79, 0
  %v92 = vsel %vm87, %v80, 0
  %94 = vmatpush.bf16.msra.mxu0 0
  %95 = vmatpush.bf16.msra.mxu0 0
  %96 = vmatpush.bf16.msra.mxu0 0
  %97 = vmatpush.bf16.msra.mxu0 0
  %98 = vmatpush.bf16.msra.mxu0 0
  %99 = vmatpush.bf16.msra.mxu0 0
  %100 = vmatpush.bf16.msra.mxu0 0
  %101 = vmatpush.bf16.msra.mxu0 %v85
  %102 = vmatmul.bf16.gmra.mxu0 %v89
  %v103 = vpop.f32.mrf.mxu0
  %v104 = vadd.f32 0.0, %v103
  %v105 = vpop.f32.mrf.mxu0
  %v106 = vadd.f32 0.0, %v105
  %107 = vmatmul.bf16.gmra.mxu0 %v92
  %v108 = vpop.f32.mrf.mxu0
  %v109 = vadd.f32 0.0, %v108
  %v110 = vpop.f32.mrf.mxu0
  %v111 = vadd.f32 0.0, %v110
  %112 = vdwg.mxu0
  %v121 = vunpack.c.l.b16 %v21
  %v122 = vunpack.c.h.b16 %v21
  %v123 = vunpack.c.l.b16 %v22
  %v124 = vunpack.c.l.b16 %v23
  %v125 = vunpack.c.h.b16 %v23
  %v126 = vunpack.c.l.b16 %v24
  %v127 = vunpack.c.l.b16 %v25
  %v128 = vunpack.c.h.b16 %v25
  %v129 = vunpack.c.l.b16 %v26
  %v130 = vunpack.c.l.b16 %v27
  %v131 = vunpack.c.h.b16 %v27
  %v132 = vunpack.c.l.b16 %v28
  %v133 = vpack.c.b16 %v124, %v121
  %v134 = vpack.c.b16 %v125, %v122
  %v135 = vpack.c.b16 %v126, %v123
  %v136 = vpack.c.b16 %v130, %v127
  %v137 = vpack.c.b16 %v131, %v128
  %v138 = vpack.c.b16 %v132, %v129
  %v179 = vunpack.c.l.b16 %v29
  %v180 = vunpack.c.l.b16 %v30
  %v181 = vunpack.c.l.b16 %v31
  %v182 = vunpack.c.l.b16 %v32
  %v183 = vunpack.c.l.b16 %v33
  %v184 = vunpack.c.l.b16 %v34
  %v185 = vunpack.c.l.b16 %v35
  %v186 = vunpack.c.l.b16 %v36
  %v187 = vunpack.c.l.b16 %v37
  %v188 = vunpack.c.l.b16 %v38
  %v189 = vunpack.c.l.b16 %v39
  %v190 = vunpack.c.l.b16 %v40
  %v191 = vunpack.c.l.b16 %v41
  %v192 = vunpack.c.l.b16 %v42
  %v193 = vunpack.c.l.b16 %v43
  %v194 = vunpack.c.l.b16 %v44
  %v195 = vunpack.c.l.b16 %v45
  %v196 = vunpack.c.l.b16 %v46
  %v197 = vunpack.c.l.b16 %v47
  %v198 = vunpack.c.l.b16 %v48
  %v199 = vunpack.c.l.b16 %v49
  %v200 = vunpack.c.l.b16 %v50
  %v201 = vunpack.c.l.b16 %v51
  %v202 = vunpack.c.l.b16 %v52
  %v203 = vunpack.c.l.b16 %v53
  %v204 = vunpack.c.l.b16 %v54
  %v205 = vunpack.c.l.b16 %v55
  %v206 = vunpack.c.l.b16 %v56
  %v207 = vunpack.c.l.b16 %v57
  %v208 = vunpack.c.l.b16 %v58
  %v209 = vunpack.c.l.b16 %v59
  %v210 = vunpack.c.l.b16 %v60
  %v211 = vunpack.c.l.b16 %v61
  %v212 = vunpack.c.l.b16 %v62
  %v213 = vunpack.c.l.b16 %v63
  %v214 = vunpack.c.l.b16 %v64
  %v215 = vpack.c.b16 %v180, %v179
  %v216 = vpack.c.b16 %v182, %v181
  %v217 = vpack.c.b16 %v184, %v183
  %v218 = vpack.c.b16 %v186, %v185
  %v219 = vpack.c.b16 %v188, %v187
  %v220 = vpack.c.b16 %v190, %v189
  %v221 = vpack.c.b16 %v192, %v191
  %v222 = vpack.c.b16 %v194, %v193
  %v223 = vpack.c.b16 %v196, %v195
  %v224 = vpack.c.b16 %v198, %v197
  %v225 = vpack.c.b16 %v200, %v199
  %v226 = vpack.c.b16 %v202, %v201
  %v227 = vpack.c.b16 %v204, %v203
  %v228 = vpack.c.b16 %v206, %v205
  %v229 = vpack.c.b16 %v208, %v207
  %v230 = vpack.c.b16 %v210, %v209
  %v231 = vpack.c.b16 %v212, %v211
  %v232 = vpack.c.b16 %v214, %v213
  %vm251 = vcmask 261120
  %v253 = vsel %vm251, %v135, 0
  %v256 = vsel %vm251, %v138, 0
  %258 = vmatpush.bf16.msra.mxu0 %v222
  %259 = vmatpush.bf16.msra.mxu0 %v221
  %260 = vmatpush.bf16.msra.mxu0 %v220
  %261 = vmatpush.bf16.msra.mxu0 %v219
  %262 = vmatpush.bf16.msra.mxu0 %v218
  %263 = vmatpush.bf16.msra.mxu0 %v217
  %264 = vmatpush.bf16.msra.mxu0 %v216
  %265 = vmatpush.bf16.msra.mxu0 %v215
  %266 = vmatmul.bf16.gmra.mxu0 %v133
  %v267 = vpop.f32.mrf.mxu0
  %v268 = vadd.f32 %v104, %v267
  %v269 = vpop.f32.mrf.mxu0
  %v270 = vadd.f32 %v106, %v269
  %271 = vmatmul.bf16.gmra.mxu0 %v136
  %v272 = vpop.f32.mrf.mxu0
  %v273 = vadd.f32 %v109, %v272
  %v274 = vpop.f32.mrf.mxu0
  %v275 = vadd.f32 %v111, %v274
  %276 = vdwg.mxu0
  %277 = vmatpush.bf16.msra.mxu0 %v230
  %278 = vmatpush.bf16.msra.mxu0 %v229
  %279 = vmatpush.bf16.msra.mxu0 %v228
  %280 = vmatpush.bf16.msra.mxu0 %v227
  %281 = vmatpush.bf16.msra.mxu0 %v226
  %282 = vmatpush.bf16.msra.mxu0 %v225
  %283 = vmatpush.bf16.msra.mxu0 %v224
  %284 = vmatpush.bf16.msra.mxu0 %v223
  %285 = vmatmul.bf16.gmra.mxu0 %v134
  %v286 = vpop.f32.mrf.mxu0
  %v287 = vadd.f32 %v268, %v286
  %v288 = vpop.f32.mrf.mxu0
  %v289 = vadd.f32 %v270, %v288
  %290 = vmatmul.bf16.gmra.mxu0 %v137
  %v291 = vpop.f32.mrf.mxu0
  %v292 = vadd.f32 %v273, %v291
  %v293 = vpop.f32.mrf.mxu0
  %v294 = vadd.f32 %v275, %v293
  %295 = vdwg.mxu0
  %296 = vmatpush.bf16.msra.mxu0 0
  %297 = vmatpush.bf16.msra.mxu0 0
  %298 = vmatpush.bf16.msra.mxu0 0
  %299 = vmatpush.bf16.msra.mxu0 0
  %300 = vmatpush.bf16.msra.mxu0 0
  %301 = vmatpush.bf16.msra.mxu0 0
  %302 = vmatpush.bf16.msra.mxu0 %v232
  %303 = vmatpush.bf16.msra.mxu0 %v231
  %304 = vmatmul.bf16.gmra.mxu0 %v253
  %v305 = vpop.f32.mrf.mxu0
  %v306 = vadd.f32 %v287, %v305
  %v307 = vpop.f32.mrf.mxu0
  %v308 = vadd.f32 %v289, %v307
  %309 = vmatmul.bf16.gmra.mxu0 %v256
  %v310 = vpop.f32.mrf.mxu0
  %v311 = vadd.f32 %v292, %v310
  %v312 = vpop.f32.mrf.mxu0
  %v313 = vadd.f32 %v294, %v312
  %314 = vdwg.mxu0
  %v315 = vld [vmem:[%s2] sm:$0x1]
  %v317 = vperm.slane %v315, 0
  %v319 = vadd.f32 %v306, %v317
  %v320 = vadd.f32 %v308, %v317
  %v321 = vadd.f32 %v311, %v317
  %v322 = vadd.f32 %v313, %v317
  %v323 = vmax.f32 %v319, 0.0
  %v324 = vmax.f32 %v320, 0.0
  %v325 = vmax.f32 %v321, 0.0
  %v326 = vmax.f32 %v322, 0.0
  %327 = vst.msk [vmem:[%s5] sm:$0xff] %vm251, %v323
  %328 = vst.msk [vmem:[%s5 + $0x8] sm:$0xff] %vm251, %v324
  %329 = vst.msk [vmem:[%s5 + $0x10] sm:$0xff] %vm251, %v325
  %330 = vst.msk [vmem:[%s5 + $0x18] sm:$0xff] %vm251, %v326
  // Predicated region
  $region22: #{resnet_forward.23} parent=0 // pred_check
    _
  $region23: #{resnet_forward.23} parent=0 // pred_check_branch
    %332 = sbr.rel (0) target = $region25
  $region24: #{resnet_forward.23} parent=0 // pred_region
    _
  $region25: #{resnet_forward.23} parent=0 // pred_fallthru
    _
  // Predicated region
  $region26: #{resnet_forward.23} parent=0 // pred_check
    _
  $region27: #{resnet_forward.23} parent=0 // pred_check_branch
    %334 = sbr.rel (0) target = $region29
  $region28: #{resnet_forward.23} parent=0 // pred_region
    _
  $region29: #{resnet_forward.23} parent=0 // pred_fallthru
    _

// kernel: resnet_forward.24
$region0: #{resnet_forward.24}
  #allocation0 [shape = 'u32[]', space=smem, size = 0x4, offset = 0x4, fixed_abs, tag = 'smem constant byte address 0x4 - core index']
  #allocation1 [shape = 'u32[72,128]{1,0:T(1,128)}', space=vmem, size = 0x9000, scoped, tag = 'internal scratch']
  %s0 = inlined_call_operand.vmem [shape: bf16[32,288], index: 0, kind: input, shape index: {}]
  %s1 = inlined_call_operand.vmem [shape: bf16[288,32], index: 1, kind: input, shape index: {}]
  %s2 = inlined_call_operand.vmem [shape: f32[1,32], index: 2, kind: input, shape index: {}]
  %s3 = inlined_call_operand.vmem [shape: f32[32,32], index: 3, kind: output, shape index: {}]
  %s4 = sld [smem:[#allocation0]]
  $region22: #{resnet_forward.24} parent=0
    _
  %s6 = ssub.s32 1, %s4
  %s7 = scalar_select 0, %s6, %s4
  // Predicated region
  $region2: #{resnet_forward.24} parent=0 // pred_check
    _
  $region3: #{resnet_forward.24} parent=0 // pred_check_branch
    %9 = sbr.rel (0) target = $region5
  $region4: #{resnet_forward.24} parent=0 // pred_region
    _
  $region5: #{resnet_forward.24} parent=0 // pred_fallthru
    _
  // Predicated region
  $region6: #{resnet_forward.24} parent=0 // pred_check
    _
  $region7: #{resnet_forward.24} parent=0 // pred_check_branch
    %11 = sbr.rel (0) target = $region9
  $region8: #{resnet_forward.24} parent=0 // pred_region
    _
  $region9: #{resnet_forward.24} parent=0 // pred_fallthru
    _
  // Predicated region
  $region10: #{resnet_forward.24} parent=0 // pred_check
    _
  $region11: #{resnet_forward.24} parent=0 // pred_check_branch
    %13 = sbr.rel (0) target = $region13
  $region12: #{resnet_forward.24} parent=0 // pred_region
    _
  $region13: #{resnet_forward.24} parent=0 // pred_fallthru
    _
  %v15 = vld [vmem:[%s0] sm:$0xff]
  %v16 = vld [vmem:[%s0 + $0x8] sm:$0xf]
  %v17 = vld [vmem:[%s0 + $0xc] sm:$0xff]
  %v18 = vld [vmem:[%s0 + $0x14] sm:$0xf]
  %v19 = vld [vmem:[%s0 + $0x18] sm:$0xff]
  %v20 = vld [vmem:[%s0 + $0x20] sm:$0xf]
  %v21 = vld [vmem:[%s0 + $0x24] sm:$0xff]
  %v22 = vld [vmem:[%s0 + $0x2c] sm:$0xf]
  %v23 = vld [vmem:[%s1] sm:$0xf]
  %v24 = vld [vmem:[%s1 + $0x4] sm:$0xf]
  %v25 = vld [vmem:[%s1 + $0x8] sm:$0xf]
  %v26 = vld [vmem:[%s1 + $0xc] sm:$0xf]
  %v27 = vld [vmem:[%s1 + $0x10] sm:$0xf]
  %v28 = vld [vmem:[%s1 + $0x14] sm:$0xf]
  %v29 = vld [vmem:[%s1 + $0x18] sm:$0xf]
  %v30 = vld [vmem:[%s1 + $0x1c] sm:$0xf]
  %v31 = vld [vmem:[%s1 + $0x20] sm:$0xf]
  %v32 = vld [vmem:[%s1 + $0x24] sm:$0xf]
  %v33 = vld [vmem:[%s1 + $0x28] sm:$0xf]
  %v34 = vld [vmem:[%s1 + $0x2c] sm:$0xf]
  %v35 = vld [vmem:[%s1 + $0x30] sm:$0xf]
  %v36 = vld [vmem:[%s1 + $0x34] sm:$0xf]
  %v37 = vld [vmem:[%s1 + $0x38] sm:$0xf]
  %v38 = vld [vmem:[%s1 + $0x3c] sm:$0xf]
  %v39 = vld [vmem:[%s1 + $0x40] sm:$0xf]
  %v40 = vld [vmem:[%s1 + $0x44] sm:$0xf]
  %v41 = vld [vmem:[%s1 + $0x48] sm:$0xf]
  %v42 = vld [vmem:[%s1 + $0x4c] sm:$0xf]
  %v43 = vld [vmem:[%s1 + $0x50] sm:$0xf]
  %v44 = vld [vmem:[%s1 + $0x54] sm:$0xf]
  %v45 = vld [vmem:[%s1 + $0x58] sm:$0xf]
  %v46 = vld [vmem:[%s1 + $0x5c] sm:$0xf]
  %v47 = vld [vmem:[%s1 + $0x60] sm:$0xf]
  %v48 = vld [vmem:[%s1 + $0x64] sm:$0xf]
  %v49 = vld [vmem:[%s1 + $0x68] sm:$0xf]
  %v50 = vld [vmem:[%s1 + $0x6c] sm:$0xf]
  %v51 = vld [vmem:[%s1 + $0x70] sm:$0xf]
  %v52 = vld [vmem:[%s1 + $0x74] sm:$0xf]
  %v53 = vld [vmem:[%s1 + $0x78] sm:$0xf]
  %v54 = vld [vmem:[%s1 + $0x7c] sm:$0xf]
  %v55 = vld [vmem:[%s1 + $0x80] sm:$0xf]
  %v56 = vld [vmem:[%s1 + $0x84] sm:$0xf]
  %v57 = vld [vmem:[%s1 + $0x88] sm:$0xf]
  %v58 = vld [vmem:[%s1 + $0x8c] sm:$0xf]
  %v59 = vld [vmem:[%s2] sm:$0x1]
  %v61 = vperm.slane %v59, 0
  %v71 = vunpack.c.l.b16 %v15
  %v72 = vunpack.c.h.b16 %v15
  %v73 = vunpack.c.l.b16 %v16
  %v74 = vunpack.c.l.b16 %v17
  %v75 = vunpack.c.h.b16 %v17
  %v76 = vunpack.c.l.b16 %v18
  %v77 = vunpack.c.l.b16 %v19
  %v78 = vunpack.c.h.b16 %v19
  %v79 = vunpack.c.l.b16 %v20
  %v80 = vunpack.c.l.b16 %v21
  %v81 = vunpack.c.h.b16 %v21
  %v82 = vunpack.c.l.b16 %v22
  %v83 = vpack.c.b16 %v74, %v71
  %v84 = vpack.c.b16 %v75, %v72
  %v85 = vpack.c.b16 %v76, %v73
  %v86 = vpack.c.b16 %v80, %v77
  %v87 = vpack.c.b16 %v81, %v78
  %v88 = vpack.c.b16 %v82, %v79
  %v129 = vunpack.c.l.b16 %v23
  %v130 = vunpack.c.l.b16 %v24
  %v131 = vunpack.c.l.b16 %v25
  %v132 = vunpack.c.l.b16 %v26
  %v133 = vunpack.c.l.b16 %v27
  %v134 = vunpack.c.l.b16 %v28
  %v135 = vunpack.c.l.b16 %v29
  %v136 = vunpack.c.l.b16 %v30
  %v137 = vunpack.c.l.b16 %v31
  %v138 = vunpack.c.l.b16 %v32
  %v139 = vunpack.c.l.b16 %v33
  %v140 = vunpack.c.l.b16 %v34
  %v141 = vunpack.c.l.b16 %v35
  %v142 = vunpack.c.l.b16 %v36
  %v143 = vunpack.c.l.b16 %v37
  %v144 = vunpack.c.l.b16 %v38
  %v145 = vunpack.c.l.b16 %v39
  %v146 = vunpack.c.l.b16 %v40
  %v147 = vunpack.c.l.b16 %v41
  %v148 = vunpack.c.l.b16 %v42
  %v149 = vunpack.c.l.b16 %v43
  %v150 = vunpack.c.l.b16 %v44
  %v151 = vunpack.c.l.b16 %v45
  %v152 = vunpack.c.l.b16 %v46
  %v153 = vunpack.c.l.b16 %v47
  %v154 = vunpack.c.l.b16 %v48
  %v155 = vunpack.c.l.b16 %v49
  %v156 = vunpack.c.l.b16 %v50
  %v157 = vunpack.c.l.b16 %v51
  %v158 = vunpack.c.l.b16 %v52
  %v159 = vunpack.c.l.b16 %v53
  %v160 = vunpack.c.l.b16 %v54
  %v161 = vunpack.c.l.b16 %v55
  %v162 = vunpack.c.l.b16 %v56
  %v163 = vunpack.c.l.b16 %v57
  %v164 = vunpack.c.l.b16 %v58
  %v165 = vpack.c.b16 %v130, %v129
  %v166 = vpack.c.b16 %v132, %v131
  %v167 = vpack.c.b16 %v134, %v133
  %v168 = vpack.c.b16 %v136, %v135
  %v169 = vpack.c.b16 %v138, %v137
  %v170 = vpack.c.b16 %v140, %v139
  %v171 = vpack.c.b16 %v142, %v141
  %v172 = vpack.c.b16 %v144, %v143
  %v173 = vpack.c.b16 %v146, %v145
  %v174 = vpack.c.b16 %v148, %v147
  %v175 = vpack.c.b16 %v150, %v149
  %v176 = vpack.c.b16 %v152, %v151
  %v177 = vpack.c.b16 %v154, %v153
  %v178 = vpack.c.b16 %v156, %v155
  %v179 = vpack.c.b16 %v158, %v157
  %v180 = vpack.c.b16 %v160, %v159
  %v181 = vpack.c.b16 %v162, %v161
  %v182 = vpack.c.b16 %v164, %v163
  %vm201 = vcmask 261120
  %v203 = vsel %vm201, %v85, 0
  %v206 = vsel %vm201, %v88, 0
  %208 = vmatpush.bf16.msra.mxu0 %v172
  %209 = vmatpush.bf16.msra.mxu0 %v171
  %210 = vmatpush.bf16.msra.mxu0 %v170
  %211 = vmatpush.bf16.msra.mxu0 %v169
  %212 = vmatpush.bf16.msra.mxu0 %v168
  %213 = vmatpush.bf16.msra.mxu0 %v167
  %214 = vmatpush.bf16.msra.mxu0 %v166
  %215 = vmatpush.bf16.msra.mxu0 %v165
  %216 = vmatmul.bf16.gmra.mxu0 %v83
  %v217 = vpop.f32.mrf.mxu0
  %v218 = vadd.f32 %v61, %v217
  %v219 = vpop.f32.mrf.mxu0
  %v220 = vadd.f32 %v61, %v219
  %221 = vmatmul.bf16.gmra.mxu0 %v86
  %v222 = vpop.f32.mrf.mxu0
  %v223 = vadd.f32 %v61, %v222
  %v224 = vpop.f32.mrf.mxu0
  %v225 = vadd.f32 %v61, %v224
  %226 = vdwg.mxu0
  %227 = vmatpush.bf16.msra.mxu0 %v180
  %228 = vmatpush.bf16.msra.mxu0 %v179
  %229 = vmatpush.bf16.msra.mxu0 %v178
  %230 = vmatpush.bf16.msra.mxu0 %v177
  %231 = vmatpush.bf16.msra.mxu0 %v176
  %232 = vmatpush.bf16.msra.mxu0 %v175
  %233 = vmatpush.bf16.msra.mxu0 %v174
  %234 = vmatpush.bf16.msra.mxu0 %v173
  %235 = vmatmul.bf16.gmra.mxu0 %v84
  %v236 = vpop.f32.mrf.mxu0
  %v237 = vadd.f32 %v218, %v236
  %v238 = vpop.f32.mrf.mxu0
  %v239 = vadd.f32 %v220, %v238
  %240 = vmatmul.bf16.gmra.mxu0 %v87
  %v241 = vpop.f32.mrf.mxu0
  %v242 = vadd.f32 %v223, %v241
  %v243 = vpop.f32.mrf.mxu0
  %v244 = vadd.f32 %v225, %v243
  %245 = vdwg.mxu0
  %246 = vmatpush.bf16.msra.mxu0 0
  %247 = vmatpush.bf16.msra.mxu0 0
  %248 = vmatpush.bf16.msra.mxu0 0
  %249 = vmatpush.bf16.msra.mxu0 0
  %250 = vmatpush.bf16.msra.mxu0 0
  %251 = vmatpush.bf16.msra.mxu0 0
  %252 = vmatpush.bf16.msra.mxu0 %v182
  %253 = vmatpush.bf16.msra.mxu0 %v181
  %254 = vmatmul.bf16.gmra.mxu0 %v203
  %v255 = vpop.f32.mrf.mxu0
  %v256 = vadd.f32 %v237, %v255
  %v257 = vpop.f32.mrf.mxu0
  %v258 = vadd.f32 %v239, %v257
  %259 = vmatmul.bf16.gmra.mxu0 %v206
  %v260 = vpop.f32.mrf.mxu0
  %v261 = vadd.f32 %v242, %v260
  %v262 = vpop.f32.mrf.mxu0
  %v263 = vadd.f32 %v244, %v262
  %264 = vdwg.mxu0
  %v265 = vmax.f32 %v256, 0.0
  %v266 = vmax.f32 %v258, 0.0
  %v267 = vmax.f32 %v261, 0.0
  %v268 = vmax.f32 %v263, 0.0
  %269 = vst.msk [vmem:[%s3] sm:$0xff] %vm201, %v265
  %270 = vst.msk [vmem:[%s3 + $0x8] sm:$0xff] %vm201, %v266
  %271 = vst.msk [vmem:[%s3 + $0x10] sm:$0xff] %vm201, %v267
  %272 = vst.msk [vmem:[%s3 + $0x18] sm:$0xff] %vm201, %v268
  // Predicated region
  $region14: #{resnet_forward.24} parent=0 // pred_check
    _
  $region15: #{resnet_forward.24} parent=0 // pred_check_branch
    %274 = sbr.rel (0) target = $region17
  $region16: #{resnet_forward.24} parent=0 // pred_region
    _
  $region17: #{resnet_forward.24} parent=0 // pred_fallthru
    _
  // Predicated region
  $region18: #{resnet_forward.24} parent=0 // pred_check
    _
  $region19: #{resnet_forward.24} parent=0 // pred_check_branch
    %276 = sbr.rel (0) target = $region21
  $region20: #{resnet_forward.24} parent=0 // pred_region
    _
  $region21: #{resnet_forward.24} parent=0 // pred_fallthru
    _

// kernel: resnet_forward.26
$region0: #{resnet_forward.26}
  #allocation0 [shape = 'u32[]', space=smem, size = 0x4, offset = 0x4, fixed_abs, tag = 'smem constant byte address 0x4 - core index']
  #allocation1 [shape = 'u32[72,128]{1,0:T(1,128)}', space=vmem, size = 0x9000, scoped, tag = 'internal scratch']
  %s0 = inlined_call_operand.vmem [shape: bf16[8,288], index: 0, kind: input, shape index: {}]
  %s1 = inlined_call_operand.vmem [shape: bf16[288,64], index: 1, kind: input, shape index: {}]
  %s2 = inlined_call_operand.vmem [shape: f32[1,64], index: 2, kind: input, shape index: {}]
  %s3 = inlined_call_operand.vmem [shape: f32[8,64], index: 3, kind: output, shape index: {}]
  %s4 = sld [smem:[#allocation0]]
  $region22: #{resnet_forward.26} parent=0
    _
  %s6 = ssub.s32 1, %s4
  %s7 = scalar_select 0, %s6, %s4
  // Predicated region
  $region2: #{resnet_forward.26} parent=0 // pred_check
    _
  $region3: #{resnet_forward.26} parent=0 // pred_check_branch
    %9 = sbr.rel (0) target = $region5
  $region4: #{resnet_forward.26} parent=0 // pred_region
    _
  $region5: #{resnet_forward.26} parent=0 // pred_fallthru
    _
  // Predicated region
  $region6: #{resnet_forward.26} parent=0 // pred_check
    _
  $region7: #{resnet_forward.26} parent=0 // pred_check_branch
    %11 = sbr.rel (0) target = $region9
  $region8: #{resnet_forward.26} parent=0 // pred_region
    _
  $region9: #{resnet_forward.26} parent=0 // pred_fallthru
    _
  // Predicated region
  $region10: #{resnet_forward.26} parent=0 // pred_check
    _
  $region11: #{resnet_forward.26} parent=0 // pred_check_branch
    %13 = sbr.rel (0) target = $region13
  $region12: #{resnet_forward.26} parent=0 // pred_region
    _
  $region13: #{resnet_forward.26} parent=0 // pred_fallthru
    _
  %v15 = vld [vmem:[%s0] sm:$0xff]
  %v16 = vld [vmem:[%s0 + $0x8] sm:$0xf]
  %v17 = vld [vmem:[%s1] sm:$0xf]
  %v18 = vld [vmem:[%s1 + $0x4] sm:$0xf]
  %v19 = vld [vmem:[%s1 + $0x8] sm:$0xf]
  %v20 = vld [vmem:[%s1 + $0xc] sm:$0xf]
  %v21 = vld [vmem:[%s1 + $0x10] sm:$0xf]
  %v22 = vld [vmem:[%s1 + $0x14] sm:$0xf]
  %v23 = vld [vmem:[%s1 + $0x18] sm:$0xf]
  %v24 = vld [vmem:[%s1 + $0x1c] sm:$0xf]
  %v25 = vld [vmem:[%s1 + $0x20] sm:$0xf]
  %v26 = vld [vmem:[%s1 + $0x24] sm:$0xf]
  %v27 = vld [vmem:[%s1 + $0x28] sm:$0xf]
  %v28 = vld [vmem:[%s1 + $0x2c] sm:$0xf]
  %v29 = vld [vmem:[%s1 + $0x30] sm:$0xf]
  %v30 = vld [vmem:[%s1 + $0x34] sm:$0xf]
  %v31 = vld [vmem:[%s1 + $0x38] sm:$0xf]
  %v32 = vld [vmem:[%s1 + $0x3c] sm:$0xf]
  %v33 = vld [vmem:[%s1 + $0x40] sm:$0xf]
  %v34 = vld [vmem:[%s1 + $0x44] sm:$0xf]
  %v35 = vld [vmem:[%s1 + $0x48] sm:$0xf]
  %v36 = vld [vmem:[%s1 + $0x4c] sm:$0xf]
  %v37 = vld [vmem:[%s1 + $0x50] sm:$0xf]
  %v38 = vld [vmem:[%s1 + $0x54] sm:$0xf]
  %v39 = vld [vmem:[%s1 + $0x58] sm:$0xf]
  %v40 = vld [vmem:[%s1 + $0x5c] sm:$0xf]
  %v41 = vld [vmem:[%s1 + $0x60] sm:$0xf]
  %v42 = vld [vmem:[%s1 + $0x64] sm:$0xf]
  %v43 = vld [vmem:[%s1 + $0x68] sm:$0xf]
  %v44 = vld [vmem:[%s1 + $0x6c] sm:$0xf]
  %v45 = vld [vmem:[%s1 + $0x70] sm:$0xf]
  %v46 = vld [vmem:[%s1 + $0x74] sm:$0xf]
  %v47 = vld [vmem:[%s1 + $0x78] sm:$0xf]
  %v48 = vld [vmem:[%s1 + $0x7c] sm:$0xf]
  %v49 = vld [vmem:[%s1 + $0x80] sm:$0xf]
  %v50 = vld [vmem:[%s1 + $0x84] sm:$0xf]
  %v51 = vld [vmem:[%s1 + $0x88] sm:$0xf]
  %v52 = vld [vmem:[%s1 + $0x8c] sm:$0xf]
  %v53 = vld [vmem:[%s2] sm:$0x1]
  %v55 = vperm.slane %v53, 0
  %v59 = vunpack.c.l.b16 %v15
  %v60 = vunpack.c.h.b16 %v15
  %v61 = vunpack.c.l.b16 %v16
  %v62 = vpack.c.b16 %v59, %v59
  %v63 = vpack.c.b16 %v60, %v60
  %v64 = vpack.c.b16 %v61, %v61
  %v103 = vunpack.c.l.b16 %v17
  %v104 = vunpack.c.l.b16 %v18
  %v105 = vunpack.c.l.b16 %v19
  %v106 = vunpack.c.l.b16 %v20
  %v107 = vunpack.c.l.b16 %v21
  %v108 = vunpack.c.l.b16 %v22
  %v109 = vunpack.c.l.b16 %v23
  %v110 = vunpack.c.l.b16 %v24
  %v111 = vunpack.c.l.b16 %v25
  %v112 = vunpack.c.l.b16 %v26
  %v113 = vunpack.c.l.b16 %v27
  %v114 = vunpack.c.l.b16 %v28
  %v115 = vunpack.c.l.b16 %v29
  %v116 = vunpack.c.l.b16 %v30
  %v117 = vunpack.c.l.b16 %v31
  %v118 = vunpack.c.l.b16 %v32
  %v119 = vunpack.c.l.b16 %v33
  %v120 = vunpack.c.l.b16 %v34
  %v121 = vunpack.c.l.b16 %v35
  %v122 = vunpack.c.l.b16 %v36
  %v123 = vunpack.c.l.b16 %v37
  %v124 = vunpack.c.l.b16 %v38
  %v125 = vunpack.c.l.b16 %v39
  %v126 = vunpack.c.l.b16 %v40
  %v127 = vunpack.c.l.b16 %v41
  %v128 = vunpack.c.l.b16 %v42
  %v129 = vunpack.c.l.b16 %v43
  %v130 = vunpack.c.l.b16 %v44
  %v131 = vunpack.c.l.b16 %v45
  %v132 = vunpack.c.l.b16 %v46
  %v133 = vunpack.c.l.b16 %v47
  %v134 = vunpack.c.l.b16 %v48
  %v135 = vunpack.c.l.b16 %v49
  %v136 = vunpack.c.l.b16 %v50
  %v137 = vunpack.c.l.b16 %v51
  %v138 = vunpack.c.l.b16 %v52
  %v139 = vpack.c.b16 %v104, %v103
  %v140 = vpack.c.b16 %v106, %v105
  %v141 = vpack.c.b16 %v108, %v107
  %v142 = vpack.c.b16 %v110, %v109
  %v143 = vpack.c.b16 %v112, %v111
  %v144 = vpack.c.b16 %v114, %v113
  %v145 = vpack.c.b16 %v116, %v115
  %v146 = vpack.c.b16 %v118, %v117
  %v147 = vpack.c.b16 %v120, %v119
  %v148 = vpack.c.b16 %v122, %v121
  %v149 = vpack.c.b16 %v124, %v123
  %v150 = vpack.c.b16 %v126, %v125
  %v151 = vpack.c.b16 %v128, %v127
  %v152 = vpack.c.b16 %v130, %v129
  %v153 = vpack.c.b16 %v132, %v131
  %v154 = vpack.c.b16 %v134, %v133
  %v155 = vpack.c.b16 %v136, %v135
  %v156 = vpack.c.b16 %v138, %v137
  %vm175 = vcmask 261120
  %v177 = vsel %vm175, %v64, 0
  %179 = vmatpush.bf16.msra.mxu0 %v146
  %180 = vmatpush.bf16.msra.mxu0 %v145
  %181 = vmatpush.bf16.msra.mxu0 %v144
  %182 = vmatpush.bf16.msra.mxu0 %v143
  %183 = vmatpush.bf16.msra.mxu0 %v142
  %184 = vmatpush.bf16.msra.mxu0 %v141
  %185 = vmatpush.bf16.msra.mxu0 %v140
  %186 = vmatpush.bf16.msra.mxu0 %v139
  %187 = vmatmul.bf16.gmra.mxu0 %v62
  %v188 = vpop.f32.mrf.mxu0
  %v189 = vadd.f32 %v55, %v188
  %v190 = vpop.f32.mrf.mxu0
  %191 = vdwg.mxu0
  %192 = vmatpush.bf16.msra.mxu0 %v154
  %193 = vmatpush.bf16.msra.mxu0 %v153
  %194 = vmatpush.bf16.msra.mxu0 %v152
  %195 = vmatpush.bf16.msra.mxu0 %v151
  %196 = vmatpush.bf16.msra.mxu0 %v150
  %197 = vmatpush.bf16.msra.mxu0 %v149
  %198 = vmatpush.bf16.msra.mxu0 %v148
  %199 = vmatpush.bf16.msra.mxu0 %v147
  %200 = vmatmul.bf16.gmra.mxu0 %v63
  %v201 = vpop.f32.mrf.mxu0
  %v202 = vadd.f32 %v189, %v201
  %v203 = vpop.f32.mrf.mxu0
  %204 = vdwg.mxu0
  %205 = vmatpush.bf16.msra.mxu0 0
  %206 = vmatpush.bf16.msra.mxu0 0
  %207 = vmatpush.bf16.msra.mxu0 0
  %208 = vmatpush.bf16.msra.mxu0 0
  %209 = vmatpush.bf16.msra.mxu0 0
  %210 = vmatpush.bf16.msra.mxu0 0
  %211 = vmatpush.bf16.msra.mxu0 %v156
  %212 = vmatpush.bf16.msra.mxu0 %v155
  %213 = vmatmul.bf16.gmra.mxu0 %v177
  %v214 = vpop.f32.mrf.mxu0
  %v215 = vadd.f32 %v202, %v214
  %v216 = vpop.f32.mrf.mxu0
  %217 = vdwg.mxu0
  %v218 = vmax.f32 %v215, 0.0
  %vm219 = vcmask 523264
  %220 = vst.msk [vmem:[%s3] sm:$0xff] %vm219, %v218
  // Predicated region
  $region14: #{resnet_forward.26} parent=0 // pred_check
    _
  $region15: #{resnet_forward.26} parent=0 // pred_check_branch
    %222 = sbr.rel (0) target = $region17
  $region16: #{resnet_forward.26} parent=0 // pred_region
    _
  $region17: #{resnet_forward.26} parent=0 // pred_fallthru
    _
  // Predicated region
  $region18: #{resnet_forward.26} parent=0 // pred_check
    _
  $region19: #{resnet_forward.26} parent=0 // pred_check_branch
    %224 = sbr.rel (0) target = $region21
  $region20: #{resnet_forward.26} parent=0 // pred_region
    _
  $region21: #{resnet_forward.26} parent=0 // pred_fallthru
    _

// kernel: resnet_forward.27
$region0: #{resnet_forward.27}
  #allocation0 [shape = 'u32[]', space=smem, size = 0x4, offset = 0x4, fixed_abs, tag = 'smem constant byte address 0x4 - core index']
  #allocation1 [shape = 'u32[72,128]{1,0:T(1,128)}', space=vmem, size = 0x9000, scoped, tag = 'internal scratch']
  %s0 = inlined_call_operand.vmem [shape: bf16[8,576], index: 0, kind: input, shape index: {}]
  %s1 = inlined_call_operand.vmem [shape: bf16[576,64], index: 1, kind: input, shape index: {}]
  %s2 = inlined_call_operand.vmem [shape: f32[1,64], index: 2, kind: input, shape index: {}]
  %s3 = inlined_call_operand.vmem [shape: bf16[8,32], index: 3, kind: input, shape index: {}]
  %s4 = inlined_call_operand.vmem [shape: bf16[32,64], index: 4, kind: input, shape index: {}]
  %s5 = inlined_call_operand.vmem [shape: f32[8,64], index: 5, kind: output, shape index: {}]
  %s6 = sld [smem:[#allocation0]]
  $region30: #{resnet_forward.27} parent=0
    _
  %s8 = ssub.s32 1, %s6
  %s9 = scalar_select 0, %s8, %s6
  // Predicated region
  $region2: #{resnet_forward.27} parent=0 // pred_check
    _
  $region3: #{resnet_forward.27} parent=0 // pred_check_branch
    %11 = sbr.rel (0) target = $region5
  $region4: #{resnet_forward.27} parent=0 // pred_region
    _
  $region5: #{resnet_forward.27} parent=0 // pred_fallthru
    _
  // Predicated region
  $region6: #{resnet_forward.27} parent=0 // pred_check
    _
  $region7: #{resnet_forward.27} parent=0 // pred_check_branch
    %13 = sbr.rel (0) target = $region9
  $region8: #{resnet_forward.27} parent=0 // pred_region
    _
  $region9: #{resnet_forward.27} parent=0 // pred_fallthru
    _
  // Predicated region
  $region10: #{resnet_forward.27} parent=0 // pred_check
    _
  $region11: #{resnet_forward.27} parent=0 // pred_check_branch
    %15 = sbr.rel (0) target = $region13
  $region12: #{resnet_forward.27} parent=0 // pred_region
    _
  $region13: #{resnet_forward.27} parent=0 // pred_fallthru
    _
  // Predicated region
  $region14: #{resnet_forward.27} parent=0 // pred_check
    _
  $region15: #{resnet_forward.27} parent=0 // pred_check_branch
    %17 = sbr.rel (0) target = $region17
  $region16: #{resnet_forward.27} parent=0 // pred_region
    _
  $region17: #{resnet_forward.27} parent=0 // pred_fallthru
    _
  // Predicated region
  $region18: #{resnet_forward.27} parent=0 // pred_check
    _
  $region19: #{resnet_forward.27} parent=0 // pred_check_branch
    %19 = sbr.rel (0) target = $region21
  $region20: #{resnet_forward.27} parent=0 // pred_region
    _
  $region21: #{resnet_forward.27} parent=0 // pred_fallthru
    _
  %v21 = vld [vmem:[%s0] sm:$0xff]
  %v22 = vld [vmem:[%s0 + $0x8] sm:$0xff]
  %v23 = vld [vmem:[%s0 + $0x10] sm:$0xf]
  %v24 = vld [vmem:[%s1] sm:$0xf]
  %v25 = vld [vmem:[%s1 + $0x4] sm:$0xf]
  %v26 = vld [vmem:[%s1 + $0x8] sm:$0xf]
  %v27 = vld [vmem:[%s1 + $0xc] sm:$0xf]
  %v28 = vld [vmem:[%s1 + $0x10] sm:$0xf]
  %v29 = vld [vmem:[%s1 + $0x14] sm:$0xf]
  %v30 = vld [vmem:[%s1 + $0x18] sm:$0xf]
  %v31 = vld [vmem:[%s1 + $0x1c] sm:$0xf]
  %v32 = vld [vmem:[%s1 + $0x20] sm:$0xf]
  %v33 = vld [vmem:[%s1 + $0x24] sm:$0xf]
  %v34 = vld [vmem:[%s1 + $0x28] sm:$0xf]
  %v35 = vld [vmem:[%s1 + $0x2c] sm:$0xf]
  %v36 = vld [vmem:[%s1 + $0x30] sm:$0xf]
  %v37 = vld [vmem:[%s1 + $0x34] sm:$0xf]
  %v38 = vld [vmem:[%s1 + $0x38] sm:$0xf]
  %v39 = vld [vmem:[%s1 + $0x3c] sm:$0xf]
  %v40 = vld [vmem:[%s1 + $0x40] sm:$0xf]
  %v41 = vld [vmem:[%s1 + $0x44] sm:$0xf]
  %v42 = vld [vmem:[%s1 + $0x48] sm:$0xf]
  %v43 = vld [vmem:[%s1 + $0x4c] sm:$0xf]
  %v44 = vld [vmem:[%s1 + $0x50] sm:$0xf]
  %v45 = vld [vmem:[%s1 + $0x54] sm:$0xf]
  %v46 = vld [vmem:[%s1 + $0x58] sm:$0xf]
  %v47 = vld [vmem:[%s1 + $0x5c] sm:$0xf]
  %v48 = vld [vmem:[%s1 + $0x60] sm:$0xf]
  %v49 = vld [vmem:[%s1 + $0x64] sm:$0xf]
  %v50 = vld [vmem:[%s1 + $0x68] sm:$0xf]
  %v51 = vld [vmem:[%s1 + $0x6c] sm:$0xf]
  %v52 = vld [vmem:[%s1 + $0x70] sm:$0xf]
  %v53 = vld [vmem:[%s1 + $0x74] sm:$0xf]
  %v54 = vld [vmem:[%s1 + $0x78] sm:$0xf]
  %v55 = vld [vmem:[%s1 + $0x7c] sm:$0xf]
  %v56 = vld [vmem:[%s1 + $0x80] sm:$0xf]
  %v57 = vld [vmem:[%s1 + $0x84] sm:$0xf]
  %v58 = vld [vmem:[%s1 + $0x88] sm:$0xf]
  %v59 = vld [vmem:[%s1 + $0x8c] sm:$0xf]
  %v60 = vld [vmem:[%s1 + $0x90] sm:$0xf]
  %v61 = vld [vmem:[%s1 + $0x94] sm:$0xf]
  %v62 = vld [vmem:[%s1 + $0x98] sm:$0xf]
  %v63 = vld [vmem:[%s1 + $0x9c] sm:$0xf]
  %v64 = vld [vmem:[%s1 + $0xa0] sm:$0xf]
  %v65 = vld [vmem:[%s1 + $0xa4] sm:$0xf]
  %v66 = vld [vmem:[%s1 + $0xa8] sm:$0xf]
  %v67 = vld [vmem:[%s1 + $0xac] sm:$0xf]
  %v68 = vld [vmem:[%s1 + $0xb0] sm:$0xf]
  %v69 = vld [vmem:[%s1 + $0xb4] sm:$0xf]
  %v70 = vld [vmem:[%s1 + $0xb8] sm:$0xf]
  %v71 = vld [vmem:[%s1 + $0xbc] sm:$0xf]
  %v72 = vld [vmem:[%s1 + $0xc0] sm:$0xf]
  %v73 = vld [vmem:[%s1 + $0xc4] sm:$0xf]
  %v74 = vld [vmem:[%s1 + $0xc8] sm:$0xf]
  %v75 = vld [vmem:[%s1 + $0xcc] sm:$0xf]
  %v76 = vld [vmem:[%s1 + $0xd0] sm:$0xf]
  %v77 = vld [vmem:[%s1 + $0xd4] sm:$0xf]
  %v78 = vld [vmem:[%s1 + $0xd8] sm:$0xf]
  %v79 = vld [vmem:[%s1 + $0xdc] sm:$0xf]
  %v80 = vld [vmem:[%s1 + $0xe0] sm:$0xf]
  %v81 = vld [vmem:[%s1 + $0xe4] sm:$0xf]
  %v82 = vld [vmem:[%s1 + $0xe8] sm:$0xf]
  %v83 = vld [vmem:[%s1 + $0xec] sm:$0xf]
  %v84 = vld [vmem:[%s1 + $0xf0] sm:$0xf]
  %v85 = vld [vmem:[%s1 + $0xf4] sm:$0xf]
  %v86 = vld [vmem:[%s1 + $0xf8] sm:$0xf]
  %v87 = vld [vmem:[%s1 + $0xfc] sm:$0xf]
  %v88 = vld [vmem:[%s1 + $0x100] sm:$0xf]
  %v89 = vld [vmem:[%s1 + $0x104] sm:$0xf]
  %v90 = vld [vmem:[%s1 + $0x108] sm:$0xf]
  %v91 = vld [vmem:[%s1 + $0x10c] sm:$0xf]
  %v92 = vld [vmem:[%s1 + $0x110] sm:$0xf]
  %v93 = vld [vmem:[%s1 + $0x114] sm:$0xf]
  %v94 = vld [vmem:[%s1 + $0x118] sm:$0xf]
  %v95 = vld [vmem:[%s1 + $0x11c] sm:$0xf]
  %v96 = vld [vmem:[%s3] sm:$0xf]
  %v97 = vld [vmem:[%s4] sm:$0xf]
  %v98 = vld [vmem:[%s4 + $0x4] sm:$0xf]
  %v99 = vld [vmem:[%s4 + $0x8] sm:$0xf]
  %v100 = vld [vmem:[%s4 + $0xc] sm:$0xf]
  %v105 = vunpack.c.l.b16 %v97
  %v106 = vunpack.c.l.b16 %v98
  %v107 = vunpack.c.l.b16 %v99
  %v108 = vunpack.c.l.b16 %v100
  %v109 = vpack.c.b16 %v106, %v105
  %v110 = vpack.c.b16 %v108, %v107
  %vm113 = vcmask 261120
  %v115 = vsel %vm113, %v96, 0
  %117 = vmatpush.bf16.msra.mxu0 0
  %118 = vmatpush.bf16.msra.mxu0 0
  %119 = vmatpush.bf16.msra.mxu0 0
  %120 = vmatpush.bf16.msra.mxu0 0
  %121 = vmatpush.bf16.msra.mxu0 0
  %122 = vmatpush.bf16.msra.mxu0 0
  %123 = vmatpush.bf16.msra.mxu0 %v110
  %124 = vmatpush.bf16.msra.mxu0 %v109
  %125 = vmatmul.bf16.gmra.mxu0 %v115
  %v126 = vpop.f32.mrf.mxu0
  %v127 = vadd.f32 0.0, %v126
  %v128 = vpop.f32.mrf.mxu0
  %129 = vdwg.mxu0
  %v133 = vunpack.c.l.b16 %v21
  %v134 = vunpack.c.h.b16 %v21
  %v135 = vunpack.c.l.b16 %v22
  %v136 = vunpack.c.h.b16 %v22
  %v137 = vunpack.c.l.b16 %v23
  %v138 = vpack.c.b16 %v133, %v133
  %v139 = vpack.c.b16 %v134, %v134
  %v140 = vpack.c.b16 %v135, %v135
  %v141 = vpack.c.b16 %v136, %v136
  %v142 = vpack.c.b16 %v137, %v137
  %v219 = vunpack.c.l.b16 %v24
  %v220 = vunpack.c.l.b16 %v25
  %v221 = vunpack.c.l.b16 %v26
  %v222 = vunpack.c.l.b16 %v27
  %v223 = vunpack.c.l.b16 %v28
  %v224 = vunpack.c.l.b16 %v29
  %v225 = vunpack.c.l.b16 %v30
  %v226 = vunpack.c.l.b16 %v31
  %v227 = vunpack.c.l.b16 %v32
  %v228 = vunpack.c.l.b16 %v33
  %v229 = vunpack.c.l.b16 %v34
  %v230 = vunpack.c.l.b16 %v35
  %v231 = vunpack.c.l.b16 %v36
  %v232 = vunpack.c.l.b16 %v37
  %v233 = vunpack.c.l.b16 %v38
  %v234 = vunpack.c.l.b16 %v39
  %v235 = vunpack.c.l.b16 %v40
  %v236 = vunpack.c.l.b16 %v41
  %v237 = vunpack.c.l.b16 %v42
  %v238 = vunpack.c.l.b16 %v43
  %v239 = vunpack.c.l.b16 %v44
  %v240 = vunpack.c.l.b16 %v45
  %v241 = vunpack.c.l.b16 %v46
  %v242 = vunpack.c.l.b16 %v47
  %v243 = vunpack.c.l.b16 %v48
  %v244 = vunpack.c.l.b16 %v49
  %v245 = vunpack.c.l.b16 %v50
  %v246 = vunpack.c.l.b16 %v51
  %v247 = vunpack.c.l.b16 %v52
  %v248 = vunpack.c.l.b16 %v53
  %v249 = vunpack.c.l.b16 %v54
  %v250 = vunpack.c.l.b16 %v55
  %v251 = vunpack.c.l.b16 %v56
  %v252 = vunpack.c.l.b16 %v57
  %v253 = vunpack.c.l.b16 %v58
  %v254 = vunpack.c.l.b16 %v59
  %v255 = vunpack.c.l.b16 %v60
  %v256 = vunpack.c.l.b16 %v61
  %v257 = vunpack.c.l.b16 %v62
  %v258 = vunpack.c.l.b16 %v63
  %v259 = vunpack.c.l.b16 %v64
  %v260 = vunpack.c.l.b16 %v65
  %v261 = vunpack.c.l.b16 %v66
  %v262 = vunpack.c.l.b16 %v67
  %v263 = vunpack.c.l.b16 %v68
  %v264 = vunpack.c.l.b16 %v69
  %v265 = vunpack.c.l.b16 %v70
  %v266 = vunpack.c.l.b16 %v71
  %v267 = vunpack.c.l.b16 %v72
  %v268 = vunpack.c.l.b16 %v73
  %v269 = vunpack.c.l.b16 %v74
  %v270 = vunpack.c.l.b16 %v75
  %v271 = vunpack.c.l.b16 %v76
  %v272 = vunpack.c.l.b16 %v77
  %v273 = vunpack.c.l.b16 %v78
  %v274 = vunpack.c.l.b16 %v79
  %v275 = vunpack.c.l.b16 %v80
  %v276 = vunpack.c.l.b16 %v81
  %v277 = vunpack.c.l.b16 %v82
  %v278 = vunpack.c.l.b16 %v83
  %v279 = vunpack.c.l.b16 %v84
  %v280 = vunpack.c.l.b16 %v85
  %v281 = vunpack.c.l.b16 %v86
  %v282 = vunpack.c.l.b16 %v87
  %v283 = vunpack.c.l.b16 %v88
  %v284 = vunpack.c.l.b16 %v89
  %v285 = vunpack.c.l.b16 %v90
  %v286 = vunpack.c.l.b16 %v91
  %v287 = vunpack.c.l.b16 %v92
  %v288 = vunpack.c.l.b16 %v93
  %v289 = vunpack.c.l.b16 %v94
  %v290 = vunpack.c.l.b16 %v95
  %v291 = vpack.c.b16 %v220, %v219
  %v292 = vpack.c.b16 %v222, %v221
  %v293 = vpack.c.b16 %v224, %v223
  %v294 = vpack.c.b16 %v226, %v225
  %v295 = vpack.c.b16 %v228, %v227
  %v296 = vpack.c.b16 %v230, %v229
  %v297 = vpack.c.b16 %v232, %v231
  %v298 = vpack.c.b16 %v234, %v233
  %v299 = vpack.c.b16 %v236, %v235
  %v300 = vpack.c.b16 %v238, %v237
  %v301 = vpack.c.b16 %v240, %v239
  %v302 = vpack.c.b16 %v242, %v241
  %v303 = vpack.c.b16 %v244, %v243
  %v304 = vpack.c.b16 %v246, %v245
  %v305 = vpack.c.b16 %v248, %v247
  %v306 = vpack.c.b16 %v250, %v249
  %v307 = vpack.c.b16 %v252, %v251
  %v308 = vpack.c.b16 %v254, %v253
  %v309 = vpack.c.b16 %v256, %v255
  %v310 = vpack.c.b16 %v258, %v257
  %v311 = vpack.c.b16 %v260, %v259
  %v312 = vpack.c.b16 %v262, %v261
  %v313 = vpack.c.b16 %v264, %v263
  %v314 = vpack.c.b16 %v266, %v265
  %v315 = vpack.c.b16 %v268, %v267
  %v316 = vpack.c.b16 %v270, %v269
  %v317 = vpack.c.b16 %v272, %v271
  %v318 = vpack.c.b16 %v274, %v273
  %v319 = vpack.c.b16 %v276, %v275
  %v320 = vpack.c.b16 %v278, %v277
  %v321 = vpack.c.b16 %v280, %v279
  %v322 = vpack.c.b16 %v282, %v281
  %v323 = vpack.c.b16 %v284, %v283
  %v324 = vpack.c.b16 %v286, %v285
  %v325 = vpack.c.b16 %v288, %v287
  %v326 = vpack.c.b16 %v290, %v289
  %vm363 = vcmask 523264
  %v365 = vsel %vm363, %v142, 0
  %367 = vmatpush.bf16.msra.mxu0 %v298
  %368 = vmatpush.bf16.msra.mxu0 %v297
  %369 = vmatpush.bf16.msra.mxu0 %v296
  %370 = vmatpush.bf16.msra.mxu0 %v295
  %371 = vmatpush.bf16.msra.mxu0 %v294
  %372 = vmatpush.bf16.msra.mxu0 %v293
  %373 = vmatpush.bf16.msra.mxu0 %v292
  %374 = vmatpush.bf16.msra.mxu0 %v291
  %375 = vmatmul.bf16.gmra.mxu0 %v138
  %v376 = vpop.f32.mrf.mxu0
  %v377 = vadd.f32 %v127, %v376
  %v378 = vpop.f32.mrf.mxu0
  %379 = vdwg.mxu0
  %380 = vmatpush.bf16.msra.mxu0 %v306
  %381 = vmatpush.bf16.msra.mxu0 %v305
  %382 = vmatpush.bf16.msra.mxu0 %v304
  %383 = vmatpush.bf16.msra.mxu0 %v303
  %384 = vmatpush.bf16.msra.mxu0 %v302
  %385 = vmatpush.bf16.msra.mxu0 %v301
  %386 = vmatpush.bf16.msra.mxu0 %v300
  %387 = vmatpush.bf16.msra.mxu0 %v299
  %388 = vmatmul.bf16.gmra.mxu0 %v139
  %v389 = vpop.f32.mrf.mxu0
  %v390 = vadd.f32 %v377, %v389
  %v391 = vpop.f32.mrf.mxu0
  %392 = vdwg.mxu0
  %393 = vmatpush.bf16.msra.mxu0 %v314
  %394 = vmatpush.bf16.msra.mxu0 %v313
  %395 = vmatpush.bf16.msra.mxu0 %v312
  %396 = vmatpush.bf16.msra.mxu0 %v311
  %397 = vmatpush.bf16.msra.mxu0 %v310
  %398 = vmatpush.bf16.msra.mxu0 %v309
  %399 = vmatpush.bf16.msra.mxu0 %v308
  %400 = vmatpush.bf16.msra.mxu0 %v307
  %401 = vmatmul.bf16.gmra.mxu0 %v140
  %v402 = vpop.f32.mrf.mxu0
  %v403 = vadd.f32 %v390, %v402
  %v404 = vpop.f32.mrf.mxu0
  %405 = vdwg.mxu0
  %406 = vmatpush.bf16.msra.mxu0 %v322
  %407 = vmatpush.bf16.msra.mxu0 %v321
  %408 = vmatpush.bf16.msra.mxu0 %v320
  %409 = vmatpush.bf16.msra.mxu0 %v319
  %410 = vmatpush.bf16.msra.mxu0 %v318
  %411 = vmatpush.bf16.msra.mxu0 %v317
  %412 = vmatpush.bf16.msra.mxu0 %v316
  %413 = vmatpush.bf16.msra.mxu0 %v315
  %414 = vmatmul.bf16.gmra.mxu0 %v141
  %v415 = vpop.f32.mrf.mxu0
  %v416 = vadd.f32 %v403, %v415
  %v417 = vpop.f32.mrf.mxu0
  %418 = vdwg.mxu0
  %419 = vmatpush.bf16.msra.mxu0 0
  %420 = vmatpush.bf16.msra.mxu0 0
  %421 = vmatpush.bf16.msra.mxu0 0
  %422 = vmatpush.bf16.msra.mxu0 0
  %423 = vmatpush.bf16.msra.mxu0 %v326
  %424 = vmatpush.bf16.msra.mxu0 %v325
  %425 = vmatpush.bf16.msra.mxu0 %v324
  %426 = vmatpush.bf16.msra.mxu0 %v323
  %427 = vmatmul.bf16.gmra.mxu0 %v365
  %v428 = vpop.f32.mrf.mxu0
  %v429 = vadd.f32 %v416, %v428
  %v430 = vpop.f32.mrf.mxu0
  %431 = vdwg.mxu0
  %v432 = vld [vmem:[%s2] sm:$0x1]
  %v434 = vperm.slane %v432, 0
  %v436 = vadd.f32 %v429, %v434
  %v437 = vmax.f32 %v436, 0.0
  %438 = vst.msk [vmem:[%s5] sm:$0xff] %vm363, %v437
  // Predicated region
  $region22: #{resnet_forward.27} parent=0 // pred_check
    _
  $region23: #{resnet_forward.27} parent=0 // pred_check_branch
    %440 = sbr.rel (0) target = $region25
  $region24: #{resnet_forward.27} parent=0 // pred_region
    _
  $region25: #{resnet_forward.27} parent=0 // pred_fallthru
    _
  // Predicated region
  $region26: #{resnet_forward.27} parent=0 // pred_check
    _
  $region27: #{resnet_forward.27} parent=0 // pred_check_branch
    %442 = sbr.rel (0) target = $region29
  $region28: #{resnet_forward.27} parent=0 // pred_region
    _
  $region29: #{resnet_forward.27} parent=0 // pred_fallthru
    _

// kernel: resnet_forward.29
$region0: #{resnet_forward.29}
  #allocation0 [shape = 'u32[]', space=smem, size = 0x4, offset = 0x4, fixed_abs, tag = 'smem constant byte address 0x4 - core index']
  #allocation1 [shape = 'u32[72,128]{1,0:T(1,128)}', space=vmem, size = 0x9000, scoped, tag = 'internal scratch']
  %s0 = inlined_call_operand.vmem [shape: bf16[8,576], index: 0, kind: input, shape index: {}]
  %s1 = inlined_call_operand.vmem [shape: bf16[576,64], index: 1, kind: input, shape index: {}]
  %s2 = inlined_call_operand.vmem [shape: f32[1,64], index: 2, kind: input, shape index: {}]
  %s3 = inlined_call_operand.vmem [shape: f32[8,64], index: 3, kind: input, shape index: {}]
  %s4 = inlined_call_operand.vmem [shape: f32[8,64], index: 4, kind: output, shape index: {}]
  %s5 = sld [smem:[#allocation0]]
  $region26: #{resnet_forward.29} parent=0
    _
  %s7 = ssub.s32 1, %s5
  %s8 = scalar_select 0, %s7, %s5
  // Predicated region
  $region2: #{resnet_forward.29} parent=0 // pred_check
    _
  $region3: #{resnet_forward.29} parent=0 // pred_check_branch
    %10 = sbr.rel (0) target = $region5
  $region4: #{resnet_forward.29} parent=0 // pred_region
    _
  $region5: #{resnet_forward.29} parent=0 // pred_fallthru
    _
  // Predicated region
  $region6: #{resnet_forward.29} parent=0 // pred_check
    _
  $region7: #{resnet_forward.29} parent=0 // pred_check_branch
    %12 = sbr.rel (0) target = $region9
  $region8: #{resnet_forward.29} parent=0 // pred_region
    _
  $region9: #{resnet_forward.29} parent=0 // pred_fallthru
    _
  // Predicated region
  $region10: #{resnet_forward.29} parent=0 // pred_check
    _
  $region11: #{resnet_forward.29} parent=0 // pred_check_branch
    %14 = sbr.rel (0) target = $region13
  $region12: #{resnet_forward.29} parent=0 // pred_region
    _
  $region13: #{resnet_forward.29} parent=0 // pred_fallthru
    _
  // Predicated region
  $region14: #{resnet_forward.29} parent=0 // pred_check
    _
  $region15: #{resnet_forward.29} parent=0 // pred_check_branch
    %16 = sbr.rel (0) target = $region17
  $region16: #{resnet_forward.29} parent=0 // pred_region
    _
  $region17: #{resnet_forward.29} parent=0 // pred_fallthru
    _
  %v18 = vld [vmem:[%s0] sm:$0xff]
  %v19 = vld [vmem:[%s0 + $0x8] sm:$0xff]
  %v20 = vld [vmem:[%s0 + $0x10] sm:$0xf]
  %v21 = vld [vmem:[%s1] sm:$0xf]
  %v22 = vld [vmem:[%s1 + $0x4] sm:$0xf]
  %v23 = vld [vmem:[%s1 + $0x8] sm:$0xf]
  %v24 = vld [vmem:[%s1 + $0xc] sm:$0xf]
  %v25 = vld [vmem:[%s1 + $0x10] sm:$0xf]
  %v26 = vld [vmem:[%s1 + $0x14] sm:$0xf]
  %v27 = vld [vmem:[%s1 + $0x18] sm:$0xf]
  %v28 = vld [vmem:[%s1 + $0x1c] sm:$0xf]
  %v29 = vld [vmem:[%s1 + $0x20] sm:$0xf]
  %v30 = vld [vmem:[%s1 + $0x24] sm:$0xf]
  %v31 = vld [vmem:[%s1 + $0x28] sm:$0xf]
  %v32 = vld [vmem:[%s1 + $0x2c] sm:$0xf]
  %v33 = vld [vmem:[%s1 + $0x30] sm:$0xf]
  %v34 = vld [vmem:[%s1 + $0x34] sm:$0xf]
  %v35 = vld [vmem:[%s1 + $0x38] sm:$0xf]
  %v36 = vld [vmem:[%s1 + $0x3c] sm:$0xf]
  %v37 = vld [vmem:[%s1 + $0x40] sm:$0xf]
  %v38 = vld [vmem:[%s1 + $0x44] sm:$0xf]
  %v39 = vld [vmem:[%s1 + $0x48] sm:$0xf]
  %v40 = vld [vmem:[%s1 + $0x4c] sm:$0xf]
  %v41 = vld [vmem:[%s1 + $0x50] sm:$0xf]
  %v42 = vld [vmem:[%s1 + $0x54] sm:$0xf]
  %v43 = vld [vmem:[%s1 + $0x58] sm:$0xf]
  %v44 = vld [vmem:[%s1 + $0x5c] sm:$0xf]
  %v45 = vld [vmem:[%s1 + $0x60] sm:$0xf]
  %v46 = vld [vmem:[%s1 + $0x64] sm:$0xf]
  %v47 = vld [vmem:[%s1 + $0x68] sm:$0xf]
  %v48 = vld [vmem:[%s1 + $0x6c] sm:$0xf]
  %v49 = vld [vmem:[%s1 + $0x70] sm:$0xf]
  %v50 = vld [vmem:[%s1 + $0x74] sm:$0xf]
  %v51 = vld [vmem:[%s1 + $0x78] sm:$0xf]
  %v52 = vld [vmem:[%s1 + $0x7c] sm:$0xf]
  %v53 = vld [vmem:[%s1 + $0x80] sm:$0xf]
  %v54 = vld [vmem:[%s1 + $0x84] sm:$0xf]
  %v55 = vld [vmem:[%s1 + $0x88] sm:$0xf]
  %v56 = vld [vmem:[%s1 + $0x8c] sm:$0xf]
  %v57 = vld [vmem:[%s1 + $0x90] sm:$0xf]
  %v58 = vld [vmem:[%s1 + $0x94] sm:$0xf]
  %v59 = vld [vmem:[%s1 + $0x98] sm:$0xf]
  %v60 = vld [vmem:[%s1 + $0x9c] sm:$0xf]
  %v61 = vld [vmem:[%s1 + $0xa0] sm:$0xf]
  %v62 = vld [vmem:[%s1 + $0xa4] sm:$0xf]
  %v63 = vld [vmem:[%s1 + $0xa8] sm:$0xf]
  %v64 = vld [vmem:[%s1 + $0xac] sm:$0xf]
  %v65 = vld [vmem:[%s1 + $0xb0] sm:$0xf]
  %v66 = vld [vmem:[%s1 + $0xb4] sm:$0xf]
  %v67 = vld [vmem:[%s1 + $0xb8] sm:$0xf]
  %v68 = vld [vmem:[%s1 + $0xbc] sm:$0xf]
  %v69 = vld [vmem:[%s1 + $0xc0] sm:$0xf]
  %v70 = vld [vmem:[%s1 + $0xc4] sm:$0xf]
  %v71 = vld [vmem:[%s1 + $0xc8] sm:$0xf]
  %v72 = vld [vmem:[%s1 + $0xcc] sm:$0xf]
  %v73 = vld [vmem:[%s1 + $0xd0] sm:$0xf]
  %v74 = vld [vmem:[%s1 + $0xd4] sm:$0xf]
  %v75 = vld [vmem:[%s1 + $0xd8] sm:$0xf]
  %v76 = vld [vmem:[%s1 + $0xdc] sm:$0xf]
  %v77 = vld [vmem:[%s1 + $0xe0] sm:$0xf]
  %v78 = vld [vmem:[%s1 + $0xe4] sm:$0xf]
  %v79 = vld [vmem:[%s1 + $0xe8] sm:$0xf]
  %v80 = vld [vmem:[%s1 + $0xec] sm:$0xf]
  %v81 = vld [vmem:[%s1 + $0xf0] sm:$0xf]
  %v82 = vld [vmem:[%s1 + $0xf4] sm:$0xf]
  %v83 = vld [vmem:[%s1 + $0xf8] sm:$0xf]
  %v84 = vld [vmem:[%s1 + $0xfc] sm:$0xf]
  %v85 = vld [vmem:[%s1 + $0x100] sm:$0xf]
  %v86 = vld [vmem:[%s1 + $0x104] sm:$0xf]
  %v87 = vld [vmem:[%s1 + $0x108] sm:$0xf]
  %v88 = vld [vmem:[%s1 + $0x10c] sm:$0xf]
  %v89 = vld [vmem:[%s1 + $0x110] sm:$0xf]
  %v90 = vld [vmem:[%s1 + $0x114] sm:$0xf]
  %v91 = vld [vmem:[%s1 + $0x118] sm:$0xf]
  %v92 = vld [vmem:[%s1 + $0x11c] sm:$0xf]
  %v93 = vld [vmem:[%s2] sm:$0x1]
  %v95 = vperm.slane %v93, 0
  %v100 = vunpack.c.l.b16 %v18
  %v101 = vunpack.c.h.b16 %v18
  %v102 = vunpack.c.l.b16 %v19
  %v103 = vunpack.c.h.b16 %v19
  %v104 = vunpack.c.l.b16 %v20
  %v105 = vpack.c.b16 %v100, %v100
  %v106 = vpack.c.b16 %v101, %v101
  %v107 = vpack.c.b16 %v102, %v102
  %v108 = vpack.c.b16 %v103, %v103
  %v109 = vpack.c.b16 %v104, %v104
  %v186 = vunpack.c.l.b16 %v21
  %v187 = vunpack.c.l.b16 %v22
  %v188 = vunpack.c.l.b16 %v23
  %v189 = vunpack.c.l.b16 %v24
  %v190 = vunpack.c.l.b16 %v25
  %v191 = vunpack.c.l.b16 %v26
  %v192 = vunpack.c.l.b16 %v27
  %v193 = vunpack.c.l.b16 %v28
  %v194 = vunpack.c.l.b16 %v29
  %v195 = vunpack.c.l.b16 %v30
  %v196 = vunpack.c.l.b16 %v31
  %v197 = vunpack.c.l.b16 %v32
  %v198 = vunpack.c.l.b16 %v33
  %v199 = vunpack.c.l.b16 %v34
  %v200 = vunpack.c.l.b16 %v35
  %v201 = vunpack.c.l.b16 %v36
  %v202 = vunpack.c.l.b16 %v37
  %v203 = vunpack.c.l.b16 %v38
  %v204 = vunpack.c.l.b16 %v39
  %v205 = vunpack.c.l.b16 %v40
  %v206 = vunpack.c.l.b16 %v41
  %v207 = vunpack.c.l.b16 %v42
  %v208 = vunpack.c.l.b16 %v43
  %v209 = vunpack.c.l.b16 %v44
  %v210 = vunpack.c.l.b16 %v45
  %v211 = vunpack.c.l.b16 %v46
  %v212 = vunpack.c.l.b16 %v47
  %v213 = vunpack.c.l.b16 %v48
  %v214 = vunpack.c.l.b16 %v49
  %v215 = vunpack.c.l.b16 %v50
  %v216 = vunpack.c.l.b16 %v51
  %v217 = vunpack.c.l.b16 %v52
  %v218 = vunpack.c.l.b16 %v53
  %v219 = vunpack.c.l.b16 %v54
  %v220 = vunpack.c.l.b16 %v55
  %v221 = vunpack.c.l.b16 %v56
  %v222 = vunpack.c.l.b16 %v57
  %v223 = vunpack.c.l.b16 %v58
  %v224 = vunpack.c.l.b16 %v59
  %v225 = vunpack.c.l.b16 %v60
  %v226 = vunpack.c.l.b16 %v61
  %v227 = vunpack.c.l.b16 %v62
  %v228 = vunpack.c.l.b16 %v63
  %v229 = vunpack.c.l.b16 %v64
  %v230 = vunpack.c.l.b16 %v65
  %v231 = vunpack.c.l.b16 %v66
  %v232 = vunpack.c.l.b16 %v67
  %v233 = vunpack.c.l.b16 %v68
  %v234 = vunpack.c.l.b16 %v69
  %v235 = vunpack.c.l.b16 %v70
  %v236 = vunpack.c.l.b16 %v71
  %v237 = vunpack.c.l.b16 %v72
  %v238 = vunpack.c.l.b16 %v73
  %v239 = vunpack.c.l.b16 %v74
  %v240 = vunpack.c.l.b16 %v75
  %v241 = vunpack.c.l.b16 %v76
  %v242 = vunpack.c.l.b16 %v77
  %v243 = vunpack.c.l.b16 %v78
  %v244 = vunpack.c.l.b16 %v79
  %v245 = vunpack.c.l.b16 %v80
  %v246 = vunpack.c.l.b16 %v81
  %v247 = vunpack.c.l.b16 %v82
  %v248 = vunpack.c.l.b16 %v83
  %v249 = vunpack.c.l.b16 %v84
  %v250 = vunpack.c.l.b16 %v85
  %v251 = vunpack.c.l.b16 %v86
  %v252 = vunpack.c.l.b16 %v87
  %v253 = vunpack.c.l.b16 %v88
  %v254 = vunpack.c.l.b16 %v89
  %v255 = vunpack.c.l.b16 %v90
  %v256 = vunpack.c.l.b16 %v91
  %v257 = vunpack.c.l.b16 %v92
  %v258 = vpack.c.b16 %v187, %v186
  %v259 = vpack.c.b16 %v189, %v188
  %v260 = vpack.c.b16 %v191, %v190
  %v261 = vpack.c.b16 %v193, %v192
  %v262 = vpack.c.b16 %v195, %v194
  %v263 = vpack.c.b16 %v197, %v196
  %v264 = vpack.c.b16 %v199, %v198
  %v265 = vpack.c.b16 %v201, %v200
  %v266 = vpack.c.b16 %v203, %v202
  %v267 = vpack.c.b16 %v205, %v204
  %v268 = vpack.c.b16 %v207, %v206
  %v269 = vpack.c.b16 %v209, %v208
  %v270 = vpack.c.b16 %v211, %v210
  %v271 = vpack.c.b16 %v213, %v212
  %v272 = vpack.c.b16 %v215, %v214
  %v273 = vpack.c.b16 %v217, %v216
  %v274 = vpack.c.b16 %v219, %v218
  %v275 = vpack.c.b16 %v221, %v220
  %v276 = vpack.c.b16 %v223, %v222
  %v277 = vpack.c.b16 %v225, %v224
  %v278 = vpack.c.b16 %v227, %v226
  %v279 = vpack.c.b16 %v229, %v228
  %v280 = vpack.c.b16 %v231, %v230
  %v281 = vpack.c.b16 %v233, %v232
  %v282 = vpack.c.b16 %v235, %v234
  %v283 = vpack.c.b16 %v237, %v236
  %v284 = vpack.c.b16 %v239, %v238
  %v285 = vpack.c.b16 %v241, %v240
  %v286 = vpack.c.b16 %v243, %v242
  %v287 = vpack.c.b16 %v245, %v244
  %v288 = vpack.c.b16 %v247, %v246
  %v289 = vpack.c.b16 %v249, %v248
  %v290 = vpack.c.b16 %v251, %v250
  %v291 = vpack.c.b16 %v253, %v252
  %v292 = vpack.c.b16 %v255, %v254
  %v293 = vpack.c.b16 %v257, %v256
  %vm330 = vcmask 523264
  %v332 = vsel %vm330, %v109, 0
  %334 = vmatpush.bf16.msra.mxu0 %v265
  %335 = vmatpush.bf16.msra.mxu0 %v264
  %336 = vmatpush.bf16.msra.mxu0 %v263
  %337 = vmatpush.bf16.msra.mxu0 %v262
  %338 = vmatpush.bf16.msra.mxu0 %v261
  %339 = vmatpush.bf16.msra.mxu0 %v260
  %340 = vmatpush.bf16.msra.mxu0 %v259
  %341 = vmatpush.bf16.msra.mxu0 %v258
  %342 = vmatmul.bf16.gmra.mxu0 %v105
  %v343 = vpop.f32.mrf.mxu0
  %v344 = vadd.f32 %v95, %v343
  %v345 = vpop.f32.mrf.mxu0
  %346 = vdwg.mxu0
  %347 = vmatpush.bf16.msra.mxu0 %v273
  %348 = vmatpush.bf16.msra.mxu0 %v272
  %349 = vmatpush.bf16.msra.mxu0 %v271
  %350 = vmatpush.bf16.msra.mxu0 %v270
  %351 = vmatpush.bf16.msra.mxu0 %v269
  %352 = vmatpush.bf16.msra.mxu0 %v268
  %353 = vmatpush.bf16.msra.mxu0 %v267
  %354 = vmatpush.bf16.msra.mxu0 %v266
  %355 = vmatmul.bf16.gmra.mxu0 %v106
  %v356 = vpop.f32.mrf.mxu0
  %v357 = vadd.f32 %v344, %v356
  %v358 = vpop.f32.mrf.mxu0
  %359 = vdwg.mxu0
  %360 = vmatpush.bf16.msra.mxu0 %v281
  %361 = vmatpush.bf16.msra.mxu0 %v280
  %362 = vmatpush.bf16.msra.mxu0 %v279
  %363 = vmatpush.bf16.msra.mxu0 %v278
  %364 = vmatpush.bf16.msra.mxu0 %v277
  %365 = vmatpush.bf16.msra.mxu0 %v276
  %366 = vmatpush.bf16.msra.mxu0 %v275
  %367 = vmatpush.bf16.msra.mxu0 %v274
  %368 = vmatmul.bf16.gmra.mxu0 %v107
  %v369 = vpop.f32.mrf.mxu0
  %v370 = vadd.f32 %v357, %v369
  %v371 = vpop.f32.mrf.mxu0
  %372 = vdwg.mxu0
  %373 = vmatpush.bf16.msra.mxu0 %v289
  %374 = vmatpush.bf16.msra.mxu0 %v288
  %375 = vmatpush.bf16.msra.mxu0 %v287
  %376 = vmatpush.bf16.msra.mxu0 %v286
  %377 = vmatpush.bf16.msra.mxu0 %v285
  %378 = vmatpush.bf16.msra.mxu0 %v284
  %379 = vmatpush.bf16.msra.mxu0 %v283
  %380 = vmatpush.bf16.msra.mxu0 %v282
  %381 = vmatmul.bf16.gmra.mxu0 %v108
  %v382 = vpop.f32.mrf.mxu0
  %v383 = vadd.f32 %v370, %v382
  %v384 = vpop.f32.mrf.mxu0
  %385 = vdwg.mxu0
  %386 = vmatpush.bf16.msra.mxu0 0
  %387 = vmatpush.bf16.msra.mxu0 0
  %388 = vmatpush.bf16.msra.mxu0 0
  %389 = vmatpush.bf16.msra.mxu0 0
  %390 = vmatpush.bf16.msra.mxu0 %v293
  %391 = vmatpush.bf16.msra.mxu0 %v292
  %392 = vmatpush.bf16.msra.mxu0 %v291
  %393 = vmatpush.bf16.msra.mxu0 %v290
  %394 = vmatmul.bf16.gmra.mxu0 %v332
  %v395 = vpop.f32.mrf.mxu0
  %v396 = vadd.f32 %v383, %v395
  %v397 = vpop.f32.mrf.mxu0
  %398 = vdwg.mxu0
  %v399 = vld [vmem:[%s3] sm:$0xff]
  %v400 = vadd.f32 %v396, %v399
  %401 = vst.msk [vmem:[%s4] sm:$0xff] %vm330, %v400
  // Predicated region
  $region18: #{resnet_forward.29} parent=0 // pred_check
    _
  $region19: #{resnet_forward.29} parent=0 // pred_check_branch
    %403 = sbr.rel (0) target = $region21
  $region20: #{resnet_forward.29} parent=0 // pred_region
    _
  $region21: #{resnet_forward.29} parent=0 // pred_fallthru
    _
  // Predicated region
  $region22: #{resnet_forward.29} parent=0 // pred_check
    _
  $region23: #{resnet_forward.29} parent=0 // pred_check_branch
    %405 = sbr.rel (0) target = $region25
  $region24: #{resnet_forward.29} parent=0 // pred_region
    _
  $region25: #{resnet_forward.29} parent=0 // pred_fallthru
    _

// kernel: resnet_forward.28
$region0: #{resnet_forward.28}
  #allocation0 [shape = 'u32[]', space=smem, size = 0x4, offset = 0x4, fixed_abs, tag = 'smem constant byte address 0x4 - core index']
  #allocation1 [shape = 'u32[72,128]{1,0:T(1,128)}', space=vmem, size = 0x9000, scoped, tag = 'internal scratch']
  %s0 = inlined_call_operand.vmem [shape: bf16[8,576], index: 0, kind: input, shape index: {}]
  %s1 = inlined_call_operand.vmem [shape: bf16[576,64], index: 1, kind: input, shape index: {}]
  %s2 = inlined_call_operand.vmem [shape: f32[1,64], index: 2, kind: input, shape index: {}]
  %s3 = inlined_call_operand.vmem [shape: f32[8,64], index: 3, kind: output, shape index: {}]
  %s4 = sld [smem:[#allocation0]]
  $region22: #{resnet_forward.28} parent=0
    _
  %s6 = ssub.s32 1, %s4
  %s7 = scalar_select 0, %s6, %s4
  // Predicated region
  $region2: #{resnet_forward.28} parent=0 // pred_check
    _
  $region3: #{resnet_forward.28} parent=0 // pred_check_branch
    %9 = sbr.rel (0) target = $region5
  $region4: #{resnet_forward.28} parent=0 // pred_region
    _
  $region5: #{resnet_forward.28} parent=0 // pred_fallthru
    _
  // Predicated region
  $region6: #{resnet_forward.28} parent=0 // pred_check
    _
  $region7: #{resnet_forward.28} parent=0 // pred_check_branch
    %11 = sbr.rel (0) target = $region9
  $region8: #{resnet_forward.28} parent=0 // pred_region
    _
  $region9: #{resnet_forward.28} parent=0 // pred_fallthru
    _
  // Predicated region
  $region10: #{resnet_forward.28} parent=0 // pred_check
    _
  $region11: #{resnet_forward.28} parent=0 // pred_check_branch
    %13 = sbr.rel (0) target = $region13
  $region12: #{resnet_forward.28} parent=0 // pred_region
    _
  $region13: #{resnet_forward.28} parent=0 // pred_fallthru
    _
  %v15 = vld [vmem:[%s0] sm:$0xff]
  %v16 = vld [vmem:[%s0 + $0x8] sm:$0xff]
  %v17 = vld [vmem:[%s0 + $0x10] sm:$0xf]
  %v18 = vld [vmem:[%s1] sm:$0xf]
  %v19 = vld [vmem:[%s1 + $0x4] sm:$0xf]
  %v20 = vld [vmem:[%s1 + $0x8] sm:$0xf]
  %v21 = vld [vmem:[%s1 + $0xc] sm:$0xf]
  %v22 = vld [vmem:[%s1 + $0x10] sm:$0xf]
  %v23 = vld [vmem:[%s1 + $0x14] sm:$0xf]
  %v24 = vld [vmem:[%s1 + $0x18] sm:$0xf]
  %v25 = vld [vmem:[%s1 + $0x1c] sm:$0xf]
  %v26 = vld [vmem:[%s1 + $0x20] sm:$0xf]
  %v27 = vld [vmem:[%s1 + $0x24] sm:$0xf]
  %v28 = vld [vmem:[%s1 + $0x28] sm:$0xf]
  %v29 = vld [vmem:[%s1 + $0x2c] sm:$0xf]
  %v30 = vld [vmem:[%s1 + $0x30] sm:$0xf]
  %v31 = vld [vmem:[%s1 + $0x34] sm:$0xf]
  %v32 = vld [vmem:[%s1 + $0x38] sm:$0xf]
  %v33 = vld [vmem:[%s1 + $0x3c] sm:$0xf]
  %v34 = vld [vmem:[%s1 + $0x40] sm:$0xf]
  %v35 = vld [vmem:[%s1 + $0x44] sm:$0xf]
  %v36 = vld [vmem:[%s1 + $0x48] sm:$0xf]
  %v37 = vld [vmem:[%s1 + $0x4c] sm:$0xf]
  %v38 = vld [vmem:[%s1 + $0x50] sm:$0xf]
  %v39 = vld [vmem:[%s1 + $0x54] sm:$0xf]
  %v40 = vld [vmem:[%s1 + $0x58] sm:$0xf]
  %v41 = vld [vmem:[%s1 + $0x5c] sm:$0xf]
  %v42 = vld [vmem:[%s1 + $0x60] sm:$0xf]
  %v43 = vld [vmem:[%s1 + $0x64] sm:$0xf]
  %v44 = vld [vmem:[%s1 + $0x68] sm:$0xf]
  %v45 = vld [vmem:[%s1 + $0x6c] sm:$0xf]
  %v46 = vld [vmem:[%s1 + $0x70] sm:$0xf]
  %v47 = vld [vmem:[%s1 + $0x74] sm:$0xf]
  %v48 = vld [vmem:[%s1 + $0x78] sm:$0xf]
  %v49 = vld [vmem:[%s1 + $0x7c] sm:$0xf]
  %v50 = vld [vmem:[%s1 + $0x80] sm:$0xf]
  %v51 = vld [vmem:[%s1 + $0x84] sm:$0xf]
  %v52 = vld [vmem:[%s1 + $0x88] sm:$0xf]
  %v53 = vld [vmem:[%s1 + $0x8c] sm:$0xf]
  %v54 = vld [vmem:[%s1 + $0x90] sm:$0xf]
  %v55 = vld [vmem:[%s1 + $0x94] sm:$0xf]
  %v56 = vld [vmem:[%s1 + $0x98] sm:$0xf]
  %v57 = vld [vmem:[%s1 + $0x9c] sm:$0xf]
  %v58 = vld [vmem:[%s1 + $0xa0] sm:$0xf]
  %v59 = vld [vmem:[%s1 + $0xa4] sm:$0xf]
  %v60 = vld [vmem:[%s1 + $0xa8] sm:$0xf]
  %v61 = vld [vmem:[%s1 + $0xac] sm:$0xf]
  %v62 = vld [vmem:[%s1 + $0xb0] sm:$0xf]
  %v63 = vld [vmem:[%s1 + $0xb4] sm:$0xf]
  %v64 = vld [vmem:[%s1 + $0xb8] sm:$0xf]
  %v65 = vld [vmem:[%s1 + $0xbc] sm:$0xf]
  %v66 = vld [vmem:[%s1 + $0xc0] sm:$0xf]
  %v67 = vld [vmem:[%s1 + $0xc4] sm:$0xf]
  %v68 = vld [vmem:[%s1 + $0xc8] sm:$0xf]
  %v69 = vld [vmem:[%s1 + $0xcc] sm:$0xf]
  %v70 = vld [vmem:[%s1 + $0xd0] sm:$0xf]
  %v71 = vld [vmem:[%s1 + $0xd4] sm:$0xf]
  %v72 = vld [vmem:[%s1 + $0xd8] sm:$0xf]
  %v73 = vld [vmem:[%s1 + $0xdc] sm:$0xf]
  %v74 = vld [vmem:[%s1 + $0xe0] sm:$0xf]
  %v75 = vld [vmem:[%s1 + $0xe4] sm:$0xf]
  %v76 = vld [vmem:[%s1 + $0xe8] sm:$0xf]
  %v77 = vld [vmem:[%s1 + $0xec] sm:$0xf]
  %v78 = vld [vmem:[%s1 + $0xf0] sm:$0xf]
  %v79 = vld [vmem:[%s1 + $0xf4] sm:$0xf]
  %v80 = vld [vmem:[%s1 + $0xf8] sm:$0xf]
  %v81 = vld [vmem:[%s1 + $0xfc] sm:$0xf]
  %v82 = vld [vmem:[%s1 + $0x100] sm:$0xf]
  %v83 = vld [vmem:[%s1 + $0x104] sm:$0xf]
  %v84 = vld [vmem:[%s1 + $0x108] sm:$0xf]
  %v85 = vld [vmem:[%s1 + $0x10c] sm:$0xf]
  %v86 = vld [vmem:[%s1 + $0x110] sm:$0xf]
  %v87 = vld [vmem:[%s1 + $0x114] sm:$0xf]
  %v88 = vld [vmem:[%s1 + $0x118] sm:$0xf]
  %v89 = vld [vmem:[%s1 + $0x11c] sm:$0xf]
  %v90 = vld [vmem:[%s2] sm:$0x1]
  %v92 = vperm.slane %v90, 0
  %v97 = vunpack.c.l.b16 %v15
  %v98 = vunpack.c.h.b16 %v15
  %v99 = vunpack.c.l.b16 %v16
  %v100 = vunpack.c.h.b16 %v16
  %v101 = vunpack.c.l.b16 %v17
  %v102 = vpack.c.b16 %v97, %v97
  %v103 = vpack.c.b16 %v98, %v98
  %v104 = vpack.c.b16 %v99, %v99
  %v105 = vpack.c.b16 %v100, %v100
  %v106 = vpack.c.b16 %v101, %v101
  %v183 = vunpack.c.l.b16 %v18
  %v184 = vunpack.c.l.b16 %v19
  %v185 = vunpack.c.l.b16 %v20
  %v186 = vunpack.c.l.b16 %v21
  %v187 = vunpack.c.l.b16 %v22
  %v188 = vunpack.c.l.b16 %v23
  %v189 = vunpack.c.l.b16 %v24
  %v190 = vunpack.c.l.b16 %v25
  %v191 = vunpack.c.l.b16 %v26
  %v192 = vunpack.c.l.b16 %v27
  %v193 = vunpack.c.l.b16 %v28
  %v194 = vunpack.c.l.b16 %v29
  %v195 = vunpack.c.l.b16 %v30
  %v196 = vunpack.c.l.b16 %v31
  %v197 = vunpack.c.l.b16 %v32
  %v198 = vunpack.c.l.b16 %v33
  %v199 = vunpack.c.l.b16 %v34
  %v200 = vunpack.c.l.b16 %v35
  %v201 = vunpack.c.l.b16 %v36
  %v202 = vunpack.c.l.b16 %v37
  %v203 = vunpack.c.l.b16 %v38
  %v204 = vunpack.c.l.b16 %v39
  %v205 = vunpack.c.l.b16 %v40
  %v206 = vunpack.c.l.b16 %v41
  %v207 = vunpack.c.l.b16 %v42
  %v208 = vunpack.c.l.b16 %v43
  %v209 = vunpack.c.l.b16 %v44
  %v210 = vunpack.c.l.b16 %v45
  %v211 = vunpack.c.l.b16 %v46
  %v212 = vunpack.c.l.b16 %v47
  %v213 = vunpack.c.l.b16 %v48
  %v214 = vunpack.c.l.b16 %v49
  %v215 = vunpack.c.l.b16 %v50
  %v216 = vunpack.c.l.b16 %v51
  %v217 = vunpack.c.l.b16 %v52
  %v218 = vunpack.c.l.b16 %v53
  %v219 = vunpack.c.l.b16 %v54
  %v220 = vunpack.c.l.b16 %v55
  %v221 = vunpack.c.l.b16 %v56
  %v222 = vunpack.c.l.b16 %v57
  %v223 = vunpack.c.l.b16 %v58
  %v224 = vunpack.c.l.b16 %v59
  %v225 = vunpack.c.l.b16 %v60
  %v226 = vunpack.c.l.b16 %v61
  %v227 = vunpack.c.l.b16 %v62
  %v228 = vunpack.c.l.b16 %v63
  %v229 = vunpack.c.l.b16 %v64
  %v230 = vunpack.c.l.b16 %v65
  %v231 = vunpack.c.l.b16 %v66
  %v232 = vunpack.c.l.b16 %v67
  %v233 = vunpack.c.l.b16 %v68
  %v234 = vunpack.c.l.b16 %v69
  %v235 = vunpack.c.l.b16 %v70
  %v236 = vunpack.c.l.b16 %v71
  %v237 = vunpack.c.l.b16 %v72
  %v238 = vunpack.c.l.b16 %v73
  %v239 = vunpack.c.l.b16 %v74
  %v240 = vunpack.c.l.b16 %v75
  %v241 = vunpack.c.l.b16 %v76
  %v242 = vunpack.c.l.b16 %v77
  %v243 = vunpack.c.l.b16 %v78
  %v244 = vunpack.c.l.b16 %v79
  %v245 = vunpack.c.l.b16 %v80
  %v246 = vunpack.c.l.b16 %v81
  %v247 = vunpack.c.l.b16 %v82
  %v248 = vunpack.c.l.b16 %v83
  %v249 = vunpack.c.l.b16 %v84
  %v250 = vunpack.c.l.b16 %v85
  %v251 = vunpack.c.l.b16 %v86
  %v252 = vunpack.c.l.b16 %v87
  %v253 = vunpack.c.l.b16 %v88
  %v254 = vunpack.c.l.b16 %v89
  %v255 = vpack.c.b16 %v184, %v183
  %v256 = vpack.c.b16 %v186, %v185
  %v257 = vpack.c.b16 %v188, %v187
  %v258 = vpack.c.b16 %v190, %v189
  %v259 = vpack.c.b16 %v192, %v191
  %v260 = vpack.c.b16 %v194, %v193
  %v261 = vpack.c.b16 %v196, %v195
  %v262 = vpack.c.b16 %v198, %v197
  %v263 = vpack.c.b16 %v200, %v199
  %v264 = vpack.c.b16 %v202, %v201
  %v265 = vpack.c.b16 %v204, %v203
  %v266 = vpack.c.b16 %v206, %v205
  %v267 = vpack.c.b16 %v208, %v207
  %v268 = vpack.c.b16 %v210, %v209
  %v269 = vpack.c.b16 %v212, %v211
  %v270 = vpack.c.b16 %v214, %v213
  %v271 = vpack.c.b16 %v216, %v215
  %v272 = vpack.c.b16 %v218, %v217
  %v273 = vpack.c.b16 %v220, %v219
  %v274 = vpack.c.b16 %v222, %v221
  %v275 = vpack.c.b16 %v224, %v223
  %v276 = vpack.c.b16 %v226, %v225
  %v277 = vpack.c.b16 %v228, %v227
  %v278 = vpack.c.b16 %v230, %v229
  %v279 = vpack.c.b16 %v232, %v231
  %v280 = vpack.c.b16 %v234, %v233
  %v281 = vpack.c.b16 %v236, %v235
  %v282 = vpack.c.b16 %v238, %v237
  %v283 = vpack.c.b16 %v240, %v239
  %v284 = vpack.c.b16 %v242, %v241
  %v285 = vpack.c.b16 %v244, %v243
  %v286 = vpack.c.b16 %v246, %v245
  %v287 = vpack.c.b16 %v248, %v247
  %v288 = vpack.c.b16 %v250, %v249
  %v289 = vpack.c.b16 %v252, %v251
  %v290 = vpack.c.b16 %v254, %v253
  %vm327 = vcmask 523264
  %v329 = vsel %vm327, %v106, 0
  %331 = vmatpush.bf16.msra.mxu0 %v262
  %332 = vmatpush.bf16.msra.mxu0 %v261
  %333 = vmatpush.bf16.msra.mxu0 %v260
  %334 = vmatpush.bf16.msra.mxu0 %v259
  %335 = vmatpush.bf16.msra.mxu0 %v258
  %336 = vmatpush.bf16.msra.mxu0 %v257
  %337 = vmatpush.bf16.msra.mxu0 %v256
  %338 = vmatpush.bf16.msra.mxu0 %v255
  %339 = vmatmul.bf16.gmra.mxu0 %v102
  %v340 = vpop.f32.mrf.mxu0
  %v341 = vadd.f32 %v92, %v340
  %v342 = vpop.f32.mrf.mxu0
  %343 = vdwg.mxu0
  %344 = vmatpush.bf16.msra.mxu0 %v270
  %345 = vmatpush.bf16.msra.mxu0 %v269
  %346 = vmatpush.bf16.msra.mxu0 %v268
  %347 = vmatpush.bf16.msra.mxu0 %v267
  %348 = vmatpush.bf16.msra.mxu0 %v266
  %349 = vmatpush.bf16.msra.mxu0 %v265
  %350 = vmatpush.bf16.msra.mxu0 %v264
  %351 = vmatpush.bf16.msra.mxu0 %v263
  %352 = vmatmul.bf16.gmra.mxu0 %v103
  %v353 = vpop.f32.mrf.mxu0
  %v354 = vadd.f32 %v341, %v353
  %v355 = vpop.f32.mrf.mxu0
  %356 = vdwg.mxu0
  %357 = vmatpush.bf16.msra.mxu0 %v278
  %358 = vmatpush.bf16.msra.mxu0 %v277
  %359 = vmatpush.bf16.msra.mxu0 %v276
  %360 = vmatpush.bf16.msra.mxu0 %v275
  %361 = vmatpush.bf16.msra.mxu0 %v274
  %362 = vmatpush.bf16.msra.mxu0 %v273
  %363 = vmatpush.bf16.msra.mxu0 %v272
  %364 = vmatpush.bf16.msra.mxu0 %v271
  %365 = vmatmul.bf16.gmra.mxu0 %v104
  %v366 = vpop.f32.mrf.mxu0
  %v367 = vadd.f32 %v354, %v366
  %v368 = vpop.f32.mrf.mxu0
  %369 = vdwg.mxu0
  %370 = vmatpush.bf16.msra.mxu0 %v286
  %371 = vmatpush.bf16.msra.mxu0 %v285
  %372 = vmatpush.bf16.msra.mxu0 %v284
  %373 = vmatpush.bf16.msra.mxu0 %v283
  %374 = vmatpush.bf16.msra.mxu0 %v282
  %375 = vmatpush.bf16.msra.mxu0 %v281
  %376 = vmatpush.bf16.msra.mxu0 %v280
  %377 = vmatpush.bf16.msra.mxu0 %v279
  %378 = vmatmul.bf16.gmra.mxu0 %v105
  %v379 = vpop.f32.mrf.mxu0
  %v380 = vadd.f32 %v367, %v379
  %v381 = vpop.f32.mrf.mxu0
  %382 = vdwg.mxu0
  %383 = vmatpush.bf16.msra.mxu0 0
  %384 = vmatpush.bf16.msra.mxu0 0
  %385 = vmatpush.bf16.msra.mxu0 0
  %386 = vmatpush.bf16.msra.mxu0 0
  %387 = vmatpush.bf16.msra.mxu0 %v290
  %388 = vmatpush.bf16.msra.mxu0 %v289
  %389 = vmatpush.bf16.msra.mxu0 %v288
  %390 = vmatpush.bf16.msra.mxu0 %v287
  %391 = vmatmul.bf16.gmra.mxu0 %v329
  %v392 = vpop.f32.mrf.mxu0
  %v393 = vadd.f32 %v380, %v392
  %v394 = vpop.f32.mrf.mxu0
  %395 = vdwg.mxu0
  %v396 = vmax.f32 %v393, 0.0
  %397 = vst.msk [vmem:[%s3] sm:$0xff] %vm327, %v396
  // Predicated region
  $region14: #{resnet_forward.28} parent=0 // pred_check
    _
  $region15: #{resnet_forward.28} parent=0 // pred_check_branch
    %399 = sbr.rel (0) target = $region17
  $region16: #{resnet_forward.28} parent=0 // pred_region
    _
  $region17: #{resnet_forward.28} parent=0 // pred_fallthru
    _
  // Predicated region
  $region18: #{resnet_forward.28} parent=0 // pred_check
    _
  $region19: #{resnet_forward.28} parent=0 // pred_check_branch
    %401 = sbr.rel (0) target = $region21
  $region20: #{resnet_forward.28} parent=0 // pred_region
    _
  $region21: #{resnet_forward.28} parent=0 // pred_fallthru
    _

// kernel: resnet_forward.30
$region0: #{resnet_forward.30}
  #allocation0 [shape = 'u32[]', space=smem, size = 0x4, offset = 0x4, fixed_abs, tag = 'smem constant byte address 0x4 - core index']
  #allocation1 [shape = 'u32[72,128]{1,0:T(1,128)}', space=vmem, size = 0x9000, scoped, tag = 'internal scratch']
  %s0 = inlined_call_operand.vmem [shape: bf16[2,576], index: 0, kind: input, shape index: {}]
  %s1 = inlined_call_operand.vmem [shape: bf16[576,128], index: 1, kind: input, shape index: {}]
  %s2 = inlined_call_operand.vmem [shape: f32[1,128], index: 2, kind: input, shape index: {}]
  %s3 = inlined_call_operand.vmem [shape: f32[2,128], index: 3, kind: output, shape index: {}]
  %s4 = sld [smem:[#allocation0]]
  $region22: #{resnet_forward.30} parent=0
    _
  %s6 = ssub.s32 1, %s4
  %s7 = scalar_select 0, %s6, %s4
  // Predicated region
  $region2: #{resnet_forward.30} parent=0 // pred_check
    _
  $region3: #{resnet_forward.30} parent=0 // pred_check_branch
    %9 = sbr.rel (0) target = $region5
  $region4: #{resnet_forward.30} parent=0 // pred_region
    _
  $region5: #{resnet_forward.30} parent=0 // pred_fallthru
    _
  // Predicated region
  $region6: #{resnet_forward.30} parent=0 // pred_check
    _
  $region7: #{resnet_forward.30} parent=0 // pred_check_branch
    %11 = sbr.rel (0) target = $region9
  $region8: #{resnet_forward.30} parent=0 // pred_region
    _
  $region9: #{resnet_forward.30} parent=0 // pred_fallthru
    _
  // Predicated region
  $region10: #{resnet_forward.30} parent=0 // pred_check
    _
  $region11: #{resnet_forward.30} parent=0 // pred_check_branch
    %13 = sbr.rel (0) target = $region13
  $region12: #{resnet_forward.30} parent=0 // pred_region
    _
  $region13: #{resnet_forward.30} parent=0 // pred_fallthru
    _
  %v15 = vld [vmem:[%s0] sm:$0x1f]
  %v16 = vld [vmem:[%s1] sm:$0xf]
  %v17 = vld [vmem:[%s1 + $0x4] sm:$0xf]
  %v18 = vld [vmem:[%s1 + $0x8] sm:$0xf]
  %v19 = vld [vmem:[%s1 + $0xc] sm:$0xf]
  %v20 = vld [vmem:[%s1 + $0x10] sm:$0xf]
  %v21 = vld [vmem:[%s1 + $0x14] sm:$0xf]
  %v22 = vld [vmem:[%s1 + $0x18] sm:$0xf]
  %v23 = vld [vmem:[%s1 + $0x1c] sm:$0xf]
  %v24 = vld [vmem:[%s1 + $0x20] sm:$0xf]
  %v25 = vld [vmem:[%s1 + $0x24] sm:$0xf]
  %v26 = vld [vmem:[%s1 + $0x28] sm:$0xf]
  %v27 = vld [vmem:[%s1 + $0x2c] sm:$0xf]
  %v28 = vld [vmem:[%s1 + $0x30] sm:$0xf]
  %v29 = vld [vmem:[%s1 + $0x34] sm:$0xf]
  %v30 = vld [vmem:[%s1 + $0x38] sm:$0xf]
  %v31 = vld [vmem:[%s1 + $0x3c] sm:$0xf]
  %v32 = vld [vmem:[%s1 + $0x40] sm:$0xf]
  %v33 = vld [vmem:[%s1 + $0x44] sm:$0xf]
  %v34 = vld [vmem:[%s1 + $0x48] sm:$0xf]
  %v35 = vld [vmem:[%s1 + $0x4c] sm:$0xf]
  %v36 = vld [vmem:[%s1 + $0x50] sm:$0xf]
  %v37 = vld [vmem:[%s1 + $0x54] sm:$0xf]
  %v38 = vld [vmem:[%s1 + $0x58] sm:$0xf]
  %v39 = vld [vmem:[%s1 + $0x5c] sm:$0xf]
  %v40 = vld [vmem:[%s1 + $0x60] sm:$0xf]
  %v41 = vld [vmem:[%s1 + $0x64] sm:$0xf]
  %v42 = vld [vmem:[%s1 + $0x68] sm:$0xf]
  %v43 = vld [vmem:[%s1 + $0x6c] sm:$0xf]
  %v44 = vld [vmem:[%s1 + $0x70] sm:$0xf]
  %v45 = vld [vmem:[%s1 + $0x74] sm:$0xf]
  %v46 = vld [vmem:[%s1 + $0x78] sm:$0xf]
  %v47 = vld [vmem:[%s1 + $0x7c] sm:$0xf]
  %v48 = vld [vmem:[%s1 + $0x80] sm:$0xf]
  %v49 = vld [vmem:[%s1 + $0x84] sm:$0xf]
  %v50 = vld [vmem:[%s1 + $0x88] sm:$0xf]
  %v51 = vld [vmem:[%s1 + $0x8c] sm:$0xf]
  %v52 = vld [vmem:[%s1 + $0x90] sm:$0xf]
  %v53 = vld [vmem:[%s1 + $0x94] sm:$0xf]
  %v54 = vld [vmem:[%s1 + $0x98] sm:$0xf]
  %v55 = vld [vmem:[%s1 + $0x9c] sm:$0xf]
  %v56 = vld [vmem:[%s1 + $0xa0] sm:$0xf]
  %v57 = vld [vmem:[%s1 + $0xa4] sm:$0xf]
  %v58 = vld [vmem:[%s1 + $0xa8] sm:$0xf]
  %v59 = vld [vmem:[%s1 + $0xac] sm:$0xf]
  %v60 = vld [vmem:[%s1 + $0xb0] sm:$0xf]
  %v61 = vld [vmem:[%s1 + $0xb4] sm:$0xf]
  %v62 = vld [vmem:[%s1 + $0xb8] sm:$0xf]
  %v63 = vld [vmem:[%s1 + $0xbc] sm:$0xf]
  %v64 = vld [vmem:[%s1 + $0xc0] sm:$0xf]
  %v65 = vld [vmem:[%s1 + $0xc4] sm:$0xf]
  %v66 = vld [vmem:[%s1 + $0xc8] sm:$0xf]
  %v67 = vld [vmem:[%s1 + $0xcc] sm:$0xf]
  %v68 = vld [vmem:[%s1 + $0xd0] sm:$0xf]
  %v69 = vld [vmem:[%s1 + $0xd4] sm:$0xf]
  %v70 = vld [vmem:[%s1 + $0xd8] sm:$0xf]
  %v71 = vld [vmem:[%s1 + $0xdc] sm:$0xf]
  %v72 = vld [vmem:[%s1 + $0xe0] sm:$0xf]
  %v73 = vld [vmem:[%s1 + $0xe4] sm:$0xf]
  %v74 = vld [vmem:[%s1 + $0xe8] sm:$0xf]
  %v75 = vld [vmem:[%s1 + $0xec] sm:$0xf]
  %v76 = vld [vmem:[%s1 + $0xf0] sm:$0xf]
  %v77 = vld [vmem:[%s1 + $0xf4] sm:$0xf]
  %v78 = vld [vmem:[%s1 + $0xf8] sm:$0xf]
  %v79 = vld [vmem:[%s1 + $0xfc] sm:$0xf]
  %v80 = vld [vmem:[%s1 + $0x100] sm:$0xf]
  %v81 = vld [vmem:[%s1 + $0x104] sm:$0xf]
  %v82 = vld [vmem:[%s1 + $0x108] sm:$0xf]
  %v83 = vld [vmem:[%s1 + $0x10c] sm:$0xf]
  %v84 = vld [vmem:[%s1 + $0x110] sm:$0xf]
  %v85 = vld [vmem:[%s1 + $0x114] sm:$0xf]
  %v86 = vld [vmem:[%s1 + $0x118] sm:$0xf]
  %v87 = vld [vmem:[%s1 + $0x11c] sm:$0xf]
  %v88 = vld [vmem:[%s2] sm:$0x1]
  %v90 = vperm.slane %v88, 0
  %93 = vst [vmem:[#allocation1] ss:$9 sm:$0xff] %v15
  %v94 = vld [vmem:[#allocation1] sm:$0xff]
  %v95 = vld [vmem:[#allocation1 + $0x9] sm:$0xff]
  %v96 = vld [vmem:[#allocation1 + $0x12] sm:$0xff]
  %v97 = vld [vmem:[#allocation1 + $0x1b] sm:$0xff]
  %v98 = vld [vmem:[#allocation1 + $0x24] sm:$0xff]
  %v175 = vunpack.c.l.b16 %v16
  %v176 = vunpack.c.l.b16 %v17
  %v177 = vunpack.c.l.b16 %v18
  %v178 = vunpack.c.l.b16 %v19
  %v179 = vunpack.c.l.b16 %v20
  %v180 = vunpack.c.l.b16 %v21
  %v181 = vunpack.c.l.b16 %v22
  %v182 = vunpack.c.l.b16 %v23
  %v183 = vunpack.c.l.b16 %v24
  %v184 = vunpack.c.l.b16 %v25
  %v185 = vunpack.c.l.b16 %v26
  %v186 = vunpack.c.l.b16 %v27
  %v187 = vunpack.c.l.b16 %v28
  %v188 = vunpack.c.l.b16 %v29
  %v189 = vunpack.c.l.b16 %v30
  %v190 = vunpack.c.l.b16 %v31
  %v191 = vunpack.c.l.b16 %v32
  %v192 = vunpack.c.l.b16 %v33
  %v193 = vunpack.c.l.b16 %v34
  %v194 = vunpack.c.l.b16 %v35
  %v195 = vunpack.c.l.b16 %v36
  %v196 = vunpack.c.l.b16 %v37
  %v197 = vunpack.c.l.b16 %v38
  %v198 = vunpack.c.l.b16 %v39
  %v199 = vunpack.c.l.b16 %v40
  %v200 = vunpack.c.l.b16 %v41
  %v201 = vunpack.c.l.b16 %v42
  %v202 = vunpack.c.l.b16 %v43
  %v203 = vunpack.c.l.b16 %v44
  %v204 = vunpack.c.l.b16 %v45
  %v205 = vunpack.c.l.b16 %v46
  %v206 = vunpack.c.l.b16 %v47
  %v207 = vunpack.c.l.b16 %v48
  %v208 = vunpack.c.l.b16 %v49
  %v209 = vunpack.c.l.b16 %v50
  %v210 = vunpack.c.l.b16 %v51
  %v211 = vunpack.c.l.b16 %v52
  %v212 = vunpack.c.l.b16 %v53
  %v213 = vunpack.c.l.b16 %v54
  %v214 = vunpack.c.l.b16 %v55
  %v215 = vunpack.c.l.b16 %v56
  %v216 = vunpack.c.l.b16 %v57
  %v217 = vunpack.c.l.b16 %v58
  %v218 = vunpack.c.l.b16 %v59
  %v219 = vunpack.c.l.b16 %v60
  %v220 = vunpack.c.l.b16 %v61
  %v221 = vunpack.c.l.b16 %v62
  %v222 = vunpack.c.l.b16 %v63
  %v223 = vunpack.c.l.b16 %v64
  %v224 = vunpack.c.l.b16 %v65
  %v225 = vunpack.c.l.b16 %v66
  %v226 = vunpack.c.l.b16 %v67
  %v227 = vunpack.c.l.b16 %v68
  %v228 = vunpack.c.l.b16 %v69
  %v229 = vunpack.c.l.b16 %v70
  %v230 = vunpack.c.l.b16 %v71
  %v231 = vunpack.c.l.b16 %v72
  %v232 = vunpack.c.l.b16 %v73
  %v233 = vunpack.c.l.b16 %v74
  %v234 = vunpack.c.l.b16 %v75
  %v235 = vunpack.c.l.b16 %v76
  %v236 = vunpack.c.l.b16 %v77
  %v237 = vunpack.c.l.b16 %v78
  %v238 = vunpack.c.l.b16 %v79
  %v239 = vunpack.c.l.b16 %v80
  %v240 = vunpack.c.l.b16 %v81
  %v241 = vunpack.c.l.b16 %v82
  %v242 = vunpack.c.l.b16 %v83
  %v243 = vunpack.c.l.b16 %v84
  %v244 = vunpack.c.l.b16 %v85
  %v245 = vunpack.c.l.b16 %v86
  %v246 = vunpack.c.l.b16 %v87
  %v247 = vpack.c.b16 %v176, %v175
  %v248 = vpack.c.b16 %v178, %v177
  %v249 = vpack.c.b16 %v180, %v179
  %v250 = vpack.c.b16 %v182, %v181
  %v251 = vpack.c.b16 %v184, %v183
  %v252 = vpack.c.b16 %v186, %v185
  %v253 = vpack.c.b16 %v188, %v187
  %v254 = vpack.c.b16 %v190, %v189
  %v255 = vpack.c.b16 %v192, %v191
  %v256 = vpack.c.b16 %v194, %v193
  %v257 = vpack.c.b16 %v196, %v195
  %v258 = vpack.c.b16 %v198, %v197
  %v259 = vpack.c.b16 %v200, %v199
  %v260 = vpack.c.b16 %v202, %v201
  %v261 = vpack.c.b16 %v204, %v203
  %v262 = vpack.c.b16 %v206, %v205
  %v263 = vpack.c.b16 %v208, %v207
  %v264 = vpack.c.b16 %v210, %v209
  %v265 = vpack.c.b16 %v212, %v211
  %v266 = vpack.c.b16 %v214, %v213
  %v267 = vpack.c.b16 %v216, %v215
  %v268 = vpack.c.b16 %v218, %v217
  %v269 = vpack.c.b16 %v220, %v219
  %v270 = vpack.c.b16 %v222, %v221
  %v271 = vpack.c.b16 %v224, %v223
  %v272 = vpack.c.b16 %v226, %v225
  %v273 = vpack.c.b16 %v228, %v227
  %v274 = vpack.c.b16 %v230, %v229
  %v275 = vpack.c.b16 %v232, %v231
  %v276 = vpack.c.b16 %v234, %v233
  %v277 = vpack.c.b16 %v236, %v235
  %v278 = vpack.c.b16 %v238, %v237
  %v279 = vpack.c.b16 %v240, %v239
  %v280 = vpack.c.b16 %v242, %v241
  %v281 = vpack.c.b16 %v244, %v243
  %v282 = vpack.c.b16 %v246, %v245
  %vm319 = vcmask 523264
  %v320 = vsel %vm319, %v98, 0
  %322 = vmatpush.bf16.msra.mxu0 %v254
  %323 = vmatpush.bf16.msra.mxu0 %v253
  %324 = vmatpush.bf16.msra.mxu0 %v252
  %325 = vmatpush.bf16.msra.mxu0 %v251
  %326 = vmatpush.bf16.msra.mxu0 %v250
  %327 = vmatpush.bf16.msra.mxu0 %v249
  %328 = vmatpush.bf16.msra.mxu0 %v248
  %329 = vmatpush.bf16.msra.mxu0 %v247
  %330 = vmatmul.bf16.gmra.mxu0 %v94
  %v331 = vpop.f32.mrf.mxu0
  %v332 = vadd.f32 %v90, %v331
  %v333 = vpop.f32.mrf.mxu0
  %334 = vdwg.mxu0
  %335 = vmatpush.bf16.msra.mxu0 %v262
  %336 = vmatpush.bf16.msra.mxu0 %v261
  %337 = vmatpush.bf16.msra.mxu0 %v260
  %338 = vmatpush.bf16.msra.mxu0 %v259
  %339 = vmatpush.bf16.msra.mxu0 %v258
  %340 = vmatpush.bf16.msra.mxu0 %v257
  %341 = vmatpush.bf16.msra.mxu0 %v256
  %342 = vmatpush.bf16.msra.mxu0 %v255
  %343 = vmatmul.bf16.gmra.mxu0 %v95
  %v344 = vpop.f32.mrf.mxu0
  %v345 = vadd.f32 %v332, %v344
  %v346 = vpop.f32.mrf.mxu0
  %347 = vdwg.mxu0
  %348 = vmatpush.bf16.msra.mxu0 %v270
  %349 = vmatpush.bf16.msra.mxu0 %v269
  %350 = vmatpush.bf16.msra.mxu0 %v268
  %351 = vmatpush.bf16.msra.mxu0 %v267
  %352 = vmatpush.bf16.msra.mxu0 %v266
  %353 = vmatpush.bf16.msra.mxu0 %v265
  %354 = vmatpush.bf16.msra.mxu0 %v264
  %355 = vmatpush.bf16.msra.mxu0 %v263
  %356 = vmatmul.bf16.gmra.mxu0 %v96
  %v357 = vpop.f32.mrf.mxu0
  %v358 = vadd.f32 %v345, %v357
  %v359 = vpop.f32.mrf.mxu0
  %360 = vdwg.mxu0
  %361 = vmatpush.bf16.msra.mxu0 %v278
  %362 = vmatpush.bf16.msra.mxu0 %v277
  %363 = vmatpush.bf16.msra.mxu0 %v276
  %364 = vmatpush.bf16.msra.mxu0 %v275
  %365 = vmatpush.bf16.msra.mxu0 %v274
  %366 = vmatpush.bf16.msra.mxu0 %v273
  %367 = vmatpush.bf16.msra.mxu0 %v272
  %368 = vmatpush.bf16.msra.mxu0 %v271
  %369 = vmatmul.bf16.gmra.mxu0 %v97
  %v370 = vpop.f32.mrf.mxu0
  %v371 = vadd.f32 %v358, %v370
  %v372 = vpop.f32.mrf.mxu0
  %373 = vdwg.mxu0
  %374 = vmatpush.bf16.msra.mxu0 0
  %375 = vmatpush.bf16.msra.mxu0 0
  %376 = vmatpush.bf16.msra.mxu0 0
  %377 = vmatpush.bf16.msra.mxu0 0
  %378 = vmatpush.bf16.msra.mxu0 %v282
  %379 = vmatpush.bf16.msra.mxu0 %v281
  %380 = vmatpush.bf16.msra.mxu0 %v280
  %381 = vmatpush.bf16.msra.mxu0 %v279
  %382 = vmatmul.bf16.gmra.mxu0 %v320
  %v383 = vpop.f32.mrf.mxu0
  %v384 = vadd.f32 %v371, %v383
  %v385 = vpop.f32.mrf.mxu0
  %386 = vdwg.mxu0
  %v387 = vmax.f32 %v384, 0.0
  %388 = vst [vmem:[%s3] sm:$0x3] %v387
  // Predicated region
  $region14: #{resnet_forward.30} parent=0 // pred_check
    _
  $region15: #{resnet_forward.30} parent=0 // pred_check_branch
    %390 = sbr.rel (0) target = $region17
  $region16: #{resnet_forward.30} parent=0 // pred_region
    _
  $region17: #{resnet_forward.30} parent=0 // pred_fallthru
    _
  // Predicated region
  $region18: #{resnet_forward.30} parent=0 // pred_check
    _
  $region19: #{resnet_forward.30} parent=0 // pred_check_branch
    %392 = sbr.rel (0) target = $region21
  $region20: #{resnet_forward.30} parent=0 // pred_region
    _
  $region21: #{resnet_forward.30} parent=0 // pred_fallthru
    _

// kernel: resnet_forward.33
$region0: #{resnet_forward.33}
  #allocation0 [shape = 'u32[]', space=smem, size = 0x4, offset = 0x4, fixed_abs, tag = 'smem constant byte address 0x4 - core index']
  #allocation1 [shape = 'u32[72,128]{1,0:T(1,128)}', space=vmem, size = 0x9000, scoped, tag = 'internal scratch']
  %s0 = inlined_call_operand.vmem [shape: bf16[2,1152], index: 0, kind: input, shape index: {}]
  %s1 = inlined_call_operand.vmem [shape: bf16[1152,128], index: 1, kind: input, shape index: {}]
  %s2 = inlined_call_operand.vmem [shape: f32[1,128], index: 2, kind: input, shape index: {}]
  %s3 = inlined_call_operand.vmem [shape: f32[2,128], index: 3, kind: input, shape index: {}]
  %s4 = inlined_call_operand.vmem [shape: f32[2,128], index: 4, kind: output, shape index: {}]
  %s5 = sld [smem:[#allocation0]]
  $region26: #{resnet_forward.33} parent=0
    _
  %s7 = ssub.s32 1, %s5
  %s8 = scalar_select 0, %s7, %s5
  // Predicated region
  $region2: #{resnet_forward.33} parent=0 // pred_check
    _
  $region3: #{resnet_forward.33} parent=0 // pred_check_branch
    %10 = sbr.rel (0) target = $region5
  $region4: #{resnet_forward.33} parent=0 // pred_region
    _
  $region5: #{resnet_forward.33} parent=0 // pred_fallthru
    _
  // Predicated region
  $region6: #{resnet_forward.33} parent=0 // pred_check
    _
  $region7: #{resnet_forward.33} parent=0 // pred_check_branch
    %12 = sbr.rel (0) target = $region9
  $region8: #{resnet_forward.33} parent=0 // pred_region
    _
  $region9: #{resnet_forward.33} parent=0 // pred_fallthru
    _
  // Predicated region
  $region10: #{resnet_forward.33} parent=0 // pred_check
    _
  $region11: #{resnet_forward.33} parent=0 // pred_check_branch
    %14 = sbr.rel (0) target = $region13
  $region12: #{resnet_forward.33} parent=0 // pred_region
    _
  $region13: #{resnet_forward.33} parent=0 // pred_fallthru
    _
  // Predicated region
  $region14: #{resnet_forward.33} parent=0 // pred_check
    _
  $region15: #{resnet_forward.33} parent=0 // pred_check_branch
    %16 = sbr.rel (0) target = $region17
  $region16: #{resnet_forward.33} parent=0 // pred_region
    _
  $region17: #{resnet_forward.33} parent=0 // pred_fallthru
    _
  %v17 = vld [vmem:[%s0] sm:$0xff]
  %v18 = vld [vmem:[%s0 + $0x8] sm:$0x1]
  %v19 = vld [vmem:[%s1] sm:$0xf]
  %v20 = vld [vmem:[%s1 + $0x4] sm:$0xf]
  %v21 = vld [vmem:[%s1 + $0x8] sm:$0xf]
  %v22 = vld [vmem:[%s1 + $0xc] sm:$0xf]
  %v23 = vld [vmem:[%s1 + $0x10] sm:$0xf]
  %v24 = vld [vmem:[%s1 + $0x14] sm:$0xf]
  %v25 = vld [vmem:[%s1 + $0x18] sm:$0xf]
  %v26 = vld [vmem:[%s1 + $0x1c] sm:$0xf]
  %v27 = vld [vmem:[%s1 + $0x20] sm:$0xf]
  %v28 = vld [vmem:[%s1 + $0x24] sm:$0xf]
  %v29 = vld [vmem:[%s1 + $0x28] sm:$0xf]
  %v30 = vld [vmem:[%s1 + $0x2c] sm:$0xf]
  %v31 = vld [vmem:[%s1 + $0x30] sm:$0xf]
  %v32 = vld [vmem:[%s1 + $0x34] sm:$0xf]
  %v33 = vld [vmem:[%s1 + $0x38] sm:$0xf]
  %v34 = vld [vmem:[%s1 + $0x3c] sm:$0xf]
  %v35 = vld [vmem:[%s1 + $0x40] sm:$0xf]
  %v36 = vld [vmem:[%s1 + $0x44] sm:$0xf]
  %v37 = vld [vmem:[%s1 + $0x48] sm:$0xf]
  %v38 = vld [vmem:[%s1 + $0x4c] sm:$0xf]
  %v39 = vld [vmem:[%s1 + $0x50] sm:$0xf]
  %v40 = vld [vmem:[%s1 + $0x54] sm:$0xf]
  %v41 = vld [vmem:[%s1 + $0x58] sm:$0xf]
  %v42 = vld [vmem:[%s1 + $0x5c] sm:$0xf]
  %v43 = vld [vmem:[%s1 + $0x60] sm:$0xf]
  %v44 = vld [vmem:[%s1 + $0x64] sm:$0xf]
  %v45 = vld [vmem:[%s1 + $0x68] sm:$0xf]
  %v46 = vld [vmem:[%s1 + $0x6c] sm:$0xf]
  %v47 = vld [vmem:[%s1 + $0x70] sm:$0xf]
  %v48 = vld [vmem:[%s1 + $0x74] sm:$0xf]
  %v49 = vld [vmem:[%s1 + $0x78] sm:$0xf]
  %v50 = vld [vmem:[%s1 + $0x7c] sm:$0xf]
  %v51 = vld [vmem:[%s1 + $0x80] sm:$0xf]
  %v52 = vld [vmem:[%s1 + $0x84] sm:$0xf]
  %v53 = vld [vmem:[%s1 + $0x88] sm:$0xf]
  %v54 = vld [vmem:[%s1 + $0x8c] sm:$0xf]
  %v55 = vld [vmem:[%s1 + $0x90] sm:$0xf]
  %v56 = vld [vmem:[%s1 + $0x94] sm:$0xf]
  %v57 = vld [vmem:[%s1 + $0x98] sm:$0xf]
  %v58 = vld [vmem:[%s1 + $0x9c] sm:$0xf]
  %v59 = vld [vmem:[%s1 + $0xa0] sm:$0xf]
  %v60 = vld [vmem:[%s1 + $0xa4] sm:$0xf]
  %v61 = vld [vmem:[%s1 + $0xa8] sm:$0xf]
  %v62 = vld [vmem:[%s1 + $0xac] sm:$0xf]
  %v63 = vld [vmem:[%s1 + $0xb0] sm:$0xf]
  %v64 = vld [vmem:[%s1 + $0xb4] sm:$0xf]
  %v65 = vld [vmem:[%s1 + $0xb8] sm:$0xf]
  %v66 = vld [vmem:[%s1 + $0xbc] sm:$0xf]
  %v67 = vld [vmem:[%s1 + $0xc0] sm:$0xf]
  %v68 = vld [vmem:[%s1 + $0xc4] sm:$0xf]
  %v69 = vld [vmem:[%s1 + $0xc8] sm:$0xf]
  %v70 = vld [vmem:[%s1 + $0xcc] sm:$0xf]
  %v71 = vld [vmem:[%s1 + $0xd0] sm:$0xf]
  %v72 = vld [vmem:[%s1 + $0xd4] sm:$0xf]
  %v73 = vld [vmem:[%s1 + $0xd8] sm:$0xf]
  %v74 = vld [vmem:[%s1 + $0xdc] sm:$0xf]
  %v75 = vld [vmem:[%s1 + $0xe0] sm:$0xf]
  %v76 = vld [vmem:[%s1 + $0xe4] sm:$0xf]
  %v77 = vld [vmem:[%s1 + $0xe8] sm:$0xf]
  %v78 = vld [vmem:[%s1 + $0xec] sm:$0xf]
  %v79 = vld [vmem:[%s1 + $0xf0] sm:$0xf]
  %v80 = vld [vmem:[%s1 + $0xf4] sm:$0xf]
  %v81 = vld [vmem:[%s1 + $0xf8] sm:$0xf]
  %v82 = vld [vmem:[%s1 + $0xfc] sm:$0xf]
  %v83 = vld [vmem:[%s1 + $0x100] sm:$0xf]
  %v84 = vld [vmem:[%s1 + $0x104] sm:$0xf]
  %v85 = vld [vmem:[%s1 + $0x108] sm:$0xf]
  %v86 = vld [vmem:[%s1 + $0x10c] sm:$0xf]
  %v87 = vld [vmem:[%s1 + $0x110] sm:$0xf]
  %v88 = vld [vmem:[%s1 + $0x114] sm:$0xf]
  %v89 = vld [vmem:[%s1 + $0x118] sm:$0xf]
  %v90 = vld [vmem:[%s1 + $0x11c] sm:$0xf]
  %v91 = vld [vmem:[%s1 + $0x120] sm:$0xf]
  %v92 = vld [vmem:[%s1 + $0x124] sm:$0xf]
  %v93 = vld [vmem:[%s1 + $0x128] sm:$0xf]
  %v94 = vld [vmem:[%s1 + $0x12c] sm:$0xf]
  %v95 = vld [vmem:[%s1 + $0x130] sm:$0xf]
  %v96 = vld [vmem:[%s1 + $0x134] sm:$0xf]
  %v97 = vld [vmem:[%s1 + $0x138] sm:$0xf]
  %v98 = vld [vmem:[%s1 + $0x13c] sm:$0xf]
  %v99 = vld [vmem:[%s1 + $0x140] sm:$0xf]
  %v100 = vld [vmem:[%s1 + $0x144] sm:$0xf]
  %v101 = vld [vmem:[%s1 + $0x148] sm:$0xf]
  %v102 = vld [vmem:[%s1 + $0x14c] sm:$0xf]
  %v103 = vld [vmem:[%s1 + $0x150] sm:$0xf]
  %v104 = vld [vmem:[%s1 + $0x154] sm:$0xf]
  %v105 = vld [vmem:[%s1 + $0x158] sm:$0xf]
  %v106 = vld [vmem:[%s1 + $0x15c] sm:$0xf]
  %v107 = vld [vmem:[%s1 + $0x160] sm:$0xf]
  %v108 = vld [vmem:[%s1 + $0x164] sm:$0xf]
  %v109 = vld [vmem:[%s1 + $0x168] sm:$0xf]
  %v110 = vld [vmem:[%s1 + $0x16c] sm:$0xf]
  %v111 = vld [vmem:[%s1 + $0x170] sm:$0xf]
  %v112 = vld [vmem:[%s1 + $0x174] sm:$0xf]
  %v113 = vld [vmem:[%s1 + $0x178] sm:$0xf]
  %v114 = vld [vmem:[%s1 + $0x17c] sm:$0xf]
  %v115 = vld [vmem:[%s1 + $0x180] sm:$0xf]
  %v116 = vld [vmem:[%s1 + $0x184] sm:$0xf]
  %v117 = vld [vmem:[%s1 + $0x188] sm:$0xf]
  %v118 = vld [vmem:[%s1 + $0x18c] sm:$0xf]
  %v119 = vld [vmem:[%s1 + $0x190] sm:$0xf]
  %v120 = vld [vmem:[%s1 + $0x194] sm:$0xf]
  %v121 = vld [vmem:[%s1 + $0x198] sm:$0xf]
  %v122 = vld [vmem:[%s1 + $0x19c] sm:$0xf]
  %v123 = vld [vmem:[%s1 + $0x1a0] sm:$0xf]
  %v124 = vld [vmem:[%s1 + $0x1a4] sm:$0xf]
  %v125 = vld [vmem:[%s1 + $0x1a8] sm:$0xf]
  %v126 = vld [vmem:[%s1 + $0x1ac] sm:$0xf]
  %v127 = vld [vmem:[%s1 + $0x1b0] sm:$0xf]
  %v128 = vld [vmem:[%s1 + $0x1b4] sm:$0xf]
  %v129 = vld [vmem:[%s1 + $0x1b8] sm:$0xf]
  %v130 = vld [vmem:[%s1 + $0x1bc] sm:$0xf]
  %v131 = vld [vmem:[%s1 + $0x1c0] sm:$0xf]
  %v132 = vld [vmem:[%s1 + $0x1c4] sm:$0xf]
  %v133 = vld [vmem:[%s1 + $0x1c8] sm:$0xf]
  %v134 = vld [vmem:[%s1 + $0x1cc] sm:$0xf]
  %v135 = vld [vmem:[%s1 + $0x1d0] sm:$0xf]
  %v136 = vld [vmem:[%s1 + $0x1d4] sm:$0xf]
  %v137 = vld [vmem:[%s1 + $0x1d8] sm:$0xf]
  %v138 = vld [vmem:[%s1 + $0x1dc] sm:$0xf]
  %v139 = vld [vmem:[%s1 + $0x1e0] sm:$0xf]
  %v140 = vld [vmem:[%s1 + $0x1e4] sm:$0xf]
  %v141 = vld [vmem:[%s1 + $0x1e8] sm:$0xf]
  %v142 = vld [vmem:[%s1 + $0x1ec] sm:$0xf]
  %v143 = vld [vmem:[%s1 + $0x1f0] sm:$0xf]
  %v144 = vld [vmem:[%s1 + $0x1f4] sm:$0xf]
  %v145 = vld [vmem:[%s1 + $0x1f8] sm:$0xf]
  %v146 = vld [vmem:[%s1 + $0x1fc] sm:$0xf]
  %v147 = vld [vmem:[%s1 + $0x200] sm:$0xf]
  %v148 = vld [vmem:[%s1 + $0x204] sm:$0xf]
  %v149 = vld [vmem:[%s1 + $0x208] sm:$0xf]
  %v150 = vld [vmem:[%s1 + $0x20c] sm:$0xf]
  %v151 = vld [vmem:[%s1 + $0x210] sm:$0xf]
  %v152 = vld [vmem:[%s1 + $0x214] sm:$0xf]
  %v153 = vld [vmem:[%s1 + $0x218] sm:$0xf]
  %v154 = vld [vmem:[%s1 + $0x21c] sm:$0xf]
  %v155 = vld [vmem:[%s1 + $0x220] sm:$0xf]
  %v156 = vld [vmem:[%s1 + $0x224] sm:$0xf]
  %v157 = vld [vmem:[%s1 + $0x228] sm:$0xf]
  %v158 = vld [vmem:[%s1 + $0x22c] sm:$0xf]
  %v159 = vld [vmem:[%s1 + $0x230] sm:$0xf]
  %v160 = vld [vmem:[%s1 + $0x234] sm:$0xf]
  %v161 = vld [vmem:[%s1 + $0x238] sm:$0xf]
  %v162 = vld [vmem:[%s1 + $0x23c] sm:$0xf]
  %v163 = vld [vmem:[%s2] sm:$0x1]
  %v165 = vperm.slane %v163, 0
  %168 = vst [vmem:[#allocation1] ss:$9 sm:$0xff] %v17
  %v169 = vld [vmem:[#allocation1] sm:$0xff]
  %v170 = vld [vmem:[#allocation1 + $0x9] sm:$0xff]
  %v171 = vld [vmem:[#allocation1 + $0x12] sm:$0xff]
  %v172 = vld [vmem:[#allocation1 + $0x1b] sm:$0xff]
  %v173 = vld [vmem:[#allocation1 + $0x24] sm:$0xff]
  %v174 = vld [vmem:[#allocation1 + $0x2d] sm:$0xff]
  %v175 = vld [vmem:[#allocation1 + $0x36] sm:$0xff]
  %v176 = vld [vmem:[#allocation1 + $0x3f] sm:$0xff]
  %178 = vst [vmem:[#allocation1] ss:$9 sm:$0xff] %v18
  %v179 = vld [vmem:[#allocation1] sm:$0xff]
  %v333 = vunpack.c.l.b16 %v19
  %v334 = vunpack.c.l.b16 %v20
  %v335 = vunpack.c.l.b16 %v21
  %v336 = vunpack.c.l.b16 %v22
  %v337 = vunpack.c.l.b16 %v23
  %v338 = vunpack.c.l.b16 %v24
  %v339 = vunpack.c.l.b16 %v25
  %v340 = vunpack.c.l.b16 %v26
  %v341 = vunpack.c.l.b16 %v27
  %v342 = vunpack.c.l.b16 %v28
  %v343 = vunpack.c.l.b16 %v29
  %v344 = vunpack.c.l.b16 %v30
  %v345 = vunpack.c.l.b16 %v31
  %v346 = vunpack.c.l.b16 %v32
  %v347 = vunpack.c.l.b16 %v33
  %v348 = vunpack.c.l.b16 %v34
  %v349 = vunpack.c.l.b16 %v35
  %v350 = vunpack.c.l.b16 %v36
  %v351 = vunpack.c.l.b16 %v37
  %v352 = vunpack.c.l.b16 %v38
  %v353 = vunpack.c.l.b16 %v39
  %v354 = vunpack.c.l.b16 %v40
  %v355 = vunpack.c.l.b16 %v41
  %v356 = vunpack.c.l.b16 %v42
  %v357 = vunpack.c.l.b16 %v43
  %v358 = vunpack.c.l.b16 %v44
  %v359 = vunpack.c.l.b16 %v45
  %v360 = vunpack.c.l.b16 %v46
  %v361 = vunpack.c.l.b16 %v47
  %v362 = vunpack.c.l.b16 %v48
  %v363 = vunpack.c.l.b16 %v49
  %v364 = vunpack.c.l.b16 %v50
  %v365 = vunpack.c.l.b16 %v51
  %v366 = vunpack.c.l.b16 %v52
  %v367 = vunpack.c.l.b16 %v53
  %v368 = vunpack.c.l.b16 %v54
  %v369 = vunpack.c.l.b16 %v55
  %v370 = vunpack.c.l.b16 %v56
  %v371 = vunpack.c.l.b16 %v57
  %v372 = vunpack.c.l.b16 %v58
  %v373 = vunpack.c.l.b16 %v59
  %v374 = vunpack.c.l.b16 %v60
  %v375 = vunpack.c.l.b16 %v61
  %v376 = vunpack.c.l.b16 %v62
  %v377 = vunpack.c.l.b16 %v63
  %v378 = vunpack.c.l.b16 %v64
  %v379 = vunpack.c.l.b16 %v65
  %v380 = vunpack.c.l.b16 %v66
  %v381 = vunpack.c.l.b16 %v67
  %v382 = vunpack.c.l.b16 %v68
  %v383 = vunpack.c.l.b16 %v69
  %v384 = vunpack.c.l.b16 %v70
  %v385 = vunpack.c.l.b16 %v71
  %v386 = vunpack.c.l.b16 %v72
  %v387 = vunpack.c.l.b16 %v73
  %v388 = vunpack.c.l.b16 %v74
  %v389 = vunpack.c.l.b16 %v75
  %v390 = vunpack.c.l.b16 %v76
  %v391 = vunpack.c.l.b16 %v77
  %v392 = vunpack.c.l.b16 %v78
  %v393 = vunpack.c.l.b16 %v79
  %v394 = vunpack.c.l.b16 %v80
  %v395 = vunpack.c.l.b16 %v81
  %v396 = vunpack.c.l.b16 %v82
  %v397 = vunpack.c.l.b16 %v83
  %v398 = vunpack.c.l.b16 %v84
  %v399 = vunpack.c.l.b16 %v85
  %v400 = vunpack.c.l.b16 %v86
  %v401 = vunpack.c.l.b16 %v87
  %v402 = vunpack.c.l.b16 %v88
  %v403 = vunpack.c.l.b16 %v89
  %v404 = vunpack.c.l.b16 %v90
  %v405 = vunpack.c.l.b16 %v91
  %v406 = vunpack.c.l.b16 %v92
  %v407 = vunpack.c.l.b16 %v93
  %v408 = vunpack.c.l.b16 %v94
  %v409 = vunpack.c.l.b16 %v95
  %v410 = vunpack.c.l.b16 %v96
  %v411 = vunpack.c.l.b16 %v97
  %v412 = vunpack.c.l.b16 %v98
  %v413 = vunpack.c.l.b16 %v99
  %v414 = vunpack.c.l.b16 %v100
  %v415 = vunpack.c.l.b16 %v101
  %v416 = vunpack.c.l.b16 %v102
  %v417 = vunpack.c.l.b16 %v103
  %v418 = vunpack.c.l.b16 %v104
  %v419 = vunpack.c.l.b16 %v105
  %v420 = vunpack.c.l.b16 %v106
  %v421 = vunpack.c.l.b16 %v107
  %v422 = vunpack.c.l.b16 %v108
  %v423 = vunpack.c.l.b16 %v109
  %v424 = vunpack.c.l.b16 %v110
  %v425 = vunpack.c.l.b16 %v111
  %v426 = vunpack.c.l.b16 %v112
  %v427 = vunpack.c.l.b16 %v113
  %v428 = vunpack.c.l.b16 %v114
  %v429 = vunpack.c.l.b16 %v115
  %v430 = vunpack.c.l.b16 %v116
  %v431 = vunpack.c.l.b16 %v117
  %v432 = vunpack.c.l.b16 %v118
  %v433 = vunpack.c.l.b16 %v119
  %v434 = vunpack.c.l.b16 %v120
  %v435 = vunpack.c.l.b16 %v121
  %v436 = vunpack.c.l.b16 %v122
  %v437 = vunpack.c.l.b16 %v123
  %v438 = vunpack.c.l.b16 %v124
  %v439 = vunpack.c.l.b16 %v125
  %v440 = vunpack.c.l.b16 %v126
  %v441 = vunpack.c.l.b16 %v127
  %v442 = vunpack.c.l.b16 %v128
  %v443 = vunpack.c.l.b16 %v129
  %v444 = vunpack.c.l.b16 %v130
  %v445 = vunpack.c.l.b16 %v131
  %v446 = vunpack.c.l.b16 %v132
  %v447 = vunpack.c.l.b16 %v133
  %v448 = vunpack.c.l.b16 %v134
  %v449 = vunpack.c.l.b16 %v135
  %v450 = vunpack.c.l.b16 %v136
  %v451 = vunpack.c.l.b16 %v137
  %v452 = vunpack.c.l.b16 %v138
  %v453 = vunpack.c.l.b16 %v139
  %v454 = vunpack.c.l.b16 %v140
  %v455 = vunpack.c.l.b16 %v141
  %v456 = vunpack.c.l.b16 %v142
  %v457 = vunpack.c.l.b16 %v143
  %v458 = vunpack.c.l.b16 %v144
  %v459 = vunpack.c.l.b16 %v145
  %v460 = vunpack.c.l.b16 %v146
  %v461 = vunpack.c.l.b16 %v147
  %v462 = vunpack.c.l.b16 %v148
  %v463 = vunpack.c.l.b16 %v149
  %v464 = vunpack.c.l.b16 %v150
  %v465 = vunpack.c.l.b16 %v151
  %v466 = vunpack.c.l.b16 %v152
  %v467 = vunpack.c.l.b16 %v153
  %v468 = vunpack.c.l.b16 %v154
  %v469 = vunpack.c.l.b16 %v155
  %v470 = vunpack.c.l.b16 %v156
  %v471 = vunpack.c.l.b16 %v157
  %v472 = vunpack.c.l.b16 %v158
  %v473 = vunpack.c.l.b16 %v159
  %v474 = vunpack.c.l.b16 %v160
  %v475 = vunpack.c.l.b16 %v161
  %v476 = vunpack.c.l.b16 %v162
  %v477 = vpack.c.b16 %v334, %v333
  %v478 = vpack.c.b16 %v336, %v335
  %v479 = vpack.c.b16 %v338, %v337
  %v480 = vpack.c.b16 %v340, %v339
  %v481 = vpack.c.b16 %v342, %v341
  %v482 = vpack.c.b16 %v344, %v343
  %v483 = vpack.c.b16 %v346, %v345
  %v484 = vpack.c.b16 %v348, %v347
  %v485 = vpack.c.b16 %v350, %v349
  %v486 = vpack.c.b16 %v352, %v351
  %v487 = vpack.c.b16 %v354, %v353
  %v488 = vpack.c.b16 %v356, %v355
  %v489 = vpack.c.b16 %v358, %v357
  %v490 = vpack.c.b16 %v360, %v359
  %v491 = vpack.c.b16 %v362, %v361
  %v492 = vpack.c.b16 %v364, %v363
  %v493 = vpack.c.b16 %v366, %v365
  %v494 = vpack.c.b16 %v368, %v367
  %v495 = vpack.c.b16 %v370, %v369
  %v496 = vpack.c.b16 %v372, %v371
  %v497 = vpack.c.b16 %v374, %v373
  %v498 = vpack.c.b16 %v376, %v375
  %v499 = vpack.c.b16 %v378, %v377
  %v500 = vpack.c.b16 %v380, %v379
  %v501 = vpack.c.b16 %v382, %v381
  %v502 = vpack.c.b16 %v384, %v383
  %v503 = vpack.c.b16 %v386, %v385
  %v504 = vpack.c.b16 %v388, %v387
  %v505 = vpack.c.b16 %v390, %v389
  %v506 = vpack.c.b16 %v392, %v391
  %v507 = vpack.c.b16 %v394, %v393
  %v508 = vpack.c.b16 %v396, %v395
  %v509 = vpack.c.b16 %v398, %v397
  %v510 = vpack.c.b16 %v400, %v399
  %v511 = vpack.c.b16 %v402, %v401
  %v512 = vpack.c.b16 %v404, %v403
  %v513 = vpack.c.b16 %v406, %v405
  %v514 = vpack.c.b16 %v408, %v407
  %v515 = vpack.c.b16 %v410, %v409
  %v516 = vpack.c.b16 %v412, %v411
  %v517 = vpack.c.b16 %v414, %v413
  %v518 = vpack.c.b16 %v416, %v415
  %v519 = vpack.c.b16 %v418, %v417
  %v520 = vpack.c.b16 %v420, %v419
  %v521 = vpack.c.b16 %v422, %v421
  %v522 = vpack.c.b16 %v424, %v423
  %v523 = vpack.c.b16 %v426, %v425
  %v524 = vpack.c.b16 %v428, %v427
  %v525 = vpack.c.b16 %v430, %v429
  %v526 = vpack.c.b16 %v432, %v431
  %v527 = vpack.c.b16 %v434, %v433
  %v528 = vpack.c.b16 %v436, %v435
  %v529 = vpack.c.b16 %v438, %v437
  %v530 = vpack.c.b16 %v440, %v439
  %v531 = vpack.c.b16 %v442, %v441
  %v532 = vpack.c.b16 %v444, %v443
  %v533 = vpack.c.b16 %v446, %v445
  %v534 = vpack.c.b16 %v448, %v447
  %v535 = vpack.c.b16 %v450, %v449
  %v536 = vpack.c.b16 %v452, %v451
  %v537 = vpack.c.b16 %v454, %v453
  %v538 = vpack.c.b16 %v456, %v455
  %v539 = vpack.c.b16 %v458, %v457
  %v540 = vpack.c.b16 %v460, %v459
  %v541 = vpack.c.b16 %v462, %v461
  %v542 = vpack.c.b16 %v464, %v463
  %v543 = vpack.c.b16 %v466, %v465
  %v544 = vpack.c.b16 %v468, %v467
  %v545 = vpack.c.b16 %v470, %v469
  %v546 = vpack.c.b16 %v472, %v471
  %v547 = vpack.c.b16 %v474, %v473
  %v548 = vpack.c.b16 %v476, %v475
  %621 = vmatpush.bf16.msra.mxu0 %v484
  %622 = vmatpush.bf16.msra.mxu0 %v483
  %623 = vmatpush.bf16.msra.mxu0 %v482
  %624 = vmatpush.bf16.msra.mxu0 %v481
  %625 = vmatpush.bf16.msra.mxu0 %v480
  %626 = vmatpush.bf16.msra.mxu0 %v479
  %627 = vmatpush.bf16.msra.mxu0 %v478
  %628 = vmatpush.bf16.msra.mxu0 %v477
  %629 = vmatmul.bf16.gmra.mxu0 %v169
  %v630 = vpop.f32.mrf.mxu0
  %v631 = vadd.f32 %v165, %v630
  %v632 = vpop.f32.mrf.mxu0
  %633 = vdwg.mxu0
  %634 = vmatpush.bf16.msra.mxu0 %v492
  %635 = vmatpush.bf16.msra.mxu0 %v491
  %636 = vmatpush.bf16.msra.mxu0 %v490
  %637 = vmatpush.bf16.msra.mxu0 %v489
  %638 = vmatpush.bf16.msra.mxu0 %v488
  %639 = vmatpush.bf16.msra.mxu0 %v487
  %640 = vmatpush.bf16.msra.mxu0 %v486
  %641 = vmatpush.bf16.msra.mxu0 %v485
  %642 = vmatmul.bf16.gmra.mxu0 %v170
  %v643 = vpop.f32.mrf.mxu0
  %v644 = vadd.f32 %v631, %v643
  %v645 = vpop.f32.mrf.mxu0
  %646 = vdwg.mxu0
  %647 = vmatpush.bf16.msra.mxu0 %v500
  %648 = vmatpush.bf16.msra.mxu0 %v499
  %649 = vmatpush.bf16.msra.mxu0 %v498
  %650 = vmatpush.bf16.msra.mxu0 %v497
  %651 = vmatpush.bf16.msra.mxu0 %v496
  %652 = vmatpush.bf16.msra.mxu0 %v495
  %653 = vmatpush.bf16.msra.mxu0 %v494
  %654 = vmatpush.bf16.msra.mxu0 %v493
  %655 = vmatmul.bf16.gmra.mxu0 %v171
  %v656 = vpop.f32.mrf.mxu0
  %v657 = vadd.f32 %v644, %v656
  %v658 = vpop.f32.mrf.mxu0
  %659 = vdwg.mxu0
  %660 = vmatpush.bf16.msra.mxu0 %v508
  %661 = vmatpush.bf16.msra.mxu0 %v507
  %662 = vmatpush.bf16.msra.mxu0 %v506
  %663 = vmatpush.bf16.msra.mxu0 %v505
  %664 = vmatpush.bf16.msra.mxu0 %v504
  %665 = vmatpush.bf16.msra.mxu0 %v503
  %666 = vmatpush.bf16.msra.mxu0 %v502
  %667 = vmatpush.bf16.msra.mxu0 %v501
  %668 = vmatmul.bf16.gmra.mxu0 %v172
  %v669 = vpop.f32.mrf.mxu0
  %v670 = vadd.f32 %v657, %v669
  %v671 = vpop.f32.mrf.mxu0
  %672 = vdwg.mxu0
  %673 = vmatpush.bf16.msra.mxu0 %v516
  %674 = vmatpush.bf16.msra.mxu0 %v515
  %675 = vmatpush.bf16.msra.mxu0 %v514
  %676 = vmatpush.bf16.msra.mxu0 %v513
  %677 = vmatpush.bf16.msra.mxu0 %v512
  %678 = vmatpush.bf16.msra.mxu0 %v511
  %679 = vmatpush.bf16.msra.mxu0 %v510
  %680 = vmatpush.bf16.msra.mxu0 %v509
  %681 = vmatmul.bf16.gmra.mxu0 %v173
  %v682 = vpop.f32.mrf.mxu0
  %v683 = vadd.f32 %v670, %v682
  %v684 = vpop.f32.mrf.mxu0
  %685 = vdwg.mxu0
  %686 = vmatpush.bf16.msra.mxu0 %v524
  %687 = vmatpush.bf16.msra.mxu0 %v523
  %688 = vmatpush.bf16.msra.mxu0 %v522
  %689 = vmatpush.bf16.msra.mxu0 %v521
  %690 = vmatpush.bf16.msra.mxu0 %v520
  %691 = vmatpush.bf16.msra.mxu0 %v519
  %692 = vmatpush.bf16.msra.mxu0 %v518
  %693 = vmatpush.bf16.msra.mxu0 %v517
  %694 = vmatmul.bf16.gmra.mxu0 %v174
  %v695 = vpop.f32.mrf.mxu0
  %v696 = vadd.f32 %v683, %v695
  %v697 = vpop.f32.mrf.mxu0
  %698 = vdwg.mxu0
  %699 = vmatpush.bf16.msra.mxu0 %v532
  %700 = vmatpush.bf16.msra.mxu0 %v531
  %701 = vmatpush.bf16.msra.mxu0 %v530
  %702 = vmatpush.bf16.msra.mxu0 %v529
  %703 = vmatpush.bf16.msra.mxu0 %v528
  %704 = vmatpush.bf16.msra.mxu0 %v527
  %705 = vmatpush.bf16.msra.mxu0 %v526
  %706 = vmatpush.bf16.msra.mxu0 %v525
  %707 = vmatmul.bf16.gmra.mxu0 %v175
  %v708 = vpop.f32.mrf.mxu0
  %v709 = vadd.f32 %v696, %v708
  %v710 = vpop.f32.mrf.mxu0
  %711 = vdwg.mxu0
  %712 = vmatpush.bf16.msra.mxu0 %v540
  %713 = vmatpush.bf16.msra.mxu0 %v539
  %714 = vmatpush.bf16.msra.mxu0 %v538
  %715 = vmatpush.bf16.msra.mxu0 %v537
  %716 = vmatpush.bf16.msra.mxu0 %v536
  %717 = vmatpush.bf16.msra.mxu0 %v535
  %718 = vmatpush.bf16.msra.mxu0 %v534
  %719 = vmatpush.bf16.msra.mxu0 %v533
  %720 = vmatmul.bf16.gmra.mxu0 %v176
  %v721 = vpop.f32.mrf.mxu0
  %v722 = vadd.f32 %v709, %v721
  %v723 = vpop.f32.mrf.mxu0
  %724 = vdwg.mxu0
  %725 = vmatpush.bf16.msra.mxu0 %v548
  %726 = vmatpush.bf16.msra.mxu0 %v547
  %727 = vmatpush.bf16.msra.mxu0 %v546
  %728 = vmatpush.bf16.msra.mxu0 %v545
  %729 = vmatpush.bf16.msra.mxu0 %v544
  %730 = vmatpush.bf16.msra.mxu0 %v543
  %731 = vmatpush.bf16.msra.mxu0 %v542
  %732 = vmatpush.bf16.msra.mxu0 %v541
  %733 = vmatmul.bf16.gmra.mxu0 %v179
  %v734 = vpop.f32.mrf.mxu0
  %v735 = vadd.f32 %v722, %v734
  %v736 = vpop.f32.mrf.mxu0
  %737 = vdwg.mxu0
  %v738 = vld [vmem:[%s3] sm:$0x3]
  %v739 = vadd.f32 %v735, %v738
  %740 = vst [vmem:[%s4] sm:$0x3] %v739
  // Predicated region
  $region18: #{resnet_forward.33} parent=0 // pred_check
    _
  $region19: #{resnet_forward.33} parent=0 // pred_check_branch
    %742 = sbr.rel (0) target = $region21
  $region20: #{resnet_forward.33} parent=0 // pred_region
    _
  $region21: #{resnet_forward.33} parent=0 // pred_fallthru
    _
  // Predicated region
  $region22: #{resnet_forward.33} parent=0 // pred_check
    _
  $region23: #{resnet_forward.33} parent=0 // pred_check_branch
    %744 = sbr.rel (0) target = $region25
  $region24: #{resnet_forward.33} parent=0 // pred_region
    _
  $region25: #{resnet_forward.33} parent=0 // pred_fallthru
    _

// kernel: resnet_forward.31
$region0: #{resnet_forward.31}
  #allocation0 [shape = 'u32[]', space=smem, size = 0x4, offset = 0x4, fixed_abs, tag = 'smem constant byte address 0x4 - core index']
  #allocation1 [shape = 'u32[72,128]{1,0:T(1,128)}', space=vmem, size = 0x9000, scoped, tag = 'internal scratch']
  %s0 = inlined_call_operand.vmem [shape: bf16[2,1152], index: 0, kind: input, shape index: {}]
  %s1 = inlined_call_operand.vmem [shape: bf16[1152,128], index: 1, kind: input, shape index: {}]
  %s2 = inlined_call_operand.vmem [shape: f32[1,128], index: 2, kind: input, shape index: {}]
  %s3 = inlined_call_operand.vmem [shape: bf16[2,64], index: 3, kind: input, shape index: {}]
  %s4 = inlined_call_operand.vmem [shape: bf16[64,128], index: 4, kind: input, shape index: {}]
  %s5 = inlined_call_operand.vmem [shape: f32[2,128], index: 5, kind: output, shape index: {}]
  %s6 = sld [smem:[#allocation0]]
  $region30: #{resnet_forward.31} parent=0
    _
  %s8 = ssub.s32 1, %s6
  %s9 = scalar_select 0, %s8, %s6
  // Predicated region
  $region2: #{resnet_forward.31} parent=0 // pred_check
    _
  $region3: #{resnet_forward.31} parent=0 // pred_check_branch
    %11 = sbr.rel (0) target = $region5
  $region4: #{resnet_forward.31} parent=0 // pred_region
    _
  $region5: #{resnet_forward.31} parent=0 // pred_fallthru
    _
  // Predicated region
  $region6: #{resnet_forward.31} parent=0 // pred_check
    _
  $region7: #{resnet_forward.31} parent=0 // pred_check_branch
    %13 = sbr.rel (0) target = $region9
  $region8: #{resnet_forward.31} parent=0 // pred_region
    _
  $region9: #{resnet_forward.31} parent=0 // pred_fallthru
    _
  // Predicated region
  $region10: #{resnet_forward.31} parent=0 // pred_check
    _
  $region11: #{resnet_forward.31} parent=0 // pred_check_branch
    %15 = sbr.rel (0) target = $region13
  $region12: #{resnet_forward.31} parent=0 // pred_region
    _
  $region13: #{resnet_forward.31} parent=0 // pred_fallthru
    _
  // Predicated region
  $region14: #{resnet_forward.31} parent=0 // pred_check
    _
  $region15: #{resnet_forward.31} parent=0 // pred_check_branch
    %17 = sbr.rel (0) target = $region17
  $region16: #{resnet_forward.31} parent=0 // pred_region
    _
  $region17: #{resnet_forward.31} parent=0 // pred_fallthru
    _
  // Predicated region
  $region18: #{resnet_forward.31} parent=0 // pred_check
    _
  $region19: #{resnet_forward.31} parent=0 // pred_check_branch
    %19 = sbr.rel (0) target = $region21
  $region20: #{resnet_forward.31} parent=0 // pred_region
    _
  $region21: #{resnet_forward.31} parent=0 // pred_fallthru
    _
  %v21 = vld [vmem:[%s0] sm:$0xff]
  %v22 = vld [vmem:[%s0 + $0x8] sm:$0x1]
  %v23 = vld [vmem:[%s1] sm:$0xf]
  %v24 = vld [vmem:[%s1 + $0x4] sm:$0xf]
  %v25 = vld [vmem:[%s1 + $0x8] sm:$0xf]
  %v26 = vld [vmem:[%s1 + $0xc] sm:$0xf]
  %v27 = vld [vmem:[%s1 + $0x10] sm:$0xf]
  %v28 = vld [vmem:[%s1 + $0x14] sm:$0xf]
  %v29 = vld [vmem:[%s1 + $0x18] sm:$0xf]
  %v30 = vld [vmem:[%s1 + $0x1c] sm:$0xf]
  %v31 = vld [vmem:[%s1 + $0x20] sm:$0xf]
  %v32 = vld [vmem:[%s1 + $0x24] sm:$0xf]
  %v33 = vld [vmem:[%s1 + $0x28] sm:$0xf]
  %v34 = vld [vmem:[%s1 + $0x2c] sm:$0xf]
  %v35 = vld [vmem:[%s1 + $0x30] sm:$0xf]
  %v36 = vld [vmem:[%s1 + $0x34] sm:$0xf]
  %v37 = vld [vmem:[%s1 + $0x38] sm:$0xf]
  %v38 = vld [vmem:[%s1 + $0x3c] sm:$0xf]
  %v39 = vld [vmem:[%s1 + $0x40] sm:$0xf]
  %v40 = vld [vmem:[%s1 + $0x44] sm:$0xf]
  %v41 = vld [vmem:[%s1 + $0x48] sm:$0xf]
  %v42 = vld [vmem:[%s1 + $0x4c] sm:$0xf]
  %v43 = vld [vmem:[%s1 + $0x50] sm:$0xf]
  %v44 = vld [vmem:[%s1 + $0x54] sm:$0xf]
  %v45 = vld [vmem:[%s1 + $0x58] sm:$0xf]
  %v46 = vld [vmem:[%s1 + $0x5c] sm:$0xf]
  %v47 = vld [vmem:[%s1 + $0x60] sm:$0xf]
  %v48 = vld [vmem:[%s1 + $0x64] sm:$0xf]
  %v49 = vld [vmem:[%s1 + $0x68] sm:$0xf]
  %v50 = vld [vmem:[%s1 + $0x6c] sm:$0xf]
  %v51 = vld [vmem:[%s1 + $0x70] sm:$0xf]
  %v52 = vld [vmem:[%s1 + $0x74] sm:$0xf]
  %v53 = vld [vmem:[%s1 + $0x78] sm:$0xf]
  %v54 = vld [vmem:[%s1 + $0x7c] sm:$0xf]
  %v55 = vld [vmem:[%s1 + $0x80] sm:$0xf]
  %v56 = vld [vmem:[%s1 + $0x84] sm:$0xf]
  %v57 = vld [vmem:[%s1 + $0x88] sm:$0xf]
  %v58 = vld [vmem:[%s1 + $0x8c] sm:$0xf]
  %v59 = vld [vmem:[%s1 + $0x90] sm:$0xf]
  %v60 = vld [vmem:[%s1 + $0x94] sm:$0xf]
  %v61 = vld [vmem:[%s1 + $0x98] sm:$0xf]
  %v62 = vld [vmem:[%s1 + $0x9c] sm:$0xf]
  %v63 = vld [vmem:[%s1 + $0xa0] sm:$0xf]
  %v64 = vld [vmem:[%s1 + $0xa4] sm:$0xf]
  %v65 = vld [vmem:[%s1 + $0xa8] sm:$0xf]
  %v66 = vld [vmem:[%s1 + $0xac] sm:$0xf]
  %v67 = vld [vmem:[%s1 + $0xb0] sm:$0xf]
  %v68 = vld [vmem:[%s1 + $0xb4] sm:$0xf]
  %v69 = vld [vmem:[%s1 + $0xb8] sm:$0xf]
  %v70 = vld [vmem:[%s1 + $0xbc] sm:$0xf]
  %v71 = vld [vmem:[%s1 + $0xc0] sm:$0xf]
  %v72 = vld [vmem:[%s1 + $0xc4] sm:$0xf]
  %v73 = vld [vmem:[%s1 + $0xc8] sm:$0xf]
  %v74 = vld [vmem:[%s1 + $0xcc] sm:$0xf]
  %v75 = vld [vmem:[%s1 + $0xd0] sm:$0xf]
  %v76 = vld [vmem:[%s1 + $0xd4] sm:$0xf]
  %v77 = vld [vmem:[%s1 + $0xd8] sm:$0xf]
  %v78 = vld [vmem:[%s1 + $0xdc] sm:$0xf]
  %v79 = vld [vmem:[%s1 + $0xe0] sm:$0xf]
  %v80 = vld [vmem:[%s1 + $0xe4] sm:$0xf]
  %v81 = vld [vmem:[%s1 + $0xe8] sm:$0xf]
  %v82 = vld [vmem:[%s1 + $0xec] sm:$0xf]
  %v83 = vld [vmem:[%s1 + $0xf0] sm:$0xf]
  %v84 = vld [vmem:[%s1 + $0xf4] sm:$0xf]
  %v85 = vld [vmem:[%s1 + $0xf8] sm:$0xf]
  %v86 = vld [vmem:[%s1 + $0xfc] sm:$0xf]
  %v87 = vld [vmem:[%s1 + $0x100] sm:$0xf]
  %v88 = vld [vmem:[%s1 + $0x104] sm:$0xf]
  %v89 = vld [vmem:[%s1 + $0x108] sm:$0xf]
  %v90 = vld [vmem:[%s1 + $0x10c] sm:$0xf]
  %v91 = vld [vmem:[%s1 + $0x110] sm:$0xf]
  %v92 = vld [vmem:[%s1 + $0x114] sm:$0xf]
  %v93 = vld [vmem:[%s1 + $0x118] sm:$0xf]
  %v94 = vld [vmem:[%s1 + $0x11c] sm:$0xf]
  %v95 = vld [vmem:[%s1 + $0x120] sm:$0xf]
  %v96 = vld [vmem:[%s1 + $0x124] sm:$0xf]
  %v97 = vld [vmem:[%s1 + $0x128] sm:$0xf]
  %v98 = vld [vmem:[%s1 + $0x12c] sm:$0xf]
  %v99 = vld [vmem:[%s1 + $0x130] sm:$0xf]
  %v100 = vld [vmem:[%s1 + $0x134] sm:$0xf]
  %v101 = vld [vmem:[%s1 + $0x138] sm:$0xf]
  %v102 = vld [vmem:[%s1 + $0x13c] sm:$0xf]
  %v103 = vld [vmem:[%s1 + $0x140] sm:$0xf]
  %v104 = vld [vmem:[%s1 + $0x144] sm:$0xf]
  %v105 = vld [vmem:[%s1 + $0x148] sm:$0xf]
  %v106 = vld [vmem:[%s1 + $0x14c] sm:$0xf]
  %v107 = vld [vmem:[%s1 + $0x150] sm:$0xf]
  %v108 = vld [vmem:[%s1 + $0x154] sm:$0xf]
  %v109 = vld [vmem:[%s1 + $0x158] sm:$0xf]
  %v110 = vld [vmem:[%s1 + $0x15c] sm:$0xf]
  %v111 = vld [vmem:[%s1 + $0x160] sm:$0xf]
  %v112 = vld [vmem:[%s1 + $0x164] sm:$0xf]
  %v113 = vld [vmem:[%s1 + $0x168] sm:$0xf]
  %v114 = vld [vmem:[%s1 + $0x16c] sm:$0xf]
  %v115 = vld [vmem:[%s1 + $0x170] sm:$0xf]
  %v116 = vld [vmem:[%s1 + $0x174] sm:$0xf]
  %v117 = vld [vmem:[%s1 + $0x178] sm:$0xf]
  %v118 = vld [vmem:[%s1 + $0x17c] sm:$0xf]
  %v119 = vld [vmem:[%s1 + $0x180] sm:$0xf]
  %v120 = vld [vmem:[%s1 + $0x184] sm:$0xf]
  %v121 = vld [vmem:[%s1 + $0x188] sm:$0xf]
  %v122 = vld [vmem:[%s1 + $0x18c] sm:$0xf]
  %v123 = vld [vmem:[%s1 + $0x190] sm:$0xf]
  %v124 = vld [vmem:[%s1 + $0x194] sm:$0xf]
  %v125 = vld [vmem:[%s1 + $0x198] sm:$0xf]
  %v126 = vld [vmem:[%s1 + $0x19c] sm:$0xf]
  %v127 = vld [vmem:[%s1 + $0x1a0] sm:$0xf]
  %v128 = vld [vmem:[%s1 + $0x1a4] sm:$0xf]
  %v129 = vld [vmem:[%s1 + $0x1a8] sm:$0xf]
  %v130 = vld [vmem:[%s1 + $0x1ac] sm:$0xf]
  %v131 = vld [vmem:[%s1 + $0x1b0] sm:$0xf]
  %v132 = vld [vmem:[%s1 + $0x1b4] sm:$0xf]
  %v133 = vld [vmem:[%s1 + $0x1b8] sm:$0xf]
  %v134 = vld [vmem:[%s1 + $0x1bc] sm:$0xf]
  %v135 = vld [vmem:[%s1 + $0x1c0] sm:$0xf]
  %v136 = vld [vmem:[%s1 + $0x1c4] sm:$0xf]
  %v137 = vld [vmem:[%s1 + $0x1c8] sm:$0xf]
  %v138 = vld [vmem:[%s1 + $0x1cc] sm:$0xf]
  %v139 = vld [vmem:[%s1 + $0x1d0] sm:$0xf]
  %v140 = vld [vmem:[%s1 + $0x1d4] sm:$0xf]
  %v141 = vld [vmem:[%s1 + $0x1d8] sm:$0xf]
  %v142 = vld [vmem:[%s1 + $0x1dc] sm:$0xf]
  %v143 = vld [vmem:[%s1 + $0x1e0] sm:$0xf]
  %v144 = vld [vmem:[%s1 + $0x1e4] sm:$0xf]
  %v145 = vld [vmem:[%s1 + $0x1e8] sm:$0xf]
  %v146 = vld [vmem:[%s1 + $0x1ec] sm:$0xf]
  %v147 = vld [vmem:[%s1 + $0x1f0] sm:$0xf]
  %v148 = vld [vmem:[%s1 + $0x1f4] sm:$0xf]
  %v149 = vld [vmem:[%s1 + $0x1f8] sm:$0xf]
  %v150 = vld [vmem:[%s1 + $0x1fc] sm:$0xf]
  %v151 = vld [vmem:[%s1 + $0x200] sm:$0xf]
  %v152 = vld [vmem:[%s1 + $0x204] sm:$0xf]
  %v153 = vld [vmem:[%s1 + $0x208] sm:$0xf]
  %v154 = vld [vmem:[%s1 + $0x20c] sm:$0xf]
  %v155 = vld [vmem:[%s1 + $0x210] sm:$0xf]
  %v156 = vld [vmem:[%s1 + $0x214] sm:$0xf]
  %v157 = vld [vmem:[%s1 + $0x218] sm:$0xf]
  %v158 = vld [vmem:[%s1 + $0x21c] sm:$0xf]
  %v159 = vld [vmem:[%s1 + $0x220] sm:$0xf]
  %v160 = vld [vmem:[%s1 + $0x224] sm:$0xf]
  %v161 = vld [vmem:[%s1 + $0x228] sm:$0xf]
  %v162 = vld [vmem:[%s1 + $0x22c] sm:$0xf]
  %v163 = vld [vmem:[%s1 + $0x230] sm:$0xf]
  %v164 = vld [vmem:[%s1 + $0x234] sm:$0xf]
  %v165 = vld [vmem:[%s1 + $0x238] sm:$0xf]
  %v166 = vld [vmem:[%s1 + $0x23c] sm:$0xf]
  %v167 = vld [vmem:[%s3] sm:$0x1]
  %v168 = vld [vmem:[%s4] sm:$0xf]
  %v169 = vld [vmem:[%s4 + $0x4] sm:$0xf]
  %v170 = vld [vmem:[%s4 + $0x8] sm:$0xf]
  %v171 = vld [vmem:[%s4 + $0xc] sm:$0xf]
  %v172 = vld [vmem:[%s4 + $0x10] sm:$0xf]
  %v173 = vld [vmem:[%s4 + $0x14] sm:$0xf]
  %v174 = vld [vmem:[%s4 + $0x18] sm:$0xf]
  %v175 = vld [vmem:[%s4 + $0x1c] sm:$0xf]
  %v184 = vunpack.c.l.b16 %v168
  %v185 = vunpack.c.l.b16 %v169
  %v186 = vunpack.c.l.b16 %v170
  %v187 = vunpack.c.l.b16 %v171
  %v188 = vunpack.c.l.b16 %v172
  %v189 = vunpack.c.l.b16 %v173
  %v190 = vunpack.c.l.b16 %v174
  %v191 = vunpack.c.l.b16 %v175
  %v192 = vpack.c.b16 %v185, %v184
  %v193 = vpack.c.b16 %v187, %v186
  %v194 = vpack.c.b16 %v189, %v188
  %v195 = vpack.c.b16 %v191, %v190
  %vm200 = vcmask 523264
  %v202 = vsel %vm200, %v167, 0
  %204 = vmatpush.bf16.msra.mxu0 0
  %205 = vmatpush.bf16.msra.mxu0 0
  %206 = vmatpush.bf16.msra.mxu0 0
  %207 = vmatpush.bf16.msra.mxu0 0
  %208 = vmatpush.bf16.msra.mxu0 %v195
  %209 = vmatpush.bf16.msra.mxu0 %v194
  %210 = vmatpush.bf16.msra.mxu0 %v193
  %211 = vmatpush.bf16.msra.mxu0 %v192
  %212 = vmatmul.bf16.gmra.mxu0 %v202
  %v213 = vpop.f32.mrf.mxu0
  %v214 = vadd.f32 0.0, %v213
  %v215 = vpop.f32.mrf.mxu0
  %216 = vdwg.mxu0
  %218 = vst [vmem:[#allocation1] ss:$9 sm:$0xff] %v21
  %v219 = vld [vmem:[#allocation1] sm:$0xff]
  %v220 = vld [vmem:[#allocation1 + $0x9] sm:$0xff]
  %v221 = vld [vmem:[#allocation1 + $0x12] sm:$0xff]
  %v222 = vld [vmem:[#allocation1 + $0x1b] sm:$0xff]
  %v223 = vld [vmem:[#allocation1 + $0x24] sm:$0xff]
  %v224 = vld [vmem:[#allocation1 + $0x2d] sm:$0xff]
  %v225 = vld [vmem:[#allocation1 + $0x36] sm:$0xff]
  %v226 = vld [vmem:[#allocation1 + $0x3f] sm:$0xff]
  %228 = vst [vmem:[#allocation1] ss:$9 sm:$0xff] %v22
  %v229 = vld [vmem:[#allocation1] sm:$0xff]
  %v383 = vunpack.c.l.b16 %v23
  %v384 = vunpack.c.l.b16 %v24
  %v385 = vunpack.c.l.b16 %v25
  %v386 = vunpack.c.l.b16 %v26
  %v387 = vunpack.c.l.b16 %v27
  %v388 = vunpack.c.l.b16 %v28
  %v389 = vunpack.c.l.b16 %v29
  %v390 = vunpack.c.l.b16 %v30
  %v391 = vunpack.c.l.b16 %v31
  %v392 = vunpack.c.l.b16 %v32
  %v393 = vunpack.c.l.b16 %v33
  %v394 = vunpack.c.l.b16 %v34
  %v395 = vunpack.c.l.b16 %v35
  %v396 = vunpack.c.l.b16 %v36
  %v397 = vunpack.c.l.b16 %v37
  %v398 = vunpack.c.l.b16 %v38
  %v399 = vunpack.c.l.b16 %v39
  %v400 = vunpack.c.l.b16 %v40
  %v401 = vunpack.c.l.b16 %v41
  %v402 = vunpack.c.l.b16 %v42
  %v403 = vunpack.c.l.b16 %v43
  %v404 = vunpack.c.l.b16 %v44
  %v405 = vunpack.c.l.b16 %v45
  %v406 = vunpack.c.l.b16 %v46
  %v407 = vunpack.c.l.b16 %v47
  %v408 = vunpack.c.l.b16 %v48
  %v409 = vunpack.c.l.b16 %v49
  %v410 = vunpack.c.l.b16 %v50
  %v411 = vunpack.c.l.b16 %v51
  %v412 = vunpack.c.l.b16 %v52
  %v413 = vunpack.c.l.b16 %v53
  %v414 = vunpack.c.l.b16 %v54
  %v415 = vunpack.c.l.b16 %v55
  %v416 = vunpack.c.l.b16 %v56
  %v417 = vunpack.c.l.b16 %v57
  %v418 = vunpack.c.l.b16 %v58
  %v419 = vunpack.c.l.b16 %v59
  %v420 = vunpack.c.l.b16 %v60
  %v421 = vunpack.c.l.b16 %v61
  %v422 = vunpack.c.l.b16 %v62
  %v423 = vunpack.c.l.b16 %v63
  %v424 = vunpack.c.l.b16 %v64
  %v425 = vunpack.c.l.b16 %v65
  %v426 = vunpack.c.l.b16 %v66
  %v427 = vunpack.c.l.b16 %v67
  %v428 = vunpack.c.l.b16 %v68
  %v429 = vunpack.c.l.b16 %v69
  %v430 = vunpack.c.l.b16 %v70
  %v431 = vunpack.c.l.b16 %v71
  %v432 = vunpack.c.l.b16 %v72
  %v433 = vunpack.c.l.b16 %v73
  %v434 = vunpack.c.l.b16 %v74
  %v435 = vunpack.c.l.b16 %v75
  %v436 = vunpack.c.l.b16 %v76
  %v437 = vunpack.c.l.b16 %v77
  %v438 = vunpack.c.l.b16 %v78
  %v439 = vunpack.c.l.b16 %v79
  %v440 = vunpack.c.l.b16 %v80
  %v441 = vunpack.c.l.b16 %v81
  %v442 = vunpack.c.l.b16 %v82
  %v443 = vunpack.c.l.b16 %v83
  %v444 = vunpack.c.l.b16 %v84
  %v445 = vunpack.c.l.b16 %v85
  %v446 = vunpack.c.l.b16 %v86
  %v447 = vunpack.c.l.b16 %v87
  %v448 = vunpack.c.l.b16 %v88
  %v449 = vunpack.c.l.b16 %v89
  %v450 = vunpack.c.l.b16 %v90
  %v451 = vunpack.c.l.b16 %v91
  %v452 = vunpack.c.l.b16 %v92
  %v453 = vunpack.c.l.b16 %v93
  %v454 = vunpack.c.l.b16 %v94
  %v455 = vunpack.c.l.b16 %v95
  %v456 = vunpack.c.l.b16 %v96
  %v457 = vunpack.c.l.b16 %v97
  %v458 = vunpack.c.l.b16 %v98
  %v459 = vunpack.c.l.b16 %v99
  %v460 = vunpack.c.l.b16 %v100
  %v461 = vunpack.c.l.b16 %v101
  %v462 = vunpack.c.l.b16 %v102
  %v463 = vunpack.c.l.b16 %v103
  %v464 = vunpack.c.l.b16 %v104
  %v465 = vunpack.c.l.b16 %v105
  %v466 = vunpack.c.l.b16 %v106
  %v467 = vunpack.c.l.b16 %v107
  %v468 = vunpack.c.l.b16 %v108
  %v469 = vunpack.c.l.b16 %v109
  %v470 = vunpack.c.l.b16 %v110
  %v471 = vunpack.c.l.b16 %v111
  %v472 = vunpack.c.l.b16 %v112
  %v473 = vunpack.c.l.b16 %v113
  %v474 = vunpack.c.l.b16 %v114
  %v475 = vunpack.c.l.b16 %v115
  %v476 = vunpack.c.l.b16 %v116
  %v477 = vunpack.c.l.b16 %v117
  %v478 = vunpack.c.l.b16 %v118
  %v479 = vunpack.c.l.b16 %v119
  %v480 = vunpack.c.l.b16 %v120
  %v481 = vunpack.c.l.b16 %v121
  %v482 = vunpack.c.l.b16 %v122
  %v483 = vunpack.c.l.b16 %v123
  %v484 = vunpack.c.l.b16 %v124
  %v485 = vunpack.c.l.b16 %v125
  %v486 = vunpack.c.l.b16 %v126
  %v487 = vunpack.c.l.b16 %v127
  %v488 = vunpack.c.l.b16 %v128
  %v489 = vunpack.c.l.b16 %v129
  %v490 = vunpack.c.l.b16 %v130
  %v491 = vunpack.c.l.b16 %v131
  %v492 = vunpack.c.l.b16 %v132
  %v493 = vunpack.c.l.b16 %v133
  %v494 = vunpack.c.l.b16 %v134
  %v495 = vunpack.c.l.b16 %v135
  %v496 = vunpack.c.l.b16 %v136
  %v497 = vunpack.c.l.b16 %v137
  %v498 = vunpack.c.l.b16 %v138
  %v499 = vunpack.c.l.b16 %v139
  %v500 = vunpack.c.l.b16 %v140
  %v501 = vunpack.c.l.b16 %v141
  %v502 = vunpack.c.l.b16 %v142
  %v503 = vunpack.c.l.b16 %v143
  %v504 = vunpack.c.l.b16 %v144
  %v505 = vunpack.c.l.b16 %v145
  %v506 = vunpack.c.l.b16 %v146
  %v507 = vunpack.c.l.b16 %v147
  %v508 = vunpack.c.l.b16 %v148
  %v509 = vunpack.c.l.b16 %v149
  %v510 = vunpack.c.l.b16 %v150
  %v511 = vunpack.c.l.b16 %v151
  %v512 = vunpack.c.l.b16 %v152
  %v513 = vunpack.c.l.b16 %v153
  %v514 = vunpack.c.l.b16 %v154
  %v515 = vunpack.c.l.b16 %v155
  %v516 = vunpack.c.l.b16 %v156
  %v517 = vunpack.c.l.b16 %v157
  %v518 = vunpack.c.l.b16 %v158
  %v519 = vunpack.c.l.b16 %v159
  %v520 = vunpack.c.l.b16 %v160
  %v521 = vunpack.c.l.b16 %v161
  %v522 = vunpack.c.l.b16 %v162
  %v523 = vunpack.c.l.b16 %v163
  %v524 = vunpack.c.l.b16 %v164
  %v525 = vunpack.c.l.b16 %v165
  %v526 = vunpack.c.l.b16 %v166
  %v527 = vpack.c.b16 %v384, %v383
  %v528 = vpack.c.b16 %v386, %v385
  %v529 = vpack.c.b16 %v388, %v387
  %v530 = vpack.c.b16 %v390, %v389
  %v531 = vpack.c.b16 %v392, %v391
  %v532 = vpack.c.b16 %v394, %v393
  %v533 = vpack.c.b16 %v396, %v395
  %v534 = vpack.c.b16 %v398, %v397
  %v535 = vpack.c.b16 %v400, %v399
  %v536 = vpack.c.b16 %v402, %v401
  %v537 = vpack.c.b16 %v404, %v403
  %v538 = vpack.c.b16 %v406, %v405
  %v539 = vpack.c.b16 %v408, %v407
  %v540 = vpack.c.b16 %v410, %v409
  %v541 = vpack.c.b16 %v412, %v411
  %v542 = vpack.c.b16 %v414, %v413
  %v543 = vpack.c.b16 %v416, %v415
  %v544 = vpack.c.b16 %v418, %v417
  %v545 = vpack.c.b16 %v420, %v419
  %v546 = vpack.c.b16 %v422, %v421
  %v547 = vpack.c.b16 %v424, %v423
  %v548 = vpack.c.b16 %v426, %v425
  %v549 = vpack.c.b16 %v428, %v427
  %v550 = vpack.c.b16 %v430, %v429
  %v551 = vpack.c.b16 %v432, %v431
  %v552 = vpack.c.b16 %v434, %v433
  %v553 = vpack.c.b16 %v436, %v435
  %v554 = vpack.c.b16 %v438, %v437
  %v555 = vpack.c.b16 %v440, %v439
  %v556 = vpack.c.b16 %v442, %v441
  %v557 = vpack.c.b16 %v444, %v443
  %v558 = vpack.c.b16 %v446, %v445
  %v559 = vpack.c.b16 %v448, %v447
  %v560 = vpack.c.b16 %v450, %v449
  %v561 = vpack.c.b16 %v452, %v451
  %v562 = vpack.c.b16 %v454, %v453
  %v563 = vpack.c.b16 %v456, %v455
  %v564 = vpack.c.b16 %v458, %v457
  %v565 = vpack.c.b16 %v460, %v459
  %v566 = vpack.c.b16 %v462, %v461
  %v567 = vpack.c.b16 %v464, %v463
  %v568 = vpack.c.b16 %v466, %v465
  %v569 = vpack.c.b16 %v468, %v467
  %v570 = vpack.c.b16 %v470, %v469
  %v571 = vpack.c.b16 %v472, %v471
  %v572 = vpack.c.b16 %v474, %v473
  %v573 = vpack.c.b16 %v476, %v475
  %v574 = vpack.c.b16 %v478, %v477
  %v575 = vpack.c.b16 %v480, %v479
  %v576 = vpack.c.b16 %v482, %v481
  %v577 = vpack.c.b16 %v484, %v483
  %v578 = vpack.c.b16 %v486, %v485
  %v579 = vpack.c.b16 %v488, %v487
  %v580 = vpack.c.b16 %v490, %v489
  %v581 = vpack.c.b16 %v492, %v491
  %v582 = vpack.c.b16 %v494, %v493
  %v583 = vpack.c.b16 %v496, %v495
  %v584 = vpack.c.b16 %v498, %v497
  %v585 = vpack.c.b16 %v500, %v499
  %v586 = vpack.c.b16 %v502, %v501
  %v587 = vpack.c.b16 %v504, %v503
  %v588 = vpack.c.b16 %v506, %v505
  %v589 = vpack.c.b16 %v508, %v507
  %v590 = vpack.c.b16 %v510, %v509
  %v591 = vpack.c.b16 %v512, %v511
  %v592 = vpack.c.b16 %v514, %v513
  %v593 = vpack.c.b16 %v516, %v515
  %v594 = vpack.c.b16 %v518, %v517
  %v595 = vpack.c.b16 %v520, %v519
  %v596 = vpack.c.b16 %v522, %v521
  %v597 = vpack.c.b16 %v524, %v523
  %v598 = vpack.c.b16 %v526, %v525
  %671 = vmatpush.bf16.msra.mxu0 %v534
  %672 = vmatpush.bf16.msra.mxu0 %v533
  %673 = vmatpush.bf16.msra.mxu0 %v532
  %674 = vmatpush.bf16.msra.mxu0 %v531
  %675 = vmatpush.bf16.msra.mxu0 %v530
  %676 = vmatpush.bf16.msra.mxu0 %v529
  %677 = vmatpush.bf16.msra.mxu0 %v528
  %678 = vmatpush.bf16.msra.mxu0 %v527
  %679 = vmatmul.bf16.gmra.mxu0 %v219
  %v680 = vpop.f32.mrf.mxu0
  %v681 = vadd.f32 %v214, %v680
  %v682 = vpop.f32.mrf.mxu0
  %683 = vdwg.mxu0
  %684 = vmatpush.bf16.msra.mxu0 %v542
  %685 = vmatpush.bf16.msra.mxu0 %v541
  %686 = vmatpush.bf16.msra.mxu0 %v540
  %687 = vmatpush.bf16.msra.mxu0 %v539
  %688 = vmatpush.bf16.msra.mxu0 %v538
  %689 = vmatpush.bf16.msra.mxu0 %v537
  %690 = vmatpush.bf16.msra.mxu0 %v536
  %691 = vmatpush.bf16.msra.mxu0 %v535
  %692 = vmatmul.bf16.gmra.mxu0 %v220
  %v693 = vpop.f32.mrf.mxu0
  %v694 = vadd.f32 %v681, %v693
  %v695 = vpop.f32.mrf.mxu0
  %696 = vdwg.mxu0
  %697 = vmatpush.bf16.msra.mxu0 %v550
  %698 = vmatpush.bf16.msra.mxu0 %v549
  %699 = vmatpush.bf16.msra.mxu0 %v548
  %700 = vmatpush.bf16.msra.mxu0 %v547
  %701 = vmatpush.bf16.msra.mxu0 %v546
  %702 = vmatpush.bf16.msra.mxu0 %v545
  %703 = vmatpush.bf16.msra.mxu0 %v544
  %704 = vmatpush.bf16.msra.mxu0 %v543
  %705 = vmatmul.bf16.gmra.mxu0 %v221
  %v706 = vpop.f32.mrf.mxu0
  %v707 = vadd.f32 %v694, %v706
  %v708 = vpop.f32.mrf.mxu0
  %709 = vdwg.mxu0
  %710 = vmatpush.bf16.msra.mxu0 %v558
  %711 = vmatpush.bf16.msra.mxu0 %v557
  %712 = vmatpush.bf16.msra.mxu0 %v556
  %713 = vmatpush.bf16.msra.mxu0 %v555
  %714 = vmatpush.bf16.msra.mxu0 %v554
  %715 = vmatpush.bf16.msra.mxu0 %v553
  %716 = vmatpush.bf16.msra.mxu0 %v552
  %717 = vmatpush.bf16.msra.mxu0 %v551
  %718 = vmatmul.bf16.gmra.mxu0 %v222
  %v719 = vpop.f32.mrf.mxu0
  %v720 = vadd.f32 %v707, %v719
  %v721 = vpop.f32.mrf.mxu0
  %722 = vdwg.mxu0
  %723 = vmatpush.bf16.msra.mxu0 %v566
  %724 = vmatpush.bf16.msra.mxu0 %v565
  %725 = vmatpush.bf16.msra.mxu0 %v564
  %726 = vmatpush.bf16.msra.mxu0 %v563
  %727 = vmatpush.bf16.msra.mxu0 %v562
  %728 = vmatpush.bf16.msra.mxu0 %v561
  %729 = vmatpush.bf16.msra.mxu0 %v560
  %730 = vmatpush.bf16.msra.mxu0 %v559
  %731 = vmatmul.bf16.gmra.mxu0 %v223
  %v732 = vpop.f32.mrf.mxu0
  %v733 = vadd.f32 %v720, %v732
  %v734 = vpop.f32.mrf.mxu0
  %735 = vdwg.mxu0
  %736 = vmatpush.bf16.msra.mxu0 %v574
  %737 = vmatpush.bf16.msra.mxu0 %v573
  %738 = vmatpush.bf16.msra.mxu0 %v572
  %739 = vmatpush.bf16.msra.mxu0 %v571
  %740 = vmatpush.bf16.msra.mxu0 %v570
  %741 = vmatpush.bf16.msra.mxu0 %v569
  %742 = vmatpush.bf16.msra.mxu0 %v568
  %743 = vmatpush.bf16.msra.mxu0 %v567
  %744 = vmatmul.bf16.gmra.mxu0 %v224
  %v745 = vpop.f32.mrf.mxu0
  %v746 = vadd.f32 %v733, %v745
  %v747 = vpop.f32.mrf.mxu0
  %748 = vdwg.mxu0
  %749 = vmatpush.bf16.msra.mxu0 %v582
  %750 = vmatpush.bf16.msra.mxu0 %v581
  %751 = vmatpush.bf16.msra.mxu0 %v580
  %752 = vmatpush.bf16.msra.mxu0 %v579
  %753 = vmatpush.bf16.msra.mxu0 %v578
  %754 = vmatpush.bf16.msra.mxu0 %v577
  %755 = vmatpush.bf16.msra.mxu0 %v576
  %756 = vmatpush.bf16.msra.mxu0 %v575
  %757 = vmatmul.bf16.gmra.mxu0 %v225
  %v758 = vpop.f32.mrf.mxu0
  %v759 = vadd.f32 %v746, %v758
  %v760 = vpop.f32.mrf.mxu0
  %761 = vdwg.mxu0
  %762 = vmatpush.bf16.msra.mxu0 %v590
  %763 = vmatpush.bf16.msra.mxu0 %v589
  %764 = vmatpush.bf16.msra.mxu0 %v588
  %765 = vmatpush.bf16.msra.mxu0 %v587
  %766 = vmatpush.bf16.msra.mxu0 %v586
  %767 = vmatpush.bf16.msra.mxu0 %v585
  %768 = vmatpush.bf16.msra.mxu0 %v584
  %769 = vmatpush.bf16.msra.mxu0 %v583
  %770 = vmatmul.bf16.gmra.mxu0 %v226
  %v771 = vpop.f32.mrf.mxu0
  %v772 = vadd.f32 %v759, %v771
  %v773 = vpop.f32.mrf.mxu0
  %774 = vdwg.mxu0
  %775 = vmatpush.bf16.msra.mxu0 %v598
  %776 = vmatpush.bf16.msra.mxu0 %v597
  %777 = vmatpush.bf16.msra.mxu0 %v596
  %778 = vmatpush.bf16.msra.mxu0 %v595
  %779 = vmatpush.bf16.msra.mxu0 %v594
  %780 = vmatpush.bf16.msra.mxu0 %v593
  %781 = vmatpush.bf16.msra.mxu0 %v592
  %782 = vmatpush.bf16.msra.mxu0 %v591
  %783 = vmatmul.bf16.gmra.mxu0 %v229
  %v784 = vpop.f32.mrf.mxu0
  %v785 = vadd.f32 %v772, %v784
  %v786 = vpop.f32.mrf.mxu0
  %787 = vdwg.mxu0
  %v788 = vld [vmem:[%s2] sm:$0x1]
  %v790 = vperm.slane %v788, 0
  %v792 = vadd.f32 %v785, %v790
  %v793 = vmax.f32 %v792, 0.0
  %794 = vst [vmem:[%s5] sm:$0x3] %v793
  // Predicated region
  $region22: #{resnet_forward.31} parent=0 // pred_check
    _
  $region23: #{resnet_forward.31} parent=0 // pred_check_branch
    %796 = sbr.rel (0) target = $region25
  $region24: #{resnet_forward.31} parent=0 // pred_region
    _
  $region25: #{resnet_forward.31} parent=0 // pred_fallthru
    _
  // Predicated region
  $region26: #{resnet_forward.31} parent=0 // pred_check
    _
  $region27: #{resnet_forward.31} parent=0 // pred_check_branch
    %798 = sbr.rel (0) target = $region29
  $region28: #{resnet_forward.31} parent=0 // pred_region
    _
  $region29: #{resnet_forward.31} parent=0 // pred_fallthru
    _

// kernel: resnet_forward.32
$region0: #{resnet_forward.32}
  #allocation0 [shape = 'u32[]', space=smem, size = 0x4, offset = 0x4, fixed_abs, tag = 'smem constant byte address 0x4 - core index']
  #allocation1 [shape = 'u32[72,128]{1,0:T(1,128)}', space=vmem, size = 0x9000, scoped, tag = 'internal scratch']
  %s0 = inlined_call_operand.vmem [shape: bf16[2,1152], index: 0, kind: input, shape index: {}]
  %s1 = inlined_call_operand.vmem [shape: bf16[1152,128], index: 1, kind: input, shape index: {}]
  %s2 = inlined_call_operand.vmem [shape: f32[1,128], index: 2, kind: input, shape index: {}]
  %s3 = inlined_call_operand.vmem [shape: f32[2,128], index: 3, kind: output, shape index: {}]
  %s4 = sld [smem:[#allocation0]]
  $region22: #{resnet_forward.32} parent=0
    _
  %s6 = ssub.s32 1, %s4
  %s7 = scalar_select 0, %s6, %s4
  // Predicated region
  $region2: #{resnet_forward.32} parent=0 // pred_check
    _
  $region3: #{resnet_forward.32} parent=0 // pred_check_branch
    %9 = sbr.rel (0) target = $region5
  $region4: #{resnet_forward.32} parent=0 // pred_region
    _
  $region5: #{resnet_forward.32} parent=0 // pred_fallthru
    _
  // Predicated region
  $region6: #{resnet_forward.32} parent=0 // pred_check
    _
  $region7: #{resnet_forward.32} parent=0 // pred_check_branch
    %11 = sbr.rel (0) target = $region9
  $region8: #{resnet_forward.32} parent=0 // pred_region
    _
  $region9: #{resnet_forward.32} parent=0 // pred_fallthru
    _
  // Predicated region
  $region10: #{resnet_forward.32} parent=0 // pred_check
    _
  $region11: #{resnet_forward.32} parent=0 // pred_check_branch
    %13 = sbr.rel (0) target = $region13
  $region12: #{resnet_forward.32} parent=0 // pred_region
    _
  $region13: #{resnet_forward.32} parent=0 // pred_fallthru
    _
  %v14 = vld [vmem:[%s0] sm:$0xff]
  %v15 = vld [vmem:[%s0 + $0x8] sm:$0x1]
  %v16 = vld [vmem:[%s1] sm:$0xf]
  %v17 = vld [vmem:[%s1 + $0x4] sm:$0xf]
  %v18 = vld [vmem:[%s1 + $0x8] sm:$0xf]
  %v19 = vld [vmem:[%s1 + $0xc] sm:$0xf]
  %v20 = vld [vmem:[%s1 + $0x10] sm:$0xf]
  %v21 = vld [vmem:[%s1 + $0x14] sm:$0xf]
  %v22 = vld [vmem:[%s1 + $0x18] sm:$0xf]
  %v23 = vld [vmem:[%s1 + $0x1c] sm:$0xf]
  %v24 = vld [vmem:[%s1 + $0x20] sm:$0xf]
  %v25 = vld [vmem:[%s1 + $0x24] sm:$0xf]
  %v26 = vld [vmem:[%s1 + $0x28] sm:$0xf]
  %v27 = vld [vmem:[%s1 + $0x2c] sm:$0xf]
  %v28 = vld [vmem:[%s1 + $0x30] sm:$0xf]
  %v29 = vld [vmem:[%s1 + $0x34] sm:$0xf]
  %v30 = vld [vmem:[%s1 + $0x38] sm:$0xf]
  %v31 = vld [vmem:[%s1 + $0x3c] sm:$0xf]
  %v32 = vld [vmem:[%s1 + $0x40] sm:$0xf]
  %v33 = vld [vmem:[%s1 + $0x44] sm:$0xf]
  %v34 = vld [vmem:[%s1 + $0x48] sm:$0xf]
  %v35 = vld [vmem:[%s1 + $0x4c] sm:$0xf]
  %v36 = vld [vmem:[%s1 + $0x50] sm:$0xf]
  %v37 = vld [vmem:[%s1 + $0x54] sm:$0xf]
  %v38 = vld [vmem:[%s1 + $0x58] sm:$0xf]
  %v39 = vld [vmem:[%s1 + $0x5c] sm:$0xf]
  %v40 = vld [vmem:[%s1 + $0x60] sm:$0xf]
  %v41 = vld [vmem:[%s1 + $0x64] sm:$0xf]
  %v42 = vld [vmem:[%s1 + $0x68] sm:$0xf]
  %v43 = vld [vmem:[%s1 + $0x6c] sm:$0xf]
  %v44 = vld [vmem:[%s1 + $0x70] sm:$0xf]
  %v45 = vld [vmem:[%s1 + $0x74] sm:$0xf]
  %v46 = vld [vmem:[%s1 + $0x78] sm:$0xf]
  %v47 = vld [vmem:[%s1 + $0x7c] sm:$0xf]
  %v48 = vld [vmem:[%s1 + $0x80] sm:$0xf]
  %v49 = vld [vmem:[%s1 + $0x84] sm:$0xf]
  %v50 = vld [vmem:[%s1 + $0x88] sm:$0xf]
  %v51 = vld [vmem:[%s1 + $0x8c] sm:$0xf]
  %v52 = vld [vmem:[%s1 + $0x90] sm:$0xf]
  %v53 = vld [vmem:[%s1 + $0x94] sm:$0xf]
  %v54 = vld [vmem:[%s1 + $0x98] sm:$0xf]
  %v55 = vld [vmem:[%s1 + $0x9c] sm:$0xf]
  %v56 = vld [vmem:[%s1 + $0xa0] sm:$0xf]
  %v57 = vld [vmem:[%s1 + $0xa4] sm:$0xf]
  %v58 = vld [vmem:[%s1 + $0xa8] sm:$0xf]
  %v59 = vld [vmem:[%s1 + $0xac] sm:$0xf]
  %v60 = vld [vmem:[%s1 + $0xb0] sm:$0xf]
  %v61 = vld [vmem:[%s1 + $0xb4] sm:$0xf]
  %v62 = vld [vmem:[%s1 + $0xb8] sm:$0xf]
  %v63 = vld [vmem:[%s1 + $0xbc] sm:$0xf]
  %v64 = vld [vmem:[%s1 + $0xc0] sm:$0xf]
  %v65 = vld [vmem:[%s1 + $0xc4] sm:$0xf]
  %v66 = vld [vmem:[%s1 + $0xc8] sm:$0xf]
  %v67 = vld [vmem:[%s1 + $0xcc] sm:$0xf]
  %v68 = vld [vmem:[%s1 + $0xd0] sm:$0xf]
  %v69 = vld [vmem:[%s1 + $0xd4] sm:$0xf]
  %v70 = vld [vmem:[%s1 + $0xd8] sm:$0xf]
  %v71 = vld [vmem:[%s1 + $0xdc] sm:$0xf]
  %v72 = vld [vmem:[%s1 + $0xe0] sm:$0xf]
  %v73 = vld [vmem:[%s1 + $0xe4] sm:$0xf]
  %v74 = vld [vmem:[%s1 + $0xe8] sm:$0xf]
  %v75 = vld [vmem:[%s1 + $0xec] sm:$0xf]
  %v76 = vld [vmem:[%s1 + $0xf0] sm:$0xf]
  %v77 = vld [vmem:[%s1 + $0xf4] sm:$0xf]
  %v78 = vld [vmem:[%s1 + $0xf8] sm:$0xf]
  %v79 = vld [vmem:[%s1 + $0xfc] sm:$0xf]
  %v80 = vld [vmem:[%s1 + $0x100] sm:$0xf]
  %v81 = vld [vmem:[%s1 + $0x104] sm:$0xf]
  %v82 = vld [vmem:[%s1 + $0x108] sm:$0xf]
  %v83 = vld [vmem:[%s1 + $0x10c] sm:$0xf]
  %v84 = vld [vmem:[%s1 + $0x110] sm:$0xf]
  %v85 = vld [vmem:[%s1 + $0x114] sm:$0xf]
  %v86 = vld [vmem:[%s1 + $0x118] sm:$0xf]
  %v87 = vld [vmem:[%s1 + $0x11c] sm:$0xf]
  %v88 = vld [vmem:[%s1 + $0x120] sm:$0xf]
  %v89 = vld [vmem:[%s1 + $0x124] sm:$0xf]
  %v90 = vld [vmem:[%s1 + $0x128] sm:$0xf]
  %v91 = vld [vmem:[%s1 + $0x12c] sm:$0xf]
  %v92 = vld [vmem:[%s1 + $0x130] sm:$0xf]
  %v93 = vld [vmem:[%s1 + $0x134] sm:$0xf]
  %v94 = vld [vmem:[%s1 + $0x138] sm:$0xf]
  %v95 = vld [vmem:[%s1 + $0x13c] sm:$0xf]
  %v96 = vld [vmem:[%s1 + $0x140] sm:$0xf]
  %v97 = vld [vmem:[%s1 + $0x144] sm:$0xf]
  %v98 = vld [vmem:[%s1 + $0x148] sm:$0xf]
  %v99 = vld [vmem:[%s1 + $0x14c] sm:$0xf]
  %v100 = vld [vmem:[%s1 + $0x150] sm:$0xf]
  %v101 = vld [vmem:[%s1 + $0x154] sm:$0xf]
  %v102 = vld [vmem:[%s1 + $0x158] sm:$0xf]
  %v103 = vld [vmem:[%s1 + $0x15c] sm:$0xf]
  %v104 = vld [vmem:[%s1 + $0x160] sm:$0xf]
  %v105 = vld [vmem:[%s1 + $0x164] sm:$0xf]
  %v106 = vld [vmem:[%s1 + $0x168] sm:$0xf]
  %v107 = vld [vmem:[%s1 + $0x16c] sm:$0xf]
  %v108 = vld [vmem:[%s1 + $0x170] sm:$0xf]
  %v109 = vld [vmem:[%s1 + $0x174] sm:$0xf]
  %v110 = vld [vmem:[%s1 + $0x178] sm:$0xf]
  %v111 = vld [vmem:[%s1 + $0x17c] sm:$0xf]
  %v112 = vld [vmem:[%s1 + $0x180] sm:$0xf]
  %v113 = vld [vmem:[%s1 + $0x184] sm:$0xf]
  %v114 = vld [vmem:[%s1 + $0x188] sm:$0xf]
  %v115 = vld [vmem:[%s1 + $0x18c] sm:$0xf]
  %v116 = vld [vmem:[%s1 + $0x190] sm:$0xf]
  %v117 = vld [vmem:[%s1 + $0x194] sm:$0xf]
  %v118 = vld [vmem:[%s1 + $0x198] sm:$0xf]
  %v119 = vld [vmem:[%s1 + $0x19c] sm:$0xf]
  %v120 = vld [vmem:[%s1 + $0x1a0] sm:$0xf]
  %v121 = vld [vmem:[%s1 + $0x1a4] sm:$0xf]
  %v122 = vld [vmem:[%s1 + $0x1a8] sm:$0xf]
  %v123 = vld [vmem:[%s1 + $0x1ac] sm:$0xf]
  %v124 = vld [vmem:[%s1 + $0x1b0] sm:$0xf]
  %v125 = vld [vmem:[%s1 + $0x1b4] sm:$0xf]
  %v126 = vld [vmem:[%s1 + $0x1b8] sm:$0xf]
  %v127 = vld [vmem:[%s1 + $0x1bc] sm:$0xf]
  %v128 = vld [vmem:[%s1 + $0x1c0] sm:$0xf]
  %v129 = vld [vmem:[%s1 + $0x1c4] sm:$0xf]
  %v130 = vld [vmem:[%s1 + $0x1c8] sm:$0xf]
  %v131 = vld [vmem:[%s1 + $0x1cc] sm:$0xf]
  %v132 = vld [vmem:[%s1 + $0x1d0] sm:$0xf]
  %v133 = vld [vmem:[%s1 + $0x1d4] sm:$0xf]
  %v134 = vld [vmem:[%s1 + $0x1d8] sm:$0xf]
  %v135 = vld [vmem:[%s1 + $0x1dc] sm:$0xf]
  %v136 = vld [vmem:[%s1 + $0x1e0] sm:$0xf]
  %v137 = vld [vmem:[%s1 + $0x1e4] sm:$0xf]
  %v138 = vld [vmem:[%s1 + $0x1e8] sm:$0xf]
  %v139 = vld [vmem:[%s1 + $0x1ec] sm:$0xf]
  %v140 = vld [vmem:[%s1 + $0x1f0] sm:$0xf]
  %v141 = vld [vmem:[%s1 + $0x1f4] sm:$0xf]
  %v142 = vld [vmem:[%s1 + $0x1f8] sm:$0xf]
  %v143 = vld [vmem:[%s1 + $0x1fc] sm:$0xf]
  %v144 = vld [vmem:[%s1 + $0x200] sm:$0xf]
  %v145 = vld [vmem:[%s1 + $0x204] sm:$0xf]
  %v146 = vld [vmem:[%s1 + $0x208] sm:$0xf]
  %v147 = vld [vmem:[%s1 + $0x20c] sm:$0xf]
  %v148 = vld [vmem:[%s1 + $0x210] sm:$0xf]
  %v149 = vld [vmem:[%s1 + $0x214] sm:$0xf]
  %v150 = vld [vmem:[%s1 + $0x218] sm:$0xf]
  %v151 = vld [vmem:[%s1 + $0x21c] sm:$0xf]
  %v152 = vld [vmem:[%s1 + $0x220] sm:$0xf]
  %v153 = vld [vmem:[%s1 + $0x224] sm:$0xf]
  %v154 = vld [vmem:[%s1 + $0x228] sm:$0xf]
  %v155 = vld [vmem:[%s1 + $0x22c] sm:$0xf]
  %v156 = vld [vmem:[%s1 + $0x230] sm:$0xf]
  %v157 = vld [vmem:[%s1 + $0x234] sm:$0xf]
  %v158 = vld [vmem:[%s1 + $0x238] sm:$0xf]
  %v159 = vld [vmem:[%s1 + $0x23c] sm:$0xf]
  %v160 = vld [vmem:[%s2] sm:$0x1]
  %v162 = vperm.slane %v160, 0
  %165 = vst [vmem:[#allocation1] ss:$9 sm:$0xff] %v14
  %v166 = vld [vmem:[#allocation1] sm:$0xff]
  %v167 = vld [vmem:[#allocation1 + $0x9] sm:$0xff]
  %v168 = vld [vmem:[#allocation1 + $0x12] sm:$0xff]
  %v169 = vld [vmem:[#allocation1 + $0x1b] sm:$0xff]
  %v170 = vld [vmem:[#allocation1 + $0x24] sm:$0xff]
  %v171 = vld [vmem:[#allocation1 + $0x2d] sm:$0xff]
  %v172 = vld [vmem:[#allocation1 + $0x36] sm:$0xff]
  %v173 = vld [vmem:[#allocation1 + $0x3f] sm:$0xff]
  %175 = vst [vmem:[#allocation1] ss:$9 sm:$0xff] %v15
  %v176 = vld [vmem:[#allocation1] sm:$0xff]
  %v330 = vunpack.c.l.b16 %v16
  %v331 = vunpack.c.l.b16 %v17
  %v332 = vunpack.c.l.b16 %v18
  %v333 = vunpack.c.l.b16 %v19
  %v334 = vunpack.c.l.b16 %v20
  %v335 = vunpack.c.l.b16 %v21
  %v336 = vunpack.c.l.b16 %v22
  %v337 = vunpack.c.l.b16 %v23
  %v338 = vunpack.c.l.b16 %v24
  %v339 = vunpack.c.l.b16 %v25
  %v340 = vunpack.c.l.b16 %v26
  %v341 = vunpack.c.l.b16 %v27
  %v342 = vunpack.c.l.b16 %v28
  %v343 = vunpack.c.l.b16 %v29
  %v344 = vunpack.c.l.b16 %v30
  %v345 = vunpack.c.l.b16 %v31
  %v346 = vunpack.c.l.b16 %v32
  %v347 = vunpack.c.l.b16 %v33
  %v348 = vunpack.c.l.b16 %v34
  %v349 = vunpack.c.l.b16 %v35
  %v350 = vunpack.c.l.b16 %v36
  %v351 = vunpack.c.l.b16 %v37
  %v352 = vunpack.c.l.b16 %v38
  %v353 = vunpack.c.l.b16 %v39
  %v354 = vunpack.c.l.b16 %v40
  %v355 = vunpack.c.l.b16 %v41
  %v356 = vunpack.c.l.b16 %v42
  %v357 = vunpack.c.l.b16 %v43
  %v358 = vunpack.c.l.b16 %v44
  %v359 = vunpack.c.l.b16 %v45
  %v360 = vunpack.c.l.b16 %v46
  %v361 = vunpack.c.l.b16 %v47
  %v362 = vunpack.c.l.b16 %v48
  %v363 = vunpack.c.l.b16 %v49
  %v364 = vunpack.c.l.b16 %v50
  %v365 = vunpack.c.l.b16 %v51
  %v366 = vunpack.c.l.b16 %v52
  %v367 = vunpack.c.l.b16 %v53
  %v368 = vunpack.c.l.b16 %v54
  %v369 = vunpack.c.l.b16 %v55
  %v370 = vunpack.c.l.b16 %v56
  %v371 = vunpack.c.l.b16 %v57
  %v372 = vunpack.c.l.b16 %v58
  %v373 = vunpack.c.l.b16 %v59
  %v374 = vunpack.c.l.b16 %v60
  %v375 = vunpack.c.l.b16 %v61
  %v376 = vunpack.c.l.b16 %v62
  %v377 = vunpack.c.l.b16 %v63
  %v378 = vunpack.c.l.b16 %v64
  %v379 = vunpack.c.l.b16 %v65
  %v380 = vunpack.c.l.b16 %v66
  %v381 = vunpack.c.l.b16 %v67
  %v382 = vunpack.c.l.b16 %v68
  %v383 = vunpack.c.l.b16 %v69
  %v384 = vunpack.c.l.b16 %v70
  %v385 = vunpack.c.l.b16 %v71
  %v386 = vunpack.c.l.b16 %v72
  %v387 = vunpack.c.l.b16 %v73
  %v388 = vunpack.c.l.b16 %v74
  %v389 = vunpack.c.l.b16 %v75
  %v390 = vunpack.c.l.b16 %v76
  %v391 = vunpack.c.l.b16 %v77
  %v392 = vunpack.c.l.b16 %v78
  %v393 = vunpack.c.l.b16 %v79
  %v394 = vunpack.c.l.b16 %v80
  %v395 = vunpack.c.l.b16 %v81
  %v396 = vunpack.c.l.b16 %v82
  %v397 = vunpack.c.l.b16 %v83
  %v398 = vunpack.c.l.b16 %v84
  %v399 = vunpack.c.l.b16 %v85
  %v400 = vunpack.c.l.b16 %v86
  %v401 = vunpack.c.l.b16 %v87
  %v402 = vunpack.c.l.b16 %v88
  %v403 = vunpack.c.l.b16 %v89
  %v404 = vunpack.c.l.b16 %v90
  %v405 = vunpack.c.l.b16 %v91
  %v406 = vunpack.c.l.b16 %v92
  %v407 = vunpack.c.l.b16 %v93
  %v408 = vunpack.c.l.b16 %v94
  %v409 = vunpack.c.l.b16 %v95
  %v410 = vunpack.c.l.b16 %v96
  %v411 = vunpack.c.l.b16 %v97
  %v412 = vunpack.c.l.b16 %v98
  %v413 = vunpack.c.l.b16 %v99
  %v414 = vunpack.c.l.b16 %v100
  %v415 = vunpack.c.l.b16 %v101
  %v416 = vunpack.c.l.b16 %v102
  %v417 = vunpack.c.l.b16 %v103
  %v418 = vunpack.c.l.b16 %v104
  %v419 = vunpack.c.l.b16 %v105
  %v420 = vunpack.c.l.b16 %v106
  %v421 = vunpack.c.l.b16 %v107
  %v422 = vunpack.c.l.b16 %v108
  %v423 = vunpack.c.l.b16 %v109
  %v424 = vunpack.c.l.b16 %v110
  %v425 = vunpack.c.l.b16 %v111
  %v426 = vunpack.c.l.b16 %v112
  %v427 = vunpack.c.l.b16 %v113
  %v428 = vunpack.c.l.b16 %v114
  %v429 = vunpack.c.l.b16 %v115
  %v430 = vunpack.c.l.b16 %v116
  %v431 = vunpack.c.l.b16 %v117
  %v432 = vunpack.c.l.b16 %v118
  %v433 = vunpack.c.l.b16 %v119
  %v434 = vunpack.c.l.b16 %v120
  %v435 = vunpack.c.l.b16 %v121
  %v436 = vunpack.c.l.b16 %v122
  %v437 = vunpack.c.l.b16 %v123
  %v438 = vunpack.c.l.b16 %v124
  %v439 = vunpack.c.l.b16 %v125
  %v440 = vunpack.c.l.b16 %v126
  %v441 = vunpack.c.l.b16 %v127
  %v442 = vunpack.c.l.b16 %v128
  %v443 = vunpack.c.l.b16 %v129
  %v444 = vunpack.c.l.b16 %v130
  %v445 = vunpack.c.l.b16 %v131
  %v446 = vunpack.c.l.b16 %v132
  %v447 = vunpack.c.l.b16 %v133
  %v448 = vunpack.c.l.b16 %v134
  %v449 = vunpack.c.l.b16 %v135
  %v450 = vunpack.c.l.b16 %v136
  %v451 = vunpack.c.l.b16 %v137
  %v452 = vunpack.c.l.b16 %v138
  %v453 = vunpack.c.l.b16 %v139
  %v454 = vunpack.c.l.b16 %v140
  %v455 = vunpack.c.l.b16 %v141
  %v456 = vunpack.c.l.b16 %v142
  %v457 = vunpack.c.l.b16 %v143
  %v458 = vunpack.c.l.b16 %v144
  %v459 = vunpack.c.l.b16 %v145
  %v460 = vunpack.c.l.b16 %v146
  %v461 = vunpack.c.l.b16 %v147
  %v462 = vunpack.c.l.b16 %v148
  %v463 = vunpack.c.l.b16 %v149
  %v464 = vunpack.c.l.b16 %v150
  %v465 = vunpack.c.l.b16 %v151
  %v466 = vunpack.c.l.b16 %v152
  %v467 = vunpack.c.l.b16 %v153
  %v468 = vunpack.c.l.b16 %v154
  %v469 = vunpack.c.l.b16 %v155
  %v470 = vunpack.c.l.b16 %v156
  %v471 = vunpack.c.l.b16 %v157
  %v472 = vunpack.c.l.b16 %v158
  %v473 = vunpack.c.l.b16 %v159
  %v474 = vpack.c.b16 %v331, %v330
  %v475 = vpack.c.b16 %v333, %v332
  %v476 = vpack.c.b16 %v335, %v334
  %v477 = vpack.c.b16 %v337, %v336
  %v478 = vpack.c.b16 %v339, %v338
  %v479 = vpack.c.b16 %v341, %v340
  %v480 = vpack.c.b16 %v343, %v342
  %v481 = vpack.c.b16 %v345, %v344
  %v482 = vpack.c.b16 %v347, %v346
  %v483 = vpack.c.b16 %v349, %v348
  %v484 = vpack.c.b16 %v351, %v350
  %v485 = vpack.c.b16 %v353, %v352
  %v486 = vpack.c.b16 %v355, %v354
  %v487 = vpack.c.b16 %v357, %v356
  %v488 = vpack.c.b16 %v359, %v358
  %v489 = vpack.c.b16 %v361, %v360
  %v490 = vpack.c.b16 %v363, %v362
  %v491 = vpack.c.b16 %v365, %v364
  %v492 = vpack.c.b16 %v367, %v366
  %v493 = vpack.c.b16 %v369, %v368
  %v494 = vpack.c.b16 %v371, %v370
  %v495 = vpack.c.b16 %v373, %v372
  %v496 = vpack.c.b16 %v375, %v374
  %v497 = vpack.c.b16 %v377, %v376
  %v498 = vpack.c.b16 %v379, %v378
  %v499 = vpack.c.b16 %v381, %v380
  %v500 = vpack.c.b16 %v383, %v382
  %v501 = vpack.c.b16 %v385, %v384
  %v502 = vpack.c.b16 %v387, %v386
  %v503 = vpack.c.b16 %v389, %v388
  %v504 = vpack.c.b16 %v391, %v390
  %v505 = vpack.c.b16 %v393, %v392
  %v506 = vpack.c.b16 %v395, %v394
  %v507 = vpack.c.b16 %v397, %v396
  %v508 = vpack.c.b16 %v399, %v398
  %v509 = vpack.c.b16 %v401, %v400
  %v510 = vpack.c.b16 %v403, %v402
  %v511 = vpack.c.b16 %v405, %v404
  %v512 = vpack.c.b16 %v407, %v406
  %v513 = vpack.c.b16 %v409, %v408
  %v514 = vpack.c.b16 %v411, %v410
  %v515 = vpack.c.b16 %v413, %v412
  %v516 = vpack.c.b16 %v415, %v414
  %v517 = vpack.c.b16 %v417, %v416
  %v518 = vpack.c.b16 %v419, %v418
  %v519 = vpack.c.b16 %v421, %v420
  %v520 = vpack.c.b16 %v423, %v422
  %v521 = vpack.c.b16 %v425, %v424
  %v522 = vpack.c.b16 %v427, %v426
  %v523 = vpack.c.b16 %v429, %v428
  %v524 = vpack.c.b16 %v431, %v430
  %v525 = vpack.c.b16 %v433, %v432
  %v526 = vpack.c.b16 %v435, %v434
  %v527 = vpack.c.b16 %v437, %v436
  %v528 = vpack.c.b16 %v439, %v438
  %v529 = vpack.c.b16 %v441, %v440
  %v530 = vpack.c.b16 %v443, %v442
  %v531 = vpack.c.b16 %v445, %v444
  %v532 = vpack.c.b16 %v447, %v446
  %v533 = vpack.c.b16 %v449, %v448
  %v534 = vpack.c.b16 %v451, %v450
  %v535 = vpack.c.b16 %v453, %v452
  %v536 = vpack.c.b16 %v455, %v454
  %v537 = vpack.c.b16 %v457, %v456
  %v538 = vpack.c.b16 %v459, %v458
  %v539 = vpack.c.b16 %v461, %v460
  %v540 = vpack.c.b16 %v463, %v462
  %v541 = vpack.c.b16 %v465, %v464
  %v542 = vpack.c.b16 %v467, %v466
  %v543 = vpack.c.b16 %v469, %v468
  %v544 = vpack.c.b16 %v471, %v470
  %v545 = vpack.c.b16 %v473, %v472
  %618 = vmatpush.bf16.msra.mxu0 %v481
  %619 = vmatpush.bf16.msra.mxu0 %v480
  %620 = vmatpush.bf16.msra.mxu0 %v479
  %621 = vmatpush.bf16.msra.mxu0 %v478
  %622 = vmatpush.bf16.msra.mxu0 %v477
  %623 = vmatpush.bf16.msra.mxu0 %v476
  %624 = vmatpush.bf16.msra.mxu0 %v475
  %625 = vmatpush.bf16.msra.mxu0 %v474
  %626 = vmatmul.bf16.gmra.mxu0 %v166
  %v627 = vpop.f32.mrf.mxu0
  %v628 = vadd.f32 %v162, %v627
  %v629 = vpop.f32.mrf.mxu0
  %630 = vdwg.mxu0
  %631 = vmatpush.bf16.msra.mxu0 %v489
  %632 = vmatpush.bf16.msra.mxu0 %v488
  %633 = vmatpush.bf16.msra.mxu0 %v487
  %634 = vmatpush.bf16.msra.mxu0 %v486
  %635 = vmatpush.bf16.msra.mxu0 %v485
  %636 = vmatpush.bf16.msra.mxu0 %v484
  %637 = vmatpush.bf16.msra.mxu0 %v483
  %638 = vmatpush.bf16.msra.mxu0 %v482
  %639 = vmatmul.bf16.gmra.mxu0 %v167
  %v640 = vpop.f32.mrf.mxu0
  %v641 = vadd.f32 %v628, %v640
  %v642 = vpop.f32.mrf.mxu0
  %643 = vdwg.mxu0
  %644 = vmatpush.bf16.msra.mxu0 %v497
  %645 = vmatpush.bf16.msra.mxu0 %v496
  %646 = vmatpush.bf16.msra.mxu0 %v495
  %647 = vmatpush.bf16.msra.mxu0 %v494
  %648 = vmatpush.bf16.msra.mxu0 %v493
  %649 = vmatpush.bf16.msra.mxu0 %v492
  %650 = vmatpush.bf16.msra.mxu0 %v491
  %651 = vmatpush.bf16.msra.mxu0 %v490
  %652 = vmatmul.bf16.gmra.mxu0 %v168
  %v653 = vpop.f32.mrf.mxu0
  %v654 = vadd.f32 %v641, %v653
  %v655 = vpop.f32.mrf.mxu0
  %656 = vdwg.mxu0
  %657 = vmatpush.bf16.msra.mxu0 %v505
  %658 = vmatpush.bf16.msra.mxu0 %v504
  %659 = vmatpush.bf16.msra.mxu0 %v503
  %660 = vmatpush.bf16.msra.mxu0 %v502
  %661 = vmatpush.bf16.msra.mxu0 %v501
  %662 = vmatpush.bf16.msra.mxu0 %v500
  %663 = vmatpush.bf16.msra.mxu0 %v499
  %664 = vmatpush.bf16.msra.mxu0 %v498
  %665 = vmatmul.bf16.gmra.mxu0 %v169
  %v666 = vpop.f32.mrf.mxu0
  %v667 = vadd.f32 %v654, %v666
  %v668 = vpop.f32.mrf.mxu0
  %669 = vdwg.mxu0
  %670 = vmatpush.bf16.msra.mxu0 %v513
  %671 = vmatpush.bf16.msra.mxu0 %v512
  %672 = vmatpush.bf16.msra.mxu0 %v511
  %673 = vmatpush.bf16.msra.mxu0 %v510
  %674 = vmatpush.bf16.msra.mxu0 %v509
  %675 = vmatpush.bf16.msra.mxu0 %v508
  %676 = vmatpush.bf16.msra.mxu0 %v507
  %677 = vmatpush.bf16.msra.mxu0 %v506
  %678 = vmatmul.bf16.gmra.mxu0 %v170
  %v679 = vpop.f32.mrf.mxu0
  %v680 = vadd.f32 %v667, %v679
  %v681 = vpop.f32.mrf.mxu0
  %682 = vdwg.mxu0
  %683 = vmatpush.bf16.msra.mxu0 %v521
  %684 = vmatpush.bf16.msra.mxu0 %v520
  %685 = vmatpush.bf16.msra.mxu0 %v519
  %686 = vmatpush.bf16.msra.mxu0 %v518
  %687 = vmatpush.bf16.msra.mxu0 %v517
  %688 = vmatpush.bf16.msra.mxu0 %v516
  %689 = vmatpush.bf16.msra.mxu0 %v515
  %690 = vmatpush.bf16.msra.mxu0 %v514
  %691 = vmatmul.bf16.gmra.mxu0 %v171
  %v692 = vpop.f32.mrf.mxu0
  %v693 = vadd.f32 %v680, %v692
  %v694 = vpop.f32.mrf.mxu0
  %695 = vdwg.mxu0
  %696 = vmatpush.bf16.msra.mxu0 %v529
  %697 = vmatpush.bf16.msra.mxu0 %v528
  %698 = vmatpush.bf16.msra.mxu0 %v527
  %699 = vmatpush.bf16.msra.mxu0 %v526
  %700 = vmatpush.bf16.msra.mxu0 %v525
  %701 = vmatpush.bf16.msra.mxu0 %v524
  %702 = vmatpush.bf16.msra.mxu0 %v523
  %703 = vmatpush.bf16.msra.mxu0 %v522
  %704 = vmatmul.bf16.gmra.mxu0 %v172
  %v705 = vpop.f32.mrf.mxu0
  %v706 = vadd.f32 %v693, %v705
  %v707 = vpop.f32.mrf.mxu0
  %708 = vdwg.mxu0
  %709 = vmatpush.bf16.msra.mxu0 %v537
  %710 = vmatpush.bf16.msra.mxu0 %v536
  %711 = vmatpush.bf16.msra.mxu0 %v535
  %712 = vmatpush.bf16.msra.mxu0 %v534
  %713 = vmatpush.bf16.msra.mxu0 %v533
  %714 = vmatpush.bf16.msra.mxu0 %v532
  %715 = vmatpush.bf16.msra.mxu0 %v531
  %716 = vmatpush.bf16.msra.mxu0 %v530
  %717 = vmatmul.bf16.gmra.mxu0 %v173
  %v718 = vpop.f32.mrf.mxu0
  %v719 = vadd.f32 %v706, %v718
  %v720 = vpop.f32.mrf.mxu0
  %721 = vdwg.mxu0
  %722 = vmatpush.bf16.msra.mxu0 %v545
  %723 = vmatpush.bf16.msra.mxu0 %v544
  %724 = vmatpush.bf16.msra.mxu0 %v543
  %725 = vmatpush.bf16.msra.mxu0 %v542
  %726 = vmatpush.bf16.msra.mxu0 %v541
  %727 = vmatpush.bf16.msra.mxu0 %v540
  %728 = vmatpush.bf16.msra.mxu0 %v539
  %729 = vmatpush.bf16.msra.mxu0 %v538
  %730 = vmatmul.bf16.gmra.mxu0 %v176
  %v731 = vpop.f32.mrf.mxu0
  %v732 = vadd.f32 %v719, %v731
  %v733 = vpop.f32.mrf.mxu0
  %734 = vdwg.mxu0
  %v735 = vmax.f32 %v732, 0.0
  %736 = vst [vmem:[%s3] sm:$0x3] %v735
  // Predicated region
  $region14: #{resnet_forward.32} parent=0 // pred_check
    _
  $region15: #{resnet_forward.32} parent=0 // pred_check_branch
    %738 = sbr.rel (0) target = $region17
  $region16: #{resnet_forward.32} parent=0 // pred_region
    _
  $region17: #{resnet_forward.32} parent=0 // pred_fallthru
    _
  // Predicated region
  $region18: #{resnet_forward.32} parent=0 // pred_check
    _
  $region19: #{resnet_forward.32} parent=0 // pred_check_branch
    %740 = sbr.rel (0) target = $region21
  $region20: #{resnet_forward.32} parent=0 // pred_region
    _
  $region21: #{resnet_forward.32} parent=0 // pred_fallthru
    _

</llo_original>
